<compile_context>
chip_gen: v7x
topology: tpu7x:2x2x1
jax: 0.10.0
libtpu: 0.0.40
codegen_flags: <defaults>
</compile_context>

<pallas_src>
import functools

import jax
import jax.numpy as jnp
from jax.experimental import pallas as pl
from jax.experimental.pallas import tpu as pltpu


# ------------------------------ Pallas kernel --------------------------------

def _decoder_block_kernel(down_ref, left_ref, r_ref, wup_ref, w1l_ref, w1u_ref,
                          w2_ref, s1_ref, b1_ref, s2_ref, b2_ref, o_ref, pad_ref,
                          *, H, W, Cd, Cl):
    S = H * W

    # Zero the padded scratch once per grid step: the 1-pixel border must read as 0
    # for the SAME convs; interiors are overwritten below.  (Tiny relative to convs.)
    pad_ref[...] = jnp.zeros_like(pad_ref)

    def set_image(img_flat, cin):
        # img_flat: (S, cin) f32 -> bf16 interior of the padded scratch.
        pad_ref[1:H + 1, 1:W + 1, :cin] = (
            img_flat.reshape(H, W, cin).astype(jnp.bfloat16))

    def conv3x3_acc(w_ref, cin, cout, acc):
        # 3x3 SAME conv of the image currently held in pad_ref[1:H+1, 1:W+1, :cin],
        # as 9 tap-dots (bf16 MXU) accumulated in f32.  Tap (dy, dx) reads the free
        # ref window pad_ref[dy:dy+H, dx:dx+W, :cin].
        for t in range(9):
            dy, dx = divmod(t, 3)
            tap = pad_ref[dy:dy + H, dx:dx + W, :cin]            # (H, W, cin) bf16
            acc = acc + jnp.dot(tap.reshape(S, cin), w_ref[t],
                                preferred_element_type=jnp.float32)
        return acc

    # ---- fused bilinear upsample:  up (S, Cd) = R (S, Sd) @ down (Sd, Cd)
    down = down_ref[0].T                                         # (Sd, Cd) f32
    up = jnp.dot(r_ref[...], down, preferred_element_type=jnp.float32)

    # ---- upconv: conv3x3(Cd -> Cl), no BN / activation
    set_image(up, Cd)
    x = conv3x3_acc(wup_ref, Cd, Cl, jnp.zeros((S, Cl), jnp.float32))

    # ---- conv1 over cat(left, x) == conv(left, w1_left) + conv(x, w1_up); BN1; ReLU
    set_image(left_ref[0].T, Cl)                                 # left channels first
    acc1 = conv3x3_acc(w1l_ref, Cl, Cl, jnp.zeros((S, Cl), jnp.float32))
    set_image(x, Cl)
    acc1 = conv3x3_acc(w1u_ref, Cl, Cl, acc1)
    y = jnp.maximum(acc1 * s1_ref[...] + b1_ref[...], 0.0)       # (S, Cl) f32

    # ---- conv2 + BN2 + ReLU
    set_image(y, Cl)
    z = conv3x3_acc(w2_ref, Cl, Cl, jnp.zeros((S, Cl), jnp.float32))
    z = jnp.maximum(z * s2_ref[...] + b2_ref[...], 0.0)

    # Lane-dense store: the minor dim of the output block is S = H*W.
    o_ref[0] = z.T.astype(o_ref.dtype)                           # (Cl, S)


# ------------------------------ wrapper / specs -------------------------------

def _interp_matrix(out_size, in_size):
    # PyTorch F.interpolate(mode='bilinear', align_corners=False) 1-D weights.
    scale = in_size / out_size
    src = (jnp.arange(out_size, dtype=jnp.float32) + 0.5) * scale - 0.5
    src = jnp.maximum(src, 0.0)
    i0 = jnp.minimum(jnp.floor(src).astype(jnp.int32), in_size - 1)
    i1 = jnp.minimum(i0 + 1, in_size - 1)
    w1 = src - i0.astype(jnp.float32)
    w0 = 1.0 - w1
    return (jax.nn.one_hot(i0, in_size, dtype=jnp.float32) * w0[:, None]
            + jax.nn.one_hot(i1, in_size, dtype=jnp.float32) * w1[:, None])


def _bilinear_kron(out_h, out_w, in_h, in_w):
    # Separable bilinear as one (out_h*out_w, in_h*in_w) matrix: kron(ry, rx).
    if (out_h, out_w) == (in_h, in_w):
        return jnp.eye(out_h * out_w, dtype=jnp.float32)
    ry = _interp_matrix(out_h, in_h)                             # (out_h, in_h)
    rx = _interp_matrix(out_w, in_w)                             # (out_w, in_w)
    return (ry[:, None, :, None] * rx[None, :, None, :]).reshape(
        out_h * out_w, in_h * in_w)


def _vmem_limit_bytes():
    # Per-generation budget: ~96 MiB on 128-MiB parts (v5e/v6e), ~48 MiB on v7x.
    try:
        cap = int(pltpu.get_tpu_info().vmem_capacity_bytes)
    except Exception:
        cap = 128 * 1024 * 1024
    return int(min(max(cap - 16 * 1024 * 1024, 32 * 1024 * 1024), 96 * 1024 * 1024))


def decoder_block(left, down, p):
    """One DecoderBlock forward.  left: (N, Cl, H, W) f32; down: (N, Cd, Hin, Win) f32."""
    N, Cl, H, W = left.shape
    _, Cd, Hin, Win = down.shape
    S, Sd = H * W, Hin * Win

    r = _bilinear_kron(H, W, Hin, Win)                           # (S, Sd) f32
    left_flat = left.reshape(N, Cl, S)                           # free: contiguous NCHW
    down_flat = down.reshape(N, Cd, Sd)

    kernel = functools.partial(_decoder_block_kernel, H=H, W=W, Cd=Cd, Cl=Cl)
    out_flat = pl.pallas_call(
        kernel,
        out_shape=jax.ShapeDtypeStruct((N, Cl, S), jnp.float32),
        grid_spec=pltpu.PrefetchScalarGridSpec(
            num_scalar_prefetch=0,
            grid=(N,),
            in_specs=[
                pl.BlockSpec((1, Cd, Sd), lambda n: (n, 0, 0)),   # down  (CHW-flat)
                pl.BlockSpec((1, Cl, S), lambda n: (n, 0, 0)),    # left  (CHW-flat)
                pl.BlockSpec((S, Sd), lambda n: (0, 0)),          # bilinear kron matrix
                pl.BlockSpec((9, Cd, Cl), lambda n: (0, 0, 0)),   # upconv weight
                pl.BlockSpec((9, Cl, Cl), lambda n: (0, 0, 0)),   # conv1 weight (left half)
                pl.BlockSpec((9, Cl, Cl), lambda n: (0, 0, 0)),   # conv1 weight (up half)
                pl.BlockSpec((9, Cl, Cl), lambda n: (0, 0, 0)),   # conv2 weight
                pl.BlockSpec((1, Cl), lambda n: (0, 0)),          # bn1 scale
                pl.BlockSpec((1, Cl), lambda n: (0, 0)),          # bn1 shift
                pl.BlockSpec((1, Cl), lambda n: (0, 0)),          # bn2 scale
                pl.BlockSpec((1, Cl), lambda n: (0, 0)),          # bn2 shift
            ],
            out_specs=pl.BlockSpec((1, Cl, S), lambda n: (n, 0, 0)),
            scratch_shapes=[
                pltpu.VMEM((H + 2, W + 2, max(Cd, Cl)), jnp.bfloat16)],
        ),
        compiler_params=pltpu.CompilerParams(
            dimension_semantics=("parallel",),
            vmem_limit_bytes=_vmem_limit_bytes(),
        ),
    )(down_flat, left_flat, r, p["wup"], p["w1l"], p["w1u"], p["w2"],
      p["bn1_scale"], p["bn1_shift"], p["bn2_scale"], p["bn2_shift"])
    return out_flat.reshape(N, Cl, H, W)


# ------------------------- parameter init & forward ---------------------------

def init_params(key, features):
    eps = 1e-5
    params = []
    for i, (down_c, left_c) in enumerate(zip(features[-1:0:-1], features[-2::-1])):
        ks = jax.random.split(jax.random.fold_in(key, i), 7)

        def conv_w(kk, cin, cout):
            # HWIO weight flattened to (9, cin, cout), tap t = ky*3 + kx; bf16 in HBM.
            w = jax.random.normal(kk, (3, 3, cin, cout), jnp.float32) / jnp.sqrt(9.0 * cin)
            return w.reshape(9, cin, cout).astype(jnp.bfloat16)

        def bn(kg, kb, c):
            gamma = 1.0 + 0.1 * jax.random.normal(kg, (c,), jnp.float32)
            beta = 0.1 * jax.random.normal(kb, (c,), jnp.float32)
            running_mean = jnp.zeros((c,), jnp.float32)
            running_var = jnp.ones((c,), jnp.float32)
            scale = gamma / jnp.sqrt(running_var + eps)
            shift = beta - running_mean * scale
            return scale[None, :], shift[None, :]

        w1 = conv_w(ks[1], 2 * left_c, left_c)                   # (9, 2*Cl, Cl)
        s1, b1 = bn(ks[3], ks[4], left_c)
        s2, b2 = bn(ks[5], ks[6], left_c)
        params.append(dict(
            wup=conv_w(ks[0], down_c, left_c),
            w1l=w1[:, :left_c, :],     # input channels 0..Cl-1   == `left`
            w1u=w1[:, left_c:, :],     # input channels Cl..2Cl-1 == upconv output
            w2=conv_w(ks[2], left_c, left_c),
            bn1_scale=s1, bn1_shift=b1, bn2_scale=s2, bn2_shift=b2,
        ))
    return params


def unet_decoder_forward(acts, params, block_fn):
    # acts: NCHW encoder activations, shallow -> deep (matches UNetDecoder.forward).
    up = acts[-1]
    for left, p in zip(acts[-2::-1], params):
        up = block_fn(left, up, p)
    return up


# --------------------- pure-JAX reference (same bf16 conv math) ---------------

def _ref_conv3x3(x, w9):
    cin, cout = w9.shape[1], w9.shape[2]
    w = w9.reshape(3, 3, cin, cout)                              # HWIO, bf16
    return jax.lax.conv_general_dilated(
        x.astype(jnp.bfloat16), w, window_strides=(1, 1), padding="SAME",
        dimension_numbers=("NCHW", "HWIO", "NCHW"),
        preferred_element_type=jnp.float32)


def _ref_decoder_block(left, down, p):
    N, Cl, H, W = left.shape
    if down.shape[2] != H or down.shape[3] != W:
        hi = jax.lax.Precision.HIGHEST
        ry = _interp_matrix(H, down.shape[2])
        rx = _interp_matrix(W, down.shape[3])
        down = jnp.einsum('oh,nchw->ncow', ry, down, precision=hi)
        down = jnp.einsum('pw,ncow->ncop', rx, down, precision=hi)
    x = _ref_conv3x3(down, p["wup"])
    x = jnp.concatenate([left, x], axis=1)                       # torch.cat((left, x), 1)
    w1 = jnp.concatenate([p["w1l"], p["w1u"]], axis=1)
    s1 = p["bn1_scale"].reshape(1, Cl, 1, 1)
    b1 = p["bn1_shift"].reshape(1, Cl, 1, 1)
    s2 = p["bn2_scale"].reshape(1, Cl, 1, 1)
    b2 = p["bn2_shift"].reshape(1, Cl, 1, 1)
    x = jnp.maximum(_ref_conv3x3(x, w1) * s1 + b1, 0.0)
    x = jnp.maximum(_ref_conv3x3(x, p["w2"]) * s2 + b2, 0.0)
    return x


# ---------------------------------- main --------------------------------------

if __name__ == "__main__":
    key = jax.random.PRNGKey(0)
    features = [4, 8, 16]          # shallow -> deep channels
    spatial = [16, 8, 4]           # matching spatial sizes
    N = 2

    # encoder activations in the module's native NCHW layout
    acts = [
        jax.random.normal(jax.random.fold_in(key, 100 + i), (N, c, s, s), jnp.float32)
        for i, (c, s) in enumerate(zip(features, spatial))
    ]
    params = init_params(jax.random.fold_in(key, 1), features)

    out = unet_decoder_forward(acts, params, decoder_block)
    jax.block_until_ready(out)

    # correctness check against a pure-JAX reference using the same bf16-MXU conv math
    ref = unet_decoder_forward(acts, params, _ref_decoder_block)
    assert out.shape == (N, features[0], spatial[0], spatial[0]), out.shape
    max_err = float(jnp.max(jnp.abs(out - ref)))
    assert jnp.allclose(out, ref, atol=2e-2, rtol=2e-2), max_err

    print("KERNEL_OK")
</pallas_src>

<mosaic_0001>
module attributes {stable_mosaic.version = 11 : i64} {
  func.func @_decoder_block_kernel(%arg0: i32, %arg1: memref<1x16x16xf32, #tpu.memory_space<vmem>>, %arg2: memref<1x8x64xf32, #tpu.memory_space<vmem>>, %arg3: memref<64x16xf32, #tpu.memory_space<vmem>>, %arg4: memref<9x16x8xbf16, #tpu.memory_space<vmem>>, %arg5: memref<9x8x8xbf16, #tpu.memory_space<vmem>>, %arg6: memref<9x8x8xbf16, #tpu.memory_space<vmem>>, %arg7: memref<9x8x8xbf16, #tpu.memory_space<vmem>>, %arg8: memref<1x8xf32, #tpu.memory_space<vmem>>, %arg9: memref<1x8xf32, #tpu.memory_space<vmem>>, %arg10: memref<1x8xf32, #tpu.memory_space<vmem>>, %arg11: memref<1x8xf32, #tpu.memory_space<vmem>>, %arg12: memref<1x8x64xf32, #tpu.memory_space<vmem>>, %arg13: memref<10x10x16xbf16, #tpu.memory_space<vmem>>) attributes {dimension_semantics = [#tpu.dimension_semantics<parallel>], iteration_bounds = array<i64: 2>, scalar_prefetch = 0 : i64, scratch_operands = 1 : i64, tpu.core_type = #tpu.core_type<tc>, window_params = [{transform_indices = @transform_0, window_bounds = array<i64: 1, 16, 16>}, {transform_indices = @transform_1, window_bounds = array<i64: 1, 8, 64>}, {pipeline_mode = #tpu.pipeline_mode<synchronous>, transform_indices = @transform_2, window_bounds = array<i64: 64, 16>}, {pipeline_mode = #tpu.pipeline_mode<synchronous>, transform_indices = @transform_3, window_bounds = array<i64: 9, 16, 8>}, {pipeline_mode = #tpu.pipeline_mode<synchronous>, transform_indices = @transform_4, window_bounds = array<i64: 9, 8, 8>}, {pipeline_mode = #tpu.pipeline_mode<synchronous>, transform_indices = @transform_5, window_bounds = array<i64: 9, 8, 8>}, {pipeline_mode = #tpu.pipeline_mode<synchronous>, transform_indices = @transform_6, window_bounds = array<i64: 9, 8, 8>}, {pipeline_mode = #tpu.pipeline_mode<synchronous>, transform_indices = @transform_7, window_bounds = array<i64: 1, 8>}, {pipeline_mode = #tpu.pipeline_mode<synchronous>, transform_indices = @transform_8, window_bounds = array<i64: 1, 8>}, {pipeline_mode = #tpu.pipeline_mode<synchronous>, transform_indices = @transform_9, window_bounds = array<i64: 1, 8>}, {pipeline_mode = #tpu.pipeline_mode<synchronous>, transform_indices = @transform_10, window_bounds = array<i64: 1, 8>}, {transform_indices = @transform_11, window_bounds = array<i64: 1, 8, 64>}]} {
    %cst = arith.constant 0.000000e+00 : bf16
    %0 = vector.broadcast %cst : bf16 to vector<10x10x16xbf16>
    %c0 = arith.constant 0 : index
    %c0_0 = arith.constant 0 : index
    %c0_1 = arith.constant 0 : index
    %1 = vector.load %arg13[%c0, %c0_0, %c0_1] : memref<10x10x16xbf16, #tpu.memory_space<vmem>>, vector<10x10x16xbf16>
    tpu.vector_store %arg13[%c0, %c0_0, %c0_1], %0 {strides = array<i32>} : memref<10x10x16xbf16, #tpu.memory_space<vmem>>, vector<10x10x16xbf16>,
    %c0_2 = arith.constant 0 : index
    %c0_3 = arith.constant 0 : index
    %c0_4 = arith.constant 0 : index
    %2 = vector.load %arg1[%c0_2, %c0_3, %c0_4] : memref<1x16x16xf32, #tpu.memory_space<vmem>>, vector<1x16x16xf32>
    %3 = vector.shape_cast %2 : vector<1x16x16xf32> to vector<16x16xf32>
    %4 = tpu.transpose %3, [1, 0] : vector<16x16xf32> -> vector<16x16xf32>
    %c0_5 = arith.constant 0 : index
    %c0_6 = arith.constant 0 : index
    %5 = vector.load %arg3[%c0_5, %c0_6] : memref<64x16xf32, #tpu.memory_space<vmem>>, vector<64x16xf32>
    %cst_7 = arith.constant dense<0.000000e+00> : vector<64x16xf32>
    %6 = tpu.matmul %5, %4, %cst_7 {dimension_numbers = #tpu.dot_dimension_numbers<[1], [0], [0], [1], [0, 0, 1, 1], [], []>} : vector<64x16xf32>, vector<16x16xf32>, vector<64x16xf32> -> vector<64x16xf32>
    %7 = vector.shape_cast %6 : vector<64x16xf32> to vector<8x8x16xf32>
    %8 = arith.truncf %7 : vector<8x8x16xf32> to vector<8x8x16xbf16>
    %c1 = arith.constant 1 : index
    %c1_8 = arith.constant 1 : index
    %c0_9 = arith.constant 0 : index
    %9 = vector.load %arg13[%c1, %c1_8, %c0_9] : memref<10x10x16xbf16, #tpu.memory_space<vmem>>, vector<8x8x16xbf16>
    tpu.vector_store %arg13[%c1, %c1_8, %c0_9], %8 {strides = array<i32>} : memref<10x10x16xbf16, #tpu.memory_space<vmem>>, vector<8x8x16xbf16>,
    %cst_10 = arith.constant 0.000000e+00 : f32
    %10 = vector.broadcast %cst_10 : f32 to vector<64x8xf32>
    %c0_11 = arith.constant 0 : index
    %c0_12 = arith.constant 0 : index
    %c0_13 = arith.constant 0 : index
    %11 = vector.load %arg13[%c0_11, %c0_12, %c0_13] : memref<10x10x16xbf16, #tpu.memory_space<vmem>>, vector<8x8x16xbf16>
    %12 = vector.shape_cast %11 : vector<8x8x16xbf16> to vector<64x16xbf16>
    %c0_14 = arith.constant 0 : index
    %c0_15 = arith.constant 0 : index
    %c0_16 = arith.constant 0 : index
    %13 = vector.load %arg4[%c0_14, %c0_15, %c0_16] : memref<9x16x8xbf16, #tpu.memory_space<vmem>>, vector<1x16x8xbf16>
    %14 = vector.shape_cast %13 : vector<1x16x8xbf16> to vector<16x8xbf16>
    %cst_17 = arith.constant dense<0.000000e+00> : vector<64x8xf32>
    %15 = tpu.matmul %12, %14, %cst_17 {dimension_numbers = #tpu.dot_dimension_numbers<[1], [0], [0], [1], [0, 0, 1, 1], [], []>} : vector<64x16xbf16>, vector<16x8xbf16>, vector<64x8xf32> -> vector<64x8xf32>
    %16 = arith.addf %10, %15 : vector<64x8xf32>
    %c0_18 = arith.constant 0 : index
    %c1_19 = arith.constant 1 : index
    %c0_20 = arith.constant 0 : index
    %17 = vector.load %arg13[%c0_18, %c1_19, %c0_20] : memref<10x10x16xbf16, #tpu.memory_space<vmem>>, vector<8x8x16xbf16>
    %18 = vector.shape_cast %17 : vector<8x8x16xbf16> to vector<64x16xbf16>
    %c1_21 = arith.constant 1 : index
    %c0_22 = arith.constant 0 : index
    %c0_23 = arith.constant 0 : index
    %19 = vector.load %arg4[%c1_21, %c0_22, %c0_23] : memref<9x16x8xbf16, #tpu.memory_space<vmem>>, vector<1x16x8xbf16>
    %20 = vector.shape_cast %19 : vector<1x16x8xbf16> to vector<16x8xbf16>
    %cst_24 = arith.constant dense<0.000000e+00> : vector<64x8xf32>
    %21 = tpu.matmul %18, %20, %cst_24 {dimension_numbers = #tpu.dot_dimension_numbers<[1], [0], [0], [1], [0, 0, 1, 1], [], []>} : vector<64x16xbf16>, vector<16x8xbf16>, vector<64x8xf32> -> vector<64x8xf32>
    %22 = arith.addf %16, %21 : vector<64x8xf32>
    %c0_25 = arith.constant 0 : index
    %c2 = arith.constant 2 : index
    %c0_26 = arith.constant 0 : index
    %23 = vector.load %arg13[%c0_25, %c2, %c0_26] : memref<10x10x16xbf16, #tpu.memory_space<vmem>>, vector<8x8x16xbf16>
    %24 = vector.shape_cast %23 : vector<8x8x16xbf16> to vector<64x16xbf16>
    %c2_27 = arith.constant 2 : index
    %c0_28 = arith.constant 0 : index
    %c0_29 = arith.constant 0 : index
    %25 = vector.load %arg4[%c2_27, %c0_28, %c0_29] : memref<9x16x8xbf16, #tpu.memory_space<vmem>>, vector<1x16x8xbf16>
    %26 = vector.shape_cast %25 : vector<1x16x8xbf16> to vector<16x8xbf16>
    %cst_30 = arith.constant dense<0.000000e+00> : vector<64x8xf32>
    %27 = tpu.matmul %24, %26, %cst_30 {dimension_numbers = #tpu.dot_dimension_numbers<[1], [0], [0], [1], [0, 0, 1, 1], [], []>} : vector<64x16xbf16>, vector<16x8xbf16>, vector<64x8xf32> -> vector<64x8xf32>
    %28 = arith.addf %22, %27 : vector<64x8xf32>
    %c1_31 = arith.constant 1 : index
    %c0_32 = arith.constant 0 : index
    %c0_33 = arith.constant 0 : index
    %29 = vector.load %arg13[%c1_31, %c0_32, %c0_33] : memref<10x10x16xbf16, #tpu.memory_space<vmem>>, vector<8x8x16xbf16>
    %30 = vector.shape_cast %29 : vector<8x8x16xbf16> to vector<64x16xbf16>
    %c3 = arith.constant 3 : index
    %c0_34 = arith.constant 0 : index
    %c0_35 = arith.constant 0 : index
    %31 = vector.load %arg4[%c3, %c0_34, %c0_35] : memref<9x16x8xbf16, #tpu.memory_space<vmem>>, vector<1x16x8xbf16>
    %32 = vector.shape_cast %31 : vector<1x16x8xbf16> to vector<16x8xbf16>
    %cst_36 = arith.constant dense<0.000000e+00> : vector<64x8xf32>
    %33 = tpu.matmul %30, %32, %cst_36 {dimension_numbers = #tpu.dot_dimension_numbers<[1], [0], [0], [1], [0, 0, 1, 1], [], []>} : vector<64x16xbf16>, vector<16x8xbf16>, vector<64x8xf32> -> vector<64x8xf32>
    %34 = arith.addf %28, %33 : vector<64x8xf32>
    %c1_37 = arith.constant 1 : index
    %c1_38 = arith.constant 1 : index
    %c0_39 = arith.constant 0 : index
    %35 = vector.load %arg13[%c1_37, %c1_38, %c0_39] : memref<10x10x16xbf16, #tpu.memory_space<vmem>>, vector<8x8x16xbf16>
    %36 = vector.shape_cast %35 : vector<8x8x16xbf16> to vector<64x16xbf16>
    %c4 = arith.constant 4 : index
    %c0_40 = arith.constant 0 : index
    %c0_41 = arith.constant 0 : index
    %37 = vector.load %arg4[%c4, %c0_40, %c0_41] : memref<9x16x8xbf16, #tpu.memory_space<vmem>>, vector<1x16x8xbf16>
    %38 = vector.shape_cast %37 : vector<1x16x8xbf16> to vector<16x8xbf16>
    %cst_42 = arith.constant dense<0.000000e+00> : vector<64x8xf32>
    %39 = tpu.matmul %36, %38, %cst_42 {dimension_numbers = #tpu.dot_dimension_numbers<[1], [0], [0], [1], [0, 0, 1, 1], [], []>} : vector<64x16xbf16>, vector<16x8xbf16>, vector<64x8xf32> -> vector<64x8xf32>
    %40 = arith.addf %34, %39 : vector<64x8xf32>
    %c1_43 = arith.constant 1 : index
    %c2_44 = arith.constant 2 : index
    %c0_45 = arith.constant 0 : index
    %41 = vector.load %arg13[%c1_43, %c2_44, %c0_45] : memref<10x10x16xbf16, #tpu.memory_space<vmem>>, vector<8x8x16xbf16>
    %42 = vector.shape_cast %41 : vector<8x8x16xbf16> to vector<64x16xbf16>
    %c5 = arith.constant 5 : index
    %c0_46 = arith.constant 0 : index
    %c0_47 = arith.constant 0 : index
    %43 = vector.load %arg4[%c5, %c0_46, %c0_47] : memref<9x16x8xbf16, #tpu.memory_space<vmem>>, vector<1x16x8xbf16>
    %44 = vector.shape_cast %43 : vector<1x16x8xbf16> to vector<16x8xbf16>
    %cst_48 = arith.constant dense<0.000000e+00> : vector<64x8xf32>
    %45 = tpu.matmul %42, %44, %cst_48 {dimension_numbers = #tpu.dot_dimension_numbers<[1], [0], [0], [1], [0, 0, 1, 1], [], []>} : vector<64x16xbf16>, vector<16x8xbf16>, vector<64x8xf32> -> vector<64x8xf32>
    %46 = arith.addf %40, %45 : vector<64x8xf32>
    %c2_49 = arith.constant 2 : index
    %c0_50 = arith.constant 0 : index
    %c0_51 = arith.constant 0 : index
    %47 = vector.load %arg13[%c2_49, %c0_50, %c0_51] : memref<10x10x16xbf16, #tpu.memory_space<vmem>>, vector<8x8x16xbf16>
    %48 = vector.shape_cast %47 : vector<8x8x16xbf16> to vector<64x16xbf16>
    %c6 = arith.constant 6 : index
    %c0_52 = arith.constant 0 : index
    %c0_53 = arith.constant 0 : index
    %49 = vector.load %arg4[%c6, %c0_52, %c0_53] : memref<9x16x8xbf16, #tpu.memory_space<vmem>>, vector<1x16x8xbf16>
    %50 = vector.shape_cast %49 : vector<1x16x8xbf16> to vector<16x8xbf16>
    %cst_54 = arith.constant dense<0.000000e+00> : vector<64x8xf32>
    %51 = tpu.matmul %48, %50, %cst_54 {dimension_numbers = #tpu.dot_dimension_numbers<[1], [0], [0], [1], [0, 0, 1, 1], [], []>} : vector<64x16xbf16>, vector<16x8xbf16>, vector<64x8xf32> -> vector<64x8xf32>
    %52 = arith.addf %46, %51 : vector<64x8xf32>
    %c2_55 = arith.constant 2 : index
    %c1_56 = arith.constant 1 : index
    %c0_57 = arith.constant 0 : index
    %53 = vector.load %arg13[%c2_55, %c1_56, %c0_57] : memref<10x10x16xbf16, #tpu.memory_space<vmem>>, vector<8x8x16xbf16>
    %54 = vector.shape_cast %53 : vector<8x8x16xbf16> to vector<64x16xbf16>
    %c7 = arith.constant 7 : index
    %c0_58 = arith.constant 0 : index
    %c0_59 = arith.constant 0 : index
    %55 = vector.load %arg4[%c7, %c0_58, %c0_59] : memref<9x16x8xbf16, #tpu.memory_space<vmem>>, vector<1x16x8xbf16>
    %56 = vector.shape_cast %55 : vector<1x16x8xbf16> to vector<16x8xbf16>
    %cst_60 = arith.constant dense<0.000000e+00> : vector<64x8xf32>
    %57 = tpu.matmul %54, %56, %cst_60 {dimension_numbers = #tpu.dot_dimension_numbers<[1], [0], [0], [1], [0, 0, 1, 1], [], []>} : vector<64x16xbf16>, vector<16x8xbf16>, vector<64x8xf32> -> vector<64x8xf32>
    %58 = arith.addf %52, %57 : vector<64x8xf32>
    %c2_61 = arith.constant 2 : index
    %c2_62 = arith.constant 2 : index
    %c0_63 = arith.constant 0 : index
    %59 = vector.load %arg13[%c2_61, %c2_62, %c0_63] : memref<10x10x16xbf16, #tpu.memory_space<vmem>>, vector<8x8x16xbf16>
    %60 = vector.shape_cast %59 : vector<8x8x16xbf16> to vector<64x16xbf16>
    %c8 = arith.constant 8 : index
    %c0_64 = arith.constant 0 : index
    %c0_65 = arith.constant 0 : index
    %61 = vector.load %arg4[%c8, %c0_64, %c0_65] : memref<9x16x8xbf16, #tpu.memory_space<vmem>>, vector<1x16x8xbf16>
    %62 = vector.shape_cast %61 : vector<1x16x8xbf16> to vector<16x8xbf16>
    %cst_66 = arith.constant dense<0.000000e+00> : vector<64x8xf32>
    %63 = tpu.matmul %60, %62, %cst_66 {dimension_numbers = #tpu.dot_dimension_numbers<[1], [0], [0], [1], [0, 0, 1, 1], [], []>} : vector<64x16xbf16>, vector<16x8xbf16>, vector<64x8xf32> -> vector<64x8xf32>
    %64 = arith.addf %58, %63 : vector<64x8xf32>
    %c0_67 = arith.constant 0 : index
    %c0_68 = arith.constant 0 : index
    %c0_69 = arith.constant 0 : index
    %65 = vector.load %arg2[%c0_67, %c0_68, %c0_69] : memref<1x8x64xf32, #tpu.memory_space<vmem>>, vector<1x8x64xf32>
    %66 = vector.shape_cast %65 : vector<1x8x64xf32> to vector<8x64xf32>
    %67 = tpu.transpose %66, [1, 0] : vector<8x64xf32> -> vector<64x8xf32>
    %68 = vector.shape_cast %67 : vector<64x8xf32> to vector<8x8x8xf32>
    %69 = arith.truncf %68 : vector<8x8x8xf32> to vector<8x8x8xbf16>
    %c1_70 = arith.constant 1 : index
    %c1_71 = arith.constant 1 : index
    %c0_72 = arith.constant 0 : index
    %70 = vector.load %arg13[%c1_70, %c1_71, %c0_72] : memref<10x10x16xbf16, #tpu.memory_space<vmem>>, vector<8x8x8xbf16>
    tpu.vector_store %arg13[%c1_70, %c1_71, %c0_72], %69 {strides = array<i32>} : memref<10x10x16xbf16, #tpu.memory_space<vmem>>, vector<8x8x8xbf16>,
    %cst_73 = arith.constant 0.000000e+00 : f32
    %71 = vector.broadcast %cst_73 : f32 to vector<64x8xf32>
    %c0_74 = arith.constant 0 : index
    %c0_75 = arith.constant 0 : index
    %c0_76 = arith.constant 0 : index
    %72 = vector.load %arg13[%c0_74, %c0_75, %c0_76] : memref<10x10x16xbf16, #tpu.memory_space<vmem>>, vector<8x8x8xbf16>
    %73 = vector.shape_cast %72 : vector<8x8x8xbf16> to vector<64x8xbf16>
    %c0_77 = arith.constant 0 : index
    %c0_78 = arith.constant 0 : index
    %c0_79 = arith.constant 0 : index
    %74 = vector.load %arg5[%c0_77, %c0_78, %c0_79] : memref<9x8x8xbf16, #tpu.memory_space<vmem>>, vector<1x8x8xbf16>
    %75 = vector.shape_cast %74 : vector<1x8x8xbf16> to vector<8x8xbf16>
    %cst_80 = arith.constant dense<0.000000e+00> : vector<64x8xf32>
    %76 = tpu.matmul %73, %75, %cst_80 {dimension_numbers = #tpu.dot_dimension_numbers<[1], [0], [0], [1], [0, 0, 1, 1], [], []>} : vector<64x8xbf16>, vector<8x8xbf16>, vector<64x8xf32> -> vector<64x8xf32>
    %77 = arith.addf %71, %76 : vector<64x8xf32>
    %c0_81 = arith.constant 0 : index
    %c1_82 = arith.constant 1 : index
    %c0_83 = arith.constant 0 : index
    %78 = vector.load %arg13[%c0_81, %c1_82, %c0_83] : memref<10x10x16xbf16, #tpu.memory_space<vmem>>, vector<8x8x8xbf16>
    %79 = vector.shape_cast %78 : vector<8x8x8xbf16> to vector<64x8xbf16>
    %c1_84 = arith.constant 1 : index
    %c0_85 = arith.constant 0 : index
    %c0_86 = arith.constant 0 : index
    %80 = vector.load %arg5[%c1_84, %c0_85, %c0_86] : memref<9x8x8xbf16, #tpu.memory_space<vmem>>, vector<1x8x8xbf16>
    %81 = vector.shape_cast %80 : vector<1x8x8xbf16> to vector<8x8xbf16>
    %cst_87 = arith.constant dense<0.000000e+00> : vector<64x8xf32>
    %82 = tpu.matmul %79, %81, %cst_87 {dimension_numbers = #tpu.dot_dimension_numbers<[1], [0], [0], [1], [0, 0, 1, 1], [], []>} : vector<64x8xbf16>, vector<8x8xbf16>, vector<64x8xf32> -> vector<64x8xf32>
    %83 = arith.addf %77, %82 : vector<64x8xf32>
    %c0_88 = arith.constant 0 : index
    %c2_89 = arith.constant 2 : index
    %c0_90 = arith.constant 0 : index
    %84 = vector.load %arg13[%c0_88, %c2_89, %c0_90] : memref<10x10x16xbf16, #tpu.memory_space<vmem>>, vector<8x8x8xbf16>
    %85 = vector.shape_cast %84 : vector<8x8x8xbf16> to vector<64x8xbf16>
    %c2_91 = arith.constant 2 : index
    %c0_92 = arith.constant 0 : index
    %c0_93 = arith.constant 0 : index
    %86 = vector.load %arg5[%c2_91, %c0_92, %c0_93] : memref<9x8x8xbf16, #tpu.memory_space<vmem>>, vector<1x8x8xbf16>
    %87 = vector.shape_cast %86 : vector<1x8x8xbf16> to vector<8x8xbf16>
    %cst_94 = arith.constant dense<0.000000e+00> : vector<64x8xf32>
    %88 = tpu.matmul %85, %87, %cst_94 {dimension_numbers = #tpu.dot_dimension_numbers<[1], [0], [0], [1], [0, 0, 1, 1], [], []>} : vector<64x8xbf16>, vector<8x8xbf16>, vector<64x8xf32> -> vector<64x8xf32>
    %89 = arith.addf %83, %88 : vector<64x8xf32>
    %c1_95 = arith.constant 1 : index
    %c0_96 = arith.constant 0 : index
    %c0_97 = arith.constant 0 : index
    %90 = vector.load %arg13[%c1_95, %c0_96, %c0_97] : memref<10x10x16xbf16, #tpu.memory_space<vmem>>, vector<8x8x8xbf16>
    %91 = vector.shape_cast %90 : vector<8x8x8xbf16> to vector<64x8xbf16>
    %c3_98 = arith.constant 3 : index
    %c0_99 = arith.constant 0 : index
    %c0_100 = arith.constant 0 : index
    %92 = vector.load %arg5[%c3_98, %c0_99, %c0_100] : memref<9x8x8xbf16, #tpu.memory_space<vmem>>, vector<1x8x8xbf16>
    %93 = vector.shape_cast %92 : vector<1x8x8xbf16> to vector<8x8xbf16>
    %cst_101 = arith.constant dense<0.000000e+00> : vector<64x8xf32>
    %94 = tpu.matmul %91, %93, %cst_101 {dimension_numbers = #tpu.dot_dimension_numbers<[1], [0], [0], [1], [0, 0, 1, 1], [], []>} : vector<64x8xbf16>, vector<8x8xbf16>, vector<64x8xf32> -> vector<64x8xf32>
    %95 = arith.addf %89, %94 : vector<64x8xf32>
    %c1_102 = arith.constant 1 : index
    %c1_103 = arith.constant 1 : index
    %c0_104 = arith.constant 0 : index
    %96 = vector.load %arg13[%c1_102, %c1_103, %c0_104] : memref<10x10x16xbf16, #tpu.memory_space<vmem>>, vector<8x8x8xbf16>
    %97 = vector.shape_cast %96 : vector<8x8x8xbf16> to vector<64x8xbf16>
    %c4_105 = arith.constant 4 : index
    %c0_106 = arith.constant 0 : index
    %c0_107 = arith.constant 0 : index
    %98 = vector.load %arg5[%c4_105, %c0_106, %c0_107] : memref<9x8x8xbf16, #tpu.memory_space<vmem>>, vector<1x8x8xbf16>
    %99 = vector.shape_cast %98 : vector<1x8x8xbf16> to vector<8x8xbf16>
    %cst_108 = arith.constant dense<0.000000e+00> : vector<64x8xf32>
    %100 = tpu.matmul %97, %99, %cst_108 {dimension_numbers = #tpu.dot_dimension_numbers<[1], [0], [0], [1], [0, 0, 1, 1], [], []>} : vector<64x8xbf16>, vector<8x8xbf16>, vector<64x8xf32> -> vector<64x8xf32>
    %101 = arith.addf %95, %100 : vector<64x8xf32>
    %c1_109 = arith.constant 1 : index
    %c2_110 = arith.constant 2 : index
    %c0_111 = arith.constant 0 : index
    %102 = vector.load %arg13[%c1_109, %c2_110, %c0_111] : memref<10x10x16xbf16, #tpu.memory_space<vmem>>, vector<8x8x8xbf16>
    %103 = vector.shape_cast %102 : vector<8x8x8xbf16> to vector<64x8xbf16>
    %c5_112 = arith.constant 5 : index
    %c0_113 = arith.constant 0 : index
    %c0_114 = arith.constant 0 : index
    %104 = vector.load %arg5[%c5_112, %c0_113, %c0_114] : memref<9x8x8xbf16, #tpu.memory_space<vmem>>, vector<1x8x8xbf16>
    %105 = vector.shape_cast %104 : vector<1x8x8xbf16> to vector<8x8xbf16>
    %cst_115 = arith.constant dense<0.000000e+00> : vector<64x8xf32>
    %106 = tpu.matmul %103, %105, %cst_115 {dimension_numbers = #tpu.dot_dimension_numbers<[1], [0], [0], [1], [0, 0, 1, 1], [], []>} : vector<64x8xbf16>, vector<8x8xbf16>, vector<64x8xf32> -> vector<64x8xf32>
    %107 = arith.addf %101, %106 : vector<64x8xf32>
    %c2_116 = arith.constant 2 : index
    %c0_117 = arith.constant 0 : index
    %c0_118 = arith.constant 0 : index
    %108 = vector.load %arg13[%c2_116, %c0_117, %c0_118] : memref<10x10x16xbf16, #tpu.memory_space<vmem>>, vector<8x8x8xbf16>
    %109 = vector.shape_cast %108 : vector<8x8x8xbf16> to vector<64x8xbf16>
    %c6_119 = arith.constant 6 : index
    %c0_120 = arith.constant 0 : index
    %c0_121 = arith.constant 0 : index
    %110 = vector.load %arg5[%c6_119, %c0_120, %c0_121] : memref<9x8x8xbf16, #tpu.memory_space<vmem>>, vector<1x8x8xbf16>
    %111 = vector.shape_cast %110 : vector<1x8x8xbf16> to vector<8x8xbf16>
    %cst_122 = arith.constant dense<0.000000e+00> : vector<64x8xf32>
    %112 = tpu.matmul %109, %111, %cst_122 {dimension_numbers = #tpu.dot_dimension_numbers<[1], [0], [0], [1], [0, 0, 1, 1], [], []>} : vector<64x8xbf16>, vector<8x8xbf16>, vector<64x8xf32> -> vector<64x8xf32>
    %113 = arith.addf %107, %112 : vector<64x8xf32>
    %c2_123 = arith.constant 2 : index
    %c1_124 = arith.constant 1 : index
    %c0_125 = arith.constant 0 : index
    %114 = vector.load %arg13[%c2_123, %c1_124, %c0_125] : memref<10x10x16xbf16, #tpu.memory_space<vmem>>, vector<8x8x8xbf16>
    %115 = vector.shape_cast %114 : vector<8x8x8xbf16> to vector<64x8xbf16>
    %c7_126 = arith.constant 7 : index
    %c0_127 = arith.constant 0 : index
    %c0_128 = arith.constant 0 : index
    %116 = vector.load %arg5[%c7_126, %c0_127, %c0_128] : memref<9x8x8xbf16, #tpu.memory_space<vmem>>, vector<1x8x8xbf16>
    %117 = vector.shape_cast %116 : vector<1x8x8xbf16> to vector<8x8xbf16>
    %cst_129 = arith.constant dense<0.000000e+00> : vector<64x8xf32>
    %118 = tpu.matmul %115, %117, %cst_129 {dimension_numbers = #tpu.dot_dimension_numbers<[1], [0], [0], [1], [0, 0, 1, 1], [], []>} : vector<64x8xbf16>, vector<8x8xbf16>, vector<64x8xf32> -> vector<64x8xf32>
    %119 = arith.addf %113, %118 : vector<64x8xf32>
    %c2_130 = arith.constant 2 : index
    %c2_131 = arith.constant 2 : index
    %c0_132 = arith.constant 0 : index
    %120 = vector.load %arg13[%c2_130, %c2_131, %c0_132] : memref<10x10x16xbf16, #tpu.memory_space<vmem>>, vector<8x8x8xbf16>
    %121 = vector.shape_cast %120 : vector<8x8x8xbf16> to vector<64x8xbf16>
    %c8_133 = arith.constant 8 : index
    %c0_134 = arith.constant 0 : index
    %c0_135 = arith.constant 0 : index
    %122 = vector.load %arg5[%c8_133, %c0_134, %c0_135] : memref<9x8x8xbf16, #tpu.memory_space<vmem>>, vector<1x8x8xbf16>
    %123 = vector.shape_cast %122 : vector<1x8x8xbf16> to vector<8x8xbf16>
    %cst_136 = arith.constant dense<0.000000e+00> : vector<64x8xf32>
    %124 = tpu.matmul %121, %123, %cst_136 {dimension_numbers = #tpu.dot_dimension_numbers<[1], [0], [0], [1], [0, 0, 1, 1], [], []>} : vector<64x8xbf16>, vector<8x8xbf16>, vector<64x8xf32> -> vector<64x8xf32>
    %125 = arith.addf %119, %124 : vector<64x8xf32>
    %126 = vector.shape_cast %64 : vector<64x8xf32> to vector<8x8x8xf32>
    %127 = arith.truncf %126 : vector<8x8x8xf32> to vector<8x8x8xbf16>
    %c1_137 = arith.constant 1 : index
    %c1_138 = arith.constant 1 : index
    %c0_139 = arith.constant 0 : index
    %128 = vector.load %arg13[%c1_137, %c1_138, %c0_139] : memref<10x10x16xbf16, #tpu.memory_space<vmem>>, vector<8x8x8xbf16>
    tpu.vector_store %arg13[%c1_137, %c1_138, %c0_139], %127 {strides = array<i32>} : memref<10x10x16xbf16, #tpu.memory_space<vmem>>, vector<8x8x8xbf16>,
    %c0_140 = arith.constant 0 : index
    %c0_141 = arith.constant 0 : index
    %c0_142 = arith.constant 0 : index
    %129 = vector.load %arg13[%c0_140, %c0_141, %c0_142] : memref<10x10x16xbf16, #tpu.memory_space<vmem>>, vector<8x8x8xbf16>
    %130 = vector.shape_cast %129 : vector<8x8x8xbf16> to vector<64x8xbf16>
    %c0_143 = arith.constant 0 : index
    %c0_144 = arith.constant 0 : index
    %c0_145 = arith.constant 0 : index
    %131 = vector.load %arg6[%c0_143, %c0_144, %c0_145] : memref<9x8x8xbf16, #tpu.memory_space<vmem>>, vector<1x8x8xbf16>
    %132 = vector.shape_cast %131 : vector<1x8x8xbf16> to vector<8x8xbf16>
    %cst_146 = arith.constant dense<0.000000e+00> : vector<64x8xf32>
    %133 = tpu.matmul %130, %132, %cst_146 {dimension_numbers = #tpu.dot_dimension_numbers<[1], [0], [0], [1], [0, 0, 1, 1], [], []>} : vector<64x8xbf16>, vector<8x8xbf16>, vector<64x8xf32> -> vector<64x8xf32>
    %134 = arith.addf %125, %133 : vector<64x8xf32>
    %c0_147 = arith.constant 0 : index
    %c1_148 = arith.constant 1 : index
    %c0_149 = arith.constant 0 : index
    %135 = vector.load %arg13[%c0_147, %c1_148, %c0_149] : memref<10x10x16xbf16, #tpu.memory_space<vmem>>, vector<8x8x8xbf16>
    %136 = vector.shape_cast %135 : vector<8x8x8xbf16> to vector<64x8xbf16>
    %c1_150 = arith.constant 1 : index
    %c0_151 = arith.constant 0 : index
    %c0_152 = arith.constant 0 : index
    %137 = vector.load %arg6[%c1_150, %c0_151, %c0_152] : memref<9x8x8xbf16, #tpu.memory_space<vmem>>, vector<1x8x8xbf16>
    %138 = vector.shape_cast %137 : vector<1x8x8xbf16> to vector<8x8xbf16>
    %cst_153 = arith.constant dense<0.000000e+00> : vector<64x8xf32>
    %139 = tpu.matmul %136, %138, %cst_153 {dimension_numbers = #tpu.dot_dimension_numbers<[1], [0], [0], [1], [0, 0, 1, 1], [], []>} : vector<64x8xbf16>, vector<8x8xbf16>, vector<64x8xf32> -> vector<64x8xf32>
    %140 = arith.addf %134, %139 : vector<64x8xf32>
    %c0_154 = arith.constant 0 : index
    %c2_155 = arith.constant 2 : index
    %c0_156 = arith.constant 0 : index
    %141 = vector.load %arg13[%c0_154, %c2_155, %c0_156] : memref<10x10x16xbf16, #tpu.memory_space<vmem>>, vector<8x8x8xbf16>
    %142 = vector.shape_cast %141 : vector<8x8x8xbf16> to vector<64x8xbf16>
    %c2_157 = arith.constant 2 : index
    %c0_158 = arith.constant 0 : index
    %c0_159 = arith.constant 0 : index
    %143 = vector.load %arg6[%c2_157, %c0_158, %c0_159] : memref<9x8x8xbf16, #tpu.memory_space<vmem>>, vector<1x8x8xbf16>
    %144 = vector.shape_cast %143 : vector<1x8x8xbf16> to vector<8x8xbf16>
    %cst_160 = arith.constant dense<0.000000e+00> : vector<64x8xf32>
    %145 = tpu.matmul %142, %144, %cst_160 {dimension_numbers = #tpu.dot_dimension_numbers<[1], [0], [0], [1], [0, 0, 1, 1], [], []>} : vector<64x8xbf16>, vector<8x8xbf16>, vector<64x8xf32> -> vector<64x8xf32>
    %146 = arith.addf %140, %145 : vector<64x8xf32>
    %c1_161 = arith.constant 1 : index
    %c0_162 = arith.constant 0 : index
    %c0_163 = arith.constant 0 : index
    %147 = vector.load %arg13[%c1_161, %c0_162, %c0_163] : memref<10x10x16xbf16, #tpu.memory_space<vmem>>, vector<8x8x8xbf16>
    %148 = vector.shape_cast %147 : vector<8x8x8xbf16> to vector<64x8xbf16>
    %c3_164 = arith.constant 3 : index
    %c0_165 = arith.constant 0 : index
    %c0_166 = arith.constant 0 : index
    %149 = vector.load %arg6[%c3_164, %c0_165, %c0_166] : memref<9x8x8xbf16, #tpu.memory_space<vmem>>, vector<1x8x8xbf16>
    %150 = vector.shape_cast %149 : vector<1x8x8xbf16> to vector<8x8xbf16>
    %cst_167 = arith.constant dense<0.000000e+00> : vector<64x8xf32>
    %151 = tpu.matmul %148, %150, %cst_167 {dimension_numbers = #tpu.dot_dimension_numbers<[1], [0], [0], [1], [0, 0, 1, 1], [], []>} : vector<64x8xbf16>, vector<8x8xbf16>, vector<64x8xf32> -> vector<64x8xf32>
    %152 = arith.addf %146, %151 : vector<64x8xf32>
    %c1_168 = arith.constant 1 : index
    %c1_169 = arith.constant 1 : index
    %c0_170 = arith.constant 0 : index
    %153 = vector.load %arg13[%c1_168, %c1_169, %c0_170] : memref<10x10x16xbf16, #tpu.memory_space<vmem>>, vector<8x8x8xbf16>
    %154 = vector.shape_cast %153 : vector<8x8x8xbf16> to vector<64x8xbf16>
    %c4_171 = arith.constant 4 : index
    %c0_172 = arith.constant 0 : index
    %c0_173 = arith.constant 0 : index
    %155 = vector.load %arg6[%c4_171, %c0_172, %c0_173] : memref<9x8x8xbf16, #tpu.memory_space<vmem>>, vector<1x8x8xbf16>
    %156 = vector.shape_cast %155 : vector<1x8x8xbf16> to vector<8x8xbf16>
    %cst_174 = arith.constant dense<0.000000e+00> : vector<64x8xf32>
    %157 = tpu.matmul %154, %156, %cst_174 {dimension_numbers = #tpu.dot_dimension_numbers<[1], [0], [0], [1], [0, 0, 1, 1], [], []>} : vector<64x8xbf16>, vector<8x8xbf16>, vector<64x8xf32> -> vector<64x8xf32>
    %158 = arith.addf %152, %157 : vector<64x8xf32>
    %c1_175 = arith.constant 1 : index
    %c2_176 = arith.constant 2 : index
    %c0_177 = arith.constant 0 : index
    %159 = vector.load %arg13[%c1_175, %c2_176, %c0_177] : memref<10x10x16xbf16, #tpu.memory_space<vmem>>, vector<8x8x8xbf16>
    %160 = vector.shape_cast %159 : vector<8x8x8xbf16> to vector<64x8xbf16>
    %c5_178 = arith.constant 5 : index
    %c0_179 = arith.constant 0 : index
    %c0_180 = arith.constant 0 : index
    %161 = vector.load %arg6[%c5_178, %c0_179, %c0_180] : memref<9x8x8xbf16, #tpu.memory_space<vmem>>, vector<1x8x8xbf16>
    %162 = vector.shape_cast %161 : vector<1x8x8xbf16> to vector<8x8xbf16>
    %cst_181 = arith.constant dense<0.000000e+00> : vector<64x8xf32>
    %163 = tpu.matmul %160, %162, %cst_181 {dimension_numbers = #tpu.dot_dimension_numbers<[1], [0], [0], [1], [0, 0, 1, 1], [], []>} : vector<64x8xbf16>, vector<8x8xbf16>, vector<64x8xf32> -> vector<64x8xf32>
    %164 = arith.addf %158, %163 : vector<64x8xf32>
    %c2_182 = arith.constant 2 : index
    %c0_183 = arith.constant 0 : index
    %c0_184 = arith.constant 0 : index
    %165 = vector.load %arg13[%c2_182, %c0_183, %c0_184] : memref<10x10x16xbf16, #tpu.memory_space<vmem>>, vector<8x8x8xbf16>
    %166 = vector.shape_cast %165 : vector<8x8x8xbf16> to vector<64x8xbf16>
    %c6_185 = arith.constant 6 : index
    %c0_186 = arith.constant 0 : index
    %c0_187 = arith.constant 0 : index
    %167 = vector.load %arg6[%c6_185, %c0_186, %c0_187] : memref<9x8x8xbf16, #tpu.memory_space<vmem>>, vector<1x8x8xbf16>
    %168 = vector.shape_cast %167 : vector<1x8x8xbf16> to vector<8x8xbf16>
    %cst_188 = arith.constant dense<0.000000e+00> : vector<64x8xf32>
    %169 = tpu.matmul %166, %168, %cst_188 {dimension_numbers = #tpu.dot_dimension_numbers<[1], [0], [0], [1], [0, 0, 1, 1], [], []>} : vector<64x8xbf16>, vector<8x8xbf16>, vector<64x8xf32> -> vector<64x8xf32>
    %170 = arith.addf %164, %169 : vector<64x8xf32>
    %c2_189 = arith.constant 2 : index
    %c1_190 = arith.constant 1 : index
    %c0_191 = arith.constant 0 : index
    %171 = vector.load %arg13[%c2_189, %c1_190, %c0_191] : memref<10x10x16xbf16, #tpu.memory_space<vmem>>, vector<8x8x8xbf16>
    %172 = vector.shape_cast %171 : vector<8x8x8xbf16> to vector<64x8xbf16>
    %c7_192 = arith.constant 7 : index
    %c0_193 = arith.constant 0 : index
    %c0_194 = arith.constant 0 : index
    %173 = vector.load %arg6[%c7_192, %c0_193, %c0_194] : memref<9x8x8xbf16, #tpu.memory_space<vmem>>, vector<1x8x8xbf16>
    %174 = vector.shape_cast %173 : vector<1x8x8xbf16> to vector<8x8xbf16>
    %cst_195 = arith.constant dense<0.000000e+00> : vector<64x8xf32>
    %175 = tpu.matmul %172, %174, %cst_195 {dimension_numbers = #tpu.dot_dimension_numbers<[1], [0], [0], [1], [0, 0, 1, 1], [], []>} : vector<64x8xbf16>, vector<8x8xbf16>, vector<64x8xf32> -> vector<64x8xf32>
    %176 = arith.addf %170, %175 : vector<64x8xf32>
    %c2_196 = arith.constant 2 : index
    %c2_197 = arith.constant 2 : index
    %c0_198 = arith.constant 0 : index
    %177 = vector.load %arg13[%c2_196, %c2_197, %c0_198] : memref<10x10x16xbf16, #tpu.memory_space<vmem>>, vector<8x8x8xbf16>
    %178 = vector.shape_cast %177 : vector<8x8x8xbf16> to vector<64x8xbf16>
    %c8_199 = arith.constant 8 : index
    %c0_200 = arith.constant 0 : index
    %c0_201 = arith.constant 0 : index
    %179 = vector.load %arg6[%c8_199, %c0_200, %c0_201] : memref<9x8x8xbf16, #tpu.memory_space<vmem>>, vector<1x8x8xbf16>
    %180 = vector.shape_cast %179 : vector<1x8x8xbf16> to vector<8x8xbf16>
    %cst_202 = arith.constant dense<0.000000e+00> : vector<64x8xf32>
    %181 = tpu.matmul %178, %180, %cst_202 {dimension_numbers = #tpu.dot_dimension_numbers<[1], [0], [0], [1], [0, 0, 1, 1], [], []>} : vector<64x8xbf16>, vector<8x8xbf16>, vector<64x8xf32> -> vector<64x8xf32>
    %182 = arith.addf %176, %181 : vector<64x8xf32>
    %c0_203 = arith.constant 0 : index
    %c0_204 = arith.constant 0 : index
    %183 = vector.load %arg8[%c0_203, %c0_204] : memref<1x8xf32, #tpu.memory_space<vmem>>, vector<1x8xf32>
    %184 = vector.broadcast %183 : vector<1x8xf32> to vector<64x8xf32>
    %185 = arith.mulf %182, %184 : vector<64x8xf32>
    %c0_205 = arith.constant 0 : index
    %c0_206 = arith.constant 0 : index
    %186 = vector.load %arg9[%c0_205, %c0_206] : memref<1x8xf32, #tpu.memory_space<vmem>>, vector<1x8xf32>
    %187 = vector.broadcast %186 : vector<1x8xf32> to vector<64x8xf32>
    %188 = arith.addf %185, %187 : vector<64x8xf32>
    %cst_207 = arith.constant 0.000000e+00 : f32
    %189 = vector.broadcast %cst_207 : f32 to vector<64x8xf32>
    %190 = arith.maximumf %188, %189 : vector<64x8xf32>
    %191 = vector.shape_cast %190 : vector<64x8xf32> to vector<8x8x8xf32>
    %192 = arith.truncf %191 : vector<8x8x8xf32> to vector<8x8x8xbf16>
    %c1_208 = arith.constant 1 : index
    %c1_209 = arith.constant 1 : index
    %c0_210 = arith.constant 0 : index
    %193 = vector.load %arg13[%c1_208, %c1_209, %c0_210] : memref<10x10x16xbf16, #tpu.memory_space<vmem>>, vector<8x8x8xbf16>
    tpu.vector_store %arg13[%c1_208, %c1_209, %c0_210], %192 {strides = array<i32>} : memref<10x10x16xbf16, #tpu.memory_space<vmem>>, vector<8x8x8xbf16>,
    %cst_211 = arith.constant 0.000000e+00 : f32
    %194 = vector.broadcast %cst_211 : f32 to vector<64x8xf32>
    %c0_212 = arith.constant 0 : index
    %c0_213 = arith.constant 0 : index
    %c0_214 = arith.constant 0 : index
    %195 = vector.load %arg13[%c0_212, %c0_213, %c0_214] : memref<10x10x16xbf16, #tpu.memory_space<vmem>>, vector<8x8x8xbf16>
    %196 = vector.shape_cast %195 : vector<8x8x8xbf16> to vector<64x8xbf16>
    %c0_215 = arith.constant 0 : index
    %c0_216 = arith.constant 0 : index
    %c0_217 = arith.constant 0 : index
    %197 = vector.load %arg7[%c0_215, %c0_216, %c0_217] : memref<9x8x8xbf16, #tpu.memory_space<vmem>>, vector<1x8x8xbf16>
    %198 = vector.shape_cast %197 : vector<1x8x8xbf16> to vector<8x8xbf16>
    %cst_218 = arith.constant dense<0.000000e+00> : vector<64x8xf32>
    %199 = tpu.matmul %196, %198, %cst_218 {dimension_numbers = #tpu.dot_dimension_numbers<[1], [0], [0], [1], [0, 0, 1, 1], [], []>} : vector<64x8xbf16>, vector<8x8xbf16>, vector<64x8xf32> -> vector<64x8xf32>
    %200 = arith.addf %194, %199 : vector<64x8xf32>
    %c0_219 = arith.constant 0 : index
    %c1_220 = arith.constant 1 : index
    %c0_221 = arith.constant 0 : index
    %201 = vector.load %arg13[%c0_219, %c1_220, %c0_221] : memref<10x10x16xbf16, #tpu.memory_space<vmem>>, vector<8x8x8xbf16>
    %202 = vector.shape_cast %201 : vector<8x8x8xbf16> to vector<64x8xbf16>
    %c1_222 = arith.constant 1 : index
    %c0_223 = arith.constant 0 : index
    %c0_224 = arith.constant 0 : index
    %203 = vector.load %arg7[%c1_222, %c0_223, %c0_224] : memref<9x8x8xbf16, #tpu.memory_space<vmem>>, vector<1x8x8xbf16>
    %204 = vector.shape_cast %203 : vector<1x8x8xbf16> to vector<8x8xbf16>
    %cst_225 = arith.constant dense<0.000000e+00> : vector<64x8xf32>
    %205 = tpu.matmul %202, %204, %cst_225 {dimension_numbers = #tpu.dot_dimension_numbers<[1], [0], [0], [1], [0, 0, 1, 1], [], []>} : vector<64x8xbf16>, vector<8x8xbf16>, vector<64x8xf32> -> vector<64x8xf32>
    %206 = arith.addf %200, %205 : vector<64x8xf32>
    %c0_226 = arith.constant 0 : index
    %c2_227 = arith.constant 2 : index
    %c0_228 = arith.constant 0 : index
    %207 = vector.load %arg13[%c0_226, %c2_227, %c0_228] : memref<10x10x16xbf16, #tpu.memory_space<vmem>>, vector<8x8x8xbf16>
    %208 = vector.shape_cast %207 : vector<8x8x8xbf16> to vector<64x8xbf16>
    %c2_229 = arith.constant 2 : index
    %c0_230 = arith.constant 0 : index
    %c0_231 = arith.constant 0 : index
    %209 = vector.load %arg7[%c2_229, %c0_230, %c0_231] : memref<9x8x8xbf16, #tpu.memory_space<vmem>>, vector<1x8x8xbf16>
    %210 = vector.shape_cast %209 : vector<1x8x8xbf16> to vector<8x8xbf16>
    %cst_232 = arith.constant dense<0.000000e+00> : vector<64x8xf32>
    %211 = tpu.matmul %208, %210, %cst_232 {dimension_numbers = #tpu.dot_dimension_numbers<[1], [0], [0], [1], [0, 0, 1, 1], [], []>} : vector<64x8xbf16>, vector<8x8xbf16>, vector<64x8xf32> -> vector<64x8xf32>
    %212 = arith.addf %206, %211 : vector<64x8xf32>
    %c1_233 = arith.constant 1 : index
    %c0_234 = arith.constant 0 : index
    %c0_235 = arith.constant 0 : index
    %213 = vector.load %arg13[%c1_233, %c0_234, %c0_235] : memref<10x10x16xbf16, #tpu.memory_space<vmem>>, vector<8x8x8xbf16>
    %214 = vector.shape_cast %213 : vector<8x8x8xbf16> to vector<64x8xbf16>
    %c3_236 = arith.constant 3 : index
    %c0_237 = arith.constant 0 : index
    %c0_238 = arith.constant 0 : index
    %215 = vector.load %arg7[%c3_236, %c0_237, %c0_238] : memref<9x8x8xbf16, #tpu.memory_space<vmem>>, vector<1x8x8xbf16>
    %216 = vector.shape_cast %215 : vector<1x8x8xbf16> to vector<8x8xbf16>
    %cst_239 = arith.constant dense<0.000000e+00> : vector<64x8xf32>
    %217 = tpu.matmul %214, %216, %cst_239 {dimension_numbers = #tpu.dot_dimension_numbers<[1], [0], [0], [1], [0, 0, 1, 1], [], []>} : vector<64x8xbf16>, vector<8x8xbf16>, vector<64x8xf32> -> vector<64x8xf32>
    %218 = arith.addf %212, %217 : vector<64x8xf32>
    %c1_240 = arith.constant 1 : index
    %c1_241 = arith.constant 1 : index
    %c0_242 = arith.constant 0 : index
    %219 = vector.load %arg13[%c1_240, %c1_241, %c0_242] : memref<10x10x16xbf16, #tpu.memory_space<vmem>>, vector<8x8x8xbf16>
    %220 = vector.shape_cast %219 : vector<8x8x8xbf16> to vector<64x8xbf16>
    %c4_243 = arith.constant 4 : index
    %c0_244 = arith.constant 0 : index
    %c0_245 = arith.constant 0 : index
    %221 = vector.load %arg7[%c4_243, %c0_244, %c0_245] : memref<9x8x8xbf16, #tpu.memory_space<vmem>>, vector<1x8x8xbf16>
    %222 = vector.shape_cast %221 : vector<1x8x8xbf16> to vector<8x8xbf16>
    %cst_246 = arith.constant dense<0.000000e+00> : vector<64x8xf32>
    %223 = tpu.matmul %220, %222, %cst_246 {dimension_numbers = #tpu.dot_dimension_numbers<[1], [0], [0], [1], [0, 0, 1, 1], [], []>} : vector<64x8xbf16>, vector<8x8xbf16>, vector<64x8xf32> -> vector<64x8xf32>
    %224 = arith.addf %218, %223 : vector<64x8xf32>
    %c1_247 = arith.constant 1 : index
    %c2_248 = arith.constant 2 : index
    %c0_249 = arith.constant 0 : index
    %225 = vector.load %arg13[%c1_247, %c2_248, %c0_249] : memref<10x10x16xbf16, #tpu.memory_space<vmem>>, vector<8x8x8xbf16>
    %226 = vector.shape_cast %225 : vector<8x8x8xbf16> to vector<64x8xbf16>
    %c5_250 = arith.constant 5 : index
    %c0_251 = arith.constant 0 : index
    %c0_252 = arith.constant 0 : index
    %227 = vector.load %arg7[%c5_250, %c0_251, %c0_252] : memref<9x8x8xbf16, #tpu.memory_space<vmem>>, vector<1x8x8xbf16>
    %228 = vector.shape_cast %227 : vector<1x8x8xbf16> to vector<8x8xbf16>
    %cst_253 = arith.constant dense<0.000000e+00> : vector<64x8xf32>
    %229 = tpu.matmul %226, %228, %cst_253 {dimension_numbers = #tpu.dot_dimension_numbers<[1], [0], [0], [1], [0, 0, 1, 1], [], []>} : vector<64x8xbf16>, vector<8x8xbf16>, vector<64x8xf32> -> vector<64x8xf32>
    %230 = arith.addf %224, %229 : vector<64x8xf32>
    %c2_254 = arith.constant 2 : index
    %c0_255 = arith.constant 0 : index
    %c0_256 = arith.constant 0 : index
    %231 = vector.load %arg13[%c2_254, %c0_255, %c0_256] : memref<10x10x16xbf16, #tpu.memory_space<vmem>>, vector<8x8x8xbf16>
    %232 = vector.shape_cast %231 : vector<8x8x8xbf16> to vector<64x8xbf16>
    %c6_257 = arith.constant 6 : index
    %c0_258 = arith.constant 0 : index
    %c0_259 = arith.constant 0 : index
    %233 = vector.load %arg7[%c6_257, %c0_258, %c0_259] : memref<9x8x8xbf16, #tpu.memory_space<vmem>>, vector<1x8x8xbf16>
    %234 = vector.shape_cast %233 : vector<1x8x8xbf16> to vector<8x8xbf16>
    %cst_260 = arith.constant dense<0.000000e+00> : vector<64x8xf32>
    %235 = tpu.matmul %232, %234, %cst_260 {dimension_numbers = #tpu.dot_dimension_numbers<[1], [0], [0], [1], [0, 0, 1, 1], [], []>} : vector<64x8xbf16>, vector<8x8xbf16>, vector<64x8xf32> -> vector<64x8xf32>
    %236 = arith.addf %230, %235 : vector<64x8xf32>
    %c2_261 = arith.constant 2 : index
    %c1_262 = arith.constant 1 : index
    %c0_263 = arith.constant 0 : index
    %237 = vector.load %arg13[%c2_261, %c1_262, %c0_263] : memref<10x10x16xbf16, #tpu.memory_space<vmem>>, vector<8x8x8xbf16>
    %238 = vector.shape_cast %237 : vector<8x8x8xbf16> to vector<64x8xbf16>
    %c7_264 = arith.constant 7 : index
    %c0_265 = arith.constant 0 : index
    %c0_266 = arith.constant 0 : index
    %239 = vector.load %arg7[%c7_264, %c0_265, %c0_266] : memref<9x8x8xbf16, #tpu.memory_space<vmem>>, vector<1x8x8xbf16>
    %240 = vector.shape_cast %239 : vector<1x8x8xbf16> to vector<8x8xbf16>
    %cst_267 = arith.constant dense<0.000000e+00> : vector<64x8xf32>
    %241 = tpu.matmul %238, %240, %cst_267 {dimension_numbers = #tpu.dot_dimension_numbers<[1], [0], [0], [1], [0, 0, 1, 1], [], []>} : vector<64x8xbf16>, vector<8x8xbf16>, vector<64x8xf32> -> vector<64x8xf32>
    %242 = arith.addf %236, %241 : vector<64x8xf32>
    %c2_268 = arith.constant 2 : index
    %c2_269 = arith.constant 2 : index
    %c0_270 = arith.constant 0 : index
    %243 = vector.load %arg13[%c2_268, %c2_269, %c0_270] : memref<10x10x16xbf16, #tpu.memory_space<vmem>>, vector<8x8x8xbf16>
    %244 = vector.shape_cast %243 : vector<8x8x8xbf16> to vector<64x8xbf16>
    %c8_271 = arith.constant 8 : index
    %c0_272 = arith.constant 0 : index
    %c0_273 = arith.constant 0 : index
    %245 = vector.load %arg7[%c8_271, %c0_272, %c0_273] : memref<9x8x8xbf16, #tpu.memory_space<vmem>>, vector<1x8x8xbf16>
    %246 = vector.shape_cast %245 : vector<1x8x8xbf16> to vector<8x8xbf16>
    %cst_274 = arith.constant dense<0.000000e+00> : vector<64x8xf32>
    %247 = tpu.matmul %244, %246, %cst_274 {dimension_numbers = #tpu.dot_dimension_numbers<[1], [0], [0], [1], [0, 0, 1, 1], [], []>} : vector<64x8xbf16>, vector<8x8xbf16>, vector<64x8xf32> -> vector<64x8xf32>
    %248 = arith.addf %242, %247 : vector<64x8xf32>
    %c0_275 = arith.constant 0 : index
    %c0_276 = arith.constant 0 : index
    %249 = vector.load %arg10[%c0_275, %c0_276] : memref<1x8xf32, #tpu.memory_space<vmem>>, vector<1x8xf32>
    %250 = vector.broadcast %249 : vector<1x8xf32> to vector<64x8xf32>
    %251 = arith.mulf %248, %250 : vector<64x8xf32>
    %c0_277 = arith.constant 0 : index
    %c0_278 = arith.constant 0 : index
    %252 = vector.load %arg11[%c0_277, %c0_278] : memref<1x8xf32, #tpu.memory_space<vmem>>, vector<1x8xf32>
    %253 = vector.broadcast %252 : vector<1x8xf32> to vector<64x8xf32>
    %254 = arith.addf %251, %253 : vector<64x8xf32>
    %cst_279 = arith.constant 0.000000e+00 : f32
    %255 = vector.broadcast %cst_279 : f32 to vector<64x8xf32>
    %256 = arith.maximumf %254, %255 : vector<64x8xf32>
    %257 = tpu.transpose %256, [1, 0] : vector<64x8xf32> -> vector<8x64xf32>
    %c0_280 = arith.constant 0 : index
    %c0_281 = arith.constant 0 : index
    %c0_282 = arith.constant 0 : index
    %258 = vector.load %arg12[%c0_280, %c0_281, %c0_282] : memref<1x8x64xf32, #tpu.memory_space<vmem>>, vector<1x8x64xf32>
    %259 = vector.shape_cast %258 : vector<1x8x64xf32> to vector<8x64xf32>
    %260 = vector.shape_cast %257 : vector<8x64xf32> to vector<1x8x64xf32>
    tpu.vector_store %arg12[%c0_280, %c0_281, %c0_282], %260 {strides = array<i32>} : memref<1x8x64xf32, #tpu.memory_space<vmem>>, vector<1x8x64xf32>,
    return
  }
  func.func @transform_0(%arg0: i32) -> (i32, i32, i32) {
    %c0_i32 = arith.constant 0 : i32
    %c0_i32_0 = arith.constant 0 : i32
    %c0_i32_1 = arith.constant 0 : i32
    return %arg0, %c0_i32, %c0_i32_0 : i32, i32, i32
  }
  func.func @transform_1(%arg0: i32) -> (i32, i32, i32) {
    %c0_i32 = arith.constant 0 : i32
    %c0_i32_0 = arith.constant 0 : i32
    %c0_i32_1 = arith.constant 0 : i32
    return %arg0, %c0_i32, %c0_i32_0 : i32, i32, i32
  }
  func.func @transform_2(%arg0: i32) -> (i32, i32) {
    %c0_i32 = arith.constant 0 : i32
    %c0_i32_0 = arith.constant 0 : i32
    %c0_i32_1 = arith.constant 0 : i32
    return %c0_i32, %c0_i32_0 : i32, i32
  }
  func.func @transform_3(%arg0: i32) -> (i32, i32, i32) {
    %c0_i32 = arith.constant 0 : i32
    %c0_i32_0 = arith.constant 0 : i32
    %c0_i32_1 = arith.constant 0 : i32
    %c0_i32_2 = arith.constant 0 : i32
    return %c0_i32, %c0_i32_0, %c0_i32_1 : i32, i32, i32
  }
  func.func @transform_4(%arg0: i32) -> (i32, i32, i32) {
    %c0_i32 = arith.constant 0 : i32
    %c0_i32_0 = arith.constant 0 : i32
    %c0_i32_1 = arith.constant 0 : i32
    %c0_i32_2 = arith.constant 0 : i32
    return %c0_i32, %c0_i32_0, %c0_i32_1 : i32, i32, i32
  }
  func.func @transform_5(%arg0: i32) -> (i32, i32, i32) {
    %c0_i32 = arith.constant 0 : i32
    %c0_i32_0 = arith.constant 0 : i32
    %c0_i32_1 = arith.constant 0 : i32
    %c0_i32_2 = arith.constant 0 : i32
    return %c0_i32, %c0_i32_0, %c0_i32_1 : i32, i32, i32
  }
  func.func @transform_6(%arg0: i32) -> (i32, i32, i32) {
    %c0_i32 = arith.constant 0 : i32
    %c0_i32_0 = arith.constant 0 : i32
    %c0_i32_1 = arith.constant 0 : i32
    %c0_i32_2 = arith.constant 0 : i32
    return %c0_i32, %c0_i32_0, %c0_i32_1 : i32, i32, i32
  }
  func.func @transform_7(%arg0: i32) -> (i32, i32) {
    %c0_i32 = arith.constant 0 : i32
    %c0_i32_0 = arith.constant 0 : i32
    %c0_i32_1 = arith.constant 0 : i32
    return %c0_i32, %c0_i32_0 : i32, i32
  }
  func.func @transform_8(%arg0: i32) -> (i32, i32) {
    %c0_i32 = arith.constant 0 : i32
    %c0_i32_0 = arith.constant 0 : i32
    %c0_i32_1 = arith.constant 0 : i32
    return %c0_i32, %c0_i32_0 : i32, i32
  }
  func.func @transform_9(%arg0: i32) -> (i32, i32) {
    %c0_i32 = arith.constant 0 : i32
    %c0_i32_0 = arith.constant 0 : i32
    %c0_i32_1 = arith.constant 0 : i32
    return %c0_i32, %c0_i32_0 : i32, i32
  }
  func.func @transform_10(%arg0: i32) -> (i32, i32) {
    %c0_i32 = arith.constant 0 : i32
    %c0_i32_0 = arith.constant 0 : i32
    %c0_i32_1 = arith.constant 0 : i32
    return %c0_i32, %c0_i32_0 : i32, i32
  }
  func.func @transform_11(%arg0: i32) -> (i32, i32, i32) {
    %c0_i32 = arith.constant 0 : i32
    %c0_i32_0 = arith.constant 0 : i32
    %c0_i32_1 = arith.constant 0 : i32
    return %arg0, %c0_i32, %c0_i32_0 : i32, i32, i32
  }
}

</mosaic_0001>

<llo_original>
// kernel: tpu_custom_call.1
$region0: #{tpu_custom_call.1}
  #allocation0 [shape = 'u32[]', space=smem, size = 0x4, offset = 0x4, fixed_abs, tag = 'smem constant byte address 0x4 - core index']
  #allocation1 [shape = 'u32[144,128]{1,0:T(1,128)}', space=vmem, size = 0x12000, scoped, tag = 'internal scratch']
  #allocation2 [shape = 'bf16[10,10,16]{2,1,0:T(8,128)(2,1)}', space=vmem, size = 0xa000, scoped, tag = 'scratch operand']
  %s0 = inlined_call_operand.hbm [shape: f32[2,16,16], index: 0, kind: input, shape index: {}]
  %s1 = inlined_call_operand.hbm [shape: f32[2,8,64], index: 1, kind: input, shape index: {}]
  %s2 = inlined_call_operand.hbm [shape: f32[64,16], index: 2, kind: input, shape index: {}]
  %s3 = inlined_call_operand.hbm [shape: bf16[9,16,8], index: 3, kind: input, shape index: {}]
  %s4 = inlined_call_operand.hbm [shape: bf16[9,8,8], index: 4, kind: input, shape index: {}]
  %s5 = inlined_call_operand.hbm [shape: bf16[9,8,8], index: 5, kind: input, shape index: {}]
  %s6 = inlined_call_operand.hbm [shape: bf16[9,8,8], index: 6, kind: input, shape index: {}]
  %s7 = inlined_call_operand.hbm [shape: f32[1,8], index: 7, kind: input, shape index: {}]
  %s8 = inlined_call_operand.hbm [shape: f32[1,8], index: 8, kind: input, shape index: {}]
  %s9 = inlined_call_operand.hbm [shape: f32[1,8], index: 9, kind: input, shape index: {}]
  %s10 = inlined_call_operand.hbm [shape: f32[1,8], index: 10, kind: input, shape index: {}]
  %s11 = inlined_call_operand.hbm [shape: f32[2,8,64], index: 11, kind: output, shape index: {}]
  %s12 = sld [smem:[#allocation0]]
  $region121: #{tpu_custom_call.1} parent=0
    _
  %s14 = ssub.s32 1, %s12
  %s15 = scalar_select 0, %s14, %s12
  $region1: #{tpu_custom_call.1} parent=0
    #allocation3 [shape = 'u8[16384]{0}', space=vmem, size = 0x4000, scoped, tag = 'input window, operand 0']
    #allocation4 [shape = 's32[2]{0}', space=sflag, size = 0x8, scoped, tag = 'scoped memory for tpu_custom_call.1']
    #allocation5 [shape = 's32[2]{0}', space=sflag, size = 0x8, scoped, tag = 'scoped memory for tpu_custom_call.1']
    #allocation6 [shape = 'u8[8192]{0}', space=vmem, size = 0x2000, scoped, tag = 'input window, operand 1']
    #allocation7 [shape = 's32[2]{0}', space=sflag, size = 0x8, scoped, tag = 'scoped memory for tpu_custom_call.1']
    #allocation8 [shape = 'u8[32768]{0}', space=vmem, size = 0x8000, scoped, tag = 'input window, operand 2, single buffered']
    #allocation9 [shape = 'u8[36864]{0}', space=vmem, size = 0x9000, scoped, tag = 'input window, operand 3, single buffered']
    #allocation10 [shape = 's32[1]{0}', space=sflag, size = 0x4, scoped, tag = 'scoped memory for tpu_custom_call.1']
    #allocation11 [shape = 'u8[18432]{0}', space=vmem, size = 0x4800, scoped, tag = 'input window, operand 4, single buffered']
    #allocation12 [shape = 'u8[18432]{0}', space=vmem, size = 0x4800, scoped, tag = 'input window, operand 5, single buffered']
    #allocation13 [shape = 's32[1]{0}', space=sflag, size = 0x4, scoped, tag = 'scoped memory for tpu_custom_call.1']
    #allocation14 [shape = 'u8[18432]{0}', space=vmem, size = 0x4800, scoped, tag = 'input window, operand 6, single buffered']
    #allocation15 [shape = 'u8[512]{0}', space=vmem, size = 0x400, scoped, tag = 'input window, operand 7, single buffered']
    #allocation16 [shape = 's32[1]{0}', space=sflag, size = 0x4, scoped, tag = 'scoped memory for tpu_custom_call.1']
    #allocation17 [shape = 'u8[512]{0}', space=vmem, size = 0x400, scoped, tag = 'input window, operand 8, single buffered']
    #allocation18 [shape = 'u8[512]{0}', space=vmem, size = 0x400, scoped, tag = 'input window, operand 9, single buffered']
    #allocation19 [shape = 's32[1]{0}', space=sflag, size = 0x4, scoped, tag = 'scoped memory for tpu_custom_call.1']
    #allocation20 [shape = 'u8[512]{0}', space=vmem, size = 0x400, scoped, tag = 'input window, operand 10, single buffered']
    #allocation21 [shape = 'u8[8192]{0}', space=vmem, size = 0x2000, scoped, tag = 'output window, operand 0']
    %16 = vsyncpa [#allocation4], 0
    %s17 = scalar_lea.sflag [#allocation4], 1
    %18 = vsyncpa %s17, 0
    %19 = vsyncpa [#allocation7], 0
    %s20 = scalar_lea.sflag [#allocation7], 1
    %21 = vsyncpa %s20, 0
    %22 = vsyncpa [#allocation10], 0
    %23 = vsyncpa [#allocation13], 0
    %24 = vsyncpa [#allocation16], 0
    %25 = vsyncpa [#allocation19], 0
    %26 = vsyncpa [#allocation5], 0
    %s27 = scalar_lea.sflag [#allocation5], 1
    %28 = vsyncpa %s27, 0
    loop: start=0, step=1, limit=4
    $region2: #{tpu_custom_call.1} parent=1 // loop_pre_header
      _
    $region3: #{tpu_custom_call.1} parent=1 // loop_header
      %s30 = sphi 0, %s34
      %p31 = scmp.ge.s32.totalorder %s30, 4
      %s40 = sphi 0, %s42
      %s43 = sphi 0, %s40
      %s44 = sphi 0, %s43
      %s60 = sphi 0, %s44
      %s66 = sphi 0, %s68
      %s69 = sphi 0, %s66
      %s70 = sphi 0, %s69
      %s86 = sphi 0, %s70
      %s90 = sphi 0, %s90
      %s92 = sphi 0, %s90
      %s93 = sphi 0, %s92
      %s107 = sphi 0, %s93
      %s111 = sphi 0, %s111
      %s113 = sphi 0, %s111
      %s114 = sphi 0, %s113
      %s128 = sphi 0, %s114
      %s132 = sphi 0, %s132
      %s134 = sphi 0, %s132
      %s135 = sphi 0, %s134
      %s149 = sphi 0, %s135
      %s153 = sphi 0, %s153
      %s155 = sphi 0, %s153
      %s156 = sphi 0, %s155
      %s170 = sphi 0, %s156
      %s174 = sphi 0, %s174
      %s176 = sphi 0, %s174
      %s177 = sphi 0, %s176
      %s191 = sphi 0, %s177
      %s195 = sphi 0, %s195
      %s197 = sphi 0, %s195
      %s198 = sphi 0, %s197
      %s212 = sphi 0, %s198
      %s216 = sphi 0, %s216
      %s218 = sphi 0, %s216
      %s219 = sphi 0, %s218
      %s233 = sphi 0, %s219
      %s237 = sphi 0, %s237
      %s239 = sphi 0, %s237
      %s240 = sphi 0, %s239
      %s254 = sphi 0, %s240
      %s258 = sphi 0, %s258
      %s260 = sphi 0, %s258
      %s261 = sphi 0, %s260
      %s275 = sphi 0, %s261
      %s281 = sphi 0, %s283
      %s284 = sphi 0, %s281
      %s285 = sphi 0, %s284
      %s301 = sphi 0, %s285
    $region4: #{tpu_custom_call.1} parent=1 // loop_header_branch
      %33 = sbr.rel (%p31) target = $region8
    $region5: #{tpu_custom_call.1} parent=1 // loop_body
      %s35 = ssub.s32 %s30, 1
      %s36 = ssub.s32 %s30, 2
      %s37 = sadd.s32 %s30, 1
      %s38 = ssub.s32 %s30, %s37
      %p39 = scmp.eq.s32.totalorder %s38, 0
      %s41 = sadd.s32 %s40, 1
      %s42 = scalar_select %p39, %s40, %s41
      %p45 = pneg %p39
      %p46 = scmp.eq.s32.totalorder %s30, 1
      %p47 = por %p45, %p46
      %p48 = scmp.ne.s32.totalorder %s40, %s43
      %p49 = scmp.eq.s32.totalorder %s30, 0
      %p50 = por %p48, %p49
      %p51 = scmp.ne.s32.totalorder %s40, %s43
      %p52 = scmp.eq.s32.totalorder %s35, 1
      %p53 = por %p51, %p52
      %p54 = scmp.ne.s32.totalorder %s43, %s44
      %p55 = scmp.eq.s32.totalorder %s35, 0
      %p56 = por %p54, %p55
      %p57 = scmp.ne.s32.totalorder %s43, %s44
      %p58 = scmp.eq.s32.totalorder %s36, 1
      %p59 = por %p57, %p58
      %p61 = scmp.ne.s32.totalorder %s44, %s60
      %p62 = scmp.eq.s32.totalorder %s36, 0
      %p63 = por %p61, %p62
      %s64 = ssub.s32 %s30, %s37
      %p65 = scmp.eq.s32.totalorder %s64, 0
      %s67 = sadd.s32 %s66, 1
      %s68 = scalar_select %p65, %s66, %s67
      %p71 = pneg %p65
      %p72 = scmp.eq.s32.totalorder %s30, 1
      %p73 = por %p71, %p72
      %p74 = scmp.ne.s32.totalorder %s66, %s69
      %p75 = scmp.eq.s32.totalorder %s30, 0
      %p76 = por %p74, %p75
      %p77 = scmp.ne.s32.totalorder %s66, %s69
      %p78 = scmp.eq.s32.totalorder %s35, 1
      %p79 = por %p77, %p78
      %p80 = scmp.ne.s32.totalorder %s69, %s70
      %p81 = scmp.eq.s32.totalorder %s35, 0
      %p82 = por %p80, %p81
      %p83 = scmp.ne.s32.totalorder %s69, %s70
      %p84 = scmp.eq.s32.totalorder %s36, 1
      %p85 = por %p83, %p84
      %p87 = scmp.ne.s32.totalorder %s70, %s86
      %p88 = scmp.eq.s32.totalorder %s36, 0
      %p89 = por %p87, %p88
      %s91 = sadd.s32 %s90, 1
      %p94 = scmp.eq.s32.totalorder %s30, 1
      %p95 = scmp.ne.s32.totalorder %s90, %s92
      %p96 = scmp.eq.s32.totalorder %s30, 0
      %p97 = por %p95, %p96
      %p98 = scmp.ne.s32.totalorder %s90, %s92
      %p99 = scmp.eq.s32.totalorder %s35, 1
      %p100 = por %p98, %p99
      %p101 = scmp.ne.s32.totalorder %s92, %s93
      %p102 = scmp.eq.s32.totalorder %s35, 0
      %p103 = por %p101, %p102
      %p104 = scmp.ne.s32.totalorder %s92, %s93
      %p105 = scmp.eq.s32.totalorder %s36, 1
      %p106 = por %p104, %p105
      %p108 = scmp.ne.s32.totalorder %s93, %s107
      %p109 = scmp.eq.s32.totalorder %s36, 0
      %p110 = por %p108, %p109
      %s112 = sadd.s32 %s111, 1
      %p115 = scmp.eq.s32.totalorder %s30, 1
      %p116 = scmp.ne.s32.totalorder %s111, %s113
      %p117 = scmp.eq.s32.totalorder %s30, 0
      %p118 = por %p116, %p117
      %p119 = scmp.ne.s32.totalorder %s111, %s113
      %p120 = scmp.eq.s32.totalorder %s35, 1
      %p121 = por %p119, %p120
      %p122 = scmp.ne.s32.totalorder %s113, %s114
      %p123 = scmp.eq.s32.totalorder %s35, 0
      %p124 = por %p122, %p123
      %p125 = scmp.ne.s32.totalorder %s113, %s114
      %p126 = scmp.eq.s32.totalorder %s36, 1
      %p127 = por %p125, %p126
      %p129 = scmp.ne.s32.totalorder %s114, %s128
      %p130 = scmp.eq.s32.totalorder %s36, 0
      %p131 = por %p129, %p130
      %s133 = sadd.s32 %s132, 1
      %p136 = scmp.eq.s32.totalorder %s30, 1
      %p137 = scmp.ne.s32.totalorder %s132, %s134
      %p138 = scmp.eq.s32.totalorder %s30, 0
      %p139 = por %p137, %p138
      %p140 = scmp.ne.s32.totalorder %s132, %s134
      %p141 = scmp.eq.s32.totalorder %s35, 1
      %p142 = por %p140, %p141
      %p143 = scmp.ne.s32.totalorder %s134, %s135
      %p144 = scmp.eq.s32.totalorder %s35, 0
      %p145 = por %p143, %p144
      %p146 = scmp.ne.s32.totalorder %s134, %s135
      %p147 = scmp.eq.s32.totalorder %s36, 1
      %p148 = por %p146, %p147
      %p150 = scmp.ne.s32.totalorder %s135, %s149
      %p151 = scmp.eq.s32.totalorder %s36, 0
      %p152 = por %p150, %p151
      %s154 = sadd.s32 %s153, 1
      %p157 = scmp.eq.s32.totalorder %s30, 1
      %p158 = scmp.ne.s32.totalorder %s153, %s155
      %p159 = scmp.eq.s32.totalorder %s30, 0
      %p160 = por %p158, %p159
      %p161 = scmp.ne.s32.totalorder %s153, %s155
      %p162 = scmp.eq.s32.totalorder %s35, 1
      %p163 = por %p161, %p162
      %p164 = scmp.ne.s32.totalorder %s155, %s156
      %p165 = scmp.eq.s32.totalorder %s35, 0
      %p166 = por %p164, %p165
      %p167 = scmp.ne.s32.totalorder %s155, %s156
      %p168 = scmp.eq.s32.totalorder %s36, 1
      %p169 = por %p167, %p168
      %p171 = scmp.ne.s32.totalorder %s156, %s170
      %p172 = scmp.eq.s32.totalorder %s36, 0
      %p173 = por %p171, %p172
      %s175 = sadd.s32 %s174, 1
      %p178 = scmp.eq.s32.totalorder %s30, 1
      %p179 = scmp.ne.s32.totalorder %s174, %s176
      %p180 = scmp.eq.s32.totalorder %s30, 0
      %p181 = por %p179, %p180
      %p182 = scmp.ne.s32.totalorder %s174, %s176
      %p183 = scmp.eq.s32.totalorder %s35, 1
      %p184 = por %p182, %p183
      %p185 = scmp.ne.s32.totalorder %s176, %s177
      %p186 = scmp.eq.s32.totalorder %s35, 0
      %p187 = por %p185, %p186
      %p188 = scmp.ne.s32.totalorder %s176, %s177
      %p189 = scmp.eq.s32.totalorder %s36, 1
      %p190 = por %p188, %p189
      %p192 = scmp.ne.s32.totalorder %s177, %s191
      %p193 = scmp.eq.s32.totalorder %s36, 0
      %p194 = por %p192, %p193
      %s196 = sadd.s32 %s195, 1
      %p199 = scmp.eq.s32.totalorder %s30, 1
      %p200 = scmp.ne.s32.totalorder %s195, %s197
      %p201 = scmp.eq.s32.totalorder %s30, 0
      %p202 = por %p200, %p201
      %p203 = scmp.ne.s32.totalorder %s195, %s197
      %p204 = scmp.eq.s32.totalorder %s35, 1
      %p205 = por %p203, %p204
      %p206 = scmp.ne.s32.totalorder %s197, %s198
      %p207 = scmp.eq.s32.totalorder %s35, 0
      %p208 = por %p206, %p207
      %p209 = scmp.ne.s32.totalorder %s197, %s198
      %p210 = scmp.eq.s32.totalorder %s36, 1
      %p211 = por %p209, %p210
      %p213 = scmp.ne.s32.totalorder %s198, %s212
      %p214 = scmp.eq.s32.totalorder %s36, 0
      %p215 = por %p213, %p214
      %s217 = sadd.s32 %s216, 1
      %p220 = scmp.eq.s32.totalorder %s30, 1
      %p221 = scmp.ne.s32.totalorder %s216, %s218
      %p222 = scmp.eq.s32.totalorder %s30, 0
      %p223 = por %p221, %p222
      %p224 = scmp.ne.s32.totalorder %s216, %s218
      %p225 = scmp.eq.s32.totalorder %s35, 1
      %p226 = por %p224, %p225
      %p227 = scmp.ne.s32.totalorder %s218, %s219
      %p228 = scmp.eq.s32.totalorder %s35, 0
      %p229 = por %p227, %p228
      %p230 = scmp.ne.s32.totalorder %s218, %s219
      %p231 = scmp.eq.s32.totalorder %s36, 1
      %p232 = por %p230, %p231
      %p234 = scmp.ne.s32.totalorder %s219, %s233
      %p235 = scmp.eq.s32.totalorder %s36, 0
      %p236 = por %p234, %p235
      %s238 = sadd.s32 %s237, 1
      %p241 = scmp.eq.s32.totalorder %s30, 1
      %p242 = scmp.ne.s32.totalorder %s237, %s239
      %p243 = scmp.eq.s32.totalorder %s30, 0
      %p244 = por %p242, %p243
      %p245 = scmp.ne.s32.totalorder %s237, %s239
      %p246 = scmp.eq.s32.totalorder %s35, 1
      %p247 = por %p245, %p246
      %p248 = scmp.ne.s32.totalorder %s239, %s240
      %p249 = scmp.eq.s32.totalorder %s35, 0
      %p250 = por %p248, %p249
      %p251 = scmp.ne.s32.totalorder %s239, %s240
      %p252 = scmp.eq.s32.totalorder %s36, 1
      %p253 = por %p251, %p252
      %p255 = scmp.ne.s32.totalorder %s240, %s254
      %p256 = scmp.eq.s32.totalorder %s36, 0
      %p257 = por %p255, %p256
      %s259 = sadd.s32 %s258, 1
      %p262 = scmp.eq.s32.totalorder %s30, 1
      %p263 = scmp.ne.s32.totalorder %s258, %s260
      %p264 = scmp.eq.s32.totalorder %s30, 0
      %p265 = por %p263, %p264
      %p266 = scmp.ne.s32.totalorder %s258, %s260
      %p267 = scmp.eq.s32.totalorder %s35, 1
      %p268 = por %p266, %p267
      %p269 = scmp.ne.s32.totalorder %s260, %s261
      %p270 = scmp.eq.s32.totalorder %s35, 0
      %p271 = por %p269, %p270
      %p272 = scmp.ne.s32.totalorder %s260, %s261
      %p273 = scmp.eq.s32.totalorder %s36, 1
      %p274 = por %p272, %p273
      %p276 = scmp.ne.s32.totalorder %s261, %s275
      %p277 = scmp.eq.s32.totalorder %s36, 0
      %p278 = por %p276, %p277
      %s279 = ssub.s32 %s30, %s37
      %p280 = scmp.eq.s32.totalorder %s279, 0
      %s282 = sadd.s32 %s281, 1
      %s283 = scalar_select %p280, %s281, %s282
      %p286 = pneg %p280
      %p287 = scmp.eq.s32.totalorder %s30, 1
      %p288 = por %p286, %p287
      %p289 = scmp.ne.s32.totalorder %s281, %s284
      %p290 = scmp.eq.s32.totalorder %s30, 0
      %p291 = por %p289, %p290
      %p292 = scmp.ne.s32.totalorder %s281, %s284
      %p293 = scmp.eq.s32.totalorder %s35, 1
      %p294 = por %p292, %p293
      %p295 = scmp.ne.s32.totalorder %s284, %s285
      %p296 = scmp.eq.s32.totalorder %s35, 0
      %p297 = por %p295, %p296
      %p298 = scmp.ne.s32.totalorder %s284, %s285
      %p299 = scmp.eq.s32.totalorder %s36, 1
      %p300 = por %p298, %p299
      %p302 = scmp.ne.s32.totalorder %s285, %s301
      %p303 = scmp.eq.s32.totalorder %s36, 0
      %p304 = por %p302, %p303
      %p305 = scmp.le.s32.totalorder 1, %s30
      %p306 = scmp.lt.s32.totalorder %s30, 3
      %p307 = pnand %p305, %p306
      %p308 = pneg %p307
      // Predicated region
      $region9: #{tpu_custom_call.1} parent=5 // pred_check
        _
      $region10: #{tpu_custom_call.1} parent=5 // pred_check_branch
        %310 = sbr.rel (%p307) target = $region12
      $region11: #{tpu_custom_call.1} parent=5 // pred_region
        %s311 = ssub.s32 %s30, 1
        // Predicated region
        $region13: #{tpu_custom_call.1} parent=11 // pred_check
          %p312 = pneg %p103
        $region14: #{tpu_custom_call.1} parent=11 // pred_check_branch
          %314 = sbr.rel (%p312) target = $region16
        $region15: #{tpu_custom_call.1} parent=11 // pred_region
          %s316 = ssub.s32 1024, 1024
          %317 = vsyncadd [#allocation7], %s316
          %s318 = sshll.u32 [#allocation8], 4
          %s319 = int_to_ptr.vmem [resolvable:$true] %s318
          %324 = dma.hbm_to_vmem [thread:$0]  %s2, 1024, %s319, [#allocation7], 128, 128, 8
        $region16: #{tpu_custom_call.1} parent=11 // pred_fallthru
          _
        // Predicated region
        $region17: #{tpu_custom_call.1} parent=11 // pred_check
          %p325 = pneg %p124
        $region18: #{tpu_custom_call.1} parent=11 // pred_check_branch
          %327 = sbr.rel (%p325) target = $region20
        $region19: #{tpu_custom_call.1} parent=11 // pred_region
          %s329 = ssub.s32 1152, 1152
          %330 = vsyncadd [#allocation10], %s329
          %s331 = sshll.u32 [#allocation9], 4
          %s332 = int_to_ptr.vmem [resolvable:$true] %s331
          %337 = dma.hbm_to_vmem [thread:$0]  %s3, 1152, %s332, [#allocation10], 64, 64, 4
        $region20: #{tpu_custom_call.1} parent=11 // pred_fallthru
          _
        // Predicated region
        $region21: #{tpu_custom_call.1} parent=11 // pred_check
          %p338 = pneg %p145
        $region22: #{tpu_custom_call.1} parent=11 // pred_check_branch
          %340 = sbr.rel (%p338) target = $region24
        $region23: #{tpu_custom_call.1} parent=11 // pred_region
          %s342 = ssub.s32 576, 576
          %343 = vsyncadd [#allocation10], %s342
          %s344 = sshll.u32 [#allocation11], 4
          %s345 = int_to_ptr.vmem [resolvable:$true] %s344
          %350 = dma.hbm_to_vmem [thread:$0]  %s4, 576, %s345, [#allocation10], 64, 64, 4
        $region24: #{tpu_custom_call.1} parent=11 // pred_fallthru
          _
        // Predicated region
        $region25: #{tpu_custom_call.1} parent=11 // pred_check
          %p351 = pneg %p166
        $region26: #{tpu_custom_call.1} parent=11 // pred_check_branch
          %353 = sbr.rel (%p351) target = $region28
        $region27: #{tpu_custom_call.1} parent=11 // pred_region
          %s355 = ssub.s32 576, 576
          %356 = vsyncadd [#allocation13], %s355
          %s357 = sshll.u32 [#allocation12], 4
          %s358 = int_to_ptr.vmem [resolvable:$true] %s357
          %363 = dma.hbm_to_vmem [thread:$0]  %s5, 576, %s358, [#allocation13], 64, 64, 4
        $region28: #{tpu_custom_call.1} parent=11 // pred_fallthru
          _
        // Predicated region
        $region29: #{tpu_custom_call.1} parent=11 // pred_check
          %p364 = pneg %p187
        $region30: #{tpu_custom_call.1} parent=11 // pred_check_branch
          %366 = sbr.rel (%p364) target = $region32
        $region31: #{tpu_custom_call.1} parent=11 // pred_region
          %s368 = ssub.s32 576, 576
          %369 = vsyncadd [#allocation13], %s368
          %s370 = sshll.u32 [#allocation14], 4
          %s371 = int_to_ptr.vmem [resolvable:$true] %s370
          %376 = dma.hbm_to_vmem [thread:$0]  %s6, 576, %s371, [#allocation13], 64, 64, 4
        $region32: #{tpu_custom_call.1} parent=11 // pred_fallthru
          _
        // Predicated region
        $region33: #{tpu_custom_call.1} parent=11 // pred_check
          %p377 = pneg %p208
        $region34: #{tpu_custom_call.1} parent=11 // pred_check_branch
          %379 = sbr.rel (%p377) target = $region36
        $region35: #{tpu_custom_call.1} parent=11 // pred_region
          %s381 = ssub.s32 16, 16
          %382 = vsyncadd [#allocation16], %s381
          %s384 = sshll.u32 [#allocation15], 4
          %s385 = int_to_ptr.vmem [resolvable:$true] %s384
          %387 = dma.hbm_to_vmem [thread:$0]  %s7, 16, %s385, [#allocation16]
        $region36: #{tpu_custom_call.1} parent=11 // pred_fallthru
          _
        // Predicated region
        $region37: #{tpu_custom_call.1} parent=11 // pred_check
          %p388 = pneg %p229
        $region38: #{tpu_custom_call.1} parent=11 // pred_check_branch
          %390 = sbr.rel (%p388) target = $region40
        $region39: #{tpu_custom_call.1} parent=11 // pred_region
          %s392 = ssub.s32 16, 16
          %393 = vsyncadd [#allocation16], %s392
          %s395 = sshll.u32 [#allocation17], 4
          %s396 = int_to_ptr.vmem [resolvable:$true] %s395
          %398 = dma.hbm_to_vmem [thread:$0]  %s8, 16, %s396, [#allocation16]
        $region40: #{tpu_custom_call.1} parent=11 // pred_fallthru
          _
        // Predicated region
        $region41: #{tpu_custom_call.1} parent=11 // pred_check
          %p399 = pneg %p250
        $region42: #{tpu_custom_call.1} parent=11 // pred_check_branch
          %401 = sbr.rel (%p399) target = $region44
        $region43: #{tpu_custom_call.1} parent=11 // pred_region
          %s403 = ssub.s32 16, 16
          %404 = vsyncadd [#allocation19], %s403
          %s406 = sshll.u32 [#allocation18], 4
          %s407 = int_to_ptr.vmem [resolvable:$true] %s406
          %409 = dma.hbm_to_vmem [thread:$0]  %s9, 16, %s407, [#allocation19]
        $region44: #{tpu_custom_call.1} parent=11 // pred_fallthru
          _
        // Predicated region
        $region45: #{tpu_custom_call.1} parent=11 // pred_check
          %p410 = pneg %p271
        $region46: #{tpu_custom_call.1} parent=11 // pred_check_branch
          %412 = sbr.rel (%p410) target = $region48
        $region47: #{tpu_custom_call.1} parent=11 // pred_region
          %s414 = ssub.s32 16, 16
          %415 = vsyncadd [#allocation19], %s414
          %s417 = sshll.u32 [#allocation20], 4
          %s418 = int_to_ptr.vmem [resolvable:$true] %s417
          %420 = dma.hbm_to_vmem [thread:$0]  %s10, 16, %s418, [#allocation19]
        $region48: #{tpu_custom_call.1} parent=11 // pred_fallthru
          _
      $region12: #{tpu_custom_call.1} parent=5 // pred_fallthru
        _
      %p421 = scmp.lt.s32.totalorder %s30, 2
      // Predicated region
      $region49: #{tpu_custom_call.1} parent=5 // pred_check
        %p422 = pneg %p421
      $region50: #{tpu_custom_call.1} parent=5 // pred_check_branch
        %424 = sbr.rel (%p422) target = $region52
      $region51: #{tpu_custom_call.1} parent=5 // pred_region
        // Predicated region
        $region53: #{tpu_custom_call.1} parent=51 // pred_check
          %p425 = pneg %p50
        $region54: #{tpu_custom_call.1} parent=51 // pred_check_branch
          %427 = sbr.rel (%p425) target = $region56
        $region55: #{tpu_custom_call.1} parent=51 // pred_region
          %s428 = sand.u32 %s40, 1
          %s429 = scalar_lea.sflag [#allocation4], %s428
          %s430 = sand.u32 %s40, 1
          %s431 = smul.addr %s430, 16
          %s432 = scalar_lea.vmem [#allocation3], %s431
          %s434 = ssub.s32 256, 256
          %435 = vsyncadd %s429, %s434
          %s436 = smul.addr %s30, 2
          %s437 = smul.addr %s436, 128
          %s438 = scalar_lea.hbm %s0, %s437
          %s439 = sshll.u32 %s432, 4
          %s440 = int_to_ptr.vmem [resolvable:$true] %s439
          %445 = dma.hbm_to_vmem [thread:$0]  %s438, 256, %s440, %s429, 128, 128, 8
        $region56: #{tpu_custom_call.1} parent=51 // pred_fallthru
          _
        // Predicated region
        $region57: #{tpu_custom_call.1} parent=51 // pred_check
          %p446 = pneg %p76
        $region58: #{tpu_custom_call.1} parent=51 // pred_check_branch
          %448 = sbr.rel (%p446) target = $region60
        $region59: #{tpu_custom_call.1} parent=51 // pred_region
          %s449 = sand.u32 %s30, 1
          %s450 = scalar_lea.sflag [#allocation7], %s449
          %s451 = sand.u32 %s66, 1
          %s452 = smul.addr %s451, 8
          %s453 = scalar_lea.vmem [#allocation6], %s452
          %s455 = ssub.s32 128, 128
          %456 = vsyncadd %s450, %s455
          %s457 = smul.addr %s30, 128
          %s458 = scalar_lea.hbm %s1, %s457
          %s460 = sshll.u32 %s453, 4
          %s461 = int_to_ptr.vmem [resolvable:$true] %s460
          %463 = dma.hbm_to_vmem [thread:$0]  %s458, 128, %s461, %s450
        $region60: #{tpu_custom_call.1} parent=51 // pred_fallthru
          _
      $region52: #{tpu_custom_call.1} parent=5 // pred_fallthru
        _
      %p464 = scmp.le.s32.totalorder 1, %s30
      %p465 = scmp.lt.s32.totalorder %s30, 3
      %p466 = pnand %p464, %p465
      %p467 = pneg %p466
      // Predicated region
      $region61: #{tpu_custom_call.1} parent=5 // pred_check
        _
      $region62: #{tpu_custom_call.1} parent=5 // pred_check_branch
        %469 = sbr.rel (%p466) target = $region64
      $region63: #{tpu_custom_call.1} parent=5 // pred_region
        %s470 = ssub.s32 %s30, 1
        %s471 = sand.u32 %s43, 1
        %s472 = scalar_lea.sflag [#allocation4], %s471
        %s473 = sand.u32 %s43, 1
        %s474 = smul.addr %s473, 16
        %s475 = scalar_lea.vmem [#allocation3], %s474
        // Predicated region
        $region65: #{tpu_custom_call.1} parent=63 // pred_check
          %p476 = pneg %p56
        $region66: #{tpu_custom_call.1} parent=63 // pred_check_branch
          %478 = sbr.rel (%p476) target = $region68
        $region67: #{tpu_custom_call.1} parent=63 // pred_region
          %479 = dma.done %s472, 256
        $region68: #{tpu_custom_call.1} parent=63 // pred_fallthru
          _
        %s480 = sand.u32 %s35, 1
        %s481 = scalar_lea.sflag [#allocation7], %s480
        %s482 = sand.u32 %s69, 1
        %s483 = smul.addr %s482, 8
        %s484 = scalar_lea.vmem [#allocation6], %s483
        // Predicated region
        $region69: #{tpu_custom_call.1} parent=63 // pred_check
          %p485 = pneg %p82
        $region70: #{tpu_custom_call.1} parent=63 // pred_check_branch
          %487 = sbr.rel (%p485) target = $region72
        $region71: #{tpu_custom_call.1} parent=63 // pred_region
          %488 = dma.done %s481, 128
        $region72: #{tpu_custom_call.1} parent=63 // pred_fallthru
          _
        // Predicated region
        $region73: #{tpu_custom_call.1} parent=63 // pred_check
          %p489 = pneg %p103
        $region74: #{tpu_custom_call.1} parent=63 // pred_check_branch
          %491 = sbr.rel (%p489) target = $region76
        $region75: #{tpu_custom_call.1} parent=63 // pred_region
          %492 = dma.done [#allocation7], 1024
        $region76: #{tpu_custom_call.1} parent=63 // pred_fallthru
          _
        // Predicated region
        $region77: #{tpu_custom_call.1} parent=63 // pred_check
          %p493 = pneg %p124
        $region78: #{tpu_custom_call.1} parent=63 // pred_check_branch
          %495 = sbr.rel (%p493) target = $region80
        $region79: #{tpu_custom_call.1} parent=63 // pred_region
          %496 = dma.done [#allocation10], 1152
        $region80: #{tpu_custom_call.1} parent=63 // pred_fallthru
          _
        // Predicated region
        $region81: #{tpu_custom_call.1} parent=63 // pred_check
          %p497 = pneg %p145
        $region82: #{tpu_custom_call.1} parent=63 // pred_check_branch
          %499 = sbr.rel (%p497) target = $region84
        $region83: #{tpu_custom_call.1} parent=63 // pred_region
          %500 = dma.done [#allocation10], 576
        $region84: #{tpu_custom_call.1} parent=63 // pred_fallthru
          _
        // Predicated region
        $region85: #{tpu_custom_call.1} parent=63 // pred_check
          %p501 = pneg %p166
        $region86: #{tpu_custom_call.1} parent=63 // pred_check_branch
          %503 = sbr.rel (%p501) target = $region88
        $region87: #{tpu_custom_call.1} parent=63 // pred_region
          %504 = dma.done [#allocation13], 576
        $region88: #{tpu_custom_call.1} parent=63 // pred_fallthru
          _
        // Predicated region
        $region89: #{tpu_custom_call.1} parent=63 // pred_check
          %p505 = pneg %p187
        $region90: #{tpu_custom_call.1} parent=63 // pred_check_branch
          %507 = sbr.rel (%p505) target = $region92
        $region91: #{tpu_custom_call.1} parent=63 // pred_region
          %508 = dma.done [#allocation13], 576
        $region92: #{tpu_custom_call.1} parent=63 // pred_fallthru
          _
        // Predicated region
        $region93: #{tpu_custom_call.1} parent=63 // pred_check
          %p509 = pneg %p208
        $region94: #{tpu_custom_call.1} parent=63 // pred_check_branch
          %511 = sbr.rel (%p509) target = $region96
        $region95: #{tpu_custom_call.1} parent=63 // pred_region
          %512 = dma.done [#allocation16], 16
        $region96: #{tpu_custom_call.1} parent=63 // pred_fallthru
          _
        // Predicated region
        $region97: #{tpu_custom_call.1} parent=63 // pred_check
          %p513 = pneg %p229
        $region98: #{tpu_custom_call.1} parent=63 // pred_check_branch
          %515 = sbr.rel (%p513) target = $region100
        $region99: #{tpu_custom_call.1} parent=63 // pred_region
          %516 = dma.done [#allocation16], 16
        $region100: #{tpu_custom_call.1} parent=63 // pred_fallthru
          _
        // Predicated region
        $region101: #{tpu_custom_call.1} parent=63 // pred_check
          %p517 = pneg %p250
        $region102: #{tpu_custom_call.1} parent=63 // pred_check_branch
          %519 = sbr.rel (%p517) target = $region104
        $region103: #{tpu_custom_call.1} parent=63 // pred_region
          %520 = dma.done [#allocation19], 16
        $region104: #{tpu_custom_call.1} parent=63 // pred_fallthru
          _
        // Predicated region
        $region105: #{tpu_custom_call.1} parent=63 // pred_check
          %p521 = pneg %p271
        $region106: #{tpu_custom_call.1} parent=63 // pred_check_branch
          %523 = sbr.rel (%p521) target = $region108
        $region107: #{tpu_custom_call.1} parent=63 // pred_region
          %524 = dma.done [#allocation19], 16
        $region108: #{tpu_custom_call.1} parent=63 // pred_fallthru
          _
        %s525 = sand.u32 %s43, 1
        %s526 = scalar_lea.sflag [#allocation4], %s525
        %s527 = sand.u32 %s43, 1
        %s528 = smul.addr %s527, 16
        %s529 = scalar_lea.vmem [#allocation3], %s528
        %p530 = pneg %p56
        %p531 = pneg %p53
        %s532 = sand.u32 %s35, 1
        %s533 = scalar_lea.sflag [#allocation7], %s532
        %s534 = sand.u32 %s69, 1
        %s535 = smul.addr %s534, 8
        %s536 = scalar_lea.vmem [#allocation6], %s535
        %p537 = pneg %p82
        %p538 = pneg %p79
        %p539 = pneg %p103
        %p540 = pneg %p100
        %p541 = pneg %p124
        %p542 = pneg %p121
        %p543 = pneg %p145
        %p544 = pneg %p142
        %p545 = pneg %p166
        %p546 = pneg %p163
        %p547 = pneg %p187
        %p548 = pneg %p184
        %p549 = pneg %p208
        %p550 = pneg %p205
        %p551 = pneg %p229
        %p552 = pneg %p226
        %p553 = pneg %p250
        %p554 = pneg %p247
        %p555 = pneg %p271
        %p556 = pneg %p268
        %p557 = pneg %p297
        %p558 = pneg %p294
        %s559 = sand.u32 %s284, 1
        %s560 = scalar_lea.sflag [#allocation5], %s559
        %s561 = sand.u32 %s284, 1
        %s562 = smul.addr %s561, 8
        %s563 = scalar_lea.vmem [#allocation21], %s562
        %vm565 = vcmask 125952
        %566 = vst.msk [vmem:[#allocation2] sm:$0xf] %vm565, 0
        %vm567 = vcmask 122880
        %568 = vst.msk [vmem:[#allocation2 + $0x4] sm:$0x1] %vm567, 0
        %569 = vst.msk [vmem:[#allocation2 + $0x8] sm:$0xf] %vm565, 0
        %570 = vst.msk [vmem:[#allocation2 + $0xc] sm:$0x1] %vm567, 0
        %571 = vst.msk [vmem:[#allocation2 + $0x10] sm:$0xf] %vm565, 0
        %572 = vst.msk [vmem:[#allocation2 + $0x14] sm:$0x1] %vm567, 0
        %573 = vst.msk [vmem:[#allocation2 + $0x18] sm:$0xf] %vm565, 0
        %574 = vst.msk [vmem:[#allocation2 + $0x1c] sm:$0x1] %vm567, 0
        %575 = vst.msk [vmem:[#allocation2 + $0x20] sm:$0xf] %vm565, 0
        %576 = vst.msk [vmem:[#allocation2 + $0x24] sm:$0x1] %vm567, 0
        %577 = vst.msk [vmem:[#allocation2 + $0x28] sm:$0xf] %vm565, 0
        %578 = vst.msk [vmem:[#allocation2 + $0x2c] sm:$0x1] %vm567, 0
        %579 = vst.msk [vmem:[#allocation2 + $0x30] sm:$0xf] %vm565, 0
        %580 = vst.msk [vmem:[#allocation2 + $0x34] sm:$0x1] %vm567, 0
        %581 = vst.msk [vmem:[#allocation2 + $0x38] sm:$0xf] %vm565, 0
        %582 = vst.msk [vmem:[#allocation2 + $0x3c] sm:$0x1] %vm567, 0
        %583 = vst.msk [vmem:[#allocation2 + $0x40] sm:$0xf] %vm565, 0
        %584 = vst.msk [vmem:[#allocation2 + $0x44] sm:$0x1] %vm567, 0
        %585 = vst.msk [vmem:[#allocation2 + $0x48] sm:$0xf] %vm565, 0
        %586 = vst.msk [vmem:[#allocation2 + $0x4c] sm:$0x1] %vm567, 0
        %v587 = vld [vmem:[%s475] sm:$0xff]
        %v588 = vld [vmem:[%s475 + $0x8] sm:$0xff]
        %v589 = vld [vmem:[#allocation8] sm:$0xff]
        %v590 = vld [vmem:[#allocation8 + $0x8] sm:$0xff]
        %v591 = vld [vmem:[#allocation8 + $0x10] sm:$0xff]
        %v592 = vld [vmem:[#allocation8 + $0x18] sm:$0xff]
        %v593 = vld [vmem:[#allocation8 + $0x20] sm:$0xff]
        %v594 = vld [vmem:[#allocation8 + $0x28] sm:$0xff]
        %v595 = vld [vmem:[#allocation8 + $0x30] sm:$0xff]
        %v596 = vld [vmem:[#allocation8 + $0x38] sm:$0xff]
        %vm597 = vcmask 130048
        %v599 = vsel %vm597, %v589, 0
        %v602 = vsel %vm597, %v590, 0
        %v605 = vsel %vm597, %v591, 0
        %v608 = vsel %vm597, %v592, 0
        %v611 = vsel %vm597, %v593, 0
        %v614 = vsel %vm597, %v594, 0
        %v617 = vsel %vm597, %v595, 0
        %v620 = vsel %vm597, %v596, 0
        %v623 = vsel %vm597, %v587, 0
        %v626 = vsel %vm597, %v588, 0
        %628 = vmatprep.subr.mxu0 0.0
        %629 = vmatpush1.xpose.msra.mxu0 %v623
        %630 = vmatprep.subr.mxu0 0.0
        %631 = vmatpush1.xpose.msra.mxu0 %v626
        %632 = vmatprep.subr.mxu0 0.0
        %633 = vmatpush1.xpose.msra.mxu0 0.0
        %634 = vmatprep.subr.mxu0 0.0
        %635 = vmatpush1.xpose.msra.mxu0 0.0
        %636 = vmatprep.subr.mxu0 0.0
        %637 = vmatpush1.xpose.msra.mxu0 0.0
        %638 = vmatprep.subr.mxu0 0.0
        %639 = vmatpush1.xpose.msra.mxu0 0.0
        %640 = vmatprep.subr.mxu0 0.0
        %641 = vmatpush1.xpose.msra.mxu0 0.0
        %642 = vmatprep.subr.mxu0 0.0
        %643 = vmatpush1.xpose.msra.mxu0 0.0
        %644 = vmatprep.subr.mxu0 0.0
        %645 = vmatpush1.xpose.msra.mxu0 0.0
        %646 = vmatprep.subr.mxu0 0.0
        %647 = vmatpush1.xpose.msra.mxu0 0.0
        %648 = vmatprep.subr.mxu0 0.0
        %649 = vmatpush1.xpose.msra.mxu0 0.0
        %650 = vmatprep.subr.mxu0 0.0
        %651 = vmatpush1.xpose.msra.mxu0 0.0
        %652 = vmatprep.subr.mxu0 0.0
        %653 = vmatpush1.xpose.msra.mxu0 0.0
        %654 = vmatprep.subr.mxu0 0.0
        %655 = vmatpush1.xpose.msra.mxu0 0.0
        %656 = vmatprep.subr.mxu0 0.0
        %657 = vmatpush1.xpose.msra.mxu0 0.0
        %658 = vmatprep.subr.mxu0 0.0
        %659 = vmatpush1.xpose.msra.mxu0 0.0
        %660 = vmatprep.subr.mxu0 0.0
        %661 = vmatpush1.xpose.msra.mxu0 0.0
        %662 = vmatprep.subr.mxu0 0.0
        %663 = vmatpush1.xpose.msra.mxu0 0.0
        %664 = vmatprep.subr.mxu0 0.0
        %665 = vmatpush1.xpose.msra.mxu0 0.0
        %666 = vmatprep.subr.mxu0 0.0
        %667 = vmatpush1.xpose.msra.mxu0 0.0
        %668 = vmatprep.subr.mxu0 0.0
        %669 = vmatpush1.xpose.msra.mxu0 0.0
        %670 = vmatprep.subr.mxu0 0.0
        %671 = vmatpush1.xpose.msra.mxu0 0.0
        %672 = vmatprep.subr.mxu0 0.0
        %673 = vmatpush1.xpose.msra.mxu0 0.0
        %674 = vmatprep.subr.mxu0 0.0
        %675 = vmatpush1.xpose.msra.mxu0 0.0
        %676 = vmatprep.subr.mxu0 0.0
        %677 = vmatpush1.xpose.msra.mxu0 0.0
        %678 = vmatprep.subr.mxu0 0.0
        %679 = vmatpush1.xpose.msra.mxu0 0.0
        %680 = vmatprep.subr.mxu0 0.0
        %681 = vmatpush1.xpose.msra.mxu0 0.0
        %682 = vmatprep.subr.mxu0 0.0
        %683 = vmatpush1.xpose.msra.mxu0 0.0
        %684 = vmatprep.subr.mxu0 0.0
        %685 = vmatpush1.xpose.msra.mxu0 0.0
        %686 = vmatprep.subr.mxu0 0.0
        %687 = vmatpush1.xpose.msra.mxu0 0.0
        %688 = vmatprep.subr.mxu0 0.0
        %689 = vmatpush1.xpose.msra.mxu0 0.0
        %690 = vmatprep.subr.mxu0 0.0
        %691 = vmatpush1.xpose.msra.mxu0 0.0
        %692 = vmatprep.mubr.f32.mxu0 0.0
        %693 = vmatmul.mubr.f32.gmra.mrb[0].mxu0 %v599
        %v694 = vpop.f32.mrb[0].mxu0
        %v695 = vadd.f32 0.0, %v694
        %v696 = vpop.f32.mrb[0].mxu0
        %697 = vmatprep.mubr.f32.mxu0 0.0
        %698 = vmatmul.mubr.f32.gmra.mrb[0].mxu0 %v602
        %v699 = vpop.f32.mrb[0].mxu0
        %v700 = vadd.f32 0.0, %v699
        %v701 = vpop.f32.mrb[0].mxu0
        %702 = vmatprep.mubr.f32.mxu0 0.0
        %703 = vmatmul.mubr.f32.gmra.mrb[0].mxu0 %v605
        %v704 = vpop.f32.mrb[0].mxu0
        %v705 = vadd.f32 0.0, %v704
        %v706 = vpop.f32.mrb[0].mxu0
        %707 = vmatprep.mubr.f32.mxu0 0.0
        %708 = vmatmul.mubr.f32.gmra.mrb[0].mxu0 %v608
        %v709 = vpop.f32.mrb[0].mxu0
        %v710 = vadd.f32 0.0, %v709
        %v711 = vpop.f32.mrb[0].mxu0
        %712 = vmatprep.mubr.f32.mxu0 0.0
        %713 = vmatmul.mubr.f32.gmra.mrb[0].mxu0 %v611
        %v714 = vpop.f32.mrb[0].mxu0
        %v715 = vadd.f32 0.0, %v714
        %v716 = vpop.f32.mrb[0].mxu0
        %717 = vmatprep.mubr.f32.mxu0 0.0
        %718 = vmatmul.mubr.f32.gmra.mrb[0].mxu0 %v614
        %v719 = vpop.f32.mrb[0].mxu0
        %v720 = vadd.f32 0.0, %v719
        %v721 = vpop.f32.mrb[0].mxu0
        %722 = vmatprep.mubr.f32.mxu0 0.0
        %723 = vmatmul.mubr.f32.gmra.mrb[0].mxu0 %v617
        %v724 = vpop.f32.mrb[0].mxu0
        %v725 = vadd.f32 0.0, %v724
        %v726 = vpop.f32.mrb[0].mxu0
        %727 = vmatprep.mubr.f32.mxu0 0.0
        %728 = vmatmul.mubr.f32.gmra.mrb[0].mxu0 %v620
        %v729 = vpop.f32.mrb[0].mxu0
        %v730 = vadd.f32 0.0, %v729
        %v731 = vpop.f32.mrb[0].mxu0
        %732 = vdwg.mxu0
        %v733 = vpack.c.bf16 %v695, %v695
        %v734 = vpack.c.bf16 %v700, %v700
        %v735 = vpack.c.bf16 %v705, %v705
        %v736 = vpack.c.bf16 %v710, %v710
        %v737 = vpack.c.bf16 %v715, %v715
        %v738 = vpack.c.bf16 %v720, %v720
        %v739 = vpack.c.bf16 %v725, %v725
        %v740 = vpack.c.bf16 %v730, %v730
        %v749 = vunpack.c.l.b16 %v733
        %v750 = vunpack.c.l.b16 %v734
        %v751 = vunpack.c.l.b16 %v735
        %v752 = vunpack.c.l.b16 %v736
        %v753 = vunpack.c.l.b16 %v737
        %v754 = vunpack.c.l.b16 %v738
        %v755 = vunpack.c.l.b16 %v739
        %v756 = vunpack.c.l.b16 %v740
        %v757 = vpack.c.b16 %v749, %v749
        %v758 = vpack.c.b16 %v750, %v750
        %v759 = vpack.c.b16 %v751, %v751
        %v760 = vpack.c.b16 %v752, %v752
        %v761 = vpack.c.b16 %v753, %v753
        %v762 = vpack.c.b16 %v754, %v754
        %v763 = vpack.c.b16 %v755, %v755
        %v764 = vpack.c.b16 %v756, %v756
        %v766 = vshrl.u32 %v757, 16
        %v768 = vrot.slane %v766, 7
        %v769 = vshll.u32 %v757, 16
        %v771 = vor.u32 %v768, %v769
        %v772 = vrot.slane %v768, 4
        %v774 = vshrl.u32 %v758, 16
        %v776 = vrot.slane %v774, 7
        %v777 = vshll.u32 %v758, 16
        %v779 = vor.u32 %v776, %v777
        %v780 = vrot.slane %v776, 4
        %v782 = vshrl.u32 %v759, 16
        %v784 = vrot.slane %v782, 7
        %v785 = vshll.u32 %v759, 16
        %v787 = vor.u32 %v784, %v785
        %v788 = vrot.slane %v784, 4
        %v790 = vshrl.u32 %v760, 16
        %v792 = vrot.slane %v790, 7
        %v793 = vshll.u32 %v760, 16
        %v795 = vor.u32 %v792, %v793
        %v796 = vrot.slane %v792, 4
        %v798 = vshrl.u32 %v761, 16
        %v800 = vrot.slane %v798, 7
        %v801 = vshll.u32 %v761, 16
        %v803 = vor.u32 %v800, %v801
        %v804 = vrot.slane %v800, 4
        %v806 = vshrl.u32 %v762, 16
        %v808 = vrot.slane %v806, 7
        %v809 = vshll.u32 %v762, 16
        %v811 = vor.u32 %v808, %v809
        %v812 = vrot.slane %v808, 4
        %v814 = vshrl.u32 %v763, 16
        %v816 = vrot.slane %v814, 7
        %v817 = vshll.u32 %v763, 16
        %v819 = vor.u32 %v816, %v817
        %v820 = vrot.slane %v816, 4
        %v822 = vshrl.u32 %v764, 16
        %v824 = vrot.slane %v822, 7
        %v825 = vshll.u32 %v764, 16
        %v827 = vor.u32 %v824, %v825
        %v828 = vrot.slane %v824, 4
        %s845 = scalar_lea.vmem [#allocation2], 8
        %vm846 = vcmask 125952
        %vm847 = vsmask.f32 7938
        %vm848 = vmand %vm846, %vm847
        %v849 = vld [vmem:[%s845] sm:$0xf]
        %v850 = vsel %vm848, %v771, %v849
        %851 = vst [vmem:[%s845] sm:$0xf] %v850
        %vm852 = vcmask 122880
        %vm853 = vsmask.f32 256
        %vm854 = vmand %vm852, %vm853
        %v855 = vld [vmem:[%s845 + $0x4] sm:$0x1]
        %v856 = vsel %vm854, %v772, %v855
        %857 = vst [vmem:[%s845 + $0x4] sm:$0x1] %v856
        %v858 = vld [vmem:[%s845 + $0x8] sm:$0xf]
        %v859 = vsel %vm848, %v779, %v858
        %860 = vst [vmem:[%s845 + $0x8] sm:$0xf] %v859
        %v861 = vld [vmem:[%s845 + $0xc] sm:$0x1]
        %v862 = vsel %vm854, %v780, %v861
        %863 = vst [vmem:[%s845 + $0xc] sm:$0x1] %v862
        %v864 = vld [vmem:[%s845 + $0x10] sm:$0xf]
        %v865 = vsel %vm848, %v787, %v864
        %866 = vst [vmem:[%s845 + $0x10] sm:$0xf] %v865
        %v867 = vld [vmem:[%s845 + $0x14] sm:$0x1]
        %v868 = vsel %vm854, %v788, %v867
        %869 = vst [vmem:[%s845 + $0x14] sm:$0x1] %v868
        %v870 = vld [vmem:[%s845 + $0x18] sm:$0xf]
        %v871 = vsel %vm848, %v795, %v870
        %872 = vst [vmem:[%s845 + $0x18] sm:$0xf] %v871
        %v873 = vld [vmem:[%s845 + $0x1c] sm:$0x1]
        %v874 = vsel %vm854, %v796, %v873
        %875 = vst [vmem:[%s845 + $0x1c] sm:$0x1] %v874
        %v876 = vld [vmem:[%s845 + $0x20] sm:$0xf]
        %v877 = vsel %vm848, %v803, %v876
        %878 = vst [vmem:[%s845 + $0x20] sm:$0xf] %v877
        %v879 = vld [vmem:[%s845 + $0x24] sm:$0x1]
        %v880 = vsel %vm854, %v804, %v879
        %881 = vst [vmem:[%s845 + $0x24] sm:$0x1] %v880
        %v882 = vld [vmem:[%s845 + $0x28] sm:$0xf]
        %v883 = vsel %vm848, %v811, %v882
        %884 = vst [vmem:[%s845 + $0x28] sm:$0xf] %v883
        %v885 = vld [vmem:[%s845 + $0x2c] sm:$0x1]
        %v886 = vsel %vm854, %v812, %v885
        %887 = vst [vmem:[%s845 + $0x2c] sm:$0x1] %v886
        %v888 = vld [vmem:[%s845 + $0x30] sm:$0xf]
        %v889 = vsel %vm848, %v819, %v888
        %890 = vst [vmem:[%s845 + $0x30] sm:$0xf] %v889
        %v891 = vld [vmem:[%s845 + $0x34] sm:$0x1]
        %v892 = vsel %vm854, %v820, %v891
        %893 = vst [vmem:[%s845 + $0x34] sm:$0x1] %v892
        %v894 = vld [vmem:[%s845 + $0x38] sm:$0xf]
        %v895 = vsel %vm848, %v827, %v894
        %896 = vst [vmem:[%s845 + $0x38] sm:$0xf] %v895
        %v897 = vld [vmem:[%s845 + $0x3c] sm:$0x1]
        %v898 = vsel %vm854, %v828, %v897
        %899 = vst [vmem:[%s845 + $0x3c] sm:$0x1] %v898
        %v900 = vld [vmem:[#allocation2] sm:$0xf]
        %v901 = vld [vmem:[#allocation2 + $0x8] sm:$0xf]
        %v902 = vld [vmem:[#allocation2 + $0x10] sm:$0xf]
        %v903 = vld [vmem:[#allocation2 + $0x18] sm:$0xf]
        %v904 = vld [vmem:[#allocation2 + $0x20] sm:$0xf]
        %v905 = vld [vmem:[#allocation2 + $0x28] sm:$0xf]
        %v906 = vld [vmem:[#allocation2 + $0x30] sm:$0xf]
        %v907 = vld [vmem:[#allocation2 + $0x38] sm:$0xf]
        %v908 = vld [vmem:[#allocation9] sm:$0xf]
        %v909 = vld [vmem:[#allocation9 + $0x4] sm:$0xf]
        %v910 = vld [vmem:[#allocation2 + $0x4] sm:$0x1]
        %v911 = vld [vmem:[#allocation2 + $0xc] sm:$0x1]
        %v912 = vld [vmem:[#allocation2 + $0x14] sm:$0x1]
        %v913 = vld [vmem:[#allocation2 + $0x1c] sm:$0x1]
        %v914 = vld [vmem:[#allocation2 + $0x24] sm:$0x1]
        %v915 = vld [vmem:[#allocation2 + $0x2c] sm:$0x1]
        %v916 = vld [vmem:[#allocation2 + $0x34] sm:$0x1]
        %v917 = vld [vmem:[#allocation2 + $0x3c] sm:$0x1]
        %vm918 = vsmask.f32 3328
        %vm919 = vsmask.f32 7440
        %vm920 = vmor %vm918, %vm919
        %v922 = vshrl.u32 %v900, 16
        %v924 = vrot.slane %v922, 4
        %v925 = vshll.u32 %v900, 16
        %v927 = vrot.slane %v925, 5
        %v928 = vor.u32 %v924, %v927
        %v929 = vrot.slane %v928, 4
        %v931 = vshll.u32 %v910, 16
        %v933 = vrot.slane %v931, 5
        %v934 = vsel %vm920, %v929, %v933
        %v936 = vshrl.u32 %v901, 16
        %v938 = vrot.slane %v936, 4
        %v939 = vshll.u32 %v901, 16
        %v941 = vrot.slane %v939, 5
        %v942 = vor.u32 %v938, %v941
        %v943 = vrot.slane %v942, 4
        %v945 = vshll.u32 %v911, 16
        %v947 = vrot.slane %v945, 5
        %v948 = vsel %vm920, %v943, %v947
        %v950 = vshrl.u32 %v902, 16
        %v952 = vrot.slane %v950, 4
        %v953 = vshll.u32 %v902, 16
        %v955 = vrot.slane %v953, 5
        %v956 = vor.u32 %v952, %v955
        %v957 = vrot.slane %v956, 4
        %v959 = vshll.u32 %v912, 16
        %v961 = vrot.slane %v959, 5
        %v962 = vsel %vm920, %v957, %v961
        %v964 = vshrl.u32 %v903, 16
        %v966 = vrot.slane %v964, 4
        %v967 = vshll.u32 %v903, 16
        %v969 = vrot.slane %v967, 5
        %v970 = vor.u32 %v966, %v969
        %v971 = vrot.slane %v970, 4
        %v973 = vshll.u32 %v913, 16
        %v975 = vrot.slane %v973, 5
        %v976 = vsel %vm920, %v971, %v975
        %v978 = vshrl.u32 %v904, 16
        %v980 = vrot.slane %v978, 4
        %v981 = vshll.u32 %v904, 16
        %v983 = vrot.slane %v981, 5
        %v984 = vor.u32 %v980, %v983
        %v985 = vrot.slane %v984, 4
        %v987 = vshll.u32 %v914, 16
        %v989 = vrot.slane %v987, 5
        %v990 = vsel %vm920, %v985, %v989
        %v992 = vshrl.u32 %v905, 16
        %v994 = vrot.slane %v992, 4
        %v995 = vshll.u32 %v905, 16
        %v997 = vrot.slane %v995, 5
        %v998 = vor.u32 %v994, %v997
        %v999 = vrot.slane %v998, 4
        %v1001 = vshll.u32 %v915, 16
        %v1003 = vrot.slane %v1001, 5
        %v1004 = vsel %vm920, %v999, %v1003
        %v1006 = vshrl.u32 %v906, 16
        %v1008 = vrot.slane %v1006, 4
        %v1009 = vshll.u32 %v906, 16
        %v1011 = vrot.slane %v1009, 5
        %v1012 = vor.u32 %v1008, %v1011
        %v1013 = vrot.slane %v1012, 4
        %v1015 = vshll.u32 %v916, 16
        %v1017 = vrot.slane %v1015, 5
        %v1018 = vsel %vm920, %v1013, %v1017
        %v1020 = vshrl.u32 %v907, 16
        %v1022 = vrot.slane %v1020, 4
        %v1023 = vshll.u32 %v907, 16
        %v1025 = vrot.slane %v1023, 5
        %v1026 = vor.u32 %v1022, %v1025
        %v1027 = vrot.slane %v1026, 4
        %v1029 = vshll.u32 %v917, 16
        %v1031 = vrot.slane %v1029, 5
        %v1032 = vsel %vm920, %v1027, %v1031
        %s1033 = scalar_lea.vmem [#allocation9], 8
        %v1034 = vld [vmem:[%s1033] sm:$0xf]
        %v1035 = vld [vmem:[%s1033 + $0x4] sm:$0xf]
        %v1036 = vunpack.c.l.b16 %v934
        %v1037 = vunpack.c.l.b16 %v948
        %v1038 = vunpack.c.l.b16 %v962
        %v1039 = vunpack.c.l.b16 %v976
        %v1040 = vunpack.c.l.b16 %v990
        %v1041 = vunpack.c.l.b16 %v1004
        %v1042 = vunpack.c.l.b16 %v1018
        %v1043 = vunpack.c.l.b16 %v1032
        %v1044 = vpack.c.b16 %v1037, %v1036
        %v1045 = vpack.c.b16 %v1039, %v1038
        %v1046 = vpack.c.b16 %v1041, %v1040
        %v1047 = vpack.c.b16 %v1043, %v1042
        %v1050 = vunpack.c.l.b16 %v1034
        %v1051 = vunpack.c.l.b16 %v1035
        %v1052 = vpack.c.b16 %v1051, %v1050
        %v1055 = vsel %vm597, %v1044, 0
        %v1058 = vsel %vm597, %v1045, 0
        %v1061 = vsel %vm597, %v1046, 0
        %v1064 = vsel %vm597, %v1047, 0
        %1066 = vmatprep.subr.bf16.mxu0 0
        %1067 = vmatpush1.bf16.msra.mxu0 %v1052
        %1068 = vmatprep.subr.bf16.mxu0 0
        %1069 = vmatpush1.bf16.msra.mxu0 0
        %1070 = vmatprep.subr.bf16.mxu0 0
        %1071 = vmatpush1.bf16.msra.mxu0 0
        %1072 = vmatprep.subr.bf16.mxu0 0
        %1073 = vmatpush1.bf16.msra.mxu0 0
        %1074 = vmatprep.subr.bf16.mxu0 0
        %1075 = vmatpush1.bf16.msra.mxu0 0
        %1076 = vmatprep.subr.bf16.mxu0 0
        %1077 = vmatpush1.bf16.msra.mxu0 0
        %1078 = vmatprep.subr.bf16.mxu0 0
        %1079 = vmatpush1.bf16.msra.mxu0 0
        %1080 = vmatprep.subr.bf16.mxu0 0
        %1081 = vmatpush1.bf16.msra.mxu0 0
        %1082 = vmatprep.subr.bf16.mxu0 0
        %1083 = vmatpush1.bf16.msra.mxu0 0
        %1084 = vmatprep.subr.bf16.mxu0 0
        %1085 = vmatpush1.bf16.msra.mxu0 0
        %1086 = vmatprep.subr.bf16.mxu0 0
        %1087 = vmatpush1.bf16.msra.mxu0 0
        %1088 = vmatprep.subr.bf16.mxu0 0
        %1089 = vmatpush1.bf16.msra.mxu0 0
        %1090 = vmatprep.subr.bf16.mxu0 0
        %1091 = vmatpush1.bf16.msra.mxu0 0
        %1092 = vmatprep.subr.bf16.mxu0 0
        %1093 = vmatpush1.bf16.msra.mxu0 0
        %1094 = vmatprep.subr.bf16.mxu0 0
        %1095 = vmatpush1.bf16.msra.mxu0 0
        %1096 = vmatprep.subr.bf16.mxu0 0
        %1097 = vmatpush1.bf16.msra.mxu0 0
        %1098 = vmatprep.mubr.bf16.mxu0 0
        %1099 = vmatmul.mubr.bf16.gmra.mrb[0].mxu0 %v1055
        %v1100 = vpop.f32.mrb[0].mxu0
        %v1101 = vadd.f32 0.0, %v1100
        %v1102 = vpop.f32.mrb[0].mxu0
        %v1103 = vpop.f32.mrb[0].mxu0
        %v1104 = vadd.f32 0.0, %v1103
        %v1105 = vpop.f32.mrb[0].mxu0
        %1106 = vmatprep.mubr.bf16.mxu0 0
        %1107 = vmatmul.mubr.bf16.gmra.mrb[0].mxu0 %v1058
        %v1108 = vpop.f32.mrb[0].mxu0
        %v1109 = vadd.f32 0.0, %v1108
        %v1110 = vpop.f32.mrb[0].mxu0
        %v1111 = vpop.f32.mrb[0].mxu0
        %v1112 = vadd.f32 0.0, %v1111
        %v1113 = vpop.f32.mrb[0].mxu0
        %1114 = vmatprep.mubr.bf16.mxu0 0
        %1115 = vmatmul.mubr.bf16.gmra.mrb[0].mxu0 %v1061
        %v1116 = vpop.f32.mrb[0].mxu0
        %v1117 = vadd.f32 0.0, %v1116
        %v1118 = vpop.f32.mrb[0].mxu0
        %v1119 = vpop.f32.mrb[0].mxu0
        %v1120 = vadd.f32 0.0, %v1119
        %v1121 = vpop.f32.mrb[0].mxu0
        %1122 = vmatprep.mubr.bf16.mxu0 0
        %1123 = vmatmul.mubr.bf16.gmra.mrb[0].mxu0 %v1064
        %v1124 = vpop.f32.mrb[0].mxu0
        %v1125 = vadd.f32 0.0, %v1124
        %v1126 = vpop.f32.mrb[0].mxu0
        %v1127 = vpop.f32.mrb[0].mxu0
        %v1128 = vadd.f32 0.0, %v1127
        %v1129 = vpop.f32.mrb[0].mxu0
        %1130 = vdwg.mxu0
        %v1139 = vunpack.c.l.b16 %v900
        %v1140 = vunpack.c.l.b16 %v901
        %v1141 = vunpack.c.l.b16 %v902
        %v1142 = vunpack.c.l.b16 %v903
        %v1143 = vunpack.c.l.b16 %v904
        %v1144 = vunpack.c.l.b16 %v905
        %v1145 = vunpack.c.l.b16 %v906
        %v1146 = vunpack.c.l.b16 %v907
        %v1147 = vpack.c.b16 %v1140, %v1139
        %v1148 = vpack.c.b16 %v1142, %v1141
        %v1149 = vpack.c.b16 %v1144, %v1143
        %v1150 = vpack.c.b16 %v1146, %v1145
        %v1153 = vunpack.c.l.b16 %v908
        %v1154 = vunpack.c.l.b16 %v909
        %v1155 = vpack.c.b16 %v1154, %v1153
        %v1158 = vsel %vm597, %v1147, 0
        %v1161 = vsel %vm597, %v1148, 0
        %v1164 = vsel %vm597, %v1149, 0
        %v1167 = vsel %vm597, %v1150, 0
        %1169 = vmatprep.subr.bf16.mxu0 0
        %1170 = vmatpush1.bf16.msra.mxu0 %v1155
        %1171 = vmatprep.subr.bf16.mxu0 0
        %1172 = vmatpush1.bf16.msra.mxu0 0
        %1173 = vmatprep.subr.bf16.mxu0 0
        %1174 = vmatpush1.bf16.msra.mxu0 0
        %1175 = vmatprep.subr.bf16.mxu0 0
        %1176 = vmatpush1.bf16.msra.mxu0 0
        %1177 = vmatprep.subr.bf16.mxu0 0
        %1178 = vmatpush1.bf16.msra.mxu0 0
        %1179 = vmatprep.subr.bf16.mxu0 0
        %1180 = vmatpush1.bf16.msra.mxu0 0
        %1181 = vmatprep.subr.bf16.mxu0 0
        %1182 = vmatpush1.bf16.msra.mxu0 0
        %1183 = vmatprep.subr.bf16.mxu0 0
        %1184 = vmatpush1.bf16.msra.mxu0 0
        %1185 = vmatprep.subr.bf16.mxu0 0
        %1186 = vmatpush1.bf16.msra.mxu0 0
        %1187 = vmatprep.subr.bf16.mxu0 0
        %1188 = vmatpush1.bf16.msra.mxu0 0
        %1189 = vmatprep.subr.bf16.mxu0 0
        %1190 = vmatpush1.bf16.msra.mxu0 0
        %1191 = vmatprep.subr.bf16.mxu0 0
        %1192 = vmatpush1.bf16.msra.mxu0 0
        %1193 = vmatprep.subr.bf16.mxu0 0
        %1194 = vmatpush1.bf16.msra.mxu0 0
        %1195 = vmatprep.subr.bf16.mxu0 0
        %1196 = vmatpush1.bf16.msra.mxu0 0
        %1197 = vmatprep.subr.bf16.mxu0 0
        %1198 = vmatpush1.bf16.msra.mxu0 0
        %1199 = vmatprep.subr.bf16.mxu0 0
        %1200 = vmatpush1.bf16.msra.mxu0 0
        %1201 = vmatprep.mubr.bf16.mxu0 0
        %1202 = vmatmul.mubr.bf16.gmra.mrb[0].mxu0 %v1158
        %v1203 = vpop.f32.mrb[0].mxu0
        %v1204 = vadd.f32 %v1101, %v1203
        %v1205 = vpop.f32.mrb[0].mxu0
        %v1206 = vpop.f32.mrb[0].mxu0
        %v1207 = vadd.f32 %v1104, %v1206
        %v1208 = vpop.f32.mrb[0].mxu0
        %1209 = vmatprep.mubr.bf16.mxu0 0
        %1210 = vmatmul.mubr.bf16.gmra.mrb[0].mxu0 %v1161
        %v1211 = vpop.f32.mrb[0].mxu0
        %v1212 = vadd.f32 %v1109, %v1211
        %v1213 = vpop.f32.mrb[0].mxu0
        %v1214 = vpop.f32.mrb[0].mxu0
        %v1215 = vadd.f32 %v1112, %v1214
        %v1216 = vpop.f32.mrb[0].mxu0
        %1217 = vmatprep.mubr.bf16.mxu0 0
        %1218 = vmatmul.mubr.bf16.gmra.mrb[0].mxu0 %v1164
        %v1219 = vpop.f32.mrb[0].mxu0
        %v1220 = vadd.f32 %v1117, %v1219
        %v1221 = vpop.f32.mrb[0].mxu0
        %v1222 = vpop.f32.mrb[0].mxu0
        %v1223 = vadd.f32 %v1120, %v1222
        %v1224 = vpop.f32.mrb[0].mxu0
        %1225 = vmatprep.mubr.bf16.mxu0 0
        %1226 = vmatmul.mubr.bf16.gmra.mrb[0].mxu0 %v1167
        %v1227 = vpop.f32.mrb[0].mxu0
        %v1228 = vadd.f32 %v1125, %v1227
        %v1229 = vpop.f32.mrb[0].mxu0
        %v1230 = vpop.f32.mrb[0].mxu0
        %v1231 = vadd.f32 %v1128, %v1230
        %v1232 = vpop.f32.mrb[0].mxu0
        %1233 = vdwg.mxu0
        %v1234 = vld [vmem:[#allocation2] sm:$0xe]
        %v1235 = vld [vmem:[#allocation2 + $0x8] sm:$0xe]
        %v1236 = vld [vmem:[#allocation2 + $0x10] sm:$0xe]
        %v1237 = vld [vmem:[#allocation2 + $0x18] sm:$0xe]
        %v1238 = vld [vmem:[#allocation2 + $0x20] sm:$0xe]
        %v1239 = vld [vmem:[#allocation2 + $0x28] sm:$0xe]
        %v1240 = vld [vmem:[#allocation2 + $0x30] sm:$0xe]
        %v1241 = vld [vmem:[#allocation2 + $0x38] sm:$0xe]
        %vm1258 = vcmask 1042432
        %vm1259 = vcmask 1046532
        %vm1260 = vmor %vm1258, %vm1259
        %v1261 = vrot.slane %v1234, 5
        %v1262 = vrot.slane %v1261, 4
        %v1263 = vrot.slane %v910, 5
        %v1264 = vsel %vm1260, %v1262, %v1263
        %v1265 = vrot.slane %v1235, 5
        %v1266 = vrot.slane %v1265, 4
        %v1267 = vrot.slane %v911, 5
        %v1268 = vsel %vm1260, %v1266, %v1267
        %v1269 = vrot.slane %v1236, 5
        %v1270 = vrot.slane %v1269, 4
        %v1271 = vrot.slane %v912, 5
        %v1272 = vsel %vm1260, %v1270, %v1271
        %v1273 = vrot.slane %v1237, 5
        %v1274 = vrot.slane %v1273, 4
        %v1275 = vrot.slane %v913, 5
        %v1276 = vsel %vm1260, %v1274, %v1275
        %v1277 = vrot.slane %v1238, 5
        %v1278 = vrot.slane %v1277, 4
        %v1279 = vrot.slane %v914, 5
        %v1280 = vsel %vm1260, %v1278, %v1279
        %v1281 = vrot.slane %v1239, 5
        %v1282 = vrot.slane %v1281, 4
        %v1283 = vrot.slane %v915, 5
        %v1284 = vsel %vm1260, %v1282, %v1283
        %v1285 = vrot.slane %v1240, 5
        %v1286 = vrot.slane %v1285, 4
        %v1287 = vrot.slane %v916, 5
        %v1288 = vsel %vm1260, %v1286, %v1287
        %v1289 = vrot.slane %v1241, 5
        %v1290 = vrot.slane %v1289, 4
        %v1291 = vrot.slane %v917, 5
        %v1292 = vsel %vm1260, %v1290, %v1291
        %s1293 = scalar_lea.vmem [#allocation9], 16
        %v1294 = vld [vmem:[%s1293] sm:$0xf]
        %v1295 = vld [vmem:[%s1293 + $0x4] sm:$0xf]
        %v1296 = vunpack.c.l.b16 %v1264
        %v1297 = vunpack.c.l.b16 %v1268
        %v1298 = vunpack.c.l.b16 %v1272
        %v1299 = vunpack.c.l.b16 %v1276
        %v1300 = vunpack.c.l.b16 %v1280
        %v1301 = vunpack.c.l.b16 %v1284
        %v1302 = vunpack.c.l.b16 %v1288
        %v1303 = vunpack.c.l.b16 %v1292
        %v1304 = vpack.c.b16 %v1297, %v1296
        %v1305 = vpack.c.b16 %v1299, %v1298
        %v1306 = vpack.c.b16 %v1301, %v1300
        %v1307 = vpack.c.b16 %v1303, %v1302
        %v1310 = vunpack.c.l.b16 %v1294
        %v1311 = vunpack.c.l.b16 %v1295
        %v1312 = vpack.c.b16 %v1311, %v1310
        %v1315 = vsel %vm597, %v1304, 0
        %v1318 = vsel %vm597, %v1305, 0
        %v1321 = vsel %vm597, %v1306, 0
        %v1324 = vsel %vm597, %v1307, 0
        %1326 = vmatprep.subr.bf16.mxu0 0
        %1327 = vmatpush1.bf16.msra.mxu0 %v1312
        %1328 = vmatprep.subr.bf16.mxu0 0
        %1329 = vmatpush1.bf16.msra.mxu0 0
        %1330 = vmatprep.subr.bf16.mxu0 0
        %1331 = vmatpush1.bf16.msra.mxu0 0
        %1332 = vmatprep.subr.bf16.mxu0 0
        %1333 = vmatpush1.bf16.msra.mxu0 0
        %1334 = vmatprep.subr.bf16.mxu0 0
        %1335 = vmatpush1.bf16.msra.mxu0 0
        %1336 = vmatprep.subr.bf16.mxu0 0
        %1337 = vmatpush1.bf16.msra.mxu0 0
        %1338 = vmatprep.subr.bf16.mxu0 0
        %1339 = vmatpush1.bf16.msra.mxu0 0
        %1340 = vmatprep.subr.bf16.mxu0 0
        %1341 = vmatpush1.bf16.msra.mxu0 0
        %1342 = vmatprep.subr.bf16.mxu0 0
        %1343 = vmatpush1.bf16.msra.mxu0 0
        %1344 = vmatprep.subr.bf16.mxu0 0
        %1345 = vmatpush1.bf16.msra.mxu0 0
        %1346 = vmatprep.subr.bf16.mxu0 0
        %1347 = vmatpush1.bf16.msra.mxu0 0
        %1348 = vmatprep.subr.bf16.mxu0 0
        %1349 = vmatpush1.bf16.msra.mxu0 0
        %1350 = vmatprep.subr.bf16.mxu0 0
        %1351 = vmatpush1.bf16.msra.mxu0 0
        %1352 = vmatprep.subr.bf16.mxu0 0
        %1353 = vmatpush1.bf16.msra.mxu0 0
        %1354 = vmatprep.subr.bf16.mxu0 0
        %1355 = vmatpush1.bf16.msra.mxu0 0
        %1356 = vmatprep.subr.bf16.mxu0 0
        %1357 = vmatpush1.bf16.msra.mxu0 0
        %1358 = vmatprep.mubr.bf16.mxu0 0
        %1359 = vmatmul.mubr.bf16.gmra.mrb[0].mxu0 %v1315
        %v1360 = vpop.f32.mrb[0].mxu0
        %v1361 = vadd.f32 0.0, %v1360
        %v1362 = vpop.f32.mrb[0].mxu0
        %v1363 = vpop.f32.mrb[0].mxu0
        %v1364 = vadd.f32 0.0, %v1363
        %v1365 = vpop.f32.mrb[0].mxu0
        %1366 = vmatprep.mubr.bf16.mxu0 0
        %1367 = vmatmul.mubr.bf16.gmra.mrb[0].mxu0 %v1318
        %v1368 = vpop.f32.mrb[0].mxu0
        %v1369 = vadd.f32 0.0, %v1368
        %v1370 = vpop.f32.mrb[0].mxu0
        %v1371 = vpop.f32.mrb[0].mxu0
        %v1372 = vadd.f32 0.0, %v1371
        %v1373 = vpop.f32.mrb[0].mxu0
        %1374 = vmatprep.mubr.bf16.mxu0 0
        %1375 = vmatmul.mubr.bf16.gmra.mrb[0].mxu0 %v1321
        %v1376 = vpop.f32.mrb[0].mxu0
        %v1377 = vadd.f32 0.0, %v1376
        %v1378 = vpop.f32.mrb[0].mxu0
        %v1379 = vpop.f32.mrb[0].mxu0
        %v1380 = vadd.f32 0.0, %v1379
        %v1381 = vpop.f32.mrb[0].mxu0
        %1382 = vmatprep.mubr.bf16.mxu0 0
        %1383 = vmatmul.mubr.bf16.gmra.mrb[0].mxu0 %v1324
        %v1384 = vpop.f32.mrb[0].mxu0
        %v1385 = vadd.f32 0.0, %v1384
        %v1386 = vpop.f32.mrb[0].mxu0
        %v1387 = vpop.f32.mrb[0].mxu0
        %v1388 = vadd.f32 0.0, %v1387
        %v1389 = vpop.f32.mrb[0].mxu0
        %1390 = vdwg.mxu0
        %v1391 = vadd.f32 %v1204, %v1361
        %v1392 = vadd.f32 %v1207, %v1364
        %v1393 = vadd.f32 %v1212, %v1369
        %v1394 = vadd.f32 %v1215, %v1372
        %v1395 = vadd.f32 %v1220, %v1377
        %v1396 = vadd.f32 %v1223, %v1380
        %v1397 = vadd.f32 %v1228, %v1385
        %v1398 = vadd.f32 %v1231, %v1388
        %v1399 = vld [vmem:[%s845] sm:$0xf]
        %v1400 = vld [vmem:[%s845 + $0x8] sm:$0xf]
        %v1401 = vld [vmem:[%s845 + $0x10] sm:$0xf]
        %v1402 = vld [vmem:[%s845 + $0x18] sm:$0xf]
        %v1403 = vld [vmem:[%s845 + $0x20] sm:$0xf]
        %v1404 = vld [vmem:[%s845 + $0x28] sm:$0xf]
        %v1405 = vld [vmem:[%s845 + $0x30] sm:$0xf]
        %v1406 = vld [vmem:[%s845 + $0x38] sm:$0xf]
        %s1407 = scalar_lea.vmem [#allocation9], 24
        %v1408 = vld [vmem:[%s1407] sm:$0xf]
        %v1409 = vld [vmem:[%s1407 + $0x4] sm:$0xf]
        %v1418 = vunpack.c.l.b16 %v1399
        %v1419 = vunpack.c.l.b16 %v1400
        %v1420 = vunpack.c.l.b16 %v1401
        %v1421 = vunpack.c.l.b16 %v1402
        %v1422 = vunpack.c.l.b16 %v1403
        %v1423 = vunpack.c.l.b16 %v1404
        %v1424 = vunpack.c.l.b16 %v1405
        %v1425 = vunpack.c.l.b16 %v1406
        %v1426 = vpack.c.b16 %v1419, %v1418
        %v1427 = vpack.c.b16 %v1421, %v1420
        %v1428 = vpack.c.b16 %v1423, %v1422
        %v1429 = vpack.c.b16 %v1425, %v1424
        %v1432 = vunpack.c.l.b16 %v1408
        %v1433 = vunpack.c.l.b16 %v1409
        %v1434 = vpack.c.b16 %v1433, %v1432
        %v1437 = vsel %vm597, %v1426, 0
        %v1440 = vsel %vm597, %v1427, 0
        %v1443 = vsel %vm597, %v1428, 0
        %v1446 = vsel %vm597, %v1429, 0
        %1448 = vmatprep.subr.bf16.mxu0 0
        %1449 = vmatpush1.bf16.msra.mxu0 %v1434
        %1450 = vmatprep.subr.bf16.mxu0 0
        %1451 = vmatpush1.bf16.msra.mxu0 0
        %1452 = vmatprep.subr.bf16.mxu0 0
        %1453 = vmatpush1.bf16.msra.mxu0 0
        %1454 = vmatprep.subr.bf16.mxu0 0
        %1455 = vmatpush1.bf16.msra.mxu0 0
        %1456 = vmatprep.subr.bf16.mxu0 0
        %1457 = vmatpush1.bf16.msra.mxu0 0
        %1458 = vmatprep.subr.bf16.mxu0 0
        %1459 = vmatpush1.bf16.msra.mxu0 0
        %1460 = vmatprep.subr.bf16.mxu0 0
        %1461 = vmatpush1.bf16.msra.mxu0 0
        %1462 = vmatprep.subr.bf16.mxu0 0
        %1463 = vmatpush1.bf16.msra.mxu0 0
        %1464 = vmatprep.subr.bf16.mxu0 0
        %1465 = vmatpush1.bf16.msra.mxu0 0
        %1466 = vmatprep.subr.bf16.mxu0 0
        %1467 = vmatpush1.bf16.msra.mxu0 0
        %1468 = vmatprep.subr.bf16.mxu0 0
        %1469 = vmatpush1.bf16.msra.mxu0 0
        %1470 = vmatprep.subr.bf16.mxu0 0
        %1471 = vmatpush1.bf16.msra.mxu0 0
        %1472 = vmatprep.subr.bf16.mxu0 0
        %1473 = vmatpush1.bf16.msra.mxu0 0
        %1474 = vmatprep.subr.bf16.mxu0 0
        %1475 = vmatpush1.bf16.msra.mxu0 0
        %1476 = vmatprep.subr.bf16.mxu0 0
        %1477 = vmatpush1.bf16.msra.mxu0 0
        %1478 = vmatprep.subr.bf16.mxu0 0
        %1479 = vmatpush1.bf16.msra.mxu0 0
        %1480 = vmatprep.mubr.bf16.mxu0 0
        %1481 = vmatmul.mubr.bf16.gmra.mrb[0].mxu0 %v1437
        %v1482 = vpop.f32.mrb[0].mxu0
        %v1483 = vadd.f32 0.0, %v1482
        %v1484 = vpop.f32.mrb[0].mxu0
        %v1485 = vpop.f32.mrb[0].mxu0
        %v1486 = vadd.f32 0.0, %v1485
        %v1487 = vpop.f32.mrb[0].mxu0
        %1488 = vmatprep.mubr.bf16.mxu0 0
        %1489 = vmatmul.mubr.bf16.gmra.mrb[0].mxu0 %v1440
        %v1490 = vpop.f32.mrb[0].mxu0
        %v1491 = vadd.f32 0.0, %v1490
        %v1492 = vpop.f32.mrb[0].mxu0
        %v1493 = vpop.f32.mrb[0].mxu0
        %v1494 = vadd.f32 0.0, %v1493
        %v1495 = vpop.f32.mrb[0].mxu0
        %1496 = vmatprep.mubr.bf16.mxu0 0
        %1497 = vmatmul.mubr.bf16.gmra.mrb[0].mxu0 %v1443
        %v1498 = vpop.f32.mrb[0].mxu0
        %v1499 = vadd.f32 0.0, %v1498
        %v1500 = vpop.f32.mrb[0].mxu0
        %v1501 = vpop.f32.mrb[0].mxu0
        %v1502 = vadd.f32 0.0, %v1501
        %v1503 = vpop.f32.mrb[0].mxu0
        %1504 = vmatprep.mubr.bf16.mxu0 0
        %1505 = vmatmul.mubr.bf16.gmra.mrb[0].mxu0 %v1446
        %v1506 = vpop.f32.mrb[0].mxu0
        %v1507 = vadd.f32 0.0, %v1506
        %v1508 = vpop.f32.mrb[0].mxu0
        %v1509 = vpop.f32.mrb[0].mxu0
        %v1510 = vadd.f32 0.0, %v1509
        %v1511 = vpop.f32.mrb[0].mxu0
        %1512 = vdwg.mxu0
        %v1513 = vadd.f32 %v1391, %v1483
        %v1514 = vadd.f32 %v1392, %v1486
        %v1515 = vadd.f32 %v1393, %v1491
        %v1516 = vadd.f32 %v1394, %v1494
        %v1517 = vadd.f32 %v1395, %v1499
        %v1518 = vadd.f32 %v1396, %v1502
        %v1519 = vadd.f32 %v1397, %v1507
        %v1520 = vadd.f32 %v1398, %v1510
        %v1521 = vld [vmem:[%s845] sm:$0xf]
        %v1522 = vld [vmem:[%s845 + $0x4] sm:$0x1]
        %v1523 = vld [vmem:[%s845 + $0x8] sm:$0xf]
        %v1524 = vld [vmem:[%s845 + $0xc] sm:$0x1]
        %v1525 = vld [vmem:[%s845 + $0x10] sm:$0xf]
        %v1526 = vld [vmem:[%s845 + $0x14] sm:$0x1]
        %v1527 = vld [vmem:[%s845 + $0x18] sm:$0xf]
        %v1528 = vld [vmem:[%s845 + $0x1c] sm:$0x1]
        %v1529 = vld [vmem:[%s845 + $0x20] sm:$0xf]
        %v1530 = vld [vmem:[%s845 + $0x24] sm:$0x1]
        %v1531 = vld [vmem:[%s845 + $0x28] sm:$0xf]
        %v1532 = vld [vmem:[%s845 + $0x2c] sm:$0x1]
        %v1533 = vld [vmem:[%s845 + $0x30] sm:$0xf]
        %v1534 = vld [vmem:[%s845 + $0x34] sm:$0x1]
        %v1535 = vld [vmem:[%s845 + $0x38] sm:$0xf]
        %v1536 = vld [vmem:[%s845 + $0x3c] sm:$0x1]
        %v1538 = vshrl.u32 %v1521, 16
        %v1540 = vrot.slane %v1538, 4
        %v1541 = vshll.u32 %v1521, 16
        %v1543 = vrot.slane %v1541, 5
        %v1544 = vor.u32 %v1540, %v1543
        %v1545 = vrot.slane %v1544, 4
        %v1547 = vshll.u32 %v1522, 16
        %v1549 = vrot.slane %v1547, 5
        %v1550 = vsel %vm920, %v1545, %v1549
        %v1552 = vshrl.u32 %v1523, 16
        %v1554 = vrot.slane %v1552, 4
        %v1555 = vshll.u32 %v1523, 16
        %v1557 = vrot.slane %v1555, 5
        %v1558 = vor.u32 %v1554, %v1557
        %v1559 = vrot.slane %v1558, 4
        %v1561 = vshll.u32 %v1524, 16
        %v1563 = vrot.slane %v1561, 5
        %v1564 = vsel %vm920, %v1559, %v1563
        %v1566 = vshrl.u32 %v1525, 16
        %v1568 = vrot.slane %v1566, 4
        %v1569 = vshll.u32 %v1525, 16
        %v1571 = vrot.slane %v1569, 5
        %v1572 = vor.u32 %v1568, %v1571
        %v1573 = vrot.slane %v1572, 4
        %v1575 = vshll.u32 %v1526, 16
        %v1577 = vrot.slane %v1575, 5
        %v1578 = vsel %vm920, %v1573, %v1577
        %v1580 = vshrl.u32 %v1527, 16
        %v1582 = vrot.slane %v1580, 4
        %v1583 = vshll.u32 %v1527, 16
        %v1585 = vrot.slane %v1583, 5
        %v1586 = vor.u32 %v1582, %v1585
        %v1587 = vrot.slane %v1586, 4
        %v1589 = vshll.u32 %v1528, 16
        %v1591 = vrot.slane %v1589, 5
        %v1592 = vsel %vm920, %v1587, %v1591
        %v1594 = vshrl.u32 %v1529, 16
        %v1596 = vrot.slane %v1594, 4
        %v1597 = vshll.u32 %v1529, 16
        %v1599 = vrot.slane %v1597, 5
        %v1600 = vor.u32 %v1596, %v1599
        %v1601 = vrot.slane %v1600, 4
        %v1603 = vshll.u32 %v1530, 16
        %v1605 = vrot.slane %v1603, 5
        %v1606 = vsel %vm920, %v1601, %v1605
        %v1608 = vshrl.u32 %v1531, 16
        %v1610 = vrot.slane %v1608, 4
        %v1611 = vshll.u32 %v1531, 16
        %v1613 = vrot.slane %v1611, 5
        %v1614 = vor.u32 %v1610, %v1613
        %v1615 = vrot.slane %v1614, 4
        %v1617 = vshll.u32 %v1532, 16
        %v1619 = vrot.slane %v1617, 5
        %v1620 = vsel %vm920, %v1615, %v1619
        %v1622 = vshrl.u32 %v1533, 16
        %v1624 = vrot.slane %v1622, 4
        %v1625 = vshll.u32 %v1533, 16
        %v1627 = vrot.slane %v1625, 5
        %v1628 = vor.u32 %v1624, %v1627
        %v1629 = vrot.slane %v1628, 4
        %v1631 = vshll.u32 %v1534, 16
        %v1633 = vrot.slane %v1631, 5
        %v1634 = vsel %vm920, %v1629, %v1633
        %v1636 = vshrl.u32 %v1535, 16
        %v1638 = vrot.slane %v1636, 4
        %v1639 = vshll.u32 %v1535, 16
        %v1641 = vrot.slane %v1639, 5
        %v1642 = vor.u32 %v1638, %v1641
        %v1643 = vrot.slane %v1642, 4
        %v1645 = vshll.u32 %v1536, 16
        %v1647 = vrot.slane %v1645, 5
        %v1648 = vsel %vm920, %v1643, %v1647
        %s1649 = scalar_lea.vmem [#allocation9], 32
        %v1650 = vld [vmem:[%s1649] sm:$0xf]
        %v1651 = vld [vmem:[%s1649 + $0x4] sm:$0xf]
        %v1652 = vunpack.c.l.b16 %v1550
        %v1653 = vunpack.c.l.b16 %v1564
        %v1654 = vunpack.c.l.b16 %v1578
        %v1655 = vunpack.c.l.b16 %v1592
        %v1656 = vunpack.c.l.b16 %v1606
        %v1657 = vunpack.c.l.b16 %v1620
        %v1658 = vunpack.c.l.b16 %v1634
        %v1659 = vunpack.c.l.b16 %v1648
        %v1660 = vpack.c.b16 %v1653, %v1652
        %v1661 = vpack.c.b16 %v1655, %v1654
        %v1662 = vpack.c.b16 %v1657, %v1656
        %v1663 = vpack.c.b16 %v1659, %v1658
        %v1666 = vunpack.c.l.b16 %v1650
        %v1667 = vunpack.c.l.b16 %v1651
        %v1668 = vpack.c.b16 %v1667, %v1666
        %v1671 = vsel %vm597, %v1660, 0
        %v1674 = vsel %vm597, %v1661, 0
        %v1677 = vsel %vm597, %v1662, 0
        %v1680 = vsel %vm597, %v1663, 0
        %1682 = vmatprep.subr.bf16.mxu0 0
        %1683 = vmatpush1.bf16.msra.mxu0 %v1668
        %1684 = vmatprep.subr.bf16.mxu0 0
        %1685 = vmatpush1.bf16.msra.mxu0 0
        %1686 = vmatprep.subr.bf16.mxu0 0
        %1687 = vmatpush1.bf16.msra.mxu0 0
        %1688 = vmatprep.subr.bf16.mxu0 0
        %1689 = vmatpush1.bf16.msra.mxu0 0
        %1690 = vmatprep.subr.bf16.mxu0 0
        %1691 = vmatpush1.bf16.msra.mxu0 0
        %1692 = vmatprep.subr.bf16.mxu0 0
        %1693 = vmatpush1.bf16.msra.mxu0 0
        %1694 = vmatprep.subr.bf16.mxu0 0
        %1695 = vmatpush1.bf16.msra.mxu0 0
        %1696 = vmatprep.subr.bf16.mxu0 0
        %1697 = vmatpush1.bf16.msra.mxu0 0
        %1698 = vmatprep.subr.bf16.mxu0 0
        %1699 = vmatpush1.bf16.msra.mxu0 0
        %1700 = vmatprep.subr.bf16.mxu0 0
        %1701 = vmatpush1.bf16.msra.mxu0 0
        %1702 = vmatprep.subr.bf16.mxu0 0
        %1703 = vmatpush1.bf16.msra.mxu0 0
        %1704 = vmatprep.subr.bf16.mxu0 0
        %1705 = vmatpush1.bf16.msra.mxu0 0
        %1706 = vmatprep.subr.bf16.mxu0 0
        %1707 = vmatpush1.bf16.msra.mxu0 0
        %1708 = vmatprep.subr.bf16.mxu0 0
        %1709 = vmatpush1.bf16.msra.mxu0 0
        %1710 = vmatprep.subr.bf16.mxu0 0
        %1711 = vmatpush1.bf16.msra.mxu0 0
        %1712 = vmatprep.subr.bf16.mxu0 0
        %1713 = vmatpush1.bf16.msra.mxu0 0
        %1714 = vmatprep.mubr.bf16.mxu0 0
        %1715 = vmatmul.mubr.bf16.gmra.mrb[0].mxu0 %v1671
        %v1716 = vpop.f32.mrb[0].mxu0
        %v1717 = vadd.f32 0.0, %v1716
        %v1718 = vpop.f32.mrb[0].mxu0
        %v1719 = vpop.f32.mrb[0].mxu0
        %v1720 = vadd.f32 0.0, %v1719
        %v1721 = vpop.f32.mrb[0].mxu0
        %1722 = vmatprep.mubr.bf16.mxu0 0
        %1723 = vmatmul.mubr.bf16.gmra.mrb[0].mxu0 %v1674
        %v1724 = vpop.f32.mrb[0].mxu0
        %v1725 = vadd.f32 0.0, %v1724
        %v1726 = vpop.f32.mrb[0].mxu0
        %v1727 = vpop.f32.mrb[0].mxu0
        %v1728 = vadd.f32 0.0, %v1727
        %v1729 = vpop.f32.mrb[0].mxu0
        %1730 = vmatprep.mubr.bf16.mxu0 0
        %1731 = vmatmul.mubr.bf16.gmra.mrb[0].mxu0 %v1677
        %v1732 = vpop.f32.mrb[0].mxu0
        %v1733 = vadd.f32 0.0, %v1732
        %v1734 = vpop.f32.mrb[0].mxu0
        %v1735 = vpop.f32.mrb[0].mxu0
        %v1736 = vadd.f32 0.0, %v1735
        %v1737 = vpop.f32.mrb[0].mxu0
        %1738 = vmatprep.mubr.bf16.mxu0 0
        %1739 = vmatmul.mubr.bf16.gmra.mrb[0].mxu0 %v1680
        %v1740 = vpop.f32.mrb[0].mxu0
        %v1741 = vadd.f32 0.0, %v1740
        %v1742 = vpop.f32.mrb[0].mxu0
        %v1743 = vpop.f32.mrb[0].mxu0
        %v1744 = vadd.f32 0.0, %v1743
        %v1745 = vpop.f32.mrb[0].mxu0
        %1746 = vdwg.mxu0
        %v1747 = vadd.f32 %v1513, %v1717
        %v1748 = vadd.f32 %v1514, %v1720
        %v1749 = vadd.f32 %v1515, %v1725
        %v1750 = vadd.f32 %v1516, %v1728
        %v1751 = vadd.f32 %v1517, %v1733
        %v1752 = vadd.f32 %v1518, %v1736
        %v1753 = vadd.f32 %v1519, %v1741
        %v1754 = vadd.f32 %v1520, %v1744
        %v1755 = vld [vmem:[%s845] sm:$0xe]
        %v1756 = vld [vmem:[%s845 + $0x8] sm:$0xe]
        %v1757 = vld [vmem:[%s845 + $0x10] sm:$0xe]
        %v1758 = vld [vmem:[%s845 + $0x18] sm:$0xe]
        %v1759 = vld [vmem:[%s845 + $0x20] sm:$0xe]
        %v1760 = vld [vmem:[%s845 + $0x28] sm:$0xe]
        %v1761 = vld [vmem:[%s845 + $0x30] sm:$0xe]
        %v1762 = vld [vmem:[%s845 + $0x38] sm:$0xe]
        %v1779 = vrot.slane %v1755, 5
        %v1780 = vrot.slane %v1779, 4
        %v1781 = vrot.slane %v1522, 5
        %v1782 = vsel %vm1260, %v1780, %v1781
        %v1783 = vrot.slane %v1756, 5
        %v1784 = vrot.slane %v1783, 4
        %v1785 = vrot.slane %v1524, 5
        %v1786 = vsel %vm1260, %v1784, %v1785
        %v1787 = vrot.slane %v1757, 5
        %v1788 = vrot.slane %v1787, 4
        %v1789 = vrot.slane %v1526, 5
        %v1790 = vsel %vm1260, %v1788, %v1789
        %v1791 = vrot.slane %v1758, 5
        %v1792 = vrot.slane %v1791, 4
        %v1793 = vrot.slane %v1528, 5
        %v1794 = vsel %vm1260, %v1792, %v1793
        %v1795 = vrot.slane %v1759, 5
        %v1796 = vrot.slane %v1795, 4
        %v1797 = vrot.slane %v1530, 5
        %v1798 = vsel %vm1260, %v1796, %v1797
        %v1799 = vrot.slane %v1760, 5
        %v1800 = vrot.slane %v1799, 4
        %v1801 = vrot.slane %v1532, 5
        %v1802 = vsel %vm1260, %v1800, %v1801
        %v1803 = vrot.slane %v1761, 5
        %v1804 = vrot.slane %v1803, 4
        %v1805 = vrot.slane %v1534, 5
        %v1806 = vsel %vm1260, %v1804, %v1805
        %v1807 = vrot.slane %v1762, 5
        %v1808 = vrot.slane %v1807, 4
        %v1809 = vrot.slane %v1536, 5
        %v1810 = vsel %vm1260, %v1808, %v1809
        %s1811 = scalar_lea.vmem [#allocation9], 40
        %v1812 = vld [vmem:[%s1811] sm:$0xf]
        %v1813 = vld [vmem:[%s1811 + $0x4] sm:$0xf]
        %v1814 = vunpack.c.l.b16 %v1782
        %v1815 = vunpack.c.l.b16 %v1786
        %v1816 = vunpack.c.l.b16 %v1790
        %v1817 = vunpack.c.l.b16 %v1794
        %v1818 = vunpack.c.l.b16 %v1798
        %v1819 = vunpack.c.l.b16 %v1802
        %v1820 = vunpack.c.l.b16 %v1806
        %v1821 = vunpack.c.l.b16 %v1810
        %v1822 = vpack.c.b16 %v1815, %v1814
        %v1823 = vpack.c.b16 %v1817, %v1816
        %v1824 = vpack.c.b16 %v1819, %v1818
        %v1825 = vpack.c.b16 %v1821, %v1820
        %v1828 = vunpack.c.l.b16 %v1812
        %v1829 = vunpack.c.l.b16 %v1813
        %v1830 = vpack.c.b16 %v1829, %v1828
        %v1833 = vsel %vm597, %v1822, 0
        %v1836 = vsel %vm597, %v1823, 0
        %v1839 = vsel %vm597, %v1824, 0
        %v1842 = vsel %vm597, %v1825, 0
        %1844 = vmatprep.subr.bf16.mxu0 0
        %1845 = vmatpush1.bf16.msra.mxu0 %v1830
        %1846 = vmatprep.subr.bf16.mxu0 0
        %1847 = vmatpush1.bf16.msra.mxu0 0
        %1848 = vmatprep.subr.bf16.mxu0 0
        %1849 = vmatpush1.bf16.msra.mxu0 0
        %1850 = vmatprep.subr.bf16.mxu0 0
        %1851 = vmatpush1.bf16.msra.mxu0 0
        %1852 = vmatprep.subr.bf16.mxu0 0
        %1853 = vmatpush1.bf16.msra.mxu0 0
        %1854 = vmatprep.subr.bf16.mxu0 0
        %1855 = vmatpush1.bf16.msra.mxu0 0
        %1856 = vmatprep.subr.bf16.mxu0 0
        %1857 = vmatpush1.bf16.msra.mxu0 0
        %1858 = vmatprep.subr.bf16.mxu0 0
        %1859 = vmatpush1.bf16.msra.mxu0 0
        %1860 = vmatprep.subr.bf16.mxu0 0
        %1861 = vmatpush1.bf16.msra.mxu0 0
        %1862 = vmatprep.subr.bf16.mxu0 0
        %1863 = vmatpush1.bf16.msra.mxu0 0
        %1864 = vmatprep.subr.bf16.mxu0 0
        %1865 = vmatpush1.bf16.msra.mxu0 0
        %1866 = vmatprep.subr.bf16.mxu0 0
        %1867 = vmatpush1.bf16.msra.mxu0 0
        %1868 = vmatprep.subr.bf16.mxu0 0
        %1869 = vmatpush1.bf16.msra.mxu0 0
        %1870 = vmatprep.subr.bf16.mxu0 0
        %1871 = vmatpush1.bf16.msra.mxu0 0
        %1872 = vmatprep.subr.bf16.mxu0 0
        %1873 = vmatpush1.bf16.msra.mxu0 0
        %1874 = vmatprep.subr.bf16.mxu0 0
        %1875 = vmatpush1.bf16.msra.mxu0 0
        %1876 = vmatprep.mubr.bf16.mxu0 0
        %1877 = vmatmul.mubr.bf16.gmra.mrb[0].mxu0 %v1833
        %v1878 = vpop.f32.mrb[0].mxu0
        %v1879 = vadd.f32 0.0, %v1878
        %v1880 = vpop.f32.mrb[0].mxu0
        %v1881 = vpop.f32.mrb[0].mxu0
        %v1882 = vadd.f32 0.0, %v1881
        %v1883 = vpop.f32.mrb[0].mxu0
        %1884 = vmatprep.mubr.bf16.mxu0 0
        %1885 = vmatmul.mubr.bf16.gmra.mrb[0].mxu0 %v1836
        %v1886 = vpop.f32.mrb[0].mxu0
        %v1887 = vadd.f32 0.0, %v1886
        %v1888 = vpop.f32.mrb[0].mxu0
        %v1889 = vpop.f32.mrb[0].mxu0
        %v1890 = vadd.f32 0.0, %v1889
        %v1891 = vpop.f32.mrb[0].mxu0
        %1892 = vmatprep.mubr.bf16.mxu0 0
        %1893 = vmatmul.mubr.bf16.gmra.mrb[0].mxu0 %v1839
        %v1894 = vpop.f32.mrb[0].mxu0
        %v1895 = vadd.f32 0.0, %v1894
        %v1896 = vpop.f32.mrb[0].mxu0
        %v1897 = vpop.f32.mrb[0].mxu0
        %v1898 = vadd.f32 0.0, %v1897
        %v1899 = vpop.f32.mrb[0].mxu0
        %1900 = vmatprep.mubr.bf16.mxu0 0
        %1901 = vmatmul.mubr.bf16.gmra.mrb[0].mxu0 %v1842
        %v1902 = vpop.f32.mrb[0].mxu0
        %v1903 = vadd.f32 0.0, %v1902
        %v1904 = vpop.f32.mrb[0].mxu0
        %v1905 = vpop.f32.mrb[0].mxu0
        %v1906 = vadd.f32 0.0, %v1905
        %v1907 = vpop.f32.mrb[0].mxu0
        %1908 = vdwg.mxu0
        %v1909 = vadd.f32 %v1747, %v1879
        %v1910 = vadd.f32 %v1748, %v1882
        %v1911 = vadd.f32 %v1749, %v1887
        %v1912 = vadd.f32 %v1750, %v1890
        %v1913 = vadd.f32 %v1751, %v1895
        %v1914 = vadd.f32 %v1752, %v1898
        %v1915 = vadd.f32 %v1753, %v1903
        %v1916 = vadd.f32 %v1754, %v1906
        %s1917 = scalar_lea.vmem [#allocation2], 16
        %v1918 = vld [vmem:[%s1917] sm:$0xf]
        %v1919 = vld [vmem:[%s1917 + $0x8] sm:$0xf]
        %v1920 = vld [vmem:[%s1917 + $0x10] sm:$0xf]
        %v1921 = vld [vmem:[%s1917 + $0x18] sm:$0xf]
        %v1922 = vld [vmem:[%s1917 + $0x20] sm:$0xf]
        %v1923 = vld [vmem:[%s1917 + $0x28] sm:$0xf]
        %v1924 = vld [vmem:[%s1917 + $0x30] sm:$0xf]
        %v1925 = vld [vmem:[%s1917 + $0x38] sm:$0xf]
        %s1926 = scalar_lea.vmem [#allocation9], 48
        %v1927 = vld [vmem:[%s1926] sm:$0xf]
        %v1928 = vld [vmem:[%s1926 + $0x4] sm:$0xf]
        %v1937 = vunpack.c.l.b16 %v1918
        %v1938 = vunpack.c.l.b16 %v1919
        %v1939 = vunpack.c.l.b16 %v1920
        %v1940 = vunpack.c.l.b16 %v1921
        %v1941 = vunpack.c.l.b16 %v1922
        %v1942 = vunpack.c.l.b16 %v1923
        %v1943 = vunpack.c.l.b16 %v1924
        %v1944 = vunpack.c.l.b16 %v1925
        %v1945 = vpack.c.b16 %v1938, %v1937
        %v1946 = vpack.c.b16 %v1940, %v1939
        %v1947 = vpack.c.b16 %v1942, %v1941
        %v1948 = vpack.c.b16 %v1944, %v1943
        %v1951 = vunpack.c.l.b16 %v1927
        %v1952 = vunpack.c.l.b16 %v1928
        %v1953 = vpack.c.b16 %v1952, %v1951
        %v1956 = vsel %vm597, %v1945, 0
        %v1959 = vsel %vm597, %v1946, 0
        %v1962 = vsel %vm597, %v1947, 0
        %v1965 = vsel %vm597, %v1948, 0
        %1967 = vmatprep.subr.bf16.mxu0 0
        %1968 = vmatpush1.bf16.msra.mxu0 %v1953
        %1969 = vmatprep.subr.bf16.mxu0 0
        %1970 = vmatpush1.bf16.msra.mxu0 0
        %1971 = vmatprep.subr.bf16.mxu0 0
        %1972 = vmatpush1.bf16.msra.mxu0 0
        %1973 = vmatprep.subr.bf16.mxu0 0
        %1974 = vmatpush1.bf16.msra.mxu0 0
        %1975 = vmatprep.subr.bf16.mxu0 0
        %1976 = vmatpush1.bf16.msra.mxu0 0
        %1977 = vmatprep.subr.bf16.mxu0 0
        %1978 = vmatpush1.bf16.msra.mxu0 0
        %1979 = vmatprep.subr.bf16.mxu0 0
        %1980 = vmatpush1.bf16.msra.mxu0 0
        %1981 = vmatprep.subr.bf16.mxu0 0
        %1982 = vmatpush1.bf16.msra.mxu0 0
        %1983 = vmatprep.subr.bf16.mxu0 0
        %1984 = vmatpush1.bf16.msra.mxu0 0
        %1985 = vmatprep.subr.bf16.mxu0 0
        %1986 = vmatpush1.bf16.msra.mxu0 0
        %1987 = vmatprep.subr.bf16.mxu0 0
        %1988 = vmatpush1.bf16.msra.mxu0 0
        %1989 = vmatprep.subr.bf16.mxu0 0
        %1990 = vmatpush1.bf16.msra.mxu0 0
        %1991 = vmatprep.subr.bf16.mxu0 0
        %1992 = vmatpush1.bf16.msra.mxu0 0
        %1993 = vmatprep.subr.bf16.mxu0 0
        %1994 = vmatpush1.bf16.msra.mxu0 0
        %1995 = vmatprep.subr.bf16.mxu0 0
        %1996 = vmatpush1.bf16.msra.mxu0 0
        %1997 = vmatprep.subr.bf16.mxu0 0
        %1998 = vmatpush1.bf16.msra.mxu0 0
        %1999 = vmatprep.mubr.bf16.mxu0 0
        %2000 = vmatmul.mubr.bf16.gmra.mrb[0].mxu0 %v1956
        %v2001 = vpop.f32.mrb[0].mxu0
        %v2002 = vadd.f32 0.0, %v2001
        %v2003 = vpop.f32.mrb[0].mxu0
        %v2004 = vpop.f32.mrb[0].mxu0
        %v2005 = vadd.f32 0.0, %v2004
        %v2006 = vpop.f32.mrb[0].mxu0
        %2007 = vmatprep.mubr.bf16.mxu0 0
        %2008 = vmatmul.mubr.bf16.gmra.mrb[0].mxu0 %v1959
        %v2009 = vpop.f32.mrb[0].mxu0
        %v2010 = vadd.f32 0.0, %v2009
        %v2011 = vpop.f32.mrb[0].mxu0
        %v2012 = vpop.f32.mrb[0].mxu0
        %v2013 = vadd.f32 0.0, %v2012
        %v2014 = vpop.f32.mrb[0].mxu0
        %2015 = vmatprep.mubr.bf16.mxu0 0
        %2016 = vmatmul.mubr.bf16.gmra.mrb[0].mxu0 %v1962
        %v2017 = vpop.f32.mrb[0].mxu0
        %v2018 = vadd.f32 0.0, %v2017
        %v2019 = vpop.f32.mrb[0].mxu0
        %v2020 = vpop.f32.mrb[0].mxu0
        %v2021 = vadd.f32 0.0, %v2020
        %v2022 = vpop.f32.mrb[0].mxu0
        %2023 = vmatprep.mubr.bf16.mxu0 0
        %2024 = vmatmul.mubr.bf16.gmra.mrb[0].mxu0 %v1965
        %v2025 = vpop.f32.mrb[0].mxu0
        %v2026 = vadd.f32 0.0, %v2025
        %v2027 = vpop.f32.mrb[0].mxu0
        %v2028 = vpop.f32.mrb[0].mxu0
        %v2029 = vadd.f32 0.0, %v2028
        %v2030 = vpop.f32.mrb[0].mxu0
        %2031 = vdwg.mxu0
        %v2032 = vadd.f32 %v1909, %v2002
        %v2033 = vadd.f32 %v1910, %v2005
        %v2034 = vadd.f32 %v1911, %v2010
        %v2035 = vadd.f32 %v1912, %v2013
        %v2036 = vadd.f32 %v1913, %v2018
        %v2037 = vadd.f32 %v1914, %v2021
        %v2038 = vadd.f32 %v1915, %v2026
        %v2039 = vadd.f32 %v1916, %v2029
        %v2040 = vld [vmem:[%s1917] sm:$0xf]
        %v2041 = vld [vmem:[%s1917 + $0x4] sm:$0x1]
        %v2042 = vld [vmem:[%s1917 + $0x8] sm:$0xf]
        %v2043 = vld [vmem:[%s1917 + $0xc] sm:$0x1]
        %v2044 = vld [vmem:[%s1917 + $0x10] sm:$0xf]
        %v2045 = vld [vmem:[%s1917 + $0x14] sm:$0x1]
        %v2046 = vld [vmem:[%s1917 + $0x18] sm:$0xf]
        %v2047 = vld [vmem:[%s1917 + $0x1c] sm:$0x1]
        %v2048 = vld [vmem:[%s1917 + $0x20] sm:$0xf]
        %v2049 = vld [vmem:[%s1917 + $0x24] sm:$0x1]
        %v2050 = vld [vmem:[%s1917 + $0x28] sm:$0xf]
        %v2051 = vld [vmem:[%s1917 + $0x2c] sm:$0x1]
        %v2052 = vld [vmem:[%s1917 + $0x30] sm:$0xf]
        %v2053 = vld [vmem:[%s1917 + $0x34] sm:$0x1]
        %v2054 = vld [vmem:[%s1917 + $0x38] sm:$0xf]
        %v2055 = vld [vmem:[%s1917 + $0x3c] sm:$0x1]
        %v2057 = vshrl.u32 %v2040, 16
        %v2059 = vrot.slane %v2057, 4
        %v2060 = vshll.u32 %v2040, 16
        %v2062 = vrot.slane %v2060, 5
        %v2063 = vor.u32 %v2059, %v2062
        %v2064 = vrot.slane %v2063, 4
        %v2066 = vshll.u32 %v2041, 16
        %v2068 = vrot.slane %v2066, 5
        %v2069 = vsel %vm920, %v2064, %v2068
        %v2071 = vshrl.u32 %v2042, 16
        %v2073 = vrot.slane %v2071, 4
        %v2074 = vshll.u32 %v2042, 16
        %v2076 = vrot.slane %v2074, 5
        %v2077 = vor.u32 %v2073, %v2076
        %v2078 = vrot.slane %v2077, 4
        %v2080 = vshll.u32 %v2043, 16
        %v2082 = vrot.slane %v2080, 5
        %v2083 = vsel %vm920, %v2078, %v2082
        %v2085 = vshrl.u32 %v2044, 16
        %v2087 = vrot.slane %v2085, 4
        %v2088 = vshll.u32 %v2044, 16
        %v2090 = vrot.slane %v2088, 5
        %v2091 = vor.u32 %v2087, %v2090
        %v2092 = vrot.slane %v2091, 4
        %v2094 = vshll.u32 %v2045, 16
        %v2096 = vrot.slane %v2094, 5
        %v2097 = vsel %vm920, %v2092, %v2096
        %v2099 = vshrl.u32 %v2046, 16
        %v2101 = vrot.slane %v2099, 4
        %v2102 = vshll.u32 %v2046, 16
        %v2104 = vrot.slane %v2102, 5
        %v2105 = vor.u32 %v2101, %v2104
        %v2106 = vrot.slane %v2105, 4
        %v2108 = vshll.u32 %v2047, 16
        %v2110 = vrot.slane %v2108, 5
        %v2111 = vsel %vm920, %v2106, %v2110
        %v2113 = vshrl.u32 %v2048, 16
        %v2115 = vrot.slane %v2113, 4
        %v2116 = vshll.u32 %v2048, 16
        %v2118 = vrot.slane %v2116, 5
        %v2119 = vor.u32 %v2115, %v2118
        %v2120 = vrot.slane %v2119, 4
        %v2122 = vshll.u32 %v2049, 16
        %v2124 = vrot.slane %v2122, 5
        %v2125 = vsel %vm920, %v2120, %v2124
        %v2127 = vshrl.u32 %v2050, 16
        %v2129 = vrot.slane %v2127, 4
        %v2130 = vshll.u32 %v2050, 16
        %v2132 = vrot.slane %v2130, 5
        %v2133 = vor.u32 %v2129, %v2132
        %v2134 = vrot.slane %v2133, 4
        %v2136 = vshll.u32 %v2051, 16
        %v2138 = vrot.slane %v2136, 5
        %v2139 = vsel %vm920, %v2134, %v2138
        %v2141 = vshrl.u32 %v2052, 16
        %v2143 = vrot.slane %v2141, 4
        %v2144 = vshll.u32 %v2052, 16
        %v2146 = vrot.slane %v2144, 5
        %v2147 = vor.u32 %v2143, %v2146
        %v2148 = vrot.slane %v2147, 4
        %v2150 = vshll.u32 %v2053, 16
        %v2152 = vrot.slane %v2150, 5
        %v2153 = vsel %vm920, %v2148, %v2152
        %v2155 = vshrl.u32 %v2054, 16
        %v2157 = vrot.slane %v2155, 4
        %v2158 = vshll.u32 %v2054, 16
        %v2160 = vrot.slane %v2158, 5
        %v2161 = vor.u32 %v2157, %v2160
        %v2162 = vrot.slane %v2161, 4
        %v2164 = vshll.u32 %v2055, 16
        %v2166 = vrot.slane %v2164, 5
        %v2167 = vsel %vm920, %v2162, %v2166
        %s2168 = scalar_lea.vmem [#allocation9], 56
        %v2169 = vld [vmem:[%s2168] sm:$0xf]
        %v2170 = vld [vmem:[%s2168 + $0x4] sm:$0xf]
        %v2171 = vunpack.c.l.b16 %v2069
        %v2172 = vunpack.c.l.b16 %v2083
        %v2173 = vunpack.c.l.b16 %v2097
        %v2174 = vunpack.c.l.b16 %v2111
        %v2175 = vunpack.c.l.b16 %v2125
        %v2176 = vunpack.c.l.b16 %v2139
        %v2177 = vunpack.c.l.b16 %v2153
        %v2178 = vunpack.c.l.b16 %v2167
        %v2179 = vpack.c.b16 %v2172, %v2171
        %v2180 = vpack.c.b16 %v2174, %v2173
        %v2181 = vpack.c.b16 %v2176, %v2175
        %v2182 = vpack.c.b16 %v2178, %v2177
        %v2185 = vunpack.c.l.b16 %v2169
        %v2186 = vunpack.c.l.b16 %v2170
        %v2187 = vpack.c.b16 %v2186, %v2185
        %v2190 = vsel %vm597, %v2179, 0
        %v2193 = vsel %vm597, %v2180, 0
        %v2196 = vsel %vm597, %v2181, 0
        %v2199 = vsel %vm597, %v2182, 0
        %2201 = vmatprep.subr.bf16.mxu0 0
        %2202 = vmatpush1.bf16.msra.mxu0 %v2187
        %2203 = vmatprep.subr.bf16.mxu0 0
        %2204 = vmatpush1.bf16.msra.mxu0 0
        %2205 = vmatprep.subr.bf16.mxu0 0
        %2206 = vmatpush1.bf16.msra.mxu0 0
        %2207 = vmatprep.subr.bf16.mxu0 0
        %2208 = vmatpush1.bf16.msra.mxu0 0
        %2209 = vmatprep.subr.bf16.mxu0 0
        %2210 = vmatpush1.bf16.msra.mxu0 0
        %2211 = vmatprep.subr.bf16.mxu0 0
        %2212 = vmatpush1.bf16.msra.mxu0 0
        %2213 = vmatprep.subr.bf16.mxu0 0
        %2214 = vmatpush1.bf16.msra.mxu0 0
        %2215 = vmatprep.subr.bf16.mxu0 0
        %2216 = vmatpush1.bf16.msra.mxu0 0
        %2217 = vmatprep.subr.bf16.mxu0 0
        %2218 = vmatpush1.bf16.msra.mxu0 0
        %2219 = vmatprep.subr.bf16.mxu0 0
        %2220 = vmatpush1.bf16.msra.mxu0 0
        %2221 = vmatprep.subr.bf16.mxu0 0
        %2222 = vmatpush1.bf16.msra.mxu0 0
        %2223 = vmatprep.subr.bf16.mxu0 0
        %2224 = vmatpush1.bf16.msra.mxu0 0
        %2225 = vmatprep.subr.bf16.mxu0 0
        %2226 = vmatpush1.bf16.msra.mxu0 0
        %2227 = vmatprep.subr.bf16.mxu0 0
        %2228 = vmatpush1.bf16.msra.mxu0 0
        %2229 = vmatprep.subr.bf16.mxu0 0
        %2230 = vmatpush1.bf16.msra.mxu0 0
        %2231 = vmatprep.subr.bf16.mxu0 0
        %2232 = vmatpush1.bf16.msra.mxu0 0
        %2233 = vmatprep.mubr.bf16.mxu0 0
        %2234 = vmatmul.mubr.bf16.gmra.mrb[0].mxu0 %v2190
        %v2235 = vpop.f32.mrb[0].mxu0
        %v2236 = vadd.f32 0.0, %v2235
        %v2237 = vpop.f32.mrb[0].mxu0
        %v2238 = vpop.f32.mrb[0].mxu0
        %v2239 = vadd.f32 0.0, %v2238
        %v2240 = vpop.f32.mrb[0].mxu0
        %2241 = vmatprep.mubr.bf16.mxu0 0
        %2242 = vmatmul.mubr.bf16.gmra.mrb[0].mxu0 %v2193
        %v2243 = vpop.f32.mrb[0].mxu0
        %v2244 = vadd.f32 0.0, %v2243
        %v2245 = vpop.f32.mrb[0].mxu0
        %v2246 = vpop.f32.mrb[0].mxu0
        %v2247 = vadd.f32 0.0, %v2246
        %v2248 = vpop.f32.mrb[0].mxu0
        %2249 = vmatprep.mubr.bf16.mxu0 0
        %2250 = vmatmul.mubr.bf16.gmra.mrb[0].mxu0 %v2196
        %v2251 = vpop.f32.mrb[0].mxu0
        %v2252 = vadd.f32 0.0, %v2251
        %v2253 = vpop.f32.mrb[0].mxu0
        %v2254 = vpop.f32.mrb[0].mxu0
        %v2255 = vadd.f32 0.0, %v2254
        %v2256 = vpop.f32.mrb[0].mxu0
        %2257 = vmatprep.mubr.bf16.mxu0 0
        %2258 = vmatmul.mubr.bf16.gmra.mrb[0].mxu0 %v2199
        %v2259 = vpop.f32.mrb[0].mxu0
        %v2260 = vadd.f32 0.0, %v2259
        %v2261 = vpop.f32.mrb[0].mxu0
        %v2262 = vpop.f32.mrb[0].mxu0
        %v2263 = vadd.f32 0.0, %v2262
        %v2264 = vpop.f32.mrb[0].mxu0
        %2265 = vdwg.mxu0
        %v2266 = vadd.f32 %v2032, %v2236
        %v2267 = vadd.f32 %v2033, %v2239
        %v2268 = vadd.f32 %v2034, %v2244
        %v2269 = vadd.f32 %v2035, %v2247
        %v2270 = vadd.f32 %v2036, %v2252
        %v2271 = vadd.f32 %v2037, %v2255
        %v2272 = vadd.f32 %v2038, %v2260
        %v2273 = vadd.f32 %v2039, %v2263
        %v2274 = vld [vmem:[%s1917] sm:$0xe]
        %v2275 = vld [vmem:[%s1917 + $0x8] sm:$0xe]
        %v2276 = vld [vmem:[%s1917 + $0x10] sm:$0xe]
        %v2277 = vld [vmem:[%s1917 + $0x18] sm:$0xe]
        %v2278 = vld [vmem:[%s1917 + $0x20] sm:$0xe]
        %v2279 = vld [vmem:[%s1917 + $0x28] sm:$0xe]
        %v2280 = vld [vmem:[%s1917 + $0x30] sm:$0xe]
        %v2281 = vld [vmem:[%s1917 + $0x38] sm:$0xe]
        %v2298 = vrot.slane %v2274, 5
        %v2299 = vrot.slane %v2298, 4
        %v2300 = vrot.slane %v2041, 5
        %v2301 = vsel %vm1260, %v2299, %v2300
        %v2302 = vrot.slane %v2275, 5
        %v2303 = vrot.slane %v2302, 4
        %v2304 = vrot.slane %v2043, 5
        %v2305 = vsel %vm1260, %v2303, %v2304
        %v2306 = vrot.slane %v2276, 5
        %v2307 = vrot.slane %v2306, 4
        %v2308 = vrot.slane %v2045, 5
        %v2309 = vsel %vm1260, %v2307, %v2308
        %v2310 = vrot.slane %v2277, 5
        %v2311 = vrot.slane %v2310, 4
        %v2312 = vrot.slane %v2047, 5
        %v2313 = vsel %vm1260, %v2311, %v2312
        %v2314 = vrot.slane %v2278, 5
        %v2315 = vrot.slane %v2314, 4
        %v2316 = vrot.slane %v2049, 5
        %v2317 = vsel %vm1260, %v2315, %v2316
        %v2318 = vrot.slane %v2279, 5
        %v2319 = vrot.slane %v2318, 4
        %v2320 = vrot.slane %v2051, 5
        %v2321 = vsel %vm1260, %v2319, %v2320
        %v2322 = vrot.slane %v2280, 5
        %v2323 = vrot.slane %v2322, 4
        %v2324 = vrot.slane %v2053, 5
        %v2325 = vsel %vm1260, %v2323, %v2324
        %v2326 = vrot.slane %v2281, 5
        %v2327 = vrot.slane %v2326, 4
        %v2328 = vrot.slane %v2055, 5
        %v2329 = vsel %vm1260, %v2327, %v2328
        %s2330 = scalar_lea.vmem [#allocation9], 64
        %v2331 = vld [vmem:[%s2330] sm:$0xf]
        %v2332 = vld [vmem:[%s2330 + $0x4] sm:$0xf]
        %v2333 = vunpack.c.l.b16 %v2301
        %v2334 = vunpack.c.l.b16 %v2305
        %v2335 = vunpack.c.l.b16 %v2309
        %v2336 = vunpack.c.l.b16 %v2313
        %v2337 = vunpack.c.l.b16 %v2317
        %v2338 = vunpack.c.l.b16 %v2321
        %v2339 = vunpack.c.l.b16 %v2325
        %v2340 = vunpack.c.l.b16 %v2329
        %v2341 = vpack.c.b16 %v2334, %v2333
        %v2342 = vpack.c.b16 %v2336, %v2335
        %v2343 = vpack.c.b16 %v2338, %v2337
        %v2344 = vpack.c.b16 %v2340, %v2339
        %v2347 = vunpack.c.l.b16 %v2331
        %v2348 = vunpack.c.l.b16 %v2332
        %v2349 = vpack.c.b16 %v2348, %v2347
        %v2352 = vsel %vm597, %v2341, 0
        %v2355 = vsel %vm597, %v2342, 0
        %v2358 = vsel %vm597, %v2343, 0
        %v2361 = vsel %vm597, %v2344, 0
        %2363 = vmatprep.subr.bf16.mxu0 0
        %2364 = vmatpush1.bf16.msra.mxu0 %v2349
        %2365 = vmatprep.subr.bf16.mxu0 0
        %2366 = vmatpush1.bf16.msra.mxu0 0
        %2367 = vmatprep.subr.bf16.mxu0 0
        %2368 = vmatpush1.bf16.msra.mxu0 0
        %2369 = vmatprep.subr.bf16.mxu0 0
        %2370 = vmatpush1.bf16.msra.mxu0 0
        %2371 = vmatprep.subr.bf16.mxu0 0
        %2372 = vmatpush1.bf16.msra.mxu0 0
        %2373 = vmatprep.subr.bf16.mxu0 0
        %2374 = vmatpush1.bf16.msra.mxu0 0
        %2375 = vmatprep.subr.bf16.mxu0 0
        %2376 = vmatpush1.bf16.msra.mxu0 0
        %2377 = vmatprep.subr.bf16.mxu0 0
        %2378 = vmatpush1.bf16.msra.mxu0 0
        %2379 = vmatprep.subr.bf16.mxu0 0
        %2380 = vmatpush1.bf16.msra.mxu0 0
        %2381 = vmatprep.subr.bf16.mxu0 0
        %2382 = vmatpush1.bf16.msra.mxu0 0
        %2383 = vmatprep.subr.bf16.mxu0 0
        %2384 = vmatpush1.bf16.msra.mxu0 0
        %2385 = vmatprep.subr.bf16.mxu0 0
        %2386 = vmatpush1.bf16.msra.mxu0 0
        %2387 = vmatprep.subr.bf16.mxu0 0
        %2388 = vmatpush1.bf16.msra.mxu0 0
        %2389 = vmatprep.subr.bf16.mxu0 0
        %2390 = vmatpush1.bf16.msra.mxu0 0
        %2391 = vmatprep.subr.bf16.mxu0 0
        %2392 = vmatpush1.bf16.msra.mxu0 0
        %2393 = vmatprep.subr.bf16.mxu0 0
        %2394 = vmatpush1.bf16.msra.mxu0 0
        %2395 = vmatprep.mubr.bf16.mxu0 0
        %2396 = vmatmul.mubr.bf16.gmra.mrb[0].mxu0 %v2352
        %v2397 = vpop.f32.mrb[0].mxu0
        %v2398 = vadd.f32 0.0, %v2397
        %v2399 = vpop.f32.mrb[0].mxu0
        %v2400 = vpop.f32.mrb[0].mxu0
        %v2401 = vadd.f32 0.0, %v2400
        %v2402 = vpop.f32.mrb[0].mxu0
        %2403 = vmatprep.mubr.bf16.mxu0 0
        %2404 = vmatmul.mubr.bf16.gmra.mrb[0].mxu0 %v2355
        %v2405 = vpop.f32.mrb[0].mxu0
        %v2406 = vadd.f32 0.0, %v2405
        %v2407 = vpop.f32.mrb[0].mxu0
        %v2408 = vpop.f32.mrb[0].mxu0
        %v2409 = vadd.f32 0.0, %v2408
        %v2410 = vpop.f32.mrb[0].mxu0
        %2411 = vmatprep.mubr.bf16.mxu0 0
        %2412 = vmatmul.mubr.bf16.gmra.mrb[0].mxu0 %v2358
        %v2413 = vpop.f32.mrb[0].mxu0
        %v2414 = vadd.f32 0.0, %v2413
        %v2415 = vpop.f32.mrb[0].mxu0
        %v2416 = vpop.f32.mrb[0].mxu0
        %v2417 = vadd.f32 0.0, %v2416
        %v2418 = vpop.f32.mrb[0].mxu0
        %2419 = vmatprep.mubr.bf16.mxu0 0
        %2420 = vmatmul.mubr.bf16.gmra.mrb[0].mxu0 %v2361
        %v2421 = vpop.f32.mrb[0].mxu0
        %v2422 = vadd.f32 0.0, %v2421
        %v2423 = vpop.f32.mrb[0].mxu0
        %v2424 = vpop.f32.mrb[0].mxu0
        %v2425 = vadd.f32 0.0, %v2424
        %v2426 = vpop.f32.mrb[0].mxu0
        %2427 = vdwg.mxu0
        %v2428 = vadd.f32 %v2266, %v2398
        %v2429 = vadd.f32 %v2267, %v2401
        %v2430 = vadd.f32 %v2268, %v2406
        %v2431 = vadd.f32 %v2269, %v2409
        %v2432 = vadd.f32 %v2270, %v2414
        %v2433 = vadd.f32 %v2271, %v2417
        %v2434 = vadd.f32 %v2272, %v2422
        %v2435 = vadd.f32 %v2273, %v2425
        %v2436 = vld [vmem:[%s484] sm:$0xff]
        %2437 = vxpose.xlu0.b32.start [1/16] %v2436, 128
        %2438 = vxpose.xlu0.b32.cont [2/16] 0.0, 128
        %2439 = vxpose.xlu0.b32.cont [3/16] 0.0, 128
        %2440 = vxpose.xlu0.b32.cont [4/16] 0.0, 128
        %2441 = vxpose.xlu0.b32.cont [5/16] 0.0, 128
        %2442 = vxpose.xlu0.b32.cont [6/16] 0.0, 128
        %2443 = vxpose.xlu0.b32.cont [7/16] 0.0, 128
        %2444 = vxpose.xlu0.b32.cont [8/16] 0.0, 128
        %2445 = vxpose.xlu0.b32.cont [9/16] 0.0, 128
        %2446 = vxpose.xlu0.b32.cont [10/16] 0.0, 128
        %2447 = vxpose.xlu0.b32.cont [11/16] 0.0, 128
        %2448 = vxpose.xlu0.b32.cont [12/16] 0.0, 128
        %2449 = vxpose.xlu0.b32.cont [13/16] 0.0, 128
        %2450 = vxpose.xlu0.b32.cont [14/16] 0.0, 128
        %2451 = vxpose.xlu0.b32.cont [15/16] 0.0, 128
        %2452 = vxpose.xlu0.b32.end [16/16] 0.0, 128
        %v2453 = vpop.trf.xlu0
        %v2454 = vpop.trf.xlu0
        %v2455 = vpop.trf.xlu0
        %v2456 = vpop.trf.xlu0
        %v2457 = vpop.trf.xlu0
        %v2458 = vpop.trf.xlu0
        %v2459 = vpop.trf.xlu0
        %v2460 = vpop.trf.xlu0
        %v2461 = vpop.trf.xlu0
        %v2462 = vpop.trf.xlu0
        %v2463 = vpop.trf.xlu0
        %v2464 = vpop.trf.xlu0
        %v2465 = vpop.trf.xlu0
        %v2466 = vpop.trf.xlu0
        %v2467 = vpop.trf.xlu0
        %v2468 = vpop.trf.xlu0
        %v2469 = vpack.c.bf16 %v2453, %v2453
        %v2470 = vpack.c.bf16 %v2454, %v2454
        %v2471 = vpack.c.bf16 %v2455, %v2455
        %v2472 = vpack.c.bf16 %v2456, %v2456
        %v2473 = vpack.c.bf16 %v2457, %v2457
        %v2474 = vpack.c.bf16 %v2458, %v2458
        %v2475 = vpack.c.bf16 %v2459, %v2459
        %v2476 = vpack.c.bf16 %v2460, %v2460
        %v2485 = vunpack.c.l.b16 %v2469
        %v2486 = vunpack.c.l.b16 %v2470
        %v2487 = vunpack.c.l.b16 %v2471
        %v2488 = vunpack.c.l.b16 %v2472
        %v2489 = vunpack.c.l.b16 %v2473
        %v2490 = vunpack.c.l.b16 %v2474
        %v2491 = vunpack.c.l.b16 %v2475
        %v2492 = vunpack.c.l.b16 %v2476
        %v2493 = vpack.c.b16 %v2485, %v2485
        %v2494 = vpack.c.b16 %v2486, %v2486
        %v2495 = vpack.c.b16 %v2487, %v2487
        %v2496 = vpack.c.b16 %v2488, %v2488
        %v2497 = vpack.c.b16 %v2489, %v2489
        %v2498 = vpack.c.b16 %v2490, %v2490
        %v2499 = vpack.c.b16 %v2491, %v2491
        %v2500 = vpack.c.b16 %v2492, %v2492
        %v2502 = vshrl.u32 %v2493, 16
        %v2504 = vrot.slane %v2502, 7
        %v2505 = vshll.u32 %v2493, 16
        %v2507 = vor.u32 %v2504, %v2505
        %v2508 = vrot.slane %v2504, 4
        %v2510 = vshrl.u32 %v2494, 16
        %v2512 = vrot.slane %v2510, 7
        %v2513 = vshll.u32 %v2494, 16
        %v2515 = vor.u32 %v2512, %v2513
        %v2516 = vrot.slane %v2512, 4
        %v2518 = vshrl.u32 %v2495, 16
        %v2520 = vrot.slane %v2518, 7
        %v2521 = vshll.u32 %v2495, 16
        %v2523 = vor.u32 %v2520, %v2521
        %v2524 = vrot.slane %v2520, 4
        %v2526 = vshrl.u32 %v2496, 16
        %v2528 = vrot.slane %v2526, 7
        %v2529 = vshll.u32 %v2496, 16
        %v2531 = vor.u32 %v2528, %v2529
        %v2532 = vrot.slane %v2528, 4
        %v2534 = vshrl.u32 %v2497, 16
        %v2536 = vrot.slane %v2534, 7
        %v2537 = vshll.u32 %v2497, 16
        %v2539 = vor.u32 %v2536, %v2537
        %v2540 = vrot.slane %v2536, 4
        %v2542 = vshrl.u32 %v2498, 16
        %v2544 = vrot.slane %v2542, 7
        %v2545 = vshll.u32 %v2498, 16
        %v2547 = vor.u32 %v2544, %v2545
        %v2548 = vrot.slane %v2544, 4
        %v2550 = vshrl.u32 %v2499, 16
        %v2552 = vrot.slane %v2550, 7
        %v2553 = vshll.u32 %v2499, 16
        %v2555 = vor.u32 %v2552, %v2553
        %v2556 = vrot.slane %v2552, 4
        %v2558 = vshrl.u32 %v2500, 16
        %v2560 = vrot.slane %v2558, 7
        %v2561 = vshll.u32 %v2500, 16
        %v2563 = vor.u32 %v2560, %v2561
        %v2564 = vrot.slane %v2560, 4
        %vm2581 = vcmask 60416
        %vm2582 = vmand %vm2581, %vm847
        %v2583 = vsel %vm2582, %v2507, %v1521
        %2584 = vst [vmem:[%s845] sm:$0xf] %v2583
        %vm2585 = vcmask 57344
        %vm2586 = vmand %vm2585, %vm853
        %v2587 = vld [vmem:[%s845 + $0x4] sm:$0x1]
        %v2588 = vsel %vm2586, %v2508, %v2587
        %2589 = vst [vmem:[%s845 + $0x4] sm:$0x1] %v2588
        %v2590 = vld [vmem:[%s845 + $0x8] sm:$0xf]
        %v2591 = vsel %vm2582, %v2515, %v2590
        %2592 = vst [vmem:[%s845 + $0x8] sm:$0xf] %v2591
        %v2593 = vld [vmem:[%s845 + $0xc] sm:$0x1]
        %v2594 = vsel %vm2586, %v2516, %v2593
        %2595 = vst [vmem:[%s845 + $0xc] sm:$0x1] %v2594
        %v2596 = vld [vmem:[%s845 + $0x10] sm:$0xf]
        %v2597 = vsel %vm2582, %v2523, %v2596
        %2598 = vst [vmem:[%s845 + $0x10] sm:$0xf] %v2597
        %v2599 = vld [vmem:[%s845 + $0x14] sm:$0x1]
        %v2600 = vsel %vm2586, %v2524, %v2599
        %2601 = vst [vmem:[%s845 + $0x14] sm:$0x1] %v2600
        %v2602 = vld [vmem:[%s845 + $0x18] sm:$0xf]
        %v2603 = vsel %vm2582, %v2531, %v2602
        %2604 = vst [vmem:[%s845 + $0x18] sm:$0xf] %v2603
        %v2605 = vld [vmem:[%s845 + $0x1c] sm:$0x1]
        %v2606 = vsel %vm2586, %v2532, %v2605
        %2607 = vst [vmem:[%s845 + $0x1c] sm:$0x1] %v2606
        %v2608 = vld [vmem:[%s845 + $0x20] sm:$0xf]
        %v2609 = vsel %vm2582, %v2539, %v2608
        %2610 = vst [vmem:[%s845 + $0x20] sm:$0xf] %v2609
        %v2611 = vld [vmem:[%s845 + $0x24] sm:$0x1]
        %v2612 = vsel %vm2586, %v2540, %v2611
        %2613 = vst [vmem:[%s845 + $0x24] sm:$0x1] %v2612
        %v2614 = vld [vmem:[%s845 + $0x28] sm:$0xf]
        %v2615 = vsel %vm2582, %v2547, %v2614
        %2616 = vst [vmem:[%s845 + $0x28] sm:$0xf] %v2615
        %v2617 = vld [vmem:[%s845 + $0x2c] sm:$0x1]
        %v2618 = vsel %vm2586, %v2548, %v2617
        %2619 = vst [vmem:[%s845 + $0x2c] sm:$0x1] %v2618
        %v2620 = vld [vmem:[%s845 + $0x30] sm:$0xf]
        %v2621 = vsel %vm2582, %v2555, %v2620
        %2622 = vst [vmem:[%s845 + $0x30] sm:$0xf] %v2621
        %v2623 = vld [vmem:[%s845 + $0x34] sm:$0x1]
        %v2624 = vsel %vm2586, %v2556, %v2623
        %2625 = vst [vmem:[%s845 + $0x34] sm:$0x1] %v2624
        %v2626 = vld [vmem:[%s845 + $0x38] sm:$0xf]
        %v2627 = vsel %vm2582, %v2563, %v2626
        %2628 = vst [vmem:[%s845 + $0x38] sm:$0xf] %v2627
        %v2629 = vld [vmem:[%s845 + $0x3c] sm:$0x1]
        %v2630 = vsel %vm2586, %v2564, %v2629
        %2631 = vst [vmem:[%s845 + $0x3c] sm:$0x1] %v2630
        %v2632 = vld [vmem:[#allocation2] sm:$0xf]
        %v2633 = vld [vmem:[#allocation2 + $0x8] sm:$0xf]
        %v2634 = vld [vmem:[#allocation2 + $0x10] sm:$0xf]
        %v2635 = vld [vmem:[#allocation2 + $0x18] sm:$0xf]
        %v2636 = vld [vmem:[#allocation2 + $0x20] sm:$0xf]
        %v2637 = vld [vmem:[#allocation2 + $0x28] sm:$0xf]
        %v2638 = vld [vmem:[#allocation2 + $0x30] sm:$0xf]
        %v2639 = vld [vmem:[#allocation2 + $0x38] sm:$0xf]
        %v2640 = vld [vmem:[#allocation11] sm:$0xf]
        %v2641 = vld [vmem:[#allocation2 + $0x4] sm:$0x1]
        %v2642 = vld [vmem:[#allocation2 + $0xc] sm:$0x1]
        %v2643 = vld [vmem:[#allocation2 + $0x14] sm:$0x1]
        %v2644 = vld [vmem:[#allocation2 + $0x1c] sm:$0x1]
        %v2645 = vld [vmem:[#allocation2 + $0x24] sm:$0x1]
        %v2646 = vld [vmem:[#allocation2 + $0x2c] sm:$0x1]
        %v2647 = vld [vmem:[#allocation2 + $0x34] sm:$0x1]
        %v2648 = vld [vmem:[#allocation2 + $0x3c] sm:$0x1]
        %v2650 = vshrl.u32 %v2632, 16
        %v2652 = vrot.slane %v2650, 4
        %v2653 = vshll.u32 %v2632, 16
        %v2655 = vrot.slane %v2653, 5
        %v2656 = vor.u32 %v2652, %v2655
        %v2657 = vrot.slane %v2656, 4
        %v2659 = vshll.u32 %v2641, 16
        %v2661 = vrot.slane %v2659, 5
        %v2662 = vsel %vm920, %v2657, %v2661
        %v2664 = vshrl.u32 %v2633, 16
        %v2666 = vrot.slane %v2664, 4
        %v2667 = vshll.u32 %v2633, 16
        %v2669 = vrot.slane %v2667, 5
        %v2670 = vor.u32 %v2666, %v2669
        %v2671 = vrot.slane %v2670, 4
        %v2673 = vshll.u32 %v2642, 16
        %v2675 = vrot.slane %v2673, 5
        %v2676 = vsel %vm920, %v2671, %v2675
        %v2678 = vshrl.u32 %v2634, 16
        %v2680 = vrot.slane %v2678, 4
        %v2681 = vshll.u32 %v2634, 16
        %v2683 = vrot.slane %v2681, 5
        %v2684 = vor.u32 %v2680, %v2683
        %v2685 = vrot.slane %v2684, 4
        %v2687 = vshll.u32 %v2643, 16
        %v2689 = vrot.slane %v2687, 5
        %v2690 = vsel %vm920, %v2685, %v2689
        %v2692 = vshrl.u32 %v2635, 16
        %v2694 = vrot.slane %v2692, 4
        %v2695 = vshll.u32 %v2635, 16
        %v2697 = vrot.slane %v2695, 5
        %v2698 = vor.u32 %v2694, %v2697
        %v2699 = vrot.slane %v2698, 4
        %v2701 = vshll.u32 %v2644, 16
        %v2703 = vrot.slane %v2701, 5
        %v2704 = vsel %vm920, %v2699, %v2703
        %v2706 = vshrl.u32 %v2636, 16
        %v2708 = vrot.slane %v2706, 4
        %v2709 = vshll.u32 %v2636, 16
        %v2711 = vrot.slane %v2709, 5
        %v2712 = vor.u32 %v2708, %v2711
        %v2713 = vrot.slane %v2712, 4
        %v2715 = vshll.u32 %v2645, 16
        %v2717 = vrot.slane %v2715, 5
        %v2718 = vsel %vm920, %v2713, %v2717
        %v2720 = vshrl.u32 %v2637, 16
        %v2722 = vrot.slane %v2720, 4
        %v2723 = vshll.u32 %v2637, 16
        %v2725 = vrot.slane %v2723, 5
        %v2726 = vor.u32 %v2722, %v2725
        %v2727 = vrot.slane %v2726, 4
        %v2729 = vshll.u32 %v2646, 16
        %v2731 = vrot.slane %v2729, 5
        %v2732 = vsel %vm920, %v2727, %v2731
        %v2734 = vshrl.u32 %v2638, 16
        %v2736 = vrot.slane %v2734, 4
        %v2737 = vshll.u32 %v2638, 16
        %v2739 = vrot.slane %v2737, 5
        %v2740 = vor.u32 %v2736, %v2739
        %v2741 = vrot.slane %v2740, 4
        %v2743 = vshll.u32 %v2647, 16
        %v2745 = vrot.slane %v2743, 5
        %v2746 = vsel %vm920, %v2741, %v2745
        %v2748 = vshrl.u32 %v2639, 16
        %v2750 = vrot.slane %v2748, 4
        %v2751 = vshll.u32 %v2639, 16
        %v2753 = vrot.slane %v2751, 5
        %v2754 = vor.u32 %v2750, %v2753
        %v2755 = vrot.slane %v2754, 4
        %v2757 = vshll.u32 %v2648, 16
        %v2759 = vrot.slane %v2757, 5
        %v2760 = vsel %vm920, %v2755, %v2759
        %s2761 = scalar_lea.vmem [#allocation11], 4
        %v2762 = vld [vmem:[%s2761] sm:$0xf]
        %v2763 = vunpack.c.l.b16 %v2662
        %v2764 = vunpack.c.l.b16 %v2676
        %v2765 = vunpack.c.l.b16 %v2690
        %v2766 = vunpack.c.l.b16 %v2704
        %v2767 = vunpack.c.l.b16 %v2718
        %v2768 = vunpack.c.l.b16 %v2732
        %v2769 = vunpack.c.l.b16 %v2746
        %v2770 = vunpack.c.l.b16 %v2760
        %v2771 = vpack.c.b16 %v2764, %v2763
        %v2772 = vpack.c.b16 %v2766, %v2765
        %v2773 = vpack.c.b16 %v2768, %v2767
        %v2774 = vpack.c.b16 %v2770, %v2769
        %vm2775 = vcmask 64512
        %v2777 = vsel %vm2775, %v2771, 0
        %v2780 = vsel %vm2775, %v2772, 0
        %v2783 = vsel %vm2775, %v2773, 0
        %v2786 = vsel %vm2775, %v2774, 0
        %vm2788 = vcmask 1043456
        %v2790 = vsel %vm2788, %v2762, 0
        %2792 = vmatprep.subr.bf16.mxu0 0
        %2793 = vmatpush1.bf16.msra.mxu0 %v2790
        %2794 = vmatprep.subr.bf16.mxu0 0
        %2795 = vmatpush1.bf16.msra.mxu0 0
        %2796 = vmatprep.subr.bf16.mxu0 0
        %2797 = vmatpush1.bf16.msra.mxu0 0
        %2798 = vmatprep.subr.bf16.mxu0 0
        %2799 = vmatpush1.bf16.msra.mxu0 0
        %2800 = vmatprep.subr.bf16.mxu0 0
        %2801 = vmatpush1.bf16.msra.mxu0 0
        %2802 = vmatprep.subr.bf16.mxu0 0
        %2803 = vmatpush1.bf16.msra.mxu0 0
        %2804 = vmatprep.subr.bf16.mxu0 0
        %2805 = vmatpush1.bf16.msra.mxu0 0
        %2806 = vmatprep.subr.bf16.mxu0 0
        %2807 = vmatpush1.bf16.msra.mxu0 0
        %2808 = vmatprep.subr.bf16.mxu0 0
        %2809 = vmatpush1.bf16.msra.mxu0 0
        %2810 = vmatprep.subr.bf16.mxu0 0
        %2811 = vmatpush1.bf16.msra.mxu0 0
        %2812 = vmatprep.subr.bf16.mxu0 0
        %2813 = vmatpush1.bf16.msra.mxu0 0
        %2814 = vmatprep.subr.bf16.mxu0 0
        %2815 = vmatpush1.bf16.msra.mxu0 0
        %2816 = vmatprep.subr.bf16.mxu0 0
        %2817 = vmatpush1.bf16.msra.mxu0 0
        %2818 = vmatprep.subr.bf16.mxu0 0
        %2819 = vmatpush1.bf16.msra.mxu0 0
        %2820 = vmatprep.subr.bf16.mxu0 0
        %2821 = vmatpush1.bf16.msra.mxu0 0
        %2822 = vmatprep.subr.bf16.mxu0 0
        %2823 = vmatpush1.bf16.msra.mxu0 0
        %2824 = vmatprep.mubr.bf16.mxu0 0
        %2825 = vmatmul.mubr.bf16.gmra.mrb[0].mxu0 %v2777
        %v2826 = vpop.f32.mrb[0].mxu0
        %v2827 = vadd.f32 0.0, %v2826
        %v2828 = vpop.f32.mrb[0].mxu0
        %v2829 = vpop.f32.mrb[0].mxu0
        %v2830 = vadd.f32 0.0, %v2829
        %v2831 = vpop.f32.mrb[0].mxu0
        %2832 = vmatprep.mubr.bf16.mxu0 0
        %2833 = vmatmul.mubr.bf16.gmra.mrb[0].mxu0 %v2780
        %v2834 = vpop.f32.mrb[0].mxu0
        %v2835 = vadd.f32 0.0, %v2834
        %v2836 = vpop.f32.mrb[0].mxu0
        %v2837 = vpop.f32.mrb[0].mxu0
        %v2838 = vadd.f32 0.0, %v2837
        %v2839 = vpop.f32.mrb[0].mxu0
        %2840 = vmatprep.mubr.bf16.mxu0 0
        %2841 = vmatmul.mubr.bf16.gmra.mrb[0].mxu0 %v2783
        %v2842 = vpop.f32.mrb[0].mxu0
        %v2843 = vadd.f32 0.0, %v2842
        %v2844 = vpop.f32.mrb[0].mxu0
        %v2845 = vpop.f32.mrb[0].mxu0
        %v2846 = vadd.f32 0.0, %v2845
        %v2847 = vpop.f32.mrb[0].mxu0
        %2848 = vmatprep.mubr.bf16.mxu0 0
        %2849 = vmatmul.mubr.bf16.gmra.mrb[0].mxu0 %v2786
        %v2850 = vpop.f32.mrb[0].mxu0
        %v2851 = vadd.f32 0.0, %v2850
        %v2852 = vpop.f32.mrb[0].mxu0
        %v2853 = vpop.f32.mrb[0].mxu0
        %v2854 = vadd.f32 0.0, %v2853
        %v2855 = vpop.f32.mrb[0].mxu0
        %2856 = vdwg.mxu0
        %v2865 = vunpack.c.l.b16 %v2632
        %v2866 = vunpack.c.l.b16 %v2633
        %v2867 = vunpack.c.l.b16 %v2634
        %v2868 = vunpack.c.l.b16 %v2635
        %v2869 = vunpack.c.l.b16 %v2636
        %v2870 = vunpack.c.l.b16 %v2637
        %v2871 = vunpack.c.l.b16 %v2638
        %v2872 = vunpack.c.l.b16 %v2639
        %v2873 = vpack.c.b16 %v2866, %v2865
        %v2874 = vpack.c.b16 %v2868, %v2867
        %v2875 = vpack.c.b16 %v2870, %v2869
        %v2876 = vpack.c.b16 %v2872, %v2871
        %v2878 = vsel %vm2775, %v2873, 0
        %v2881 = vsel %vm2775, %v2874, 0
        %v2884 = vsel %vm2775, %v2875, 0
        %v2887 = vsel %vm2775, %v2876, 0
        %v2890 = vsel %vm2788, %v2640, 0
        %2892 = vmatprep.subr.bf16.mxu0 0
        %2893 = vmatpush1.bf16.msra.mxu0 %v2890
        %2894 = vmatprep.subr.bf16.mxu0 0
        %2895 = vmatpush1.bf16.msra.mxu0 0
        %2896 = vmatprep.subr.bf16.mxu0 0
        %2897 = vmatpush1.bf16.msra.mxu0 0
        %2898 = vmatprep.subr.bf16.mxu0 0
        %2899 = vmatpush1.bf16.msra.mxu0 0
        %2900 = vmatprep.subr.bf16.mxu0 0
        %2901 = vmatpush1.bf16.msra.mxu0 0
        %2902 = vmatprep.subr.bf16.mxu0 0
        %2903 = vmatpush1.bf16.msra.mxu0 0
        %2904 = vmatprep.subr.bf16.mxu0 0
        %2905 = vmatpush1.bf16.msra.mxu0 0
        %2906 = vmatprep.subr.bf16.mxu0 0
        %2907 = vmatpush1.bf16.msra.mxu0 0
        %2908 = vmatprep.subr.bf16.mxu0 0
        %2909 = vmatpush1.bf16.msra.mxu0 0
        %2910 = vmatprep.subr.bf16.mxu0 0
        %2911 = vmatpush1.bf16.msra.mxu0 0
        %2912 = vmatprep.subr.bf16.mxu0 0
        %2913 = vmatpush1.bf16.msra.mxu0 0
        %2914 = vmatprep.subr.bf16.mxu0 0
        %2915 = vmatpush1.bf16.msra.mxu0 0
        %2916 = vmatprep.subr.bf16.mxu0 0
        %2917 = vmatpush1.bf16.msra.mxu0 0
        %2918 = vmatprep.subr.bf16.mxu0 0
        %2919 = vmatpush1.bf16.msra.mxu0 0
        %2920 = vmatprep.subr.bf16.mxu0 0
        %2921 = vmatpush1.bf16.msra.mxu0 0
        %2922 = vmatprep.subr.bf16.mxu0 0
        %2923 = vmatpush1.bf16.msra.mxu0 0
        %2924 = vmatprep.mubr.bf16.mxu0 0
        %2925 = vmatmul.mubr.bf16.gmra.mrb[0].mxu0 %v2878
        %v2926 = vpop.f32.mrb[0].mxu0
        %v2927 = vadd.f32 %v2827, %v2926
        %v2928 = vpop.f32.mrb[0].mxu0
        %v2929 = vpop.f32.mrb[0].mxu0
        %v2930 = vadd.f32 %v2830, %v2929
        %v2931 = vpop.f32.mrb[0].mxu0
        %2932 = vmatprep.mubr.bf16.mxu0 0
        %2933 = vmatmul.mubr.bf16.gmra.mrb[0].mxu0 %v2881
        %v2934 = vpop.f32.mrb[0].mxu0
        %v2935 = vadd.f32 %v2835, %v2934
        %v2936 = vpop.f32.mrb[0].mxu0
        %v2937 = vpop.f32.mrb[0].mxu0
        %v2938 = vadd.f32 %v2838, %v2937
        %v2939 = vpop.f32.mrb[0].mxu0
        %2940 = vmatprep.mubr.bf16.mxu0 0
        %2941 = vmatmul.mubr.bf16.gmra.mrb[0].mxu0 %v2884
        %v2942 = vpop.f32.mrb[0].mxu0
        %v2943 = vadd.f32 %v2843, %v2942
        %v2944 = vpop.f32.mrb[0].mxu0
        %v2945 = vpop.f32.mrb[0].mxu0
        %v2946 = vadd.f32 %v2846, %v2945
        %v2947 = vpop.f32.mrb[0].mxu0
        %2948 = vmatprep.mubr.bf16.mxu0 0
        %2949 = vmatmul.mubr.bf16.gmra.mrb[0].mxu0 %v2887
        %v2950 = vpop.f32.mrb[0].mxu0
        %v2951 = vadd.f32 %v2851, %v2950
        %v2952 = vpop.f32.mrb[0].mxu0
        %v2953 = vpop.f32.mrb[0].mxu0
        %v2954 = vadd.f32 %v2854, %v2953
        %v2955 = vpop.f32.mrb[0].mxu0
        %2956 = vdwg.mxu0
        %v2957 = vld [vmem:[#allocation2] sm:$0xe]
        %v2958 = vld [vmem:[#allocation2 + $0x8] sm:$0xe]
        %v2959 = vld [vmem:[#allocation2 + $0x10] sm:$0xe]
        %v2960 = vld [vmem:[#allocation2 + $0x18] sm:$0xe]
        %v2961 = vld [vmem:[#allocation2 + $0x20] sm:$0xe]
        %v2962 = vld [vmem:[#allocation2 + $0x28] sm:$0xe]
        %v2963 = vld [vmem:[#allocation2 + $0x30] sm:$0xe]
        %v2964 = vld [vmem:[#allocation2 + $0x38] sm:$0xe]
        %v2981 = vrot.slane %v2957, 5
        %v2982 = vrot.slane %v2981, 4
        %v2983 = vrot.slane %v2641, 5
        %v2984 = vsel %vm1260, %v2982, %v2983
        %v2985 = vrot.slane %v2958, 5
        %v2986 = vrot.slane %v2985, 4
        %v2987 = vrot.slane %v2642, 5
        %v2988 = vsel %vm1260, %v2986, %v2987
        %v2989 = vrot.slane %v2959, 5
        %v2990 = vrot.slane %v2989, 4
        %v2991 = vrot.slane %v2643, 5
        %v2992 = vsel %vm1260, %v2990, %v2991
        %v2993 = vrot.slane %v2960, 5
        %v2994 = vrot.slane %v2993, 4
        %v2995 = vrot.slane %v2644, 5
        %v2996 = vsel %vm1260, %v2994, %v2995
        %v2997 = vrot.slane %v2961, 5
        %v2998 = vrot.slane %v2997, 4
        %v2999 = vrot.slane %v2645, 5
        %v3000 = vsel %vm1260, %v2998, %v2999
        %v3001 = vrot.slane %v2962, 5
        %v3002 = vrot.slane %v3001, 4
        %v3003 = vrot.slane %v2646, 5
        %v3004 = vsel %vm1260, %v3002, %v3003
        %v3005 = vrot.slane %v2963, 5
        %v3006 = vrot.slane %v3005, 4
        %v3007 = vrot.slane %v2647, 5
        %v3008 = vsel %vm1260, %v3006, %v3007
        %v3009 = vrot.slane %v2964, 5
        %v3010 = vrot.slane %v3009, 4
        %v3011 = vrot.slane %v2648, 5
        %v3012 = vsel %vm1260, %v3010, %v3011
        %s3013 = scalar_lea.vmem [#allocation11], 8
        %v3014 = vld [vmem:[%s3013] sm:$0xf]
        %v3015 = vunpack.c.l.b16 %v2984
        %v3016 = vunpack.c.l.b16 %v2988
        %v3017 = vunpack.c.l.b16 %v2992
        %v3018 = vunpack.c.l.b16 %v2996
        %v3019 = vunpack.c.l.b16 %v3000
        %v3020 = vunpack.c.l.b16 %v3004
        %v3021 = vunpack.c.l.b16 %v3008
        %v3022 = vunpack.c.l.b16 %v3012
        %v3023 = vpack.c.b16 %v3016, %v3015
        %v3024 = vpack.c.b16 %v3018, %v3017
        %v3025 = vpack.c.b16 %v3020, %v3019
        %v3026 = vpack.c.b16 %v3022, %v3021
        %v3028 = vsel %vm2775, %v3023, 0
        %v3031 = vsel %vm2775, %v3024, 0
        %v3034 = vsel %vm2775, %v3025, 0
        %v3037 = vsel %vm2775, %v3026, 0
        %v3040 = vsel %vm2788, %v3014, 0
        %3042 = vmatprep.subr.bf16.mxu0 0
        %3043 = vmatpush1.bf16.msra.mxu0 %v3040
        %3044 = vmatprep.subr.bf16.mxu0 0
        %3045 = vmatpush1.bf16.msra.mxu0 0
        %3046 = vmatprep.subr.bf16.mxu0 0
        %3047 = vmatpush1.bf16.msra.mxu0 0
        %3048 = vmatprep.subr.bf16.mxu0 0
        %3049 = vmatpush1.bf16.msra.mxu0 0
        %3050 = vmatprep.subr.bf16.mxu0 0
        %3051 = vmatpush1.bf16.msra.mxu0 0
        %3052 = vmatprep.subr.bf16.mxu0 0
        %3053 = vmatpush1.bf16.msra.mxu0 0
        %3054 = vmatprep.subr.bf16.mxu0 0
        %3055 = vmatpush1.bf16.msra.mxu0 0
        %3056 = vmatprep.subr.bf16.mxu0 0
        %3057 = vmatpush1.bf16.msra.mxu0 0
        %3058 = vmatprep.subr.bf16.mxu0 0
        %3059 = vmatpush1.bf16.msra.mxu0 0
        %3060 = vmatprep.subr.bf16.mxu0 0
        %3061 = vmatpush1.bf16.msra.mxu0 0
        %3062 = vmatprep.subr.bf16.mxu0 0
        %3063 = vmatpush1.bf16.msra.mxu0 0
        %3064 = vmatprep.subr.bf16.mxu0 0
        %3065 = vmatpush1.bf16.msra.mxu0 0
        %3066 = vmatprep.subr.bf16.mxu0 0
        %3067 = vmatpush1.bf16.msra.mxu0 0
        %3068 = vmatprep.subr.bf16.mxu0 0
        %3069 = vmatpush1.bf16.msra.mxu0 0
        %3070 = vmatprep.subr.bf16.mxu0 0
        %3071 = vmatpush1.bf16.msra.mxu0 0
        %3072 = vmatprep.subr.bf16.mxu0 0
        %3073 = vmatpush1.bf16.msra.mxu0 0
        %3074 = vmatprep.mubr.bf16.mxu0 0
        %3075 = vmatmul.mubr.bf16.gmra.mrb[0].mxu0 %v3028
        %v3076 = vpop.f32.mrb[0].mxu0
        %v3077 = vadd.f32 0.0, %v3076
        %v3078 = vpop.f32.mrb[0].mxu0
        %v3079 = vpop.f32.mrb[0].mxu0
        %v3080 = vadd.f32 0.0, %v3079
        %v3081 = vpop.f32.mrb[0].mxu0
        %3082 = vmatprep.mubr.bf16.mxu0 0
        %3083 = vmatmul.mubr.bf16.gmra.mrb[0].mxu0 %v3031
        %v3084 = vpop.f32.mrb[0].mxu0
        %v3085 = vadd.f32 0.0, %v3084
        %v3086 = vpop.f32.mrb[0].mxu0
        %v3087 = vpop.f32.mrb[0].mxu0
        %v3088 = vadd.f32 0.0, %v3087
        %v3089 = vpop.f32.mrb[0].mxu0
        %3090 = vmatprep.mubr.bf16.mxu0 0
        %3091 = vmatmul.mubr.bf16.gmra.mrb[0].mxu0 %v3034
        %v3092 = vpop.f32.mrb[0].mxu0
        %v3093 = vadd.f32 0.0, %v3092
        %v3094 = vpop.f32.mrb[0].mxu0
        %v3095 = vpop.f32.mrb[0].mxu0
        %v3096 = vadd.f32 0.0, %v3095
        %v3097 = vpop.f32.mrb[0].mxu0
        %3098 = vmatprep.mubr.bf16.mxu0 0
        %3099 = vmatmul.mubr.bf16.gmra.mrb[0].mxu0 %v3037
        %v3100 = vpop.f32.mrb[0].mxu0
        %v3101 = vadd.f32 0.0, %v3100
        %v3102 = vpop.f32.mrb[0].mxu0
        %v3103 = vpop.f32.mrb[0].mxu0
        %v3104 = vadd.f32 0.0, %v3103
        %v3105 = vpop.f32.mrb[0].mxu0
        %3106 = vdwg.mxu0
        %v3107 = vadd.f32 %v2927, %v3077
        %v3108 = vadd.f32 %v2930, %v3080
        %v3109 = vadd.f32 %v2935, %v3085
        %v3110 = vadd.f32 %v2938, %v3088
        %v3111 = vadd.f32 %v2943, %v3093
        %v3112 = vadd.f32 %v2946, %v3096
        %v3113 = vadd.f32 %v2951, %v3101
        %v3114 = vadd.f32 %v2954, %v3104
        %v3115 = vld [vmem:[%s845] sm:$0xf]
        %v3116 = vld [vmem:[%s845 + $0x8] sm:$0xf]
        %v3117 = vld [vmem:[%s845 + $0x10] sm:$0xf]
        %v3118 = vld [vmem:[%s845 + $0x18] sm:$0xf]
        %v3119 = vld [vmem:[%s845 + $0x20] sm:$0xf]
        %v3120 = vld [vmem:[%s845 + $0x28] sm:$0xf]
        %v3121 = vld [vmem:[%s845 + $0x30] sm:$0xf]
        %v3122 = vld [vmem:[%s845 + $0x38] sm:$0xf]
        %s3123 = scalar_lea.vmem [#allocation11], 12
        %v3124 = vld [vmem:[%s3123] sm:$0xf]
        %v3133 = vunpack.c.l.b16 %v3115
        %v3134 = vunpack.c.l.b16 %v3116
        %v3135 = vunpack.c.l.b16 %v3117
        %v3136 = vunpack.c.l.b16 %v3118
        %v3137 = vunpack.c.l.b16 %v3119
        %v3138 = vunpack.c.l.b16 %v3120
        %v3139 = vunpack.c.l.b16 %v3121
        %v3140 = vunpack.c.l.b16 %v3122
        %v3141 = vpack.c.b16 %v3134, %v3133
        %v3142 = vpack.c.b16 %v3136, %v3135
        %v3143 = vpack.c.b16 %v3138, %v3137
        %v3144 = vpack.c.b16 %v3140, %v3139
        %v3146 = vsel %vm2775, %v3141, 0
        %v3149 = vsel %vm2775, %v3142, 0
        %v3152 = vsel %vm2775, %v3143, 0
        %v3155 = vsel %vm2775, %v3144, 0
        %v3158 = vsel %vm2788, %v3124, 0
        %3160 = vmatprep.subr.bf16.mxu0 0
        %3161 = vmatpush1.bf16.msra.mxu0 %v3158
        %3162 = vmatprep.subr.bf16.mxu0 0
        %3163 = vmatpush1.bf16.msra.mxu0 0
        %3164 = vmatprep.subr.bf16.mxu0 0
        %3165 = vmatpush1.bf16.msra.mxu0 0
        %3166 = vmatprep.subr.bf16.mxu0 0
        %3167 = vmatpush1.bf16.msra.mxu0 0
        %3168 = vmatprep.subr.bf16.mxu0 0
        %3169 = vmatpush1.bf16.msra.mxu0 0
        %3170 = vmatprep.subr.bf16.mxu0 0
        %3171 = vmatpush1.bf16.msra.mxu0 0
        %3172 = vmatprep.subr.bf16.mxu0 0
        %3173 = vmatpush1.bf16.msra.mxu0 0
        %3174 = vmatprep.subr.bf16.mxu0 0
        %3175 = vmatpush1.bf16.msra.mxu0 0
        %3176 = vmatprep.subr.bf16.mxu0 0
        %3177 = vmatpush1.bf16.msra.mxu0 0
        %3178 = vmatprep.subr.bf16.mxu0 0
        %3179 = vmatpush1.bf16.msra.mxu0 0
        %3180 = vmatprep.subr.bf16.mxu0 0
        %3181 = vmatpush1.bf16.msra.mxu0 0
        %3182 = vmatprep.subr.bf16.mxu0 0
        %3183 = vmatpush1.bf16.msra.mxu0 0
        %3184 = vmatprep.subr.bf16.mxu0 0
        %3185 = vmatpush1.bf16.msra.mxu0 0
        %3186 = vmatprep.subr.bf16.mxu0 0
        %3187 = vmatpush1.bf16.msra.mxu0 0
        %3188 = vmatprep.subr.bf16.mxu0 0
        %3189 = vmatpush1.bf16.msra.mxu0 0
        %3190 = vmatprep.subr.bf16.mxu0 0
        %3191 = vmatpush1.bf16.msra.mxu0 0
        %3192 = vmatprep.mubr.bf16.mxu0 0
        %3193 = vmatmul.mubr.bf16.gmra.mrb[0].mxu0 %v3146
        %v3194 = vpop.f32.mrb[0].mxu0
        %v3195 = vadd.f32 0.0, %v3194
        %v3196 = vpop.f32.mrb[0].mxu0
        %v3197 = vpop.f32.mrb[0].mxu0
        %v3198 = vadd.f32 0.0, %v3197
        %v3199 = vpop.f32.mrb[0].mxu0
        %3200 = vmatprep.mubr.bf16.mxu0 0
        %3201 = vmatmul.mubr.bf16.gmra.mrb[0].mxu0 %v3149
        %v3202 = vpop.f32.mrb[0].mxu0
        %v3203 = vadd.f32 0.0, %v3202
        %v3204 = vpop.f32.mrb[0].mxu0
        %v3205 = vpop.f32.mrb[0].mxu0
        %v3206 = vadd.f32 0.0, %v3205
        %v3207 = vpop.f32.mrb[0].mxu0
        %3208 = vmatprep.mubr.bf16.mxu0 0
        %3209 = vmatmul.mubr.bf16.gmra.mrb[0].mxu0 %v3152
        %v3210 = vpop.f32.mrb[0].mxu0
        %v3211 = vadd.f32 0.0, %v3210
        %v3212 = vpop.f32.mrb[0].mxu0
        %v3213 = vpop.f32.mrb[0].mxu0
        %v3214 = vadd.f32 0.0, %v3213
        %v3215 = vpop.f32.mrb[0].mxu0
        %3216 = vmatprep.mubr.bf16.mxu0 0
        %3217 = vmatmul.mubr.bf16.gmra.mrb[0].mxu0 %v3155
        %v3218 = vpop.f32.mrb[0].mxu0
        %v3219 = vadd.f32 0.0, %v3218
        %v3220 = vpop.f32.mrb[0].mxu0
        %v3221 = vpop.f32.mrb[0].mxu0
        %v3222 = vadd.f32 0.0, %v3221
        %v3223 = vpop.f32.mrb[0].mxu0
        %3224 = vdwg.mxu0
        %v3225 = vadd.f32 %v3107, %v3195
        %v3226 = vadd.f32 %v3108, %v3198
        %v3227 = vadd.f32 %v3109, %v3203
        %v3228 = vadd.f32 %v3110, %v3206
        %v3229 = vadd.f32 %v3111, %v3211
        %v3230 = vadd.f32 %v3112, %v3214
        %v3231 = vadd.f32 %v3113, %v3219
        %v3232 = vadd.f32 %v3114, %v3222
        %v3233 = vld [vmem:[%s845] sm:$0xf]
        %v3234 = vld [vmem:[%s845 + $0x4] sm:$0x1]
        %v3235 = vld [vmem:[%s845 + $0x8] sm:$0xf]
        %v3236 = vld [vmem:[%s845 + $0xc] sm:$0x1]
        %v3237 = vld [vmem:[%s845 + $0x10] sm:$0xf]
        %v3238 = vld [vmem:[%s845 + $0x14] sm:$0x1]
        %v3239 = vld [vmem:[%s845 + $0x18] sm:$0xf]
        %v3240 = vld [vmem:[%s845 + $0x1c] sm:$0x1]
        %v3241 = vld [vmem:[%s845 + $0x20] sm:$0xf]
        %v3242 = vld [vmem:[%s845 + $0x24] sm:$0x1]
        %v3243 = vld [vmem:[%s845 + $0x28] sm:$0xf]
        %v3244 = vld [vmem:[%s845 + $0x2c] sm:$0x1]
        %v3245 = vld [vmem:[%s845 + $0x30] sm:$0xf]
        %v3246 = vld [vmem:[%s845 + $0x34] sm:$0x1]
        %v3247 = vld [vmem:[%s845 + $0x38] sm:$0xf]
        %v3248 = vld [vmem:[%s845 + $0x3c] sm:$0x1]
        %v3250 = vshrl.u32 %v3233, 16
        %v3252 = vrot.slane %v3250, 4
        %v3253 = vshll.u32 %v3233, 16
        %v3255 = vrot.slane %v3253, 5
        %v3256 = vor.u32 %v3252, %v3255
        %v3257 = vrot.slane %v3256, 4
        %v3259 = vshll.u32 %v3234, 16
        %v3261 = vrot.slane %v3259, 5
        %v3262 = vsel %vm920, %v3257, %v3261
        %v3264 = vshrl.u32 %v3235, 16
        %v3266 = vrot.slane %v3264, 4
        %v3267 = vshll.u32 %v3235, 16
        %v3269 = vrot.slane %v3267, 5
        %v3270 = vor.u32 %v3266, %v3269
        %v3271 = vrot.slane %v3270, 4
        %v3273 = vshll.u32 %v3236, 16
        %v3275 = vrot.slane %v3273, 5
        %v3276 = vsel %vm920, %v3271, %v3275
        %v3278 = vshrl.u32 %v3237, 16
        %v3280 = vrot.slane %v3278, 4
        %v3281 = vshll.u32 %v3237, 16
        %v3283 = vrot.slane %v3281, 5
        %v3284 = vor.u32 %v3280, %v3283
        %v3285 = vrot.slane %v3284, 4
        %v3287 = vshll.u32 %v3238, 16
        %v3289 = vrot.slane %v3287, 5
        %v3290 = vsel %vm920, %v3285, %v3289
        %v3292 = vshrl.u32 %v3239, 16
        %v3294 = vrot.slane %v3292, 4
        %v3295 = vshll.u32 %v3239, 16
        %v3297 = vrot.slane %v3295, 5
        %v3298 = vor.u32 %v3294, %v3297
        %v3299 = vrot.slane %v3298, 4
        %v3301 = vshll.u32 %v3240, 16
        %v3303 = vrot.slane %v3301, 5
        %v3304 = vsel %vm920, %v3299, %v3303
        %v3306 = vshrl.u32 %v3241, 16
        %v3308 = vrot.slane %v3306, 4
        %v3309 = vshll.u32 %v3241, 16
        %v3311 = vrot.slane %v3309, 5
        %v3312 = vor.u32 %v3308, %v3311
        %v3313 = vrot.slane %v3312, 4
        %v3315 = vshll.u32 %v3242, 16
        %v3317 = vrot.slane %v3315, 5
        %v3318 = vsel %vm920, %v3313, %v3317
        %v3320 = vshrl.u32 %v3243, 16
        %v3322 = vrot.slane %v3320, 4
        %v3323 = vshll.u32 %v3243, 16
        %v3325 = vrot.slane %v3323, 5
        %v3326 = vor.u32 %v3322, %v3325
        %v3327 = vrot.slane %v3326, 4
        %v3329 = vshll.u32 %v3244, 16
        %v3331 = vrot.slane %v3329, 5
        %v3332 = vsel %vm920, %v3327, %v3331
        %v3334 = vshrl.u32 %v3245, 16
        %v3336 = vrot.slane %v3334, 4
        %v3337 = vshll.u32 %v3245, 16
        %v3339 = vrot.slane %v3337, 5
        %v3340 = vor.u32 %v3336, %v3339
        %v3341 = vrot.slane %v3340, 4
        %v3343 = vshll.u32 %v3246, 16
        %v3345 = vrot.slane %v3343, 5
        %v3346 = vsel %vm920, %v3341, %v3345
        %v3348 = vshrl.u32 %v3247, 16
        %v3350 = vrot.slane %v3348, 4
        %v3351 = vshll.u32 %v3247, 16
        %v3353 = vrot.slane %v3351, 5
        %v3354 = vor.u32 %v3350, %v3353
        %v3355 = vrot.slane %v3354, 4
        %v3357 = vshll.u32 %v3248, 16
        %v3359 = vrot.slane %v3357, 5
        %v3360 = vsel %vm920, %v3355, %v3359
        %s3361 = scalar_lea.vmem [#allocation11], 16
        %v3362 = vld [vmem:[%s3361] sm:$0xf]
        %v3363 = vunpack.c.l.b16 %v3262
        %v3364 = vunpack.c.l.b16 %v3276
        %v3365 = vunpack.c.l.b16 %v3290
        %v3366 = vunpack.c.l.b16 %v3304
        %v3367 = vunpack.c.l.b16 %v3318
        %v3368 = vunpack.c.l.b16 %v3332
        %v3369 = vunpack.c.l.b16 %v3346
        %v3370 = vunpack.c.l.b16 %v3360
        %v3371 = vpack.c.b16 %v3364, %v3363
        %v3372 = vpack.c.b16 %v3366, %v3365
        %v3373 = vpack.c.b16 %v3368, %v3367
        %v3374 = vpack.c.b16 %v3370, %v3369
        %v3376 = vsel %vm2775, %v3371, 0
        %v3379 = vsel %vm2775, %v3372, 0
        %v3382 = vsel %vm2775, %v3373, 0
        %v3385 = vsel %vm2775, %v3374, 0
        %v3388 = vsel %vm2788, %v3362, 0
        %3390 = vmatprep.subr.bf16.mxu0 0
        %3391 = vmatpush1.bf16.msra.mxu0 %v3388
        %3392 = vmatprep.subr.bf16.mxu0 0
        %3393 = vmatpush1.bf16.msra.mxu0 0
        %3394 = vmatprep.subr.bf16.mxu0 0
        %3395 = vmatpush1.bf16.msra.mxu0 0
        %3396 = vmatprep.subr.bf16.mxu0 0
        %3397 = vmatpush1.bf16.msra.mxu0 0
        %3398 = vmatprep.subr.bf16.mxu0 0
        %3399 = vmatpush1.bf16.msra.mxu0 0
        %3400 = vmatprep.subr.bf16.mxu0 0
        %3401 = vmatpush1.bf16.msra.mxu0 0
        %3402 = vmatprep.subr.bf16.mxu0 0
        %3403 = vmatpush1.bf16.msra.mxu0 0
        %3404 = vmatprep.subr.bf16.mxu0 0
        %3405 = vmatpush1.bf16.msra.mxu0 0
        %3406 = vmatprep.subr.bf16.mxu0 0
        %3407 = vmatpush1.bf16.msra.mxu0 0
        %3408 = vmatprep.subr.bf16.mxu0 0
        %3409 = vmatpush1.bf16.msra.mxu0 0
        %3410 = vmatprep.subr.bf16.mxu0 0
        %3411 = vmatpush1.bf16.msra.mxu0 0
        %3412 = vmatprep.subr.bf16.mxu0 0
        %3413 = vmatpush1.bf16.msra.mxu0 0
        %3414 = vmatprep.subr.bf16.mxu0 0
        %3415 = vmatpush1.bf16.msra.mxu0 0
        %3416 = vmatprep.subr.bf16.mxu0 0
        %3417 = vmatpush1.bf16.msra.mxu0 0
        %3418 = vmatprep.subr.bf16.mxu0 0
        %3419 = vmatpush1.bf16.msra.mxu0 0
        %3420 = vmatprep.subr.bf16.mxu0 0
        %3421 = vmatpush1.bf16.msra.mxu0 0
        %3422 = vmatprep.mubr.bf16.mxu0 0
        %3423 = vmatmul.mubr.bf16.gmra.mrb[0].mxu0 %v3376
        %v3424 = vpop.f32.mrb[0].mxu0
        %v3425 = vadd.f32 0.0, %v3424
        %v3426 = vpop.f32.mrb[0].mxu0
        %v3427 = vpop.f32.mrb[0].mxu0
        %v3428 = vadd.f32 0.0, %v3427
        %v3429 = vpop.f32.mrb[0].mxu0
        %3430 = vmatprep.mubr.bf16.mxu0 0
        %3431 = vmatmul.mubr.bf16.gmra.mrb[0].mxu0 %v3379
        %v3432 = vpop.f32.mrb[0].mxu0
        %v3433 = vadd.f32 0.0, %v3432
        %v3434 = vpop.f32.mrb[0].mxu0
        %v3435 = vpop.f32.mrb[0].mxu0
        %v3436 = vadd.f32 0.0, %v3435
        %v3437 = vpop.f32.mrb[0].mxu0
        %3438 = vmatprep.mubr.bf16.mxu0 0
        %3439 = vmatmul.mubr.bf16.gmra.mrb[0].mxu0 %v3382
        %v3440 = vpop.f32.mrb[0].mxu0
        %v3441 = vadd.f32 0.0, %v3440
        %v3442 = vpop.f32.mrb[0].mxu0
        %v3443 = vpop.f32.mrb[0].mxu0
        %v3444 = vadd.f32 0.0, %v3443
        %v3445 = vpop.f32.mrb[0].mxu0
        %3446 = vmatprep.mubr.bf16.mxu0 0
        %3447 = vmatmul.mubr.bf16.gmra.mrb[0].mxu0 %v3385
        %v3448 = vpop.f32.mrb[0].mxu0
        %v3449 = vadd.f32 0.0, %v3448
        %v3450 = vpop.f32.mrb[0].mxu0
        %v3451 = vpop.f32.mrb[0].mxu0
        %v3452 = vadd.f32 0.0, %v3451
        %v3453 = vpop.f32.mrb[0].mxu0
        %3454 = vdwg.mxu0
        %v3455 = vadd.f32 %v3225, %v3425
        %v3456 = vadd.f32 %v3226, %v3428
        %v3457 = vadd.f32 %v3227, %v3433
        %v3458 = vadd.f32 %v3228, %v3436
        %v3459 = vadd.f32 %v3229, %v3441
        %v3460 = vadd.f32 %v3230, %v3444
        %v3461 = vadd.f32 %v3231, %v3449
        %v3462 = vadd.f32 %v3232, %v3452
        %v3463 = vld [vmem:[%s845] sm:$0xe]
        %v3464 = vld [vmem:[%s845 + $0x8] sm:$0xe]
        %v3465 = vld [vmem:[%s845 + $0x10] sm:$0xe]
        %v3466 = vld [vmem:[%s845 + $0x18] sm:$0xe]
        %v3467 = vld [vmem:[%s845 + $0x20] sm:$0xe]
        %v3468 = vld [vmem:[%s845 + $0x28] sm:$0xe]
        %v3469 = vld [vmem:[%s845 + $0x30] sm:$0xe]
        %v3470 = vld [vmem:[%s845 + $0x38] sm:$0xe]
        %v3487 = vrot.slane %v3463, 5
        %v3488 = vrot.slane %v3487, 4
        %v3489 = vrot.slane %v3234, 5
        %v3490 = vsel %vm1260, %v3488, %v3489
        %v3491 = vrot.slane %v3464, 5
        %v3492 = vrot.slane %v3491, 4
        %v3493 = vrot.slane %v3236, 5
        %v3494 = vsel %vm1260, %v3492, %v3493
        %v3495 = vrot.slane %v3465, 5
        %v3496 = vrot.slane %v3495, 4
        %v3497 = vrot.slane %v3238, 5
        %v3498 = vsel %vm1260, %v3496, %v3497
        %v3499 = vrot.slane %v3466, 5
        %v3500 = vrot.slane %v3499, 4
        %v3501 = vrot.slane %v3240, 5
        %v3502 = vsel %vm1260, %v3500, %v3501
        %v3503 = vrot.slane %v3467, 5
        %v3504 = vrot.slane %v3503, 4
        %v3505 = vrot.slane %v3242, 5
        %v3506 = vsel %vm1260, %v3504, %v3505
        %v3507 = vrot.slane %v3468, 5
        %v3508 = vrot.slane %v3507, 4
        %v3509 = vrot.slane %v3244, 5
        %v3510 = vsel %vm1260, %v3508, %v3509
        %v3511 = vrot.slane %v3469, 5
        %v3512 = vrot.slane %v3511, 4
        %v3513 = vrot.slane %v3246, 5
        %v3514 = vsel %vm1260, %v3512, %v3513
        %v3515 = vrot.slane %v3470, 5
        %v3516 = vrot.slane %v3515, 4
        %v3517 = vrot.slane %v3248, 5
        %v3518 = vsel %vm1260, %v3516, %v3517
        %s3519 = scalar_lea.vmem [#allocation11], 20
        %v3520 = vld [vmem:[%s3519] sm:$0xf]
        %v3521 = vunpack.c.l.b16 %v3490
        %v3522 = vunpack.c.l.b16 %v3494
        %v3523 = vunpack.c.l.b16 %v3498
        %v3524 = vunpack.c.l.b16 %v3502
        %v3525 = vunpack.c.l.b16 %v3506
        %v3526 = vunpack.c.l.b16 %v3510
        %v3527 = vunpack.c.l.b16 %v3514
        %v3528 = vunpack.c.l.b16 %v3518
        %v3529 = vpack.c.b16 %v3522, %v3521
        %v3530 = vpack.c.b16 %v3524, %v3523
        %v3531 = vpack.c.b16 %v3526, %v3525
        %v3532 = vpack.c.b16 %v3528, %v3527
        %v3534 = vsel %vm2775, %v3529, 0
        %v3537 = vsel %vm2775, %v3530, 0
        %v3540 = vsel %vm2775, %v3531, 0
        %v3543 = vsel %vm2775, %v3532, 0
        %v3546 = vsel %vm2788, %v3520, 0
        %3548 = vmatprep.subr.bf16.mxu0 0
        %3549 = vmatpush1.bf16.msra.mxu0 %v3546
        %3550 = vmatprep.subr.bf16.mxu0 0
        %3551 = vmatpush1.bf16.msra.mxu0 0
        %3552 = vmatprep.subr.bf16.mxu0 0
        %3553 = vmatpush1.bf16.msra.mxu0 0
        %3554 = vmatprep.subr.bf16.mxu0 0
        %3555 = vmatpush1.bf16.msra.mxu0 0
        %3556 = vmatprep.subr.bf16.mxu0 0
        %3557 = vmatpush1.bf16.msra.mxu0 0
        %3558 = vmatprep.subr.bf16.mxu0 0
        %3559 = vmatpush1.bf16.msra.mxu0 0
        %3560 = vmatprep.subr.bf16.mxu0 0
        %3561 = vmatpush1.bf16.msra.mxu0 0
        %3562 = vmatprep.subr.bf16.mxu0 0
        %3563 = vmatpush1.bf16.msra.mxu0 0
        %3564 = vmatprep.subr.bf16.mxu0 0
        %3565 = vmatpush1.bf16.msra.mxu0 0
        %3566 = vmatprep.subr.bf16.mxu0 0
        %3567 = vmatpush1.bf16.msra.mxu0 0
        %3568 = vmatprep.subr.bf16.mxu0 0
        %3569 = vmatpush1.bf16.msra.mxu0 0
        %3570 = vmatprep.subr.bf16.mxu0 0
        %3571 = vmatpush1.bf16.msra.mxu0 0
        %3572 = vmatprep.subr.bf16.mxu0 0
        %3573 = vmatpush1.bf16.msra.mxu0 0
        %3574 = vmatprep.subr.bf16.mxu0 0
        %3575 = vmatpush1.bf16.msra.mxu0 0
        %3576 = vmatprep.subr.bf16.mxu0 0
        %3577 = vmatpush1.bf16.msra.mxu0 0
        %3578 = vmatprep.subr.bf16.mxu0 0
        %3579 = vmatpush1.bf16.msra.mxu0 0
        %3580 = vmatprep.mubr.bf16.mxu0 0
        %3581 = vmatmul.mubr.bf16.gmra.mrb[0].mxu0 %v3534
        %v3582 = vpop.f32.mrb[0].mxu0
        %v3583 = vadd.f32 0.0, %v3582
        %v3584 = vpop.f32.mrb[0].mxu0
        %v3585 = vpop.f32.mrb[0].mxu0
        %v3586 = vadd.f32 0.0, %v3585
        %v3587 = vpop.f32.mrb[0].mxu0
        %3588 = vmatprep.mubr.bf16.mxu0 0
        %3589 = vmatmul.mubr.bf16.gmra.mrb[0].mxu0 %v3537
        %v3590 = vpop.f32.mrb[0].mxu0
        %v3591 = vadd.f32 0.0, %v3590
        %v3592 = vpop.f32.mrb[0].mxu0
        %v3593 = vpop.f32.mrb[0].mxu0
        %v3594 = vadd.f32 0.0, %v3593
        %v3595 = vpop.f32.mrb[0].mxu0
        %3596 = vmatprep.mubr.bf16.mxu0 0
        %3597 = vmatmul.mubr.bf16.gmra.mrb[0].mxu0 %v3540
        %v3598 = vpop.f32.mrb[0].mxu0
        %v3599 = vadd.f32 0.0, %v3598
        %v3600 = vpop.f32.mrb[0].mxu0
        %v3601 = vpop.f32.mrb[0].mxu0
        %v3602 = vadd.f32 0.0, %v3601
        %v3603 = vpop.f32.mrb[0].mxu0
        %3604 = vmatprep.mubr.bf16.mxu0 0
        %3605 = vmatmul.mubr.bf16.gmra.mrb[0].mxu0 %v3543
        %v3606 = vpop.f32.mrb[0].mxu0
        %v3607 = vadd.f32 0.0, %v3606
        %v3608 = vpop.f32.mrb[0].mxu0
        %v3609 = vpop.f32.mrb[0].mxu0
        %v3610 = vadd.f32 0.0, %v3609
        %v3611 = vpop.f32.mrb[0].mxu0
        %3612 = vdwg.mxu0
        %v3613 = vadd.f32 %v3455, %v3583
        %v3614 = vadd.f32 %v3456, %v3586
        %v3615 = vadd.f32 %v3457, %v3591
        %v3616 = vadd.f32 %v3458, %v3594
        %v3617 = vadd.f32 %v3459, %v3599
        %v3618 = vadd.f32 %v3460, %v3602
        %v3619 = vadd.f32 %v3461, %v3607
        %v3620 = vadd.f32 %v3462, %v3610
        %v3621 = vld [vmem:[%s1917] sm:$0xf]
        %v3622 = vld [vmem:[%s1917 + $0x8] sm:$0xf]
        %v3623 = vld [vmem:[%s1917 + $0x10] sm:$0xf]
        %v3624 = vld [vmem:[%s1917 + $0x18] sm:$0xf]
        %v3625 = vld [vmem:[%s1917 + $0x20] sm:$0xf]
        %v3626 = vld [vmem:[%s1917 + $0x28] sm:$0xf]
        %v3627 = vld [vmem:[%s1917 + $0x30] sm:$0xf]
        %v3628 = vld [vmem:[%s1917 + $0x38] sm:$0xf]
        %s3629 = scalar_lea.vmem [#allocation11], 24
        %v3630 = vld [vmem:[%s3629] sm:$0xf]
        %v3639 = vunpack.c.l.b16 %v3621
        %v3640 = vunpack.c.l.b16 %v3622
        %v3641 = vunpack.c.l.b16 %v3623
        %v3642 = vunpack.c.l.b16 %v3624
        %v3643 = vunpack.c.l.b16 %v3625
        %v3644 = vunpack.c.l.b16 %v3626
        %v3645 = vunpack.c.l.b16 %v3627
        %v3646 = vunpack.c.l.b16 %v3628
        %v3647 = vpack.c.b16 %v3640, %v3639
        %v3648 = vpack.c.b16 %v3642, %v3641
        %v3649 = vpack.c.b16 %v3644, %v3643
        %v3650 = vpack.c.b16 %v3646, %v3645
        %v3652 = vsel %vm2775, %v3647, 0
        %v3655 = vsel %vm2775, %v3648, 0
        %v3658 = vsel %vm2775, %v3649, 0
        %v3661 = vsel %vm2775, %v3650, 0
        %v3664 = vsel %vm2788, %v3630, 0
        %3666 = vmatprep.subr.bf16.mxu0 0
        %3667 = vmatpush1.bf16.msra.mxu0 %v3664
        %3668 = vmatprep.subr.bf16.mxu0 0
        %3669 = vmatpush1.bf16.msra.mxu0 0
        %3670 = vmatprep.subr.bf16.mxu0 0
        %3671 = vmatpush1.bf16.msra.mxu0 0
        %3672 = vmatprep.subr.bf16.mxu0 0
        %3673 = vmatpush1.bf16.msra.mxu0 0
        %3674 = vmatprep.subr.bf16.mxu0 0
        %3675 = vmatpush1.bf16.msra.mxu0 0
        %3676 = vmatprep.subr.bf16.mxu0 0
        %3677 = vmatpush1.bf16.msra.mxu0 0
        %3678 = vmatprep.subr.bf16.mxu0 0
        %3679 = vmatpush1.bf16.msra.mxu0 0
        %3680 = vmatprep.subr.bf16.mxu0 0
        %3681 = vmatpush1.bf16.msra.mxu0 0
        %3682 = vmatprep.subr.bf16.mxu0 0
        %3683 = vmatpush1.bf16.msra.mxu0 0
        %3684 = vmatprep.subr.bf16.mxu0 0
        %3685 = vmatpush1.bf16.msra.mxu0 0
        %3686 = vmatprep.subr.bf16.mxu0 0
        %3687 = vmatpush1.bf16.msra.mxu0 0
        %3688 = vmatprep.subr.bf16.mxu0 0
        %3689 = vmatpush1.bf16.msra.mxu0 0
        %3690 = vmatprep.subr.bf16.mxu0 0
        %3691 = vmatpush1.bf16.msra.mxu0 0
        %3692 = vmatprep.subr.bf16.mxu0 0
        %3693 = vmatpush1.bf16.msra.mxu0 0
        %3694 = vmatprep.subr.bf16.mxu0 0
        %3695 = vmatpush1.bf16.msra.mxu0 0
        %3696 = vmatprep.subr.bf16.mxu0 0
        %3697 = vmatpush1.bf16.msra.mxu0 0
        %3698 = vmatprep.mubr.bf16.mxu0 0
        %3699 = vmatmul.mubr.bf16.gmra.mrb[0].mxu0 %v3652
        %v3700 = vpop.f32.mrb[0].mxu0
        %v3701 = vadd.f32 0.0, %v3700
        %v3702 = vpop.f32.mrb[0].mxu0
        %v3703 = vpop.f32.mrb[0].mxu0
        %v3704 = vadd.f32 0.0, %v3703
        %v3705 = vpop.f32.mrb[0].mxu0
        %3706 = vmatprep.mubr.bf16.mxu0 0
        %3707 = vmatmul.mubr.bf16.gmra.mrb[0].mxu0 %v3655
        %v3708 = vpop.f32.mrb[0].mxu0
        %v3709 = vadd.f32 0.0, %v3708
        %v3710 = vpop.f32.mrb[0].mxu0
        %v3711 = vpop.f32.mrb[0].mxu0
        %v3712 = vadd.f32 0.0, %v3711
        %v3713 = vpop.f32.mrb[0].mxu0
        %3714 = vmatprep.mubr.bf16.mxu0 0
        %3715 = vmatmul.mubr.bf16.gmra.mrb[0].mxu0 %v3658
        %v3716 = vpop.f32.mrb[0].mxu0
        %v3717 = vadd.f32 0.0, %v3716
        %v3718 = vpop.f32.mrb[0].mxu0
        %v3719 = vpop.f32.mrb[0].mxu0
        %v3720 = vadd.f32 0.0, %v3719
        %v3721 = vpop.f32.mrb[0].mxu0
        %3722 = vmatprep.mubr.bf16.mxu0 0
        %3723 = vmatmul.mubr.bf16.gmra.mrb[0].mxu0 %v3661
        %v3724 = vpop.f32.mrb[0].mxu0
        %v3725 = vadd.f32 0.0, %v3724
        %v3726 = vpop.f32.mrb[0].mxu0
        %v3727 = vpop.f32.mrb[0].mxu0
        %v3728 = vadd.f32 0.0, %v3727
        %v3729 = vpop.f32.mrb[0].mxu0
        %3730 = vdwg.mxu0
        %v3731 = vadd.f32 %v3613, %v3701
        %v3732 = vadd.f32 %v3614, %v3704
        %v3733 = vadd.f32 %v3615, %v3709
        %v3734 = vadd.f32 %v3616, %v3712
        %v3735 = vadd.f32 %v3617, %v3717
        %v3736 = vadd.f32 %v3618, %v3720
        %v3737 = vadd.f32 %v3619, %v3725
        %v3738 = vadd.f32 %v3620, %v3728
        %v3739 = vld [vmem:[%s1917] sm:$0xf]
        %v3740 = vld [vmem:[%s1917 + $0x4] sm:$0x1]
        %v3741 = vld [vmem:[%s1917 + $0x8] sm:$0xf]
        %v3742 = vld [vmem:[%s1917 + $0xc] sm:$0x1]
        %v3743 = vld [vmem:[%s1917 + $0x10] sm:$0xf]
        %v3744 = vld [vmem:[%s1917 + $0x14] sm:$0x1]
        %v3745 = vld [vmem:[%s1917 + $0x18] sm:$0xf]
        %v3746 = vld [vmem:[%s1917 + $0x1c] sm:$0x1]
        %v3747 = vld [vmem:[%s1917 + $0x20] sm:$0xf]
        %v3748 = vld [vmem:[%s1917 + $0x24] sm:$0x1]
        %v3749 = vld [vmem:[%s1917 + $0x28] sm:$0xf]
        %v3750 = vld [vmem:[%s1917 + $0x2c] sm:$0x1]
        %v3751 = vld [vmem:[%s1917 + $0x30] sm:$0xf]
        %v3752 = vld [vmem:[%s1917 + $0x34] sm:$0x1]
        %v3753 = vld [vmem:[%s1917 + $0x38] sm:$0xf]
        %v3754 = vld [vmem:[%s1917 + $0x3c] sm:$0x1]
        %v3756 = vshrl.u32 %v3739, 16
        %v3758 = vrot.slane %v3756, 4
        %v3759 = vshll.u32 %v3739, 16
        %v3761 = vrot.slane %v3759, 5
        %v3762 = vor.u32 %v3758, %v3761
        %v3763 = vrot.slane %v3762, 4
        %v3765 = vshll.u32 %v3740, 16
        %v3767 = vrot.slane %v3765, 5
        %v3768 = vsel %vm920, %v3763, %v3767
        %v3770 = vshrl.u32 %v3741, 16
        %v3772 = vrot.slane %v3770, 4
        %v3773 = vshll.u32 %v3741, 16
        %v3775 = vrot.slane %v3773, 5
        %v3776 = vor.u32 %v3772, %v3775
        %v3777 = vrot.slane %v3776, 4
        %v3779 = vshll.u32 %v3742, 16
        %v3781 = vrot.slane %v3779, 5
        %v3782 = vsel %vm920, %v3777, %v3781
        %v3784 = vshrl.u32 %v3743, 16
        %v3786 = vrot.slane %v3784, 4
        %v3787 = vshll.u32 %v3743, 16
        %v3789 = vrot.slane %v3787, 5
        %v3790 = vor.u32 %v3786, %v3789
        %v3791 = vrot.slane %v3790, 4
        %v3793 = vshll.u32 %v3744, 16
        %v3795 = vrot.slane %v3793, 5
        %v3796 = vsel %vm920, %v3791, %v3795
        %v3798 = vshrl.u32 %v3745, 16
        %v3800 = vrot.slane %v3798, 4
        %v3801 = vshll.u32 %v3745, 16
        %v3803 = vrot.slane %v3801, 5
        %v3804 = vor.u32 %v3800, %v3803
        %v3805 = vrot.slane %v3804, 4
        %v3807 = vshll.u32 %v3746, 16
        %v3809 = vrot.slane %v3807, 5
        %v3810 = vsel %vm920, %v3805, %v3809
        %v3812 = vshrl.u32 %v3747, 16
        %v3814 = vrot.slane %v3812, 4
        %v3815 = vshll.u32 %v3747, 16
        %v3817 = vrot.slane %v3815, 5
        %v3818 = vor.u32 %v3814, %v3817
        %v3819 = vrot.slane %v3818, 4
        %v3821 = vshll.u32 %v3748, 16
        %v3823 = vrot.slane %v3821, 5
        %v3824 = vsel %vm920, %v3819, %v3823
        %v3826 = vshrl.u32 %v3749, 16
        %v3828 = vrot.slane %v3826, 4
        %v3829 = vshll.u32 %v3749, 16
        %v3831 = vrot.slane %v3829, 5
        %v3832 = vor.u32 %v3828, %v3831
        %v3833 = vrot.slane %v3832, 4
        %v3835 = vshll.u32 %v3750, 16
        %v3837 = vrot.slane %v3835, 5
        %v3838 = vsel %vm920, %v3833, %v3837
        %v3840 = vshrl.u32 %v3751, 16
        %v3842 = vrot.slane %v3840, 4
        %v3843 = vshll.u32 %v3751, 16
        %v3845 = vrot.slane %v3843, 5
        %v3846 = vor.u32 %v3842, %v3845
        %v3847 = vrot.slane %v3846, 4
        %v3849 = vshll.u32 %v3752, 16
        %v3851 = vrot.slane %v3849, 5
        %v3852 = vsel %vm920, %v3847, %v3851
        %v3854 = vshrl.u32 %v3753, 16
        %v3856 = vrot.slane %v3854, 4
        %v3857 = vshll.u32 %v3753, 16
        %v3859 = vrot.slane %v3857, 5
        %v3860 = vor.u32 %v3856, %v3859
        %v3861 = vrot.slane %v3860, 4
        %v3863 = vshll.u32 %v3754, 16
        %v3865 = vrot.slane %v3863, 5
        %v3866 = vsel %vm920, %v3861, %v3865
        %s3867 = scalar_lea.vmem [#allocation11], 28
        %v3868 = vld [vmem:[%s3867] sm:$0xf]
        %v3869 = vunpack.c.l.b16 %v3768
        %v3870 = vunpack.c.l.b16 %v3782
        %v3871 = vunpack.c.l.b16 %v3796
        %v3872 = vunpack.c.l.b16 %v3810
        %v3873 = vunpack.c.l.b16 %v3824
        %v3874 = vunpack.c.l.b16 %v3838
        %v3875 = vunpack.c.l.b16 %v3852
        %v3876 = vunpack.c.l.b16 %v3866
        %v3877 = vpack.c.b16 %v3870, %v3869
        %v3878 = vpack.c.b16 %v3872, %v3871
        %v3879 = vpack.c.b16 %v3874, %v3873
        %v3880 = vpack.c.b16 %v3876, %v3875
        %v3882 = vsel %vm2775, %v3877, 0
        %v3885 = vsel %vm2775, %v3878, 0
        %v3888 = vsel %vm2775, %v3879, 0
        %v3891 = vsel %vm2775, %v3880, 0
        %v3894 = vsel %vm2788, %v3868, 0
        %3896 = vmatprep.subr.bf16.mxu0 0
        %3897 = vmatpush1.bf16.msra.mxu0 %v3894
        %3898 = vmatprep.subr.bf16.mxu0 0
        %3899 = vmatpush1.bf16.msra.mxu0 0
        %3900 = vmatprep.subr.bf16.mxu0 0
        %3901 = vmatpush1.bf16.msra.mxu0 0
        %3902 = vmatprep.subr.bf16.mxu0 0
        %3903 = vmatpush1.bf16.msra.mxu0 0
        %3904 = vmatprep.subr.bf16.mxu0 0
        %3905 = vmatpush1.bf16.msra.mxu0 0
        %3906 = vmatprep.subr.bf16.mxu0 0
        %3907 = vmatpush1.bf16.msra.mxu0 0
        %3908 = vmatprep.subr.bf16.mxu0 0
        %3909 = vmatpush1.bf16.msra.mxu0 0
        %3910 = vmatprep.subr.bf16.mxu0 0
        %3911 = vmatpush1.bf16.msra.mxu0 0
        %3912 = vmatprep.subr.bf16.mxu0 0
        %3913 = vmatpush1.bf16.msra.mxu0 0
        %3914 = vmatprep.subr.bf16.mxu0 0
        %3915 = vmatpush1.bf16.msra.mxu0 0
        %3916 = vmatprep.subr.bf16.mxu0 0
        %3917 = vmatpush1.bf16.msra.mxu0 0
        %3918 = vmatprep.subr.bf16.mxu0 0
        %3919 = vmatpush1.bf16.msra.mxu0 0
        %3920 = vmatprep.subr.bf16.mxu0 0
        %3921 = vmatpush1.bf16.msra.mxu0 0
        %3922 = vmatprep.subr.bf16.mxu0 0
        %3923 = vmatpush1.bf16.msra.mxu0 0
        %3924 = vmatprep.subr.bf16.mxu0 0
        %3925 = vmatpush1.bf16.msra.mxu0 0
        %3926 = vmatprep.subr.bf16.mxu0 0
        %3927 = vmatpush1.bf16.msra.mxu0 0
        %3928 = vmatprep.mubr.bf16.mxu0 0
        %3929 = vmatmul.mubr.bf16.gmra.mrb[0].mxu0 %v3882
        %v3930 = vpop.f32.mrb[0].mxu0
        %v3931 = vadd.f32 0.0, %v3930
        %v3932 = vpop.f32.mrb[0].mxu0
        %v3933 = vpop.f32.mrb[0].mxu0
        %v3934 = vadd.f32 0.0, %v3933
        %v3935 = vpop.f32.mrb[0].mxu0
        %3936 = vmatprep.mubr.bf16.mxu0 0
        %3937 = vmatmul.mubr.bf16.gmra.mrb[0].mxu0 %v3885
        %v3938 = vpop.f32.mrb[0].mxu0
        %v3939 = vadd.f32 0.0, %v3938
        %v3940 = vpop.f32.mrb[0].mxu0
        %v3941 = vpop.f32.mrb[0].mxu0
        %v3942 = vadd.f32 0.0, %v3941
        %v3943 = vpop.f32.mrb[0].mxu0
        %3944 = vmatprep.mubr.bf16.mxu0 0
        %3945 = vmatmul.mubr.bf16.gmra.mrb[0].mxu0 %v3888
        %v3946 = vpop.f32.mrb[0].mxu0
        %v3947 = vadd.f32 0.0, %v3946
        %v3948 = vpop.f32.mrb[0].mxu0
        %v3949 = vpop.f32.mrb[0].mxu0
        %v3950 = vadd.f32 0.0, %v3949
        %v3951 = vpop.f32.mrb[0].mxu0
        %3952 = vmatprep.mubr.bf16.mxu0 0
        %3953 = vmatmul.mubr.bf16.gmra.mrb[0].mxu0 %v3891
        %v3954 = vpop.f32.mrb[0].mxu0
        %v3955 = vadd.f32 0.0, %v3954
        %v3956 = vpop.f32.mrb[0].mxu0
        %v3957 = vpop.f32.mrb[0].mxu0
        %v3958 = vadd.f32 0.0, %v3957
        %v3959 = vpop.f32.mrb[0].mxu0
        %3960 = vdwg.mxu0
        %v3961 = vadd.f32 %v3731, %v3931
        %v3962 = vadd.f32 %v3732, %v3934
        %v3963 = vadd.f32 %v3733, %v3939
        %v3964 = vadd.f32 %v3734, %v3942
        %v3965 = vadd.f32 %v3735, %v3947
        %v3966 = vadd.f32 %v3736, %v3950
        %v3967 = vadd.f32 %v3737, %v3955
        %v3968 = vadd.f32 %v3738, %v3958
        %v3969 = vld [vmem:[%s1917] sm:$0xe]
        %v3970 = vld [vmem:[%s1917 + $0x8] sm:$0xe]
        %v3971 = vld [vmem:[%s1917 + $0x10] sm:$0xe]
        %v3972 = vld [vmem:[%s1917 + $0x18] sm:$0xe]
        %v3973 = vld [vmem:[%s1917 + $0x20] sm:$0xe]
        %v3974 = vld [vmem:[%s1917 + $0x28] sm:$0xe]
        %v3975 = vld [vmem:[%s1917 + $0x30] sm:$0xe]
        %v3976 = vld [vmem:[%s1917 + $0x38] sm:$0xe]
        %v3993 = vrot.slane %v3969, 5
        %v3994 = vrot.slane %v3993, 4
        %v3995 = vrot.slane %v3740, 5
        %v3996 = vsel %vm1260, %v3994, %v3995
        %v3997 = vrot.slane %v3970, 5
        %v3998 = vrot.slane %v3997, 4
        %v3999 = vrot.slane %v3742, 5
        %v4000 = vsel %vm1260, %v3998, %v3999
        %v4001 = vrot.slane %v3971, 5
        %v4002 = vrot.slane %v4001, 4
        %v4003 = vrot.slane %v3744, 5
        %v4004 = vsel %vm1260, %v4002, %v4003
        %v4005 = vrot.slane %v3972, 5
        %v4006 = vrot.slane %v4005, 4
        %v4007 = vrot.slane %v3746, 5
        %v4008 = vsel %vm1260, %v4006, %v4007
        %v4009 = vrot.slane %v3973, 5
        %v4010 = vrot.slane %v4009, 4
        %v4011 = vrot.slane %v3748, 5
        %v4012 = vsel %vm1260, %v4010, %v4011
        %v4013 = vrot.slane %v3974, 5
        %v4014 = vrot.slane %v4013, 4
        %v4015 = vrot.slane %v3750, 5
        %v4016 = vsel %vm1260, %v4014, %v4015
        %v4017 = vrot.slane %v3975, 5
        %v4018 = vrot.slane %v4017, 4
        %v4019 = vrot.slane %v3752, 5
        %v4020 = vsel %vm1260, %v4018, %v4019
        %v4021 = vrot.slane %v3976, 5
        %v4022 = vrot.slane %v4021, 4
        %v4023 = vrot.slane %v3754, 5
        %v4024 = vsel %vm1260, %v4022, %v4023
        %s4025 = scalar_lea.vmem [#allocation11], 32
        %v4026 = vld [vmem:[%s4025] sm:$0xf]
        %v4027 = vunpack.c.l.b16 %v3996
        %v4028 = vunpack.c.l.b16 %v4000
        %v4029 = vunpack.c.l.b16 %v4004
        %v4030 = vunpack.c.l.b16 %v4008
        %v4031 = vunpack.c.l.b16 %v4012
        %v4032 = vunpack.c.l.b16 %v4016
        %v4033 = vunpack.c.l.b16 %v4020
        %v4034 = vunpack.c.l.b16 %v4024
        %v4035 = vpack.c.b16 %v4028, %v4027
        %v4036 = vpack.c.b16 %v4030, %v4029
        %v4037 = vpack.c.b16 %v4032, %v4031
        %v4038 = vpack.c.b16 %v4034, %v4033
        %v4040 = vsel %vm2775, %v4035, 0
        %v4043 = vsel %vm2775, %v4036, 0
        %v4046 = vsel %vm2775, %v4037, 0
        %v4049 = vsel %vm2775, %v4038, 0
        %v4052 = vsel %vm2788, %v4026, 0
        %4054 = vmatprep.subr.bf16.mxu0 0
        %4055 = vmatpush1.bf16.msra.mxu0 %v4052
        %4056 = vmatprep.subr.bf16.mxu0 0
        %4057 = vmatpush1.bf16.msra.mxu0 0
        %4058 = vmatprep.subr.bf16.mxu0 0
        %4059 = vmatpush1.bf16.msra.mxu0 0
        %4060 = vmatprep.subr.bf16.mxu0 0
        %4061 = vmatpush1.bf16.msra.mxu0 0
        %4062 = vmatprep.subr.bf16.mxu0 0
        %4063 = vmatpush1.bf16.msra.mxu0 0
        %4064 = vmatprep.subr.bf16.mxu0 0
        %4065 = vmatpush1.bf16.msra.mxu0 0
        %4066 = vmatprep.subr.bf16.mxu0 0
        %4067 = vmatpush1.bf16.msra.mxu0 0
        %4068 = vmatprep.subr.bf16.mxu0 0
        %4069 = vmatpush1.bf16.msra.mxu0 0
        %4070 = vmatprep.subr.bf16.mxu0 0
        %4071 = vmatpush1.bf16.msra.mxu0 0
        %4072 = vmatprep.subr.bf16.mxu0 0
        %4073 = vmatpush1.bf16.msra.mxu0 0
        %4074 = vmatprep.subr.bf16.mxu0 0
        %4075 = vmatpush1.bf16.msra.mxu0 0
        %4076 = vmatprep.subr.bf16.mxu0 0
        %4077 = vmatpush1.bf16.msra.mxu0 0
        %4078 = vmatprep.subr.bf16.mxu0 0
        %4079 = vmatpush1.bf16.msra.mxu0 0
        %4080 = vmatprep.subr.bf16.mxu0 0
        %4081 = vmatpush1.bf16.msra.mxu0 0
        %4082 = vmatprep.subr.bf16.mxu0 0
        %4083 = vmatpush1.bf16.msra.mxu0 0
        %4084 = vmatprep.subr.bf16.mxu0 0
        %4085 = vmatpush1.bf16.msra.mxu0 0
        %4086 = vmatprep.mubr.bf16.mxu0 0
        %4087 = vmatmul.mubr.bf16.gmra.mrb[0].mxu0 %v4040
        %v4088 = vpop.f32.mrb[0].mxu0
        %v4089 = vadd.f32 0.0, %v4088
        %v4090 = vpop.f32.mrb[0].mxu0
        %v4091 = vpop.f32.mrb[0].mxu0
        %v4092 = vadd.f32 0.0, %v4091
        %v4093 = vpop.f32.mrb[0].mxu0
        %4094 = vmatprep.mubr.bf16.mxu0 0
        %4095 = vmatmul.mubr.bf16.gmra.mrb[0].mxu0 %v4043
        %v4096 = vpop.f32.mrb[0].mxu0
        %v4097 = vadd.f32 0.0, %v4096
        %v4098 = vpop.f32.mrb[0].mxu0
        %v4099 = vpop.f32.mrb[0].mxu0
        %v4100 = vadd.f32 0.0, %v4099
        %v4101 = vpop.f32.mrb[0].mxu0
        %4102 = vmatprep.mubr.bf16.mxu0 0
        %4103 = vmatmul.mubr.bf16.gmra.mrb[0].mxu0 %v4046
        %v4104 = vpop.f32.mrb[0].mxu0
        %v4105 = vadd.f32 0.0, %v4104
        %v4106 = vpop.f32.mrb[0].mxu0
        %v4107 = vpop.f32.mrb[0].mxu0
        %v4108 = vadd.f32 0.0, %v4107
        %v4109 = vpop.f32.mrb[0].mxu0
        %4110 = vmatprep.mubr.bf16.mxu0 0
        %4111 = vmatmul.mubr.bf16.gmra.mrb[0].mxu0 %v4049
        %v4112 = vpop.f32.mrb[0].mxu0
        %v4113 = vadd.f32 0.0, %v4112
        %v4114 = vpop.f32.mrb[0].mxu0
        %v4115 = vpop.f32.mrb[0].mxu0
        %v4116 = vadd.f32 0.0, %v4115
        %v4117 = vpop.f32.mrb[0].mxu0
        %4118 = vdwg.mxu0
        %v4119 = vadd.f32 %v3961, %v4089
        %v4120 = vadd.f32 %v3962, %v4092
        %v4121 = vadd.f32 %v3963, %v4097
        %v4122 = vadd.f32 %v3964, %v4100
        %v4123 = vadd.f32 %v3965, %v4105
        %v4124 = vadd.f32 %v3966, %v4108
        %v4125 = vadd.f32 %v3967, %v4113
        %v4126 = vadd.f32 %v3968, %v4116
        %v4127 = vpack.c.bf16 %v2428, %v2428
        %v4128 = vpack.c.bf16 %v2429, %v2429
        %v4129 = vpack.c.bf16 %v2430, %v2430
        %v4130 = vpack.c.bf16 %v2431, %v2431
        %v4131 = vpack.c.bf16 %v2432, %v2432
        %v4132 = vpack.c.bf16 %v2433, %v2433
        %v4133 = vpack.c.bf16 %v2434, %v2434
        %v4134 = vpack.c.bf16 %v2435, %v2435
        %v4143 = vunpack.c.l.b16 %v4127
        %v4144 = vunpack.c.l.b16 %v4128
        %v4145 = vunpack.c.l.b16 %v4129
        %v4146 = vunpack.c.l.b16 %v4130
        %v4147 = vunpack.c.l.b16 %v4131
        %v4148 = vunpack.c.l.b16 %v4132
        %v4149 = vunpack.c.l.b16 %v4133
        %v4150 = vunpack.c.l.b16 %v4134
        %v4151 = vpack.c.b16 %v4143, %v4143
        %v4152 = vpack.c.b16 %v4144, %v4144
        %v4153 = vpack.c.b16 %v4145, %v4145
        %v4154 = vpack.c.b16 %v4146, %v4146
        %v4155 = vpack.c.b16 %v4147, %v4147
        %v4156 = vpack.c.b16 %v4148, %v4148
        %v4157 = vpack.c.b16 %v4149, %v4149
        %v4158 = vpack.c.b16 %v4150, %v4150
        %v4160 = vshrl.u32 %v4151, 16
        %v4162 = vrot.slane %v4160, 7
        %v4163 = vshll.u32 %v4151, 16
        %v4165 = vor.u32 %v4162, %v4163
        %v4166 = vrot.slane %v4162, 4
        %v4168 = vshrl.u32 %v4152, 16
        %v4170 = vrot.slane %v4168, 7
        %v4171 = vshll.u32 %v4152, 16
        %v4173 = vor.u32 %v4170, %v4171
        %v4174 = vrot.slane %v4170, 4
        %v4176 = vshrl.u32 %v4153, 16
        %v4178 = vrot.slane %v4176, 7
        %v4179 = vshll.u32 %v4153, 16
        %v4181 = vor.u32 %v4178, %v4179
        %v4182 = vrot.slane %v4178, 4
        %v4184 = vshrl.u32 %v4154, 16
        %v4186 = vrot.slane %v4184, 7
        %v4187 = vshll.u32 %v4154, 16
        %v4189 = vor.u32 %v4186, %v4187
        %v4190 = vrot.slane %v4186, 4
        %v4192 = vshrl.u32 %v4155, 16
        %v4194 = vrot.slane %v4192, 7
        %v4195 = vshll.u32 %v4155, 16
        %v4197 = vor.u32 %v4194, %v4195
        %v4198 = vrot.slane %v4194, 4
        %v4200 = vshrl.u32 %v4156, 16
        %v4202 = vrot.slane %v4200, 7
        %v4203 = vshll.u32 %v4156, 16
        %v4205 = vor.u32 %v4202, %v4203
        %v4206 = vrot.slane %v4202, 4
        %v4208 = vshrl.u32 %v4157, 16
        %v4210 = vrot.slane %v4208, 7
        %v4211 = vshll.u32 %v4157, 16
        %v4213 = vor.u32 %v4210, %v4211
        %v4214 = vrot.slane %v4210, 4
        %v4216 = vshrl.u32 %v4158, 16
        %v4218 = vrot.slane %v4216, 7
        %v4219 = vshll.u32 %v4158, 16
        %v4221 = vor.u32 %v4218, %v4219
        %v4222 = vrot.slane %v4218, 4
        %v4239 = vsel %vm2582, %v4165, %v3233
        %4240 = vst [vmem:[%s845] sm:$0xf] %v4239
        %v4241 = vld [vmem:[%s845 + $0x4] sm:$0x1]
        %v4242 = vsel %vm2586, %v4166, %v4241
        %4243 = vst [vmem:[%s845 + $0x4] sm:$0x1] %v4242
        %v4244 = vld [vmem:[%s845 + $0x8] sm:$0xf]
        %v4245 = vsel %vm2582, %v4173, %v4244
        %4246 = vst [vmem:[%s845 + $0x8] sm:$0xf] %v4245
        %v4247 = vld [vmem:[%s845 + $0xc] sm:$0x1]
        %v4248 = vsel %vm2586, %v4174, %v4247
        %4249 = vst [vmem:[%s845 + $0xc] sm:$0x1] %v4248
        %v4250 = vld [vmem:[%s845 + $0x10] sm:$0xf]
        %v4251 = vsel %vm2582, %v4181, %v4250
        %4252 = vst [vmem:[%s845 + $0x10] sm:$0xf] %v4251
        %v4253 = vld [vmem:[%s845 + $0x14] sm:$0x1]
        %v4254 = vsel %vm2586, %v4182, %v4253
        %4255 = vst [vmem:[%s845 + $0x14] sm:$0x1] %v4254
        %v4256 = vld [vmem:[%s845 + $0x18] sm:$0xf]
        %v4257 = vsel %vm2582, %v4189, %v4256
        %4258 = vst [vmem:[%s845 + $0x18] sm:$0xf] %v4257
        %v4259 = vld [vmem:[%s845 + $0x1c] sm:$0x1]
        %v4260 = vsel %vm2586, %v4190, %v4259
        %4261 = vst [vmem:[%s845 + $0x1c] sm:$0x1] %v4260
        %v4262 = vld [vmem:[%s845 + $0x20] sm:$0xf]
        %v4263 = vsel %vm2582, %v4197, %v4262
        %4264 = vst [vmem:[%s845 + $0x20] sm:$0xf] %v4263
        %v4265 = vld [vmem:[%s845 + $0x24] sm:$0x1]
        %v4266 = vsel %vm2586, %v4198, %v4265
        %4267 = vst [vmem:[%s845 + $0x24] sm:$0x1] %v4266
        %v4268 = vld [vmem:[%s845 + $0x28] sm:$0xf]
        %v4269 = vsel %vm2582, %v4205, %v4268
        %4270 = vst [vmem:[%s845 + $0x28] sm:$0xf] %v4269
        %v4271 = vld [vmem:[%s845 + $0x2c] sm:$0x1]
        %v4272 = vsel %vm2586, %v4206, %v4271
        %4273 = vst [vmem:[%s845 + $0x2c] sm:$0x1] %v4272
        %v4274 = vld [vmem:[%s845 + $0x30] sm:$0xf]
        %v4275 = vsel %vm2582, %v4213, %v4274
        %4276 = vst [vmem:[%s845 + $0x30] sm:$0xf] %v4275
        %v4277 = vld [vmem:[%s845 + $0x34] sm:$0x1]
        %v4278 = vsel %vm2586, %v4214, %v4277
        %4279 = vst [vmem:[%s845 + $0x34] sm:$0x1] %v4278
        %v4280 = vld [vmem:[%s845 + $0x38] sm:$0xf]
        %v4281 = vsel %vm2582, %v4221, %v4280
        %4282 = vst [vmem:[%s845 + $0x38] sm:$0xf] %v4281
        %v4283 = vld [vmem:[%s845 + $0x3c] sm:$0x1]
        %v4284 = vsel %vm2586, %v4222, %v4283
        %4285 = vst [vmem:[%s845 + $0x3c] sm:$0x1] %v4284
        %v4286 = vld [vmem:[#allocation2] sm:$0xf]
        %v4287 = vld [vmem:[#allocation2 + $0x8] sm:$0xf]
        %v4288 = vld [vmem:[#allocation2 + $0x10] sm:$0xf]
        %v4289 = vld [vmem:[#allocation2 + $0x18] sm:$0xf]
        %v4290 = vld [vmem:[#allocation2 + $0x20] sm:$0xf]
        %v4291 = vld [vmem:[#allocation2 + $0x28] sm:$0xf]
        %v4292 = vld [vmem:[#allocation2 + $0x30] sm:$0xf]
        %v4293 = vld [vmem:[#allocation2 + $0x38] sm:$0xf]
        %v4294 = vld [vmem:[#allocation12] sm:$0xf]
        %v4303 = vunpack.c.l.b16 %v4286
        %v4304 = vunpack.c.l.b16 %v4287
        %v4305 = vunpack.c.l.b16 %v4288
        %v4306 = vunpack.c.l.b16 %v4289
        %v4307 = vunpack.c.l.b16 %v4290
        %v4308 = vunpack.c.l.b16 %v4291
        %v4309 = vunpack.c.l.b16 %v4292
        %v4310 = vunpack.c.l.b16 %v4293
        %v4311 = vpack.c.b16 %v4304, %v4303
        %v4312 = vpack.c.b16 %v4306, %v4305
        %v4313 = vpack.c.b16 %v4308, %v4307
        %v4314 = vpack.c.b16 %v4310, %v4309
        %v4316 = vsel %vm2775, %v4311, 0
        %v4319 = vsel %vm2775, %v4312, 0
        %v4322 = vsel %vm2775, %v4313, 0
        %v4325 = vsel %vm2775, %v4314, 0
        %v4328 = vsel %vm2788, %v4294, 0
        %4330 = vmatprep.subr.bf16.mxu0 0
        %4331 = vmatpush1.bf16.msra.mxu0 %v4328
        %4332 = vmatprep.subr.bf16.mxu0 0
        %4333 = vmatpush1.bf16.msra.mxu0 0
        %4334 = vmatprep.subr.bf16.mxu0 0
        %4335 = vmatpush1.bf16.msra.mxu0 0
        %4336 = vmatprep.subr.bf16.mxu0 0
        %4337 = vmatpush1.bf16.msra.mxu0 0
        %4338 = vmatprep.subr.bf16.mxu0 0
        %4339 = vmatpush1.bf16.msra.mxu0 0
        %4340 = vmatprep.subr.bf16.mxu0 0
        %4341 = vmatpush1.bf16.msra.mxu0 0
        %4342 = vmatprep.subr.bf16.mxu0 0
        %4343 = vmatpush1.bf16.msra.mxu0 0
        %4344 = vmatprep.subr.bf16.mxu0 0
        %4345 = vmatpush1.bf16.msra.mxu0 0
        %4346 = vmatprep.subr.bf16.mxu0 0
        %4347 = vmatpush1.bf16.msra.mxu0 0
        %4348 = vmatprep.subr.bf16.mxu0 0
        %4349 = vmatpush1.bf16.msra.mxu0 0
        %4350 = vmatprep.subr.bf16.mxu0 0
        %4351 = vmatpush1.bf16.msra.mxu0 0
        %4352 = vmatprep.subr.bf16.mxu0 0
        %4353 = vmatpush1.bf16.msra.mxu0 0
        %4354 = vmatprep.subr.bf16.mxu0 0
        %4355 = vmatpush1.bf16.msra.mxu0 0
        %4356 = vmatprep.subr.bf16.mxu0 0
        %4357 = vmatpush1.bf16.msra.mxu0 0
        %4358 = vmatprep.subr.bf16.mxu0 0
        %4359 = vmatpush1.bf16.msra.mxu0 0
        %4360 = vmatprep.subr.bf16.mxu0 0
        %4361 = vmatpush1.bf16.msra.mxu0 0
        %4362 = vmatprep.mubr.bf16.mxu0 0
        %4363 = vmatmul.mubr.bf16.gmra.mrb[0].mxu0 %v4316
        %v4364 = vpop.f32.mrb[0].mxu0
        %v4365 = vadd.f32 0.0, %v4364
        %v4366 = vpop.f32.mrb[0].mxu0
        %v4367 = vpop.f32.mrb[0].mxu0
        %v4368 = vadd.f32 0.0, %v4367
        %v4369 = vpop.f32.mrb[0].mxu0
        %4370 = vmatprep.mubr.bf16.mxu0 0
        %4371 = vmatmul.mubr.bf16.gmra.mrb[0].mxu0 %v4319
        %v4372 = vpop.f32.mrb[0].mxu0
        %v4373 = vadd.f32 0.0, %v4372
        %v4374 = vpop.f32.mrb[0].mxu0
        %v4375 = vpop.f32.mrb[0].mxu0
        %v4376 = vadd.f32 0.0, %v4375
        %v4377 = vpop.f32.mrb[0].mxu0
        %4378 = vmatprep.mubr.bf16.mxu0 0
        %4379 = vmatmul.mubr.bf16.gmra.mrb[0].mxu0 %v4322
        %v4380 = vpop.f32.mrb[0].mxu0
        %v4381 = vadd.f32 0.0, %v4380
        %v4382 = vpop.f32.mrb[0].mxu0
        %v4383 = vpop.f32.mrb[0].mxu0
        %v4384 = vadd.f32 0.0, %v4383
        %v4385 = vpop.f32.mrb[0].mxu0
        %4386 = vmatprep.mubr.bf16.mxu0 0
        %4387 = vmatmul.mubr.bf16.gmra.mrb[0].mxu0 %v4325
        %v4388 = vpop.f32.mrb[0].mxu0
        %v4389 = vadd.f32 0.0, %v4388
        %v4390 = vpop.f32.mrb[0].mxu0
        %v4391 = vpop.f32.mrb[0].mxu0
        %v4392 = vadd.f32 0.0, %v4391
        %v4393 = vpop.f32.mrb[0].mxu0
        %4394 = vdwg.mxu0
        %v4395 = vadd.f32 %v4119, %v4365
        %v4396 = vadd.f32 %v4120, %v4368
        %v4397 = vadd.f32 %v4121, %v4373
        %v4398 = vadd.f32 %v4122, %v4376
        %v4399 = vadd.f32 %v4123, %v4381
        %v4400 = vadd.f32 %v4124, %v4384
        %v4401 = vadd.f32 %v4125, %v4389
        %v4402 = vadd.f32 %v4126, %v4392
        %v4403 = vld [vmem:[#allocation2] sm:$0xf]
        %v4404 = vld [vmem:[#allocation2 + $0x4] sm:$0x1]
        %v4405 = vld [vmem:[#allocation2 + $0x8] sm:$0xf]
        %v4406 = vld [vmem:[#allocation2 + $0xc] sm:$0x1]
        %v4407 = vld [vmem:[#allocation2 + $0x10] sm:$0xf]
        %v4408 = vld [vmem:[#allocation2 + $0x14] sm:$0x1]
        %v4409 = vld [vmem:[#allocation2 + $0x18] sm:$0xf]
        %v4410 = vld [vmem:[#allocation2 + $0x1c] sm:$0x1]
        %v4411 = vld [vmem:[#allocation2 + $0x20] sm:$0xf]
        %v4412 = vld [vmem:[#allocation2 + $0x24] sm:$0x1]
        %v4413 = vld [vmem:[#allocation2 + $0x28] sm:$0xf]
        %v4414 = vld [vmem:[#allocation2 + $0x2c] sm:$0x1]
        %v4415 = vld [vmem:[#allocation2 + $0x30] sm:$0xf]
        %v4416 = vld [vmem:[#allocation2 + $0x34] sm:$0x1]
        %v4417 = vld [vmem:[#allocation2 + $0x38] sm:$0xf]
        %v4418 = vld [vmem:[#allocation2 + $0x3c] sm:$0x1]
        %v4420 = vshrl.u32 %v4403, 16
        %v4422 = vrot.slane %v4420, 4
        %v4423 = vshll.u32 %v4403, 16
        %v4425 = vrot.slane %v4423, 5
        %v4426 = vor.u32 %v4422, %v4425
        %v4427 = vrot.slane %v4426, 4
        %v4429 = vshll.u32 %v4404, 16
        %v4431 = vrot.slane %v4429, 5
        %v4432 = vsel %vm920, %v4427, %v4431
        %v4434 = vshrl.u32 %v4405, 16
        %v4436 = vrot.slane %v4434, 4
        %v4437 = vshll.u32 %v4405, 16
        %v4439 = vrot.slane %v4437, 5
        %v4440 = vor.u32 %v4436, %v4439
        %v4441 = vrot.slane %v4440, 4
        %v4443 = vshll.u32 %v4406, 16
        %v4445 = vrot.slane %v4443, 5
        %v4446 = vsel %vm920, %v4441, %v4445
        %v4448 = vshrl.u32 %v4407, 16
        %v4450 = vrot.slane %v4448, 4
        %v4451 = vshll.u32 %v4407, 16
        %v4453 = vrot.slane %v4451, 5
        %v4454 = vor.u32 %v4450, %v4453
        %v4455 = vrot.slane %v4454, 4
        %v4457 = vshll.u32 %v4408, 16
        %v4459 = vrot.slane %v4457, 5
        %v4460 = vsel %vm920, %v4455, %v4459
        %v4462 = vshrl.u32 %v4409, 16
        %v4464 = vrot.slane %v4462, 4
        %v4465 = vshll.u32 %v4409, 16
        %v4467 = vrot.slane %v4465, 5
        %v4468 = vor.u32 %v4464, %v4467
        %v4469 = vrot.slane %v4468, 4
        %v4471 = vshll.u32 %v4410, 16
        %v4473 = vrot.slane %v4471, 5
        %v4474 = vsel %vm920, %v4469, %v4473
        %v4476 = vshrl.u32 %v4411, 16
        %v4478 = vrot.slane %v4476, 4
        %v4479 = vshll.u32 %v4411, 16
        %v4481 = vrot.slane %v4479, 5
        %v4482 = vor.u32 %v4478, %v4481
        %v4483 = vrot.slane %v4482, 4
        %v4485 = vshll.u32 %v4412, 16
        %v4487 = vrot.slane %v4485, 5
        %v4488 = vsel %vm920, %v4483, %v4487
        %v4490 = vshrl.u32 %v4413, 16
        %v4492 = vrot.slane %v4490, 4
        %v4493 = vshll.u32 %v4413, 16
        %v4495 = vrot.slane %v4493, 5
        %v4496 = vor.u32 %v4492, %v4495
        %v4497 = vrot.slane %v4496, 4
        %v4499 = vshll.u32 %v4414, 16
        %v4501 = vrot.slane %v4499, 5
        %v4502 = vsel %vm920, %v4497, %v4501
        %v4504 = vshrl.u32 %v4415, 16
        %v4506 = vrot.slane %v4504, 4
        %v4507 = vshll.u32 %v4415, 16
        %v4509 = vrot.slane %v4507, 5
        %v4510 = vor.u32 %v4506, %v4509
        %v4511 = vrot.slane %v4510, 4
        %v4513 = vshll.u32 %v4416, 16
        %v4515 = vrot.slane %v4513, 5
        %v4516 = vsel %vm920, %v4511, %v4515
        %v4518 = vshrl.u32 %v4417, 16
        %v4520 = vrot.slane %v4518, 4
        %v4521 = vshll.u32 %v4417, 16
        %v4523 = vrot.slane %v4521, 5
        %v4524 = vor.u32 %v4520, %v4523
        %v4525 = vrot.slane %v4524, 4
        %v4527 = vshll.u32 %v4418, 16
        %v4529 = vrot.slane %v4527, 5
        %v4530 = vsel %vm920, %v4525, %v4529
        %s4531 = scalar_lea.vmem [#allocation12], 4
        %v4532 = vld [vmem:[%s4531] sm:$0xf]
        %v4533 = vunpack.c.l.b16 %v4432
        %v4534 = vunpack.c.l.b16 %v4446
        %v4535 = vunpack.c.l.b16 %v4460
        %v4536 = vunpack.c.l.b16 %v4474
        %v4537 = vunpack.c.l.b16 %v4488
        %v4538 = vunpack.c.l.b16 %v4502
        %v4539 = vunpack.c.l.b16 %v4516
        %v4540 = vunpack.c.l.b16 %v4530
        %v4541 = vpack.c.b16 %v4534, %v4533
        %v4542 = vpack.c.b16 %v4536, %v4535
        %v4543 = vpack.c.b16 %v4538, %v4537
        %v4544 = vpack.c.b16 %v4540, %v4539
        %v4546 = vsel %vm2775, %v4541, 0
        %v4549 = vsel %vm2775, %v4542, 0
        %v4552 = vsel %vm2775, %v4543, 0
        %v4555 = vsel %vm2775, %v4544, 0
        %v4558 = vsel %vm2788, %v4532, 0
        %4560 = vmatprep.subr.bf16.mxu0 0
        %4561 = vmatpush1.bf16.msra.mxu0 %v4558
        %4562 = vmatprep.subr.bf16.mxu0 0
        %4563 = vmatpush1.bf16.msra.mxu0 0
        %4564 = vmatprep.subr.bf16.mxu0 0
        %4565 = vmatpush1.bf16.msra.mxu0 0
        %4566 = vmatprep.subr.bf16.mxu0 0
        %4567 = vmatpush1.bf16.msra.mxu0 0
        %4568 = vmatprep.subr.bf16.mxu0 0
        %4569 = vmatpush1.bf16.msra.mxu0 0
        %4570 = vmatprep.subr.bf16.mxu0 0
        %4571 = vmatpush1.bf16.msra.mxu0 0
        %4572 = vmatprep.subr.bf16.mxu0 0
        %4573 = vmatpush1.bf16.msra.mxu0 0
        %4574 = vmatprep.subr.bf16.mxu0 0
        %4575 = vmatpush1.bf16.msra.mxu0 0
        %4576 = vmatprep.subr.bf16.mxu0 0
        %4577 = vmatpush1.bf16.msra.mxu0 0
        %4578 = vmatprep.subr.bf16.mxu0 0
        %4579 = vmatpush1.bf16.msra.mxu0 0
        %4580 = vmatprep.subr.bf16.mxu0 0
        %4581 = vmatpush1.bf16.msra.mxu0 0
        %4582 = vmatprep.subr.bf16.mxu0 0
        %4583 = vmatpush1.bf16.msra.mxu0 0
        %4584 = vmatprep.subr.bf16.mxu0 0
        %4585 = vmatpush1.bf16.msra.mxu0 0
        %4586 = vmatprep.subr.bf16.mxu0 0
        %4587 = vmatpush1.bf16.msra.mxu0 0
        %4588 = vmatprep.subr.bf16.mxu0 0
        %4589 = vmatpush1.bf16.msra.mxu0 0
        %4590 = vmatprep.subr.bf16.mxu0 0
        %4591 = vmatpush1.bf16.msra.mxu0 0
        %4592 = vmatprep.mubr.bf16.mxu0 0
        %4593 = vmatmul.mubr.bf16.gmra.mrb[0].mxu0 %v4546
        %v4594 = vpop.f32.mrb[0].mxu0
        %v4595 = vadd.f32 0.0, %v4594
        %v4596 = vpop.f32.mrb[0].mxu0
        %v4597 = vpop.f32.mrb[0].mxu0
        %v4598 = vadd.f32 0.0, %v4597
        %v4599 = vpop.f32.mrb[0].mxu0
        %4600 = vmatprep.mubr.bf16.mxu0 0
        %4601 = vmatmul.mubr.bf16.gmra.mrb[0].mxu0 %v4549
        %v4602 = vpop.f32.mrb[0].mxu0
        %v4603 = vadd.f32 0.0, %v4602
        %v4604 = vpop.f32.mrb[0].mxu0
        %v4605 = vpop.f32.mrb[0].mxu0
        %v4606 = vadd.f32 0.0, %v4605
        %v4607 = vpop.f32.mrb[0].mxu0
        %4608 = vmatprep.mubr.bf16.mxu0 0
        %4609 = vmatmul.mubr.bf16.gmra.mrb[0].mxu0 %v4552
        %v4610 = vpop.f32.mrb[0].mxu0
        %v4611 = vadd.f32 0.0, %v4610
        %v4612 = vpop.f32.mrb[0].mxu0
        %v4613 = vpop.f32.mrb[0].mxu0
        %v4614 = vadd.f32 0.0, %v4613
        %v4615 = vpop.f32.mrb[0].mxu0
        %4616 = vmatprep.mubr.bf16.mxu0 0
        %4617 = vmatmul.mubr.bf16.gmra.mrb[0].mxu0 %v4555
        %v4618 = vpop.f32.mrb[0].mxu0
        %v4619 = vadd.f32 0.0, %v4618
        %v4620 = vpop.f32.mrb[0].mxu0
        %v4621 = vpop.f32.mrb[0].mxu0
        %v4622 = vadd.f32 0.0, %v4621
        %v4623 = vpop.f32.mrb[0].mxu0
        %4624 = vdwg.mxu0
        %v4625 = vadd.f32 %v4395, %v4595
        %v4626 = vadd.f32 %v4396, %v4598
        %v4627 = vadd.f32 %v4397, %v4603
        %v4628 = vadd.f32 %v4398, %v4606
        %v4629 = vadd.f32 %v4399, %v4611
        %v4630 = vadd.f32 %v4400, %v4614
        %v4631 = vadd.f32 %v4401, %v4619
        %v4632 = vadd.f32 %v4402, %v4622
        %v4633 = vld [vmem:[#allocation2] sm:$0xe]
        %v4634 = vld [vmem:[#allocation2 + $0x8] sm:$0xe]
        %v4635 = vld [vmem:[#allocation2 + $0x10] sm:$0xe]
        %v4636 = vld [vmem:[#allocation2 + $0x18] sm:$0xe]
        %v4637 = vld [vmem:[#allocation2 + $0x20] sm:$0xe]
        %v4638 = vld [vmem:[#allocation2 + $0x28] sm:$0xe]
        %v4639 = vld [vmem:[#allocation2 + $0x30] sm:$0xe]
        %v4640 = vld [vmem:[#allocation2 + $0x38] sm:$0xe]
        %v4657 = vrot.slane %v4633, 5
        %v4658 = vrot.slane %v4657, 4
        %v4659 = vrot.slane %v4404, 5
        %v4660 = vsel %vm1260, %v4658, %v4659
        %v4661 = vrot.slane %v4634, 5
        %v4662 = vrot.slane %v4661, 4
        %v4663 = vrot.slane %v4406, 5
        %v4664 = vsel %vm1260, %v4662, %v4663
        %v4665 = vrot.slane %v4635, 5
        %v4666 = vrot.slane %v4665, 4
        %v4667 = vrot.slane %v4408, 5
        %v4668 = vsel %vm1260, %v4666, %v4667
        %v4669 = vrot.slane %v4636, 5
        %v4670 = vrot.slane %v4669, 4
        %v4671 = vrot.slane %v4410, 5
        %v4672 = vsel %vm1260, %v4670, %v4671
        %v4673 = vrot.slane %v4637, 5
        %v4674 = vrot.slane %v4673, 4
        %v4675 = vrot.slane %v4412, 5
        %v4676 = vsel %vm1260, %v4674, %v4675
        %v4677 = vrot.slane %v4638, 5
        %v4678 = vrot.slane %v4677, 4
        %v4679 = vrot.slane %v4414, 5
        %v4680 = vsel %vm1260, %v4678, %v4679
        %v4681 = vrot.slane %v4639, 5
        %v4682 = vrot.slane %v4681, 4
        %v4683 = vrot.slane %v4416, 5
        %v4684 = vsel %vm1260, %v4682, %v4683
        %v4685 = vrot.slane %v4640, 5
        %v4686 = vrot.slane %v4685, 4
        %v4687 = vrot.slane %v4418, 5
        %v4688 = vsel %vm1260, %v4686, %v4687
        %s4689 = scalar_lea.vmem [#allocation12], 8
        %v4690 = vld [vmem:[%s4689] sm:$0xf]
        %v4691 = vunpack.c.l.b16 %v4660
        %v4692 = vunpack.c.l.b16 %v4664
        %v4693 = vunpack.c.l.b16 %v4668
        %v4694 = vunpack.c.l.b16 %v4672
        %v4695 = vunpack.c.l.b16 %v4676
        %v4696 = vunpack.c.l.b16 %v4680
        %v4697 = vunpack.c.l.b16 %v4684
        %v4698 = vunpack.c.l.b16 %v4688
        %v4699 = vpack.c.b16 %v4692, %v4691
        %v4700 = vpack.c.b16 %v4694, %v4693
        %v4701 = vpack.c.b16 %v4696, %v4695
        %v4702 = vpack.c.b16 %v4698, %v4697
        %v4704 = vsel %vm2775, %v4699, 0
        %v4707 = vsel %vm2775, %v4700, 0
        %v4710 = vsel %vm2775, %v4701, 0
        %v4713 = vsel %vm2775, %v4702, 0
        %v4716 = vsel %vm2788, %v4690, 0
        %4718 = vmatprep.subr.bf16.mxu0 0
        %4719 = vmatpush1.bf16.msra.mxu0 %v4716
        %4720 = vmatprep.subr.bf16.mxu0 0
        %4721 = vmatpush1.bf16.msra.mxu0 0
        %4722 = vmatprep.subr.bf16.mxu0 0
        %4723 = vmatpush1.bf16.msra.mxu0 0
        %4724 = vmatprep.subr.bf16.mxu0 0
        %4725 = vmatpush1.bf16.msra.mxu0 0
        %4726 = vmatprep.subr.bf16.mxu0 0
        %4727 = vmatpush1.bf16.msra.mxu0 0
        %4728 = vmatprep.subr.bf16.mxu0 0
        %4729 = vmatpush1.bf16.msra.mxu0 0
        %4730 = vmatprep.subr.bf16.mxu0 0
        %4731 = vmatpush1.bf16.msra.mxu0 0
        %4732 = vmatprep.subr.bf16.mxu0 0
        %4733 = vmatpush1.bf16.msra.mxu0 0
        %4734 = vmatprep.subr.bf16.mxu0 0
        %4735 = vmatpush1.bf16.msra.mxu0 0
        %4736 = vmatprep.subr.bf16.mxu0 0
        %4737 = vmatpush1.bf16.msra.mxu0 0
        %4738 = vmatprep.subr.bf16.mxu0 0
        %4739 = vmatpush1.bf16.msra.mxu0 0
        %4740 = vmatprep.subr.bf16.mxu0 0
        %4741 = vmatpush1.bf16.msra.mxu0 0
        %4742 = vmatprep.subr.bf16.mxu0 0
        %4743 = vmatpush1.bf16.msra.mxu0 0
        %4744 = vmatprep.subr.bf16.mxu0 0
        %4745 = vmatpush1.bf16.msra.mxu0 0
        %4746 = vmatprep.subr.bf16.mxu0 0
        %4747 = vmatpush1.bf16.msra.mxu0 0
        %4748 = vmatprep.subr.bf16.mxu0 0
        %4749 = vmatpush1.bf16.msra.mxu0 0
        %4750 = vmatprep.mubr.bf16.mxu0 0
        %4751 = vmatmul.mubr.bf16.gmra.mrb[0].mxu0 %v4704
        %v4752 = vpop.f32.mrb[0].mxu0
        %v4753 = vadd.f32 0.0, %v4752
        %v4754 = vpop.f32.mrb[0].mxu0
        %v4755 = vpop.f32.mrb[0].mxu0
        %v4756 = vadd.f32 0.0, %v4755
        %v4757 = vpop.f32.mrb[0].mxu0
        %4758 = vmatprep.mubr.bf16.mxu0 0
        %4759 = vmatmul.mubr.bf16.gmra.mrb[0].mxu0 %v4707
        %v4760 = vpop.f32.mrb[0].mxu0
        %v4761 = vadd.f32 0.0, %v4760
        %v4762 = vpop.f32.mrb[0].mxu0
        %v4763 = vpop.f32.mrb[0].mxu0
        %v4764 = vadd.f32 0.0, %v4763
        %v4765 = vpop.f32.mrb[0].mxu0
        %4766 = vmatprep.mubr.bf16.mxu0 0
        %4767 = vmatmul.mubr.bf16.gmra.mrb[0].mxu0 %v4710
        %v4768 = vpop.f32.mrb[0].mxu0
        %v4769 = vadd.f32 0.0, %v4768
        %v4770 = vpop.f32.mrb[0].mxu0
        %v4771 = vpop.f32.mrb[0].mxu0
        %v4772 = vadd.f32 0.0, %v4771
        %v4773 = vpop.f32.mrb[0].mxu0
        %4774 = vmatprep.mubr.bf16.mxu0 0
        %4775 = vmatmul.mubr.bf16.gmra.mrb[0].mxu0 %v4713
        %v4776 = vpop.f32.mrb[0].mxu0
        %v4777 = vadd.f32 0.0, %v4776
        %v4778 = vpop.f32.mrb[0].mxu0
        %v4779 = vpop.f32.mrb[0].mxu0
        %v4780 = vadd.f32 0.0, %v4779
        %v4781 = vpop.f32.mrb[0].mxu0
        %4782 = vdwg.mxu0
        %v4783 = vadd.f32 %v4625, %v4753
        %v4784 = vadd.f32 %v4626, %v4756
        %v4785 = vadd.f32 %v4627, %v4761
        %v4786 = vadd.f32 %v4628, %v4764
        %v4787 = vadd.f32 %v4629, %v4769
        %v4788 = vadd.f32 %v4630, %v4772
        %v4789 = vadd.f32 %v4631, %v4777
        %v4790 = vadd.f32 %v4632, %v4780
        %v4791 = vld [vmem:[%s845] sm:$0xf]
        %v4792 = vld [vmem:[%s845 + $0x8] sm:$0xf]
        %v4793 = vld [vmem:[%s845 + $0x10] sm:$0xf]
        %v4794 = vld [vmem:[%s845 + $0x18] sm:$0xf]
        %v4795 = vld [vmem:[%s845 + $0x20] sm:$0xf]
        %v4796 = vld [vmem:[%s845 + $0x28] sm:$0xf]
        %v4797 = vld [vmem:[%s845 + $0x30] sm:$0xf]
        %v4798 = vld [vmem:[%s845 + $0x38] sm:$0xf]
        %s4799 = scalar_lea.vmem [#allocation12], 12
        %v4800 = vld [vmem:[%s4799] sm:$0xf]
        %v4809 = vunpack.c.l.b16 %v4791
        %v4810 = vunpack.c.l.b16 %v4792
        %v4811 = vunpack.c.l.b16 %v4793
        %v4812 = vunpack.c.l.b16 %v4794
        %v4813 = vunpack.c.l.b16 %v4795
        %v4814 = vunpack.c.l.b16 %v4796
        %v4815 = vunpack.c.l.b16 %v4797
        %v4816 = vunpack.c.l.b16 %v4798
        %v4817 = vpack.c.b16 %v4810, %v4809
        %v4818 = vpack.c.b16 %v4812, %v4811
        %v4819 = vpack.c.b16 %v4814, %v4813
        %v4820 = vpack.c.b16 %v4816, %v4815
        %v4822 = vsel %vm2775, %v4817, 0
        %v4825 = vsel %vm2775, %v4818, 0
        %v4828 = vsel %vm2775, %v4819, 0
        %v4831 = vsel %vm2775, %v4820, 0
        %v4834 = vsel %vm2788, %v4800, 0
        %4836 = vmatprep.subr.bf16.mxu0 0
        %4837 = vmatpush1.bf16.msra.mxu0 %v4834
        %4838 = vmatprep.subr.bf16.mxu0 0
        %4839 = vmatpush1.bf16.msra.mxu0 0
        %4840 = vmatprep.subr.bf16.mxu0 0
        %4841 = vmatpush1.bf16.msra.mxu0 0
        %4842 = vmatprep.subr.bf16.mxu0 0
        %4843 = vmatpush1.bf16.msra.mxu0 0
        %4844 = vmatprep.subr.bf16.mxu0 0
        %4845 = vmatpush1.bf16.msra.mxu0 0
        %4846 = vmatprep.subr.bf16.mxu0 0
        %4847 = vmatpush1.bf16.msra.mxu0 0
        %4848 = vmatprep.subr.bf16.mxu0 0
        %4849 = vmatpush1.bf16.msra.mxu0 0
        %4850 = vmatprep.subr.bf16.mxu0 0
        %4851 = vmatpush1.bf16.msra.mxu0 0
        %4852 = vmatprep.subr.bf16.mxu0 0
        %4853 = vmatpush1.bf16.msra.mxu0 0
        %4854 = vmatprep.subr.bf16.mxu0 0
        %4855 = vmatpush1.bf16.msra.mxu0 0
        %4856 = vmatprep.subr.bf16.mxu0 0
        %4857 = vmatpush1.bf16.msra.mxu0 0
        %4858 = vmatprep.subr.bf16.mxu0 0
        %4859 = vmatpush1.bf16.msra.mxu0 0
        %4860 = vmatprep.subr.bf16.mxu0 0
        %4861 = vmatpush1.bf16.msra.mxu0 0
        %4862 = vmatprep.subr.bf16.mxu0 0
        %4863 = vmatpush1.bf16.msra.mxu0 0
        %4864 = vmatprep.subr.bf16.mxu0 0
        %4865 = vmatpush1.bf16.msra.mxu0 0
        %4866 = vmatprep.subr.bf16.mxu0 0
        %4867 = vmatpush1.bf16.msra.mxu0 0
        %4868 = vmatprep.mubr.bf16.mxu0 0
        %4869 = vmatmul.mubr.bf16.gmra.mrb[0].mxu0 %v4822
        %v4870 = vpop.f32.mrb[0].mxu0
        %v4871 = vadd.f32 0.0, %v4870
        %v4872 = vpop.f32.mrb[0].mxu0
        %v4873 = vpop.f32.mrb[0].mxu0
        %v4874 = vadd.f32 0.0, %v4873
        %v4875 = vpop.f32.mrb[0].mxu0
        %4876 = vmatprep.mubr.bf16.mxu0 0
        %4877 = vmatmul.mubr.bf16.gmra.mrb[0].mxu0 %v4825
        %v4878 = vpop.f32.mrb[0].mxu0
        %v4879 = vadd.f32 0.0, %v4878
        %v4880 = vpop.f32.mrb[0].mxu0
        %v4881 = vpop.f32.mrb[0].mxu0
        %v4882 = vadd.f32 0.0, %v4881
        %v4883 = vpop.f32.mrb[0].mxu0
        %4884 = vmatprep.mubr.bf16.mxu0 0
        %4885 = vmatmul.mubr.bf16.gmra.mrb[0].mxu0 %v4828
        %v4886 = vpop.f32.mrb[0].mxu0
        %v4887 = vadd.f32 0.0, %v4886
        %v4888 = vpop.f32.mrb[0].mxu0
        %v4889 = vpop.f32.mrb[0].mxu0
        %v4890 = vadd.f32 0.0, %v4889
        %v4891 = vpop.f32.mrb[0].mxu0
        %4892 = vmatprep.mubr.bf16.mxu0 0
        %4893 = vmatmul.mubr.bf16.gmra.mrb[0].mxu0 %v4831
        %v4894 = vpop.f32.mrb[0].mxu0
        %v4895 = vadd.f32 0.0, %v4894
        %v4896 = vpop.f32.mrb[0].mxu0
        %v4897 = vpop.f32.mrb[0].mxu0
        %v4898 = vadd.f32 0.0, %v4897
        %v4899 = vpop.f32.mrb[0].mxu0
        %4900 = vdwg.mxu0
        %v4901 = vadd.f32 %v4783, %v4871
        %v4902 = vadd.f32 %v4784, %v4874
        %v4903 = vadd.f32 %v4785, %v4879
        %v4904 = vadd.f32 %v4786, %v4882
        %v4905 = vadd.f32 %v4787, %v4887
        %v4906 = vadd.f32 %v4788, %v4890
        %v4907 = vadd.f32 %v4789, %v4895
        %v4908 = vadd.f32 %v4790, %v4898
        %v4909 = vld [vmem:[%s845] sm:$0xf]
        %v4910 = vld [vmem:[%s845 + $0x4] sm:$0x1]
        %v4911 = vld [vmem:[%s845 + $0x8] sm:$0xf]
        %v4912 = vld [vmem:[%s845 + $0xc] sm:$0x1]
        %v4913 = vld [vmem:[%s845 + $0x10] sm:$0xf]
        %v4914 = vld [vmem:[%s845 + $0x14] sm:$0x1]
        %v4915 = vld [vmem:[%s845 + $0x18] sm:$0xf]
        %v4916 = vld [vmem:[%s845 + $0x1c] sm:$0x1]
        %v4917 = vld [vmem:[%s845 + $0x20] sm:$0xf]
        %v4918 = vld [vmem:[%s845 + $0x24] sm:$0x1]
        %v4919 = vld [vmem:[%s845 + $0x28] sm:$0xf]
        %v4920 = vld [vmem:[%s845 + $0x2c] sm:$0x1]
        %v4921 = vld [vmem:[%s845 + $0x30] sm:$0xf]
        %v4922 = vld [vmem:[%s845 + $0x34] sm:$0x1]
        %v4923 = vld [vmem:[%s845 + $0x38] sm:$0xf]
        %v4924 = vld [vmem:[%s845 + $0x3c] sm:$0x1]
        %v4926 = vshrl.u32 %v4909, 16
        %v4928 = vrot.slane %v4926, 4
        %v4929 = vshll.u32 %v4909, 16
        %v4931 = vrot.slane %v4929, 5
        %v4932 = vor.u32 %v4928, %v4931
        %v4933 = vrot.slane %v4932, 4
        %v4935 = vshll.u32 %v4910, 16
        %v4937 = vrot.slane %v4935, 5
        %v4938 = vsel %vm920, %v4933, %v4937
        %v4940 = vshrl.u32 %v4911, 16
        %v4942 = vrot.slane %v4940, 4
        %v4943 = vshll.u32 %v4911, 16
        %v4945 = vrot.slane %v4943, 5
        %v4946 = vor.u32 %v4942, %v4945
        %v4947 = vrot.slane %v4946, 4
        %v4949 = vshll.u32 %v4912, 16
        %v4951 = vrot.slane %v4949, 5
        %v4952 = vsel %vm920, %v4947, %v4951
        %v4954 = vshrl.u32 %v4913, 16
        %v4956 = vrot.slane %v4954, 4
        %v4957 = vshll.u32 %v4913, 16
        %v4959 = vrot.slane %v4957, 5
        %v4960 = vor.u32 %v4956, %v4959
        %v4961 = vrot.slane %v4960, 4
        %v4963 = vshll.u32 %v4914, 16
        %v4965 = vrot.slane %v4963, 5
        %v4966 = vsel %vm920, %v4961, %v4965
        %v4968 = vshrl.u32 %v4915, 16
        %v4970 = vrot.slane %v4968, 4
        %v4971 = vshll.u32 %v4915, 16
        %v4973 = vrot.slane %v4971, 5
        %v4974 = vor.u32 %v4970, %v4973
        %v4975 = vrot.slane %v4974, 4
        %v4977 = vshll.u32 %v4916, 16
        %v4979 = vrot.slane %v4977, 5
        %v4980 = vsel %vm920, %v4975, %v4979
        %v4982 = vshrl.u32 %v4917, 16
        %v4984 = vrot.slane %v4982, 4
        %v4985 = vshll.u32 %v4917, 16
        %v4987 = vrot.slane %v4985, 5
        %v4988 = vor.u32 %v4984, %v4987
        %v4989 = vrot.slane %v4988, 4
        %v4991 = vshll.u32 %v4918, 16
        %v4993 = vrot.slane %v4991, 5
        %v4994 = vsel %vm920, %v4989, %v4993
        %v4996 = vshrl.u32 %v4919, 16
        %v4998 = vrot.slane %v4996, 4
        %v4999 = vshll.u32 %v4919, 16
        %v5001 = vrot.slane %v4999, 5
        %v5002 = vor.u32 %v4998, %v5001
        %v5003 = vrot.slane %v5002, 4
        %v5005 = vshll.u32 %v4920, 16
        %v5007 = vrot.slane %v5005, 5
        %v5008 = vsel %vm920, %v5003, %v5007
        %v5010 = vshrl.u32 %v4921, 16
        %v5012 = vrot.slane %v5010, 4
        %v5013 = vshll.u32 %v4921, 16
        %v5015 = vrot.slane %v5013, 5
        %v5016 = vor.u32 %v5012, %v5015
        %v5017 = vrot.slane %v5016, 4
        %v5019 = vshll.u32 %v4922, 16
        %v5021 = vrot.slane %v5019, 5
        %v5022 = vsel %vm920, %v5017, %v5021
        %v5024 = vshrl.u32 %v4923, 16
        %v5026 = vrot.slane %v5024, 4
        %v5027 = vshll.u32 %v4923, 16
        %v5029 = vrot.slane %v5027, 5
        %v5030 = vor.u32 %v5026, %v5029
        %v5031 = vrot.slane %v5030, 4
        %v5033 = vshll.u32 %v4924, 16
        %v5035 = vrot.slane %v5033, 5
        %v5036 = vsel %vm920, %v5031, %v5035
        %s5037 = scalar_lea.vmem [#allocation12], 16
        %v5038 = vld [vmem:[%s5037] sm:$0xf]
        %v5039 = vunpack.c.l.b16 %v4938
        %v5040 = vunpack.c.l.b16 %v4952
        %v5041 = vunpack.c.l.b16 %v4966
        %v5042 = vunpack.c.l.b16 %v4980
        %v5043 = vunpack.c.l.b16 %v4994
        %v5044 = vunpack.c.l.b16 %v5008
        %v5045 = vunpack.c.l.b16 %v5022
        %v5046 = vunpack.c.l.b16 %v5036
        %v5047 = vpack.c.b16 %v5040, %v5039
        %v5048 = vpack.c.b16 %v5042, %v5041
        %v5049 = vpack.c.b16 %v5044, %v5043
        %v5050 = vpack.c.b16 %v5046, %v5045
        %v5052 = vsel %vm2775, %v5047, 0
        %v5055 = vsel %vm2775, %v5048, 0
        %v5058 = vsel %vm2775, %v5049, 0
        %v5061 = vsel %vm2775, %v5050, 0
        %v5064 = vsel %vm2788, %v5038, 0
        %5066 = vmatprep.subr.bf16.mxu0 0
        %5067 = vmatpush1.bf16.msra.mxu0 %v5064
        %5068 = vmatprep.subr.bf16.mxu0 0
        %5069 = vmatpush1.bf16.msra.mxu0 0
        %5070 = vmatprep.subr.bf16.mxu0 0
        %5071 = vmatpush1.bf16.msra.mxu0 0
        %5072 = vmatprep.subr.bf16.mxu0 0
        %5073 = vmatpush1.bf16.msra.mxu0 0
        %5074 = vmatprep.subr.bf16.mxu0 0
        %5075 = vmatpush1.bf16.msra.mxu0 0
        %5076 = vmatprep.subr.bf16.mxu0 0
        %5077 = vmatpush1.bf16.msra.mxu0 0
        %5078 = vmatprep.subr.bf16.mxu0 0
        %5079 = vmatpush1.bf16.msra.mxu0 0
        %5080 = vmatprep.subr.bf16.mxu0 0
        %5081 = vmatpush1.bf16.msra.mxu0 0
        %5082 = vmatprep.subr.bf16.mxu0 0
        %5083 = vmatpush1.bf16.msra.mxu0 0
        %5084 = vmatprep.subr.bf16.mxu0 0
        %5085 = vmatpush1.bf16.msra.mxu0 0
        %5086 = vmatprep.subr.bf16.mxu0 0
        %5087 = vmatpush1.bf16.msra.mxu0 0
        %5088 = vmatprep.subr.bf16.mxu0 0
        %5089 = vmatpush1.bf16.msra.mxu0 0
        %5090 = vmatprep.subr.bf16.mxu0 0
        %5091 = vmatpush1.bf16.msra.mxu0 0
        %5092 = vmatprep.subr.bf16.mxu0 0
        %5093 = vmatpush1.bf16.msra.mxu0 0
        %5094 = vmatprep.subr.bf16.mxu0 0
        %5095 = vmatpush1.bf16.msra.mxu0 0
        %5096 = vmatprep.subr.bf16.mxu0 0
        %5097 = vmatpush1.bf16.msra.mxu0 0
        %5098 = vmatprep.mubr.bf16.mxu0 0
        %5099 = vmatmul.mubr.bf16.gmra.mrb[0].mxu0 %v5052
        %v5100 = vpop.f32.mrb[0].mxu0
        %v5101 = vadd.f32 0.0, %v5100
        %v5102 = vpop.f32.mrb[0].mxu0
        %v5103 = vpop.f32.mrb[0].mxu0
        %v5104 = vadd.f32 0.0, %v5103
        %v5105 = vpop.f32.mrb[0].mxu0
        %5106 = vmatprep.mubr.bf16.mxu0 0
        %5107 = vmatmul.mubr.bf16.gmra.mrb[0].mxu0 %v5055
        %v5108 = vpop.f32.mrb[0].mxu0
        %v5109 = vadd.f32 0.0, %v5108
        %v5110 = vpop.f32.mrb[0].mxu0
        %v5111 = vpop.f32.mrb[0].mxu0
        %v5112 = vadd.f32 0.0, %v5111
        %v5113 = vpop.f32.mrb[0].mxu0
        %5114 = vmatprep.mubr.bf16.mxu0 0
        %5115 = vmatmul.mubr.bf16.gmra.mrb[0].mxu0 %v5058
        %v5116 = vpop.f32.mrb[0].mxu0
        %v5117 = vadd.f32 0.0, %v5116
        %v5118 = vpop.f32.mrb[0].mxu0
        %v5119 = vpop.f32.mrb[0].mxu0
        %v5120 = vadd.f32 0.0, %v5119
        %v5121 = vpop.f32.mrb[0].mxu0
        %5122 = vmatprep.mubr.bf16.mxu0 0
        %5123 = vmatmul.mubr.bf16.gmra.mrb[0].mxu0 %v5061
        %v5124 = vpop.f32.mrb[0].mxu0
        %v5125 = vadd.f32 0.0, %v5124
        %v5126 = vpop.f32.mrb[0].mxu0
        %v5127 = vpop.f32.mrb[0].mxu0
        %v5128 = vadd.f32 0.0, %v5127
        %v5129 = vpop.f32.mrb[0].mxu0
        %5130 = vdwg.mxu0
        %v5131 = vadd.f32 %v4901, %v5101
        %v5132 = vadd.f32 %v4902, %v5104
        %v5133 = vadd.f32 %v4903, %v5109
        %v5134 = vadd.f32 %v4904, %v5112
        %v5135 = vadd.f32 %v4905, %v5117
        %v5136 = vadd.f32 %v4906, %v5120
        %v5137 = vadd.f32 %v4907, %v5125
        %v5138 = vadd.f32 %v4908, %v5128
        %v5139 = vld [vmem:[%s845] sm:$0xe]
        %v5140 = vld [vmem:[%s845 + $0x8] sm:$0xe]
        %v5141 = vld [vmem:[%s845 + $0x10] sm:$0xe]
        %v5142 = vld [vmem:[%s845 + $0x18] sm:$0xe]
        %v5143 = vld [vmem:[%s845 + $0x20] sm:$0xe]
        %v5144 = vld [vmem:[%s845 + $0x28] sm:$0xe]
        %v5145 = vld [vmem:[%s845 + $0x30] sm:$0xe]
        %v5146 = vld [vmem:[%s845 + $0x38] sm:$0xe]
        %v5163 = vrot.slane %v5139, 5
        %v5164 = vrot.slane %v5163, 4
        %v5165 = vrot.slane %v4910, 5
        %v5166 = vsel %vm1260, %v5164, %v5165
        %v5167 = vrot.slane %v5140, 5
        %v5168 = vrot.slane %v5167, 4
        %v5169 = vrot.slane %v4912, 5
        %v5170 = vsel %vm1260, %v5168, %v5169
        %v5171 = vrot.slane %v5141, 5
        %v5172 = vrot.slane %v5171, 4
        %v5173 = vrot.slane %v4914, 5
        %v5174 = vsel %vm1260, %v5172, %v5173
        %v5175 = vrot.slane %v5142, 5
        %v5176 = vrot.slane %v5175, 4
        %v5177 = vrot.slane %v4916, 5
        %v5178 = vsel %vm1260, %v5176, %v5177
        %v5179 = vrot.slane %v5143, 5
        %v5180 = vrot.slane %v5179, 4
        %v5181 = vrot.slane %v4918, 5
        %v5182 = vsel %vm1260, %v5180, %v5181
        %v5183 = vrot.slane %v5144, 5
        %v5184 = vrot.slane %v5183, 4
        %v5185 = vrot.slane %v4920, 5
        %v5186 = vsel %vm1260, %v5184, %v5185
        %v5187 = vrot.slane %v5145, 5
        %v5188 = vrot.slane %v5187, 4
        %v5189 = vrot.slane %v4922, 5
        %v5190 = vsel %vm1260, %v5188, %v5189
        %v5191 = vrot.slane %v5146, 5
        %v5192 = vrot.slane %v5191, 4
        %v5193 = vrot.slane %v4924, 5
        %v5194 = vsel %vm1260, %v5192, %v5193
        %s5195 = scalar_lea.vmem [#allocation12], 20
        %v5196 = vld [vmem:[%s5195] sm:$0xf]
        %v5197 = vunpack.c.l.b16 %v5166
        %v5198 = vunpack.c.l.b16 %v5170
        %v5199 = vunpack.c.l.b16 %v5174
        %v5200 = vunpack.c.l.b16 %v5178
        %v5201 = vunpack.c.l.b16 %v5182
        %v5202 = vunpack.c.l.b16 %v5186
        %v5203 = vunpack.c.l.b16 %v5190
        %v5204 = vunpack.c.l.b16 %v5194
        %v5205 = vpack.c.b16 %v5198, %v5197
        %v5206 = vpack.c.b16 %v5200, %v5199
        %v5207 = vpack.c.b16 %v5202, %v5201
        %v5208 = vpack.c.b16 %v5204, %v5203
        %v5210 = vsel %vm2775, %v5205, 0
        %v5213 = vsel %vm2775, %v5206, 0
        %v5216 = vsel %vm2775, %v5207, 0
        %v5219 = vsel %vm2775, %v5208, 0
        %v5222 = vsel %vm2788, %v5196, 0
        %5224 = vmatprep.subr.bf16.mxu0 0
        %5225 = vmatpush1.bf16.msra.mxu0 %v5222
        %5226 = vmatprep.subr.bf16.mxu0 0
        %5227 = vmatpush1.bf16.msra.mxu0 0
        %5228 = vmatprep.subr.bf16.mxu0 0
        %5229 = vmatpush1.bf16.msra.mxu0 0
        %5230 = vmatprep.subr.bf16.mxu0 0
        %5231 = vmatpush1.bf16.msra.mxu0 0
        %5232 = vmatprep.subr.bf16.mxu0 0
        %5233 = vmatpush1.bf16.msra.mxu0 0
        %5234 = vmatprep.subr.bf16.mxu0 0
        %5235 = vmatpush1.bf16.msra.mxu0 0
        %5236 = vmatprep.subr.bf16.mxu0 0
        %5237 = vmatpush1.bf16.msra.mxu0 0
        %5238 = vmatprep.subr.bf16.mxu0 0
        %5239 = vmatpush1.bf16.msra.mxu0 0
        %5240 = vmatprep.subr.bf16.mxu0 0
        %5241 = vmatpush1.bf16.msra.mxu0 0
        %5242 = vmatprep.subr.bf16.mxu0 0
        %5243 = vmatpush1.bf16.msra.mxu0 0
        %5244 = vmatprep.subr.bf16.mxu0 0
        %5245 = vmatpush1.bf16.msra.mxu0 0
        %5246 = vmatprep.subr.bf16.mxu0 0
        %5247 = vmatpush1.bf16.msra.mxu0 0
        %5248 = vmatprep.subr.bf16.mxu0 0
        %5249 = vmatpush1.bf16.msra.mxu0 0
        %5250 = vmatprep.subr.bf16.mxu0 0
        %5251 = vmatpush1.bf16.msra.mxu0 0
        %5252 = vmatprep.subr.bf16.mxu0 0
        %5253 = vmatpush1.bf16.msra.mxu0 0
        %5254 = vmatprep.subr.bf16.mxu0 0
        %5255 = vmatpush1.bf16.msra.mxu0 0
        %5256 = vmatprep.mubr.bf16.mxu0 0
        %5257 = vmatmul.mubr.bf16.gmra.mrb[0].mxu0 %v5210
        %v5258 = vpop.f32.mrb[0].mxu0
        %v5259 = vadd.f32 0.0, %v5258
        %v5260 = vpop.f32.mrb[0].mxu0
        %v5261 = vpop.f32.mrb[0].mxu0
        %v5262 = vadd.f32 0.0, %v5261
        %v5263 = vpop.f32.mrb[0].mxu0
        %5264 = vmatprep.mubr.bf16.mxu0 0
        %5265 = vmatmul.mubr.bf16.gmra.mrb[0].mxu0 %v5213
        %v5266 = vpop.f32.mrb[0].mxu0
        %v5267 = vadd.f32 0.0, %v5266
        %v5268 = vpop.f32.mrb[0].mxu0
        %v5269 = vpop.f32.mrb[0].mxu0
        %v5270 = vadd.f32 0.0, %v5269
        %v5271 = vpop.f32.mrb[0].mxu0
        %5272 = vmatprep.mubr.bf16.mxu0 0
        %5273 = vmatmul.mubr.bf16.gmra.mrb[0].mxu0 %v5216
        %v5274 = vpop.f32.mrb[0].mxu0
        %v5275 = vadd.f32 0.0, %v5274
        %v5276 = vpop.f32.mrb[0].mxu0
        %v5277 = vpop.f32.mrb[0].mxu0
        %v5278 = vadd.f32 0.0, %v5277
        %v5279 = vpop.f32.mrb[0].mxu0
        %5280 = vmatprep.mubr.bf16.mxu0 0
        %5281 = vmatmul.mubr.bf16.gmra.mrb[0].mxu0 %v5219
        %v5282 = vpop.f32.mrb[0].mxu0
        %v5283 = vadd.f32 0.0, %v5282
        %v5284 = vpop.f32.mrb[0].mxu0
        %v5285 = vpop.f32.mrb[0].mxu0
        %v5286 = vadd.f32 0.0, %v5285
        %v5287 = vpop.f32.mrb[0].mxu0
        %5288 = vdwg.mxu0
        %v5289 = vadd.f32 %v5131, %v5259
        %v5290 = vadd.f32 %v5132, %v5262
        %v5291 = vadd.f32 %v5133, %v5267
        %v5292 = vadd.f32 %v5134, %v5270
        %v5293 = vadd.f32 %v5135, %v5275
        %v5294 = vadd.f32 %v5136, %v5278
        %v5295 = vadd.f32 %v5137, %v5283
        %v5296 = vadd.f32 %v5138, %v5286
        %v5297 = vld [vmem:[%s1917] sm:$0xf]
        %v5298 = vld [vmem:[%s1917 + $0x8] sm:$0xf]
        %v5299 = vld [vmem:[%s1917 + $0x10] sm:$0xf]
        %v5300 = vld [vmem:[%s1917 + $0x18] sm:$0xf]
        %v5301 = vld [vmem:[%s1917 + $0x20] sm:$0xf]
        %v5302 = vld [vmem:[%s1917 + $0x28] sm:$0xf]
        %v5303 = vld [vmem:[%s1917 + $0x30] sm:$0xf]
        %v5304 = vld [vmem:[%s1917 + $0x38] sm:$0xf]
        %s5305 = scalar_lea.vmem [#allocation12], 24
        %v5306 = vld [vmem:[%s5305] sm:$0xf]
        %v5315 = vunpack.c.l.b16 %v5297
        %v5316 = vunpack.c.l.b16 %v5298
        %v5317 = vunpack.c.l.b16 %v5299
        %v5318 = vunpack.c.l.b16 %v5300
        %v5319 = vunpack.c.l.b16 %v5301
        %v5320 = vunpack.c.l.b16 %v5302
        %v5321 = vunpack.c.l.b16 %v5303
        %v5322 = vunpack.c.l.b16 %v5304
        %v5323 = vpack.c.b16 %v5316, %v5315
        %v5324 = vpack.c.b16 %v5318, %v5317
        %v5325 = vpack.c.b16 %v5320, %v5319
        %v5326 = vpack.c.b16 %v5322, %v5321
        %v5328 = vsel %vm2775, %v5323, 0
        %v5331 = vsel %vm2775, %v5324, 0
        %v5334 = vsel %vm2775, %v5325, 0
        %v5337 = vsel %vm2775, %v5326, 0
        %v5340 = vsel %vm2788, %v5306, 0
        %5342 = vmatprep.subr.bf16.mxu0 0
        %5343 = vmatpush1.bf16.msra.mxu0 %v5340
        %5344 = vmatprep.subr.bf16.mxu0 0
        %5345 = vmatpush1.bf16.msra.mxu0 0
        %5346 = vmatprep.subr.bf16.mxu0 0
        %5347 = vmatpush1.bf16.msra.mxu0 0
        %5348 = vmatprep.subr.bf16.mxu0 0
        %5349 = vmatpush1.bf16.msra.mxu0 0
        %5350 = vmatprep.subr.bf16.mxu0 0
        %5351 = vmatpush1.bf16.msra.mxu0 0
        %5352 = vmatprep.subr.bf16.mxu0 0
        %5353 = vmatpush1.bf16.msra.mxu0 0
        %5354 = vmatprep.subr.bf16.mxu0 0
        %5355 = vmatpush1.bf16.msra.mxu0 0
        %5356 = vmatprep.subr.bf16.mxu0 0
        %5357 = vmatpush1.bf16.msra.mxu0 0
        %5358 = vmatprep.subr.bf16.mxu0 0
        %5359 = vmatpush1.bf16.msra.mxu0 0
        %5360 = vmatprep.subr.bf16.mxu0 0
        %5361 = vmatpush1.bf16.msra.mxu0 0
        %5362 = vmatprep.subr.bf16.mxu0 0
        %5363 = vmatpush1.bf16.msra.mxu0 0
        %5364 = vmatprep.subr.bf16.mxu0 0
        %5365 = vmatpush1.bf16.msra.mxu0 0
        %5366 = vmatprep.subr.bf16.mxu0 0
        %5367 = vmatpush1.bf16.msra.mxu0 0
        %5368 = vmatprep.subr.bf16.mxu0 0
        %5369 = vmatpush1.bf16.msra.mxu0 0
        %5370 = vmatprep.subr.bf16.mxu0 0
        %5371 = vmatpush1.bf16.msra.mxu0 0
        %5372 = vmatprep.subr.bf16.mxu0 0
        %5373 = vmatpush1.bf16.msra.mxu0 0
        %5374 = vmatprep.mubr.bf16.mxu0 0
        %5375 = vmatmul.mubr.bf16.gmra.mrb[0].mxu0 %v5328
        %v5376 = vpop.f32.mrb[0].mxu0
        %v5377 = vadd.f32 0.0, %v5376
        %v5378 = vpop.f32.mrb[0].mxu0
        %v5379 = vpop.f32.mrb[0].mxu0
        %v5380 = vadd.f32 0.0, %v5379
        %v5381 = vpop.f32.mrb[0].mxu0
        %5382 = vmatprep.mubr.bf16.mxu0 0
        %5383 = vmatmul.mubr.bf16.gmra.mrb[0].mxu0 %v5331
        %v5384 = vpop.f32.mrb[0].mxu0
        %v5385 = vadd.f32 0.0, %v5384
        %v5386 = vpop.f32.mrb[0].mxu0
        %v5387 = vpop.f32.mrb[0].mxu0
        %v5388 = vadd.f32 0.0, %v5387
        %v5389 = vpop.f32.mrb[0].mxu0
        %5390 = vmatprep.mubr.bf16.mxu0 0
        %5391 = vmatmul.mubr.bf16.gmra.mrb[0].mxu0 %v5334
        %v5392 = vpop.f32.mrb[0].mxu0
        %v5393 = vadd.f32 0.0, %v5392
        %v5394 = vpop.f32.mrb[0].mxu0
        %v5395 = vpop.f32.mrb[0].mxu0
        %v5396 = vadd.f32 0.0, %v5395
        %v5397 = vpop.f32.mrb[0].mxu0
        %5398 = vmatprep.mubr.bf16.mxu0 0
        %5399 = vmatmul.mubr.bf16.gmra.mrb[0].mxu0 %v5337
        %v5400 = vpop.f32.mrb[0].mxu0
        %v5401 = vadd.f32 0.0, %v5400
        %v5402 = vpop.f32.mrb[0].mxu0
        %v5403 = vpop.f32.mrb[0].mxu0
        %v5404 = vadd.f32 0.0, %v5403
        %v5405 = vpop.f32.mrb[0].mxu0
        %5406 = vdwg.mxu0
        %v5407 = vadd.f32 %v5289, %v5377
        %v5408 = vadd.f32 %v5290, %v5380
        %v5409 = vadd.f32 %v5291, %v5385
        %v5410 = vadd.f32 %v5292, %v5388
        %v5411 = vadd.f32 %v5293, %v5393
        %v5412 = vadd.f32 %v5294, %v5396
        %v5413 = vadd.f32 %v5295, %v5401
        %v5414 = vadd.f32 %v5296, %v5404
        %v5415 = vld [vmem:[%s1917] sm:$0xf]
        %v5416 = vld [vmem:[%s1917 + $0x4] sm:$0x1]
        %v5417 = vld [vmem:[%s1917 + $0x8] sm:$0xf]
        %v5418 = vld [vmem:[%s1917 + $0xc] sm:$0x1]
        %v5419 = vld [vmem:[%s1917 + $0x10] sm:$0xf]
        %v5420 = vld [vmem:[%s1917 + $0x14] sm:$0x1]
        %v5421 = vld [vmem:[%s1917 + $0x18] sm:$0xf]
        %v5422 = vld [vmem:[%s1917 + $0x1c] sm:$0x1]
        %v5423 = vld [vmem:[%s1917 + $0x20] sm:$0xf]
        %v5424 = vld [vmem:[%s1917 + $0x24] sm:$0x1]
        %v5425 = vld [vmem:[%s1917 + $0x28] sm:$0xf]
        %v5426 = vld [vmem:[%s1917 + $0x2c] sm:$0x1]
        %v5427 = vld [vmem:[%s1917 + $0x30] sm:$0xf]
        %v5428 = vld [vmem:[%s1917 + $0x34] sm:$0x1]
        %v5429 = vld [vmem:[%s1917 + $0x38] sm:$0xf]
        %v5430 = vld [vmem:[%s1917 + $0x3c] sm:$0x1]
        %v5432 = vshrl.u32 %v5415, 16
        %v5434 = vrot.slane %v5432, 4
        %v5435 = vshll.u32 %v5415, 16
        %v5437 = vrot.slane %v5435, 5
        %v5438 = vor.u32 %v5434, %v5437
        %v5439 = vrot.slane %v5438, 4
        %v5441 = vshll.u32 %v5416, 16
        %v5443 = vrot.slane %v5441, 5
        %v5444 = vsel %vm920, %v5439, %v5443
        %v5446 = vshrl.u32 %v5417, 16
        %v5448 = vrot.slane %v5446, 4
        %v5449 = vshll.u32 %v5417, 16
        %v5451 = vrot.slane %v5449, 5
        %v5452 = vor.u32 %v5448, %v5451
        %v5453 = vrot.slane %v5452, 4
        %v5455 = vshll.u32 %v5418, 16
        %v5457 = vrot.slane %v5455, 5
        %v5458 = vsel %vm920, %v5453, %v5457
        %v5460 = vshrl.u32 %v5419, 16
        %v5462 = vrot.slane %v5460, 4
        %v5463 = vshll.u32 %v5419, 16
        %v5465 = vrot.slane %v5463, 5
        %v5466 = vor.u32 %v5462, %v5465
        %v5467 = vrot.slane %v5466, 4
        %v5469 = vshll.u32 %v5420, 16
        %v5471 = vrot.slane %v5469, 5
        %v5472 = vsel %vm920, %v5467, %v5471
        %v5474 = vshrl.u32 %v5421, 16
        %v5476 = vrot.slane %v5474, 4
        %v5477 = vshll.u32 %v5421, 16
        %v5479 = vrot.slane %v5477, 5
        %v5480 = vor.u32 %v5476, %v5479
        %v5481 = vrot.slane %v5480, 4
        %v5483 = vshll.u32 %v5422, 16
        %v5485 = vrot.slane %v5483, 5
        %v5486 = vsel %vm920, %v5481, %v5485
        %v5488 = vshrl.u32 %v5423, 16
        %v5490 = vrot.slane %v5488, 4
        %v5491 = vshll.u32 %v5423, 16
        %v5493 = vrot.slane %v5491, 5
        %v5494 = vor.u32 %v5490, %v5493
        %v5495 = vrot.slane %v5494, 4
        %v5497 = vshll.u32 %v5424, 16
        %v5499 = vrot.slane %v5497, 5
        %v5500 = vsel %vm920, %v5495, %v5499
        %v5502 = vshrl.u32 %v5425, 16
        %v5504 = vrot.slane %v5502, 4
        %v5505 = vshll.u32 %v5425, 16
        %v5507 = vrot.slane %v5505, 5
        %v5508 = vor.u32 %v5504, %v5507
        %v5509 = vrot.slane %v5508, 4
        %v5511 = vshll.u32 %v5426, 16
        %v5513 = vrot.slane %v5511, 5
        %v5514 = vsel %vm920, %v5509, %v5513
        %v5516 = vshrl.u32 %v5427, 16
        %v5518 = vrot.slane %v5516, 4
        %v5519 = vshll.u32 %v5427, 16
        %v5521 = vrot.slane %v5519, 5
        %v5522 = vor.u32 %v5518, %v5521
        %v5523 = vrot.slane %v5522, 4
        %v5525 = vshll.u32 %v5428, 16
        %v5527 = vrot.slane %v5525, 5
        %v5528 = vsel %vm920, %v5523, %v5527
        %v5530 = vshrl.u32 %v5429, 16
        %v5532 = vrot.slane %v5530, 4
        %v5533 = vshll.u32 %v5429, 16
        %v5535 = vrot.slane %v5533, 5
        %v5536 = vor.u32 %v5532, %v5535
        %v5537 = vrot.slane %v5536, 4
        %v5539 = vshll.u32 %v5430, 16
        %v5541 = vrot.slane %v5539, 5
        %v5542 = vsel %vm920, %v5537, %v5541
        %s5543 = scalar_lea.vmem [#allocation12], 28
        %v5544 = vld [vmem:[%s5543] sm:$0xf]
        %v5545 = vunpack.c.l.b16 %v5444
        %v5546 = vunpack.c.l.b16 %v5458
        %v5547 = vunpack.c.l.b16 %v5472
        %v5548 = vunpack.c.l.b16 %v5486
        %v5549 = vunpack.c.l.b16 %v5500
        %v5550 = vunpack.c.l.b16 %v5514
        %v5551 = vunpack.c.l.b16 %v5528
        %v5552 = vunpack.c.l.b16 %v5542
        %v5553 = vpack.c.b16 %v5546, %v5545
        %v5554 = vpack.c.b16 %v5548, %v5547
        %v5555 = vpack.c.b16 %v5550, %v5549
        %v5556 = vpack.c.b16 %v5552, %v5551
        %v5558 = vsel %vm2775, %v5553, 0
        %v5561 = vsel %vm2775, %v5554, 0
        %v5564 = vsel %vm2775, %v5555, 0
        %v5567 = vsel %vm2775, %v5556, 0
        %v5570 = vsel %vm2788, %v5544, 0
        %5572 = vmatprep.subr.bf16.mxu0 0
        %5573 = vmatpush1.bf16.msra.mxu0 %v5570
        %5574 = vmatprep.subr.bf16.mxu0 0
        %5575 = vmatpush1.bf16.msra.mxu0 0
        %5576 = vmatprep.subr.bf16.mxu0 0
        %5577 = vmatpush1.bf16.msra.mxu0 0
        %5578 = vmatprep.subr.bf16.mxu0 0
        %5579 = vmatpush1.bf16.msra.mxu0 0
        %5580 = vmatprep.subr.bf16.mxu0 0
        %5581 = vmatpush1.bf16.msra.mxu0 0
        %5582 = vmatprep.subr.bf16.mxu0 0
        %5583 = vmatpush1.bf16.msra.mxu0 0
        %5584 = vmatprep.subr.bf16.mxu0 0
        %5585 = vmatpush1.bf16.msra.mxu0 0
        %5586 = vmatprep.subr.bf16.mxu0 0
        %5587 = vmatpush1.bf16.msra.mxu0 0
        %5588 = vmatprep.subr.bf16.mxu0 0
        %5589 = vmatpush1.bf16.msra.mxu0 0
        %5590 = vmatprep.subr.bf16.mxu0 0
        %5591 = vmatpush1.bf16.msra.mxu0 0
        %5592 = vmatprep.subr.bf16.mxu0 0
        %5593 = vmatpush1.bf16.msra.mxu0 0
        %5594 = vmatprep.subr.bf16.mxu0 0
        %5595 = vmatpush1.bf16.msra.mxu0 0
        %5596 = vmatprep.subr.bf16.mxu0 0
        %5597 = vmatpush1.bf16.msra.mxu0 0
        %5598 = vmatprep.subr.bf16.mxu0 0
        %5599 = vmatpush1.bf16.msra.mxu0 0
        %5600 = vmatprep.subr.bf16.mxu0 0
        %5601 = vmatpush1.bf16.msra.mxu0 0
        %5602 = vmatprep.subr.bf16.mxu0 0
        %5603 = vmatpush1.bf16.msra.mxu0 0
        %5604 = vmatprep.mubr.bf16.mxu0 0
        %5605 = vmatmul.mubr.bf16.gmra.mrb[0].mxu0 %v5558
        %v5606 = vpop.f32.mrb[0].mxu0
        %v5607 = vadd.f32 0.0, %v5606
        %v5608 = vpop.f32.mrb[0].mxu0
        %v5609 = vpop.f32.mrb[0].mxu0
        %v5610 = vadd.f32 0.0, %v5609
        %v5611 = vpop.f32.mrb[0].mxu0
        %5612 = vmatprep.mubr.bf16.mxu0 0
        %5613 = vmatmul.mubr.bf16.gmra.mrb[0].mxu0 %v5561
        %v5614 = vpop.f32.mrb[0].mxu0
        %v5615 = vadd.f32 0.0, %v5614
        %v5616 = vpop.f32.mrb[0].mxu0
        %v5617 = vpop.f32.mrb[0].mxu0
        %v5618 = vadd.f32 0.0, %v5617
        %v5619 = vpop.f32.mrb[0].mxu0
        %5620 = vmatprep.mubr.bf16.mxu0 0
        %5621 = vmatmul.mubr.bf16.gmra.mrb[0].mxu0 %v5564
        %v5622 = vpop.f32.mrb[0].mxu0
        %v5623 = vadd.f32 0.0, %v5622
        %v5624 = vpop.f32.mrb[0].mxu0
        %v5625 = vpop.f32.mrb[0].mxu0
        %v5626 = vadd.f32 0.0, %v5625
        %v5627 = vpop.f32.mrb[0].mxu0
        %5628 = vmatprep.mubr.bf16.mxu0 0
        %5629 = vmatmul.mubr.bf16.gmra.mrb[0].mxu0 %v5567
        %v5630 = vpop.f32.mrb[0].mxu0
        %v5631 = vadd.f32 0.0, %v5630
        %v5632 = vpop.f32.mrb[0].mxu0
        %v5633 = vpop.f32.mrb[0].mxu0
        %v5634 = vadd.f32 0.0, %v5633
        %v5635 = vpop.f32.mrb[0].mxu0
        %5636 = vdwg.mxu0
        %v5637 = vadd.f32 %v5407, %v5607
        %v5638 = vadd.f32 %v5408, %v5610
        %v5639 = vadd.f32 %v5409, %v5615
        %v5640 = vadd.f32 %v5410, %v5618
        %v5641 = vadd.f32 %v5411, %v5623
        %v5642 = vadd.f32 %v5412, %v5626
        %v5643 = vadd.f32 %v5413, %v5631
        %v5644 = vadd.f32 %v5414, %v5634
        %v5645 = vld [vmem:[%s1917] sm:$0xe]
        %v5646 = vld [vmem:[%s1917 + $0x8] sm:$0xe]
        %v5647 = vld [vmem:[%s1917 + $0x10] sm:$0xe]
        %v5648 = vld [vmem:[%s1917 + $0x18] sm:$0xe]
        %v5649 = vld [vmem:[%s1917 + $0x20] sm:$0xe]
        %v5650 = vld [vmem:[%s1917 + $0x28] sm:$0xe]
        %v5651 = vld [vmem:[%s1917 + $0x30] sm:$0xe]
        %v5652 = vld [vmem:[%s1917 + $0x38] sm:$0xe]
        %v5669 = vrot.slane %v5645, 5
        %v5670 = vrot.slane %v5669, 4
        %v5671 = vrot.slane %v5416, 5
        %v5672 = vsel %vm1260, %v5670, %v5671
        %v5673 = vrot.slane %v5646, 5
        %v5674 = vrot.slane %v5673, 4
        %v5675 = vrot.slane %v5418, 5
        %v5676 = vsel %vm1260, %v5674, %v5675
        %v5677 = vrot.slane %v5647, 5
        %v5678 = vrot.slane %v5677, 4
        %v5679 = vrot.slane %v5420, 5
        %v5680 = vsel %vm1260, %v5678, %v5679
        %v5681 = vrot.slane %v5648, 5
        %v5682 = vrot.slane %v5681, 4
        %v5683 = vrot.slane %v5422, 5
        %v5684 = vsel %vm1260, %v5682, %v5683
        %v5685 = vrot.slane %v5649, 5
        %v5686 = vrot.slane %v5685, 4
        %v5687 = vrot.slane %v5424, 5
        %v5688 = vsel %vm1260, %v5686, %v5687
        %v5689 = vrot.slane %v5650, 5
        %v5690 = vrot.slane %v5689, 4
        %v5691 = vrot.slane %v5426, 5
        %v5692 = vsel %vm1260, %v5690, %v5691
        %v5693 = vrot.slane %v5651, 5
        %v5694 = vrot.slane %v5693, 4
        %v5695 = vrot.slane %v5428, 5
        %v5696 = vsel %vm1260, %v5694, %v5695
        %v5697 = vrot.slane %v5652, 5
        %v5698 = vrot.slane %v5697, 4
        %v5699 = vrot.slane %v5430, 5
        %v5700 = vsel %vm1260, %v5698, %v5699
        %s5701 = scalar_lea.vmem [#allocation12], 32
        %v5702 = vld [vmem:[%s5701] sm:$0xf]
        %v5703 = vunpack.c.l.b16 %v5672
        %v5704 = vunpack.c.l.b16 %v5676
        %v5705 = vunpack.c.l.b16 %v5680
        %v5706 = vunpack.c.l.b16 %v5684
        %v5707 = vunpack.c.l.b16 %v5688
        %v5708 = vunpack.c.l.b16 %v5692
        %v5709 = vunpack.c.l.b16 %v5696
        %v5710 = vunpack.c.l.b16 %v5700
        %v5711 = vpack.c.b16 %v5704, %v5703
        %v5712 = vpack.c.b16 %v5706, %v5705
        %v5713 = vpack.c.b16 %v5708, %v5707
        %v5714 = vpack.c.b16 %v5710, %v5709
        %v5716 = vsel %vm2775, %v5711, 0
        %v5719 = vsel %vm2775, %v5712, 0
        %v5722 = vsel %vm2775, %v5713, 0
        %v5725 = vsel %vm2775, %v5714, 0
        %v5728 = vsel %vm2788, %v5702, 0
        %5730 = vmatprep.subr.bf16.mxu0 0
        %5731 = vmatpush1.bf16.msra.mxu0 %v5728
        %5732 = vmatprep.subr.bf16.mxu0 0
        %5733 = vmatpush1.bf16.msra.mxu0 0
        %5734 = vmatprep.subr.bf16.mxu0 0
        %5735 = vmatpush1.bf16.msra.mxu0 0
        %5736 = vmatprep.subr.bf16.mxu0 0
        %5737 = vmatpush1.bf16.msra.mxu0 0
        %5738 = vmatprep.subr.bf16.mxu0 0
        %5739 = vmatpush1.bf16.msra.mxu0 0
        %5740 = vmatprep.subr.bf16.mxu0 0
        %5741 = vmatpush1.bf16.msra.mxu0 0
        %5742 = vmatprep.subr.bf16.mxu0 0
        %5743 = vmatpush1.bf16.msra.mxu0 0
        %5744 = vmatprep.subr.bf16.mxu0 0
        %5745 = vmatpush1.bf16.msra.mxu0 0
        %5746 = vmatprep.subr.bf16.mxu0 0
        %5747 = vmatpush1.bf16.msra.mxu0 0
        %5748 = vmatprep.subr.bf16.mxu0 0
        %5749 = vmatpush1.bf16.msra.mxu0 0
        %5750 = vmatprep.subr.bf16.mxu0 0
        %5751 = vmatpush1.bf16.msra.mxu0 0
        %5752 = vmatprep.subr.bf16.mxu0 0
        %5753 = vmatpush1.bf16.msra.mxu0 0
        %5754 = vmatprep.subr.bf16.mxu0 0
        %5755 = vmatpush1.bf16.msra.mxu0 0
        %5756 = vmatprep.subr.bf16.mxu0 0
        %5757 = vmatpush1.bf16.msra.mxu0 0
        %5758 = vmatprep.subr.bf16.mxu0 0
        %5759 = vmatpush1.bf16.msra.mxu0 0
        %5760 = vmatprep.subr.bf16.mxu0 0
        %5761 = vmatpush1.bf16.msra.mxu0 0
        %5762 = vmatprep.mubr.bf16.mxu0 0
        %5763 = vmatmul.mubr.bf16.gmra.mrb[0].mxu0 %v5716
        %v5764 = vpop.f32.mrb[0].mxu0
        %v5765 = vadd.f32 0.0, %v5764
        %v5766 = vpop.f32.mrb[0].mxu0
        %v5767 = vpop.f32.mrb[0].mxu0
        %v5768 = vadd.f32 0.0, %v5767
        %v5769 = vpop.f32.mrb[0].mxu0
        %5770 = vmatprep.mubr.bf16.mxu0 0
        %5771 = vmatmul.mubr.bf16.gmra.mrb[0].mxu0 %v5719
        %v5772 = vpop.f32.mrb[0].mxu0
        %v5773 = vadd.f32 0.0, %v5772
        %v5774 = vpop.f32.mrb[0].mxu0
        %v5775 = vpop.f32.mrb[0].mxu0
        %v5776 = vadd.f32 0.0, %v5775
        %v5777 = vpop.f32.mrb[0].mxu0
        %5778 = vmatprep.mubr.bf16.mxu0 0
        %5779 = vmatmul.mubr.bf16.gmra.mrb[0].mxu0 %v5722
        %v5780 = vpop.f32.mrb[0].mxu0
        %v5781 = vadd.f32 0.0, %v5780
        %v5782 = vpop.f32.mrb[0].mxu0
        %v5783 = vpop.f32.mrb[0].mxu0
        %v5784 = vadd.f32 0.0, %v5783
        %v5785 = vpop.f32.mrb[0].mxu0
        %5786 = vmatprep.mubr.bf16.mxu0 0
        %5787 = vmatmul.mubr.bf16.gmra.mrb[0].mxu0 %v5725
        %v5788 = vpop.f32.mrb[0].mxu0
        %v5789 = vadd.f32 0.0, %v5788
        %v5790 = vpop.f32.mrb[0].mxu0
        %v5791 = vpop.f32.mrb[0].mxu0
        %v5792 = vadd.f32 0.0, %v5791
        %v5793 = vpop.f32.mrb[0].mxu0
        %5794 = vdwg.mxu0
        %v5795 = vadd.f32 %v5637, %v5765
        %v5796 = vadd.f32 %v5638, %v5768
        %v5797 = vadd.f32 %v5639, %v5773
        %v5798 = vadd.f32 %v5640, %v5776
        %v5799 = vadd.f32 %v5641, %v5781
        %v5800 = vadd.f32 %v5642, %v5784
        %v5801 = vadd.f32 %v5643, %v5789
        %v5802 = vadd.f32 %v5644, %v5792
        %v5803 = vld [vmem:[#allocation15] sm:$0x1]
        %v5805 = vlaneseq
        %v5806 = vshrl.u32 %v5805, 7
        %v5807 = vsub.s32 0, %v5806
        %v5808 = vrot.slane %v5803, %v5807
        %v5810 = vmul.f32 %v5795, %v5808
        %v5811 = vmul.f32 %v5796, %v5808
        %v5812 = vmul.f32 %v5797, %v5808
        %v5813 = vmul.f32 %v5798, %v5808
        %v5814 = vmul.f32 %v5799, %v5808
        %v5815 = vmul.f32 %v5800, %v5808
        %v5816 = vmul.f32 %v5801, %v5808
        %v5817 = vmul.f32 %v5802, %v5808
        %v5818 = vld [vmem:[#allocation17] sm:$0x1]
        %v5820 = vlaneseq
        %v5821 = vshrl.u32 %v5820, 7
        %v5822 = vsub.s32 0, %v5821
        %v5823 = vrot.slane %v5818, %v5822
        %v5825 = vadd.f32 %v5810, %v5823
        %v5826 = vadd.f32 %v5811, %v5823
        %v5827 = vadd.f32 %v5812, %v5823
        %v5828 = vadd.f32 %v5813, %v5823
        %v5829 = vadd.f32 %v5814, %v5823
        %v5830 = vadd.f32 %v5815, %v5823
        %v5831 = vadd.f32 %v5816, %v5823
        %v5832 = vadd.f32 %v5817, %v5823
        %v5833 = vmax.f32 %v5825, 0.0
        %v5834 = vmax.f32 %v5826, 0.0
        %v5835 = vmax.f32 %v5827, 0.0
        %v5836 = vmax.f32 %v5828, 0.0
        %v5837 = vmax.f32 %v5829, 0.0
        %v5838 = vmax.f32 %v5830, 0.0
        %v5839 = vmax.f32 %v5831, 0.0
        %v5840 = vmax.f32 %v5832, 0.0
        %v5841 = vpack.c.bf16 %v5833, %v5833
        %v5842 = vpack.c.bf16 %v5834, %v5834
        %v5843 = vpack.c.bf16 %v5835, %v5835
        %v5844 = vpack.c.bf16 %v5836, %v5836
        %v5845 = vpack.c.bf16 %v5837, %v5837
        %v5846 = vpack.c.bf16 %v5838, %v5838
        %v5847 = vpack.c.bf16 %v5839, %v5839
        %v5848 = vpack.c.bf16 %v5840, %v5840
        %v5857 = vunpack.c.l.b16 %v5841
        %v5858 = vunpack.c.l.b16 %v5842
        %v5859 = vunpack.c.l.b16 %v5843
        %v5860 = vunpack.c.l.b16 %v5844
        %v5861 = vunpack.c.l.b16 %v5845
        %v5862 = vunpack.c.l.b16 %v5846
        %v5863 = vunpack.c.l.b16 %v5847
        %v5864 = vunpack.c.l.b16 %v5848
        %v5865 = vpack.c.b16 %v5857, %v5857
        %v5866 = vpack.c.b16 %v5858, %v5858
        %v5867 = vpack.c.b16 %v5859, %v5859
        %v5868 = vpack.c.b16 %v5860, %v5860
        %v5869 = vpack.c.b16 %v5861, %v5861
        %v5870 = vpack.c.b16 %v5862, %v5862
        %v5871 = vpack.c.b16 %v5863, %v5863
        %v5872 = vpack.c.b16 %v5864, %v5864
        %v5874 = vshrl.u32 %v5865, 16
        %v5876 = vrot.slane %v5874, 7
        %v5877 = vshll.u32 %v5865, 16
        %v5879 = vor.u32 %v5876, %v5877
        %v5880 = vrot.slane %v5876, 4
        %v5882 = vshrl.u32 %v5866, 16
        %v5884 = vrot.slane %v5882, 7
        %v5885 = vshll.u32 %v5866, 16
        %v5887 = vor.u32 %v5884, %v5885
        %v5888 = vrot.slane %v5884, 4
        %v5890 = vshrl.u32 %v5867, 16
        %v5892 = vrot.slane %v5890, 7
        %v5893 = vshll.u32 %v5867, 16
        %v5895 = vor.u32 %v5892, %v5893
        %v5896 = vrot.slane %v5892, 4
        %v5898 = vshrl.u32 %v5868, 16
        %v5900 = vrot.slane %v5898, 7
        %v5901 = vshll.u32 %v5868, 16
        %v5903 = vor.u32 %v5900, %v5901
        %v5904 = vrot.slane %v5900, 4
        %v5906 = vshrl.u32 %v5869, 16
        %v5908 = vrot.slane %v5906, 7
        %v5909 = vshll.u32 %v5869, 16
        %v5911 = vor.u32 %v5908, %v5909
        %v5912 = vrot.slane %v5908, 4
        %v5914 = vshrl.u32 %v5870, 16
        %v5916 = vrot.slane %v5914, 7
        %v5917 = vshll.u32 %v5870, 16
        %v5919 = vor.u32 %v5916, %v5917
        %v5920 = vrot.slane %v5916, 4
        %v5922 = vshrl.u32 %v5871, 16
        %v5924 = vrot.slane %v5922, 7
        %v5925 = vshll.u32 %v5871, 16
        %v5927 = vor.u32 %v5924, %v5925
        %v5928 = vrot.slane %v5924, 4
        %v5930 = vshrl.u32 %v5872, 16
        %v5932 = vrot.slane %v5930, 7
        %v5933 = vshll.u32 %v5872, 16
        %v5935 = vor.u32 %v5932, %v5933
        %v5936 = vrot.slane %v5932, 4
        %v5953 = vsel %vm2582, %v5879, %v4909
        %5954 = vst [vmem:[%s845] sm:$0xf] %v5953
        %v5955 = vld [vmem:[%s845 + $0x4] sm:$0x1]
        %v5956 = vsel %vm2586, %v5880, %v5955
        %5957 = vst [vmem:[%s845 + $0x4] sm:$0x1] %v5956
        %v5958 = vld [vmem:[%s845 + $0x8] sm:$0xf]
        %v5959 = vsel %vm2582, %v5887, %v5958
        %5960 = vst [vmem:[%s845 + $0x8] sm:$0xf] %v5959
        %v5961 = vld [vmem:[%s845 + $0xc] sm:$0x1]
        %v5962 = vsel %vm2586, %v5888, %v5961
        %5963 = vst [vmem:[%s845 + $0xc] sm:$0x1] %v5962
        %v5964 = vld [vmem:[%s845 + $0x10] sm:$0xf]
        %v5965 = vsel %vm2582, %v5895, %v5964
        %5966 = vst [vmem:[%s845 + $0x10] sm:$0xf] %v5965
        %v5967 = vld [vmem:[%s845 + $0x14] sm:$0x1]
        %v5968 = vsel %vm2586, %v5896, %v5967
        %5969 = vst [vmem:[%s845 + $0x14] sm:$0x1] %v5968
        %v5970 = vld [vmem:[%s845 + $0x18] sm:$0xf]
        %v5971 = vsel %vm2582, %v5903, %v5970
        %5972 = vst [vmem:[%s845 + $0x18] sm:$0xf] %v5971
        %v5973 = vld [vmem:[%s845 + $0x1c] sm:$0x1]
        %v5974 = vsel %vm2586, %v5904, %v5973
        %5975 = vst [vmem:[%s845 + $0x1c] sm:$0x1] %v5974
        %v5976 = vld [vmem:[%s845 + $0x20] sm:$0xf]
        %v5977 = vsel %vm2582, %v5911, %v5976
        %5978 = vst [vmem:[%s845 + $0x20] sm:$0xf] %v5977
        %v5979 = vld [vmem:[%s845 + $0x24] sm:$0x1]
        %v5980 = vsel %vm2586, %v5912, %v5979
        %5981 = vst [vmem:[%s845 + $0x24] sm:$0x1] %v5980
        %v5982 = vld [vmem:[%s845 + $0x28] sm:$0xf]
        %v5983 = vsel %vm2582, %v5919, %v5982
        %5984 = vst [vmem:[%s845 + $0x28] sm:$0xf] %v5983
        %v5985 = vld [vmem:[%s845 + $0x2c] sm:$0x1]
        %v5986 = vsel %vm2586, %v5920, %v5985
        %5987 = vst [vmem:[%s845 + $0x2c] sm:$0x1] %v5986
        %v5988 = vld [vmem:[%s845 + $0x30] sm:$0xf]
        %v5989 = vsel %vm2582, %v5927, %v5988
        %5990 = vst [vmem:[%s845 + $0x30] sm:$0xf] %v5989
        %v5991 = vld [vmem:[%s845 + $0x34] sm:$0x1]
        %v5992 = vsel %vm2586, %v5928, %v5991
        %5993 = vst [vmem:[%s845 + $0x34] sm:$0x1] %v5992
        %v5994 = vld [vmem:[%s845 + $0x38] sm:$0xf]
        %v5995 = vsel %vm2582, %v5935, %v5994
        %5996 = vst [vmem:[%s845 + $0x38] sm:$0xf] %v5995
        %v5997 = vld [vmem:[%s845 + $0x3c] sm:$0x1]
        %v5998 = vsel %vm2586, %v5936, %v5997
        %5999 = vst [vmem:[%s845 + $0x3c] sm:$0x1] %v5998
        %v6000 = vld [vmem:[#allocation2] sm:$0xf]
        %v6001 = vld [vmem:[#allocation2 + $0x8] sm:$0xf]
        %v6002 = vld [vmem:[#allocation2 + $0x10] sm:$0xf]
        %v6003 = vld [vmem:[#allocation2 + $0x18] sm:$0xf]
        %v6004 = vld [vmem:[#allocation2 + $0x20] sm:$0xf]
        %v6005 = vld [vmem:[#allocation2 + $0x28] sm:$0xf]
        %v6006 = vld [vmem:[#allocation2 + $0x30] sm:$0xf]
        %v6007 = vld [vmem:[#allocation2 + $0x38] sm:$0xf]
        %v6008 = vld [vmem:[#allocation14] sm:$0xf]
        %v6009 = vld [vmem:[#allocation2 + $0x4] sm:$0x1]
        %v6010 = vld [vmem:[#allocation2 + $0xc] sm:$0x1]
        %v6011 = vld [vmem:[#allocation2 + $0x14] sm:$0x1]
        %v6012 = vld [vmem:[#allocation2 + $0x1c] sm:$0x1]
        %v6013 = vld [vmem:[#allocation2 + $0x24] sm:$0x1]
        %v6014 = vld [vmem:[#allocation2 + $0x2c] sm:$0x1]
        %v6015 = vld [vmem:[#allocation2 + $0x34] sm:$0x1]
        %v6016 = vld [vmem:[#allocation2 + $0x3c] sm:$0x1]
        %v6018 = vshrl.u32 %v6000, 16
        %v6020 = vrot.slane %v6018, 4
        %v6021 = vshll.u32 %v6000, 16
        %v6023 = vrot.slane %v6021, 5
        %v6024 = vor.u32 %v6020, %v6023
        %v6025 = vrot.slane %v6024, 4
        %v6027 = vshll.u32 %v6009, 16
        %v6029 = vrot.slane %v6027, 5
        %v6030 = vsel %vm920, %v6025, %v6029
        %v6032 = vshrl.u32 %v6001, 16
        %v6034 = vrot.slane %v6032, 4
        %v6035 = vshll.u32 %v6001, 16
        %v6037 = vrot.slane %v6035, 5
        %v6038 = vor.u32 %v6034, %v6037
        %v6039 = vrot.slane %v6038, 4
        %v6041 = vshll.u32 %v6010, 16
        %v6043 = vrot.slane %v6041, 5
        %v6044 = vsel %vm920, %v6039, %v6043
        %v6046 = vshrl.u32 %v6002, 16
        %v6048 = vrot.slane %v6046, 4
        %v6049 = vshll.u32 %v6002, 16
        %v6051 = vrot.slane %v6049, 5
        %v6052 = vor.u32 %v6048, %v6051
        %v6053 = vrot.slane %v6052, 4
        %v6055 = vshll.u32 %v6011, 16
        %v6057 = vrot.slane %v6055, 5
        %v6058 = vsel %vm920, %v6053, %v6057
        %v6060 = vshrl.u32 %v6003, 16
        %v6062 = vrot.slane %v6060, 4
        %v6063 = vshll.u32 %v6003, 16
        %v6065 = vrot.slane %v6063, 5
        %v6066 = vor.u32 %v6062, %v6065
        %v6067 = vrot.slane %v6066, 4
        %v6069 = vshll.u32 %v6012, 16
        %v6071 = vrot.slane %v6069, 5
        %v6072 = vsel %vm920, %v6067, %v6071
        %v6074 = vshrl.u32 %v6004, 16
        %v6076 = vrot.slane %v6074, 4
        %v6077 = vshll.u32 %v6004, 16
        %v6079 = vrot.slane %v6077, 5
        %v6080 = vor.u32 %v6076, %v6079
        %v6081 = vrot.slane %v6080, 4
        %v6083 = vshll.u32 %v6013, 16
        %v6085 = vrot.slane %v6083, 5
        %v6086 = vsel %vm920, %v6081, %v6085
        %v6088 = vshrl.u32 %v6005, 16
        %v6090 = vrot.slane %v6088, 4
        %v6091 = vshll.u32 %v6005, 16
        %v6093 = vrot.slane %v6091, 5
        %v6094 = vor.u32 %v6090, %v6093
        %v6095 = vrot.slane %v6094, 4
        %v6097 = vshll.u32 %v6014, 16
        %v6099 = vrot.slane %v6097, 5
        %v6100 = vsel %vm920, %v6095, %v6099
        %v6102 = vshrl.u32 %v6006, 16
        %v6104 = vrot.slane %v6102, 4
        %v6105 = vshll.u32 %v6006, 16
        %v6107 = vrot.slane %v6105, 5
        %v6108 = vor.u32 %v6104, %v6107
        %v6109 = vrot.slane %v6108, 4
        %v6111 = vshll.u32 %v6015, 16
        %v6113 = vrot.slane %v6111, 5
        %v6114 = vsel %vm920, %v6109, %v6113
        %v6116 = vshrl.u32 %v6007, 16
        %v6118 = vrot.slane %v6116, 4
        %v6119 = vshll.u32 %v6007, 16
        %v6121 = vrot.slane %v6119, 5
        %v6122 = vor.u32 %v6118, %v6121
        %v6123 = vrot.slane %v6122, 4
        %v6125 = vshll.u32 %v6016, 16
        %v6127 = vrot.slane %v6125, 5
        %v6128 = vsel %vm920, %v6123, %v6127
        %s6129 = scalar_lea.vmem [#allocation14], 4
        %v6130 = vld [vmem:[%s6129] sm:$0xf]
        %v6131 = vunpack.c.l.b16 %v6030
        %v6132 = vunpack.c.l.b16 %v6044
        %v6133 = vunpack.c.l.b16 %v6058
        %v6134 = vunpack.c.l.b16 %v6072
        %v6135 = vunpack.c.l.b16 %v6086
        %v6136 = vunpack.c.l.b16 %v6100
        %v6137 = vunpack.c.l.b16 %v6114
        %v6138 = vunpack.c.l.b16 %v6128
        %v6139 = vpack.c.b16 %v6132, %v6131
        %v6140 = vpack.c.b16 %v6134, %v6133
        %v6141 = vpack.c.b16 %v6136, %v6135
        %v6142 = vpack.c.b16 %v6138, %v6137
        %v6144 = vsel %vm2775, %v6139, 0
        %v6147 = vsel %vm2775, %v6140, 0
        %v6150 = vsel %vm2775, %v6141, 0
        %v6153 = vsel %vm2775, %v6142, 0
        %v6156 = vsel %vm2788, %v6130, 0
        %6158 = vmatprep.subr.bf16.mxu0 0
        %6159 = vmatpush1.bf16.msra.mxu0 %v6156
        %6160 = vmatprep.subr.bf16.mxu0 0
        %6161 = vmatpush1.bf16.msra.mxu0 0
        %6162 = vmatprep.subr.bf16.mxu0 0
        %6163 = vmatpush1.bf16.msra.mxu0 0
        %6164 = vmatprep.subr.bf16.mxu0 0
        %6165 = vmatpush1.bf16.msra.mxu0 0
        %6166 = vmatprep.subr.bf16.mxu0 0
        %6167 = vmatpush1.bf16.msra.mxu0 0
        %6168 = vmatprep.subr.bf16.mxu0 0
        %6169 = vmatpush1.bf16.msra.mxu0 0
        %6170 = vmatprep.subr.bf16.mxu0 0
        %6171 = vmatpush1.bf16.msra.mxu0 0
        %6172 = vmatprep.subr.bf16.mxu0 0
        %6173 = vmatpush1.bf16.msra.mxu0 0
        %6174 = vmatprep.subr.bf16.mxu0 0
        %6175 = vmatpush1.bf16.msra.mxu0 0
        %6176 = vmatprep.subr.bf16.mxu0 0
        %6177 = vmatpush1.bf16.msra.mxu0 0
        %6178 = vmatprep.subr.bf16.mxu0 0
        %6179 = vmatpush1.bf16.msra.mxu0 0
        %6180 = vmatprep.subr.bf16.mxu0 0
        %6181 = vmatpush1.bf16.msra.mxu0 0
        %6182 = vmatprep.subr.bf16.mxu0 0
        %6183 = vmatpush1.bf16.msra.mxu0 0
        %6184 = vmatprep.subr.bf16.mxu0 0
        %6185 = vmatpush1.bf16.msra.mxu0 0
        %6186 = vmatprep.subr.bf16.mxu0 0
        %6187 = vmatpush1.bf16.msra.mxu0 0
        %6188 = vmatprep.subr.bf16.mxu0 0
        %6189 = vmatpush1.bf16.msra.mxu0 0
        %6190 = vmatprep.mubr.bf16.mxu0 0
        %6191 = vmatmul.mubr.bf16.gmra.mrb[0].mxu0 %v6144
        %v6192 = vpop.f32.mrb[0].mxu0
        %v6193 = vadd.f32 0.0, %v6192
        %v6194 = vpop.f32.mrb[0].mxu0
        %v6195 = vpop.f32.mrb[0].mxu0
        %v6196 = vadd.f32 0.0, %v6195
        %v6197 = vpop.f32.mrb[0].mxu0
        %6198 = vmatprep.mubr.bf16.mxu0 0
        %6199 = vmatmul.mubr.bf16.gmra.mrb[0].mxu0 %v6147
        %v6200 = vpop.f32.mrb[0].mxu0
        %v6201 = vadd.f32 0.0, %v6200
        %v6202 = vpop.f32.mrb[0].mxu0
        %v6203 = vpop.f32.mrb[0].mxu0
        %v6204 = vadd.f32 0.0, %v6203
        %v6205 = vpop.f32.mrb[0].mxu0
        %6206 = vmatprep.mubr.bf16.mxu0 0
        %6207 = vmatmul.mubr.bf16.gmra.mrb[0].mxu0 %v6150
        %v6208 = vpop.f32.mrb[0].mxu0
        %v6209 = vadd.f32 0.0, %v6208
        %v6210 = vpop.f32.mrb[0].mxu0
        %v6211 = vpop.f32.mrb[0].mxu0
        %v6212 = vadd.f32 0.0, %v6211
        %v6213 = vpop.f32.mrb[0].mxu0
        %6214 = vmatprep.mubr.bf16.mxu0 0
        %6215 = vmatmul.mubr.bf16.gmra.mrb[0].mxu0 %v6153
        %v6216 = vpop.f32.mrb[0].mxu0
        %v6217 = vadd.f32 0.0, %v6216
        %v6218 = vpop.f32.mrb[0].mxu0
        %v6219 = vpop.f32.mrb[0].mxu0
        %v6220 = vadd.f32 0.0, %v6219
        %v6221 = vpop.f32.mrb[0].mxu0
        %6222 = vdwg.mxu0
        %v6231 = vunpack.c.l.b16 %v6000
        %v6232 = vunpack.c.l.b16 %v6001
        %v6233 = vunpack.c.l.b16 %v6002
        %v6234 = vunpack.c.l.b16 %v6003
        %v6235 = vunpack.c.l.b16 %v6004
        %v6236 = vunpack.c.l.b16 %v6005
        %v6237 = vunpack.c.l.b16 %v6006
        %v6238 = vunpack.c.l.b16 %v6007
        %v6239 = vpack.c.b16 %v6232, %v6231
        %v6240 = vpack.c.b16 %v6234, %v6233
        %v6241 = vpack.c.b16 %v6236, %v6235
        %v6242 = vpack.c.b16 %v6238, %v6237
        %v6244 = vsel %vm2775, %v6239, 0
        %v6247 = vsel %vm2775, %v6240, 0
        %v6250 = vsel %vm2775, %v6241, 0
        %v6253 = vsel %vm2775, %v6242, 0
        %v6256 = vsel %vm2788, %v6008, 0
        %6258 = vmatprep.subr.bf16.mxu0 0
        %6259 = vmatpush1.bf16.msra.mxu0 %v6256
        %6260 = vmatprep.subr.bf16.mxu0 0
        %6261 = vmatpush1.bf16.msra.mxu0 0
        %6262 = vmatprep.subr.bf16.mxu0 0
        %6263 = vmatpush1.bf16.msra.mxu0 0
        %6264 = vmatprep.subr.bf16.mxu0 0
        %6265 = vmatpush1.bf16.msra.mxu0 0
        %6266 = vmatprep.subr.bf16.mxu0 0
        %6267 = vmatpush1.bf16.msra.mxu0 0
        %6268 = vmatprep.subr.bf16.mxu0 0
        %6269 = vmatpush1.bf16.msra.mxu0 0
        %6270 = vmatprep.subr.bf16.mxu0 0
        %6271 = vmatpush1.bf16.msra.mxu0 0
        %6272 = vmatprep.subr.bf16.mxu0 0
        %6273 = vmatpush1.bf16.msra.mxu0 0
        %6274 = vmatprep.subr.bf16.mxu0 0
        %6275 = vmatpush1.bf16.msra.mxu0 0
        %6276 = vmatprep.subr.bf16.mxu0 0
        %6277 = vmatpush1.bf16.msra.mxu0 0
        %6278 = vmatprep.subr.bf16.mxu0 0
        %6279 = vmatpush1.bf16.msra.mxu0 0
        %6280 = vmatprep.subr.bf16.mxu0 0
        %6281 = vmatpush1.bf16.msra.mxu0 0
        %6282 = vmatprep.subr.bf16.mxu0 0
        %6283 = vmatpush1.bf16.msra.mxu0 0
        %6284 = vmatprep.subr.bf16.mxu0 0
        %6285 = vmatpush1.bf16.msra.mxu0 0
        %6286 = vmatprep.subr.bf16.mxu0 0
        %6287 = vmatpush1.bf16.msra.mxu0 0
        %6288 = vmatprep.subr.bf16.mxu0 0
        %6289 = vmatpush1.bf16.msra.mxu0 0
        %6290 = vmatprep.mubr.bf16.mxu0 0
        %6291 = vmatmul.mubr.bf16.gmra.mrb[0].mxu0 %v6244
        %v6292 = vpop.f32.mrb[0].mxu0
        %v6293 = vadd.f32 %v6193, %v6292
        %v6294 = vpop.f32.mrb[0].mxu0
        %v6295 = vpop.f32.mrb[0].mxu0
        %v6296 = vadd.f32 %v6196, %v6295
        %v6297 = vpop.f32.mrb[0].mxu0
        %6298 = vmatprep.mubr.bf16.mxu0 0
        %6299 = vmatmul.mubr.bf16.gmra.mrb[0].mxu0 %v6247
        %v6300 = vpop.f32.mrb[0].mxu0
        %v6301 = vadd.f32 %v6201, %v6300
        %v6302 = vpop.f32.mrb[0].mxu0
        %v6303 = vpop.f32.mrb[0].mxu0
        %v6304 = vadd.f32 %v6204, %v6303
        %v6305 = vpop.f32.mrb[0].mxu0
        %6306 = vmatprep.mubr.bf16.mxu0 0
        %6307 = vmatmul.mubr.bf16.gmra.mrb[0].mxu0 %v6250
        %v6308 = vpop.f32.mrb[0].mxu0
        %v6309 = vadd.f32 %v6209, %v6308
        %v6310 = vpop.f32.mrb[0].mxu0
        %v6311 = vpop.f32.mrb[0].mxu0
        %v6312 = vadd.f32 %v6212, %v6311
        %v6313 = vpop.f32.mrb[0].mxu0
        %6314 = vmatprep.mubr.bf16.mxu0 0
        %6315 = vmatmul.mubr.bf16.gmra.mrb[0].mxu0 %v6253
        %v6316 = vpop.f32.mrb[0].mxu0
        %v6317 = vadd.f32 %v6217, %v6316
        %v6318 = vpop.f32.mrb[0].mxu0
        %v6319 = vpop.f32.mrb[0].mxu0
        %v6320 = vadd.f32 %v6220, %v6319
        %v6321 = vpop.f32.mrb[0].mxu0
        %6322 = vdwg.mxu0
        %v6323 = vld [vmem:[#allocation2] sm:$0xe]
        %v6324 = vld [vmem:[#allocation2 + $0x8] sm:$0xe]
        %v6325 = vld [vmem:[#allocation2 + $0x10] sm:$0xe]
        %v6326 = vld [vmem:[#allocation2 + $0x18] sm:$0xe]
        %v6327 = vld [vmem:[#allocation2 + $0x20] sm:$0xe]
        %v6328 = vld [vmem:[#allocation2 + $0x28] sm:$0xe]
        %v6329 = vld [vmem:[#allocation2 + $0x30] sm:$0xe]
        %v6330 = vld [vmem:[#allocation2 + $0x38] sm:$0xe]
        %v6347 = vrot.slane %v6323, 5
        %v6348 = vrot.slane %v6347, 4
        %v6349 = vrot.slane %v6009, 5
        %v6350 = vsel %vm1260, %v6348, %v6349
        %v6351 = vrot.slane %v6324, 5
        %v6352 = vrot.slane %v6351, 4
        %v6353 = vrot.slane %v6010, 5
        %v6354 = vsel %vm1260, %v6352, %v6353
        %v6355 = vrot.slane %v6325, 5
        %v6356 = vrot.slane %v6355, 4
        %v6357 = vrot.slane %v6011, 5
        %v6358 = vsel %vm1260, %v6356, %v6357
        %v6359 = vrot.slane %v6326, 5
        %v6360 = vrot.slane %v6359, 4
        %v6361 = vrot.slane %v6012, 5
        %v6362 = vsel %vm1260, %v6360, %v6361
        %v6363 = vrot.slane %v6327, 5
        %v6364 = vrot.slane %v6363, 4
        %v6365 = vrot.slane %v6013, 5
        %v6366 = vsel %vm1260, %v6364, %v6365
        %v6367 = vrot.slane %v6328, 5
        %v6368 = vrot.slane %v6367, 4
        %v6369 = vrot.slane %v6014, 5
        %v6370 = vsel %vm1260, %v6368, %v6369
        %v6371 = vrot.slane %v6329, 5
        %v6372 = vrot.slane %v6371, 4
        %v6373 = vrot.slane %v6015, 5
        %v6374 = vsel %vm1260, %v6372, %v6373
        %v6375 = vrot.slane %v6330, 5
        %v6376 = vrot.slane %v6375, 4
        %v6377 = vrot.slane %v6016, 5
        %v6378 = vsel %vm1260, %v6376, %v6377
        %s6379 = scalar_lea.vmem [#allocation14], 8
        %v6380 = vld [vmem:[%s6379] sm:$0xf]
        %v6381 = vunpack.c.l.b16 %v6350
        %v6382 = vunpack.c.l.b16 %v6354
        %v6383 = vunpack.c.l.b16 %v6358
        %v6384 = vunpack.c.l.b16 %v6362
        %v6385 = vunpack.c.l.b16 %v6366
        %v6386 = vunpack.c.l.b16 %v6370
        %v6387 = vunpack.c.l.b16 %v6374
        %v6388 = vunpack.c.l.b16 %v6378
        %v6389 = vpack.c.b16 %v6382, %v6381
        %v6390 = vpack.c.b16 %v6384, %v6383
        %v6391 = vpack.c.b16 %v6386, %v6385
        %v6392 = vpack.c.b16 %v6388, %v6387
        %v6394 = vsel %vm2775, %v6389, 0
        %v6397 = vsel %vm2775, %v6390, 0
        %v6400 = vsel %vm2775, %v6391, 0
        %v6403 = vsel %vm2775, %v6392, 0
        %v6406 = vsel %vm2788, %v6380, 0
        %6408 = vmatprep.subr.bf16.mxu0 0
        %6409 = vmatpush1.bf16.msra.mxu0 %v6406
        %6410 = vmatprep.subr.bf16.mxu0 0
        %6411 = vmatpush1.bf16.msra.mxu0 0
        %6412 = vmatprep.subr.bf16.mxu0 0
        %6413 = vmatpush1.bf16.msra.mxu0 0
        %6414 = vmatprep.subr.bf16.mxu0 0
        %6415 = vmatpush1.bf16.msra.mxu0 0
        %6416 = vmatprep.subr.bf16.mxu0 0
        %6417 = vmatpush1.bf16.msra.mxu0 0
        %6418 = vmatprep.subr.bf16.mxu0 0
        %6419 = vmatpush1.bf16.msra.mxu0 0
        %6420 = vmatprep.subr.bf16.mxu0 0
        %6421 = vmatpush1.bf16.msra.mxu0 0
        %6422 = vmatprep.subr.bf16.mxu0 0
        %6423 = vmatpush1.bf16.msra.mxu0 0
        %6424 = vmatprep.subr.bf16.mxu0 0
        %6425 = vmatpush1.bf16.msra.mxu0 0
        %6426 = vmatprep.subr.bf16.mxu0 0
        %6427 = vmatpush1.bf16.msra.mxu0 0
        %6428 = vmatprep.subr.bf16.mxu0 0
        %6429 = vmatpush1.bf16.msra.mxu0 0
        %6430 = vmatprep.subr.bf16.mxu0 0
        %6431 = vmatpush1.bf16.msra.mxu0 0
        %6432 = vmatprep.subr.bf16.mxu0 0
        %6433 = vmatpush1.bf16.msra.mxu0 0
        %6434 = vmatprep.subr.bf16.mxu0 0
        %6435 = vmatpush1.bf16.msra.mxu0 0
        %6436 = vmatprep.subr.bf16.mxu0 0
        %6437 = vmatpush1.bf16.msra.mxu0 0
        %6438 = vmatprep.subr.bf16.mxu0 0
        %6439 = vmatpush1.bf16.msra.mxu0 0
        %6440 = vmatprep.mubr.bf16.mxu0 0
        %6441 = vmatmul.mubr.bf16.gmra.mrb[0].mxu0 %v6394
        %v6442 = vpop.f32.mrb[0].mxu0
        %v6443 = vadd.f32 0.0, %v6442
        %v6444 = vpop.f32.mrb[0].mxu0
        %v6445 = vpop.f32.mrb[0].mxu0
        %v6446 = vadd.f32 0.0, %v6445
        %v6447 = vpop.f32.mrb[0].mxu0
        %6448 = vmatprep.mubr.bf16.mxu0 0
        %6449 = vmatmul.mubr.bf16.gmra.mrb[0].mxu0 %v6397
        %v6450 = vpop.f32.mrb[0].mxu0
        %v6451 = vadd.f32 0.0, %v6450
        %v6452 = vpop.f32.mrb[0].mxu0
        %v6453 = vpop.f32.mrb[0].mxu0
        %v6454 = vadd.f32 0.0, %v6453
        %v6455 = vpop.f32.mrb[0].mxu0
        %6456 = vmatprep.mubr.bf16.mxu0 0
        %6457 = vmatmul.mubr.bf16.gmra.mrb[0].mxu0 %v6400
        %v6458 = vpop.f32.mrb[0].mxu0
        %v6459 = vadd.f32 0.0, %v6458
        %v6460 = vpop.f32.mrb[0].mxu0
        %v6461 = vpop.f32.mrb[0].mxu0
        %v6462 = vadd.f32 0.0, %v6461
        %v6463 = vpop.f32.mrb[0].mxu0
        %6464 = vmatprep.mubr.bf16.mxu0 0
        %6465 = vmatmul.mubr.bf16.gmra.mrb[0].mxu0 %v6403
        %v6466 = vpop.f32.mrb[0].mxu0
        %v6467 = vadd.f32 0.0, %v6466
        %v6468 = vpop.f32.mrb[0].mxu0
        %v6469 = vpop.f32.mrb[0].mxu0
        %v6470 = vadd.f32 0.0, %v6469
        %v6471 = vpop.f32.mrb[0].mxu0
        %6472 = vdwg.mxu0
        %v6473 = vadd.f32 %v6293, %v6443
        %v6474 = vadd.f32 %v6296, %v6446
        %v6475 = vadd.f32 %v6301, %v6451
        %v6476 = vadd.f32 %v6304, %v6454
        %v6477 = vadd.f32 %v6309, %v6459
        %v6478 = vadd.f32 %v6312, %v6462
        %v6479 = vadd.f32 %v6317, %v6467
        %v6480 = vadd.f32 %v6320, %v6470
        %v6481 = vld [vmem:[%s845] sm:$0xf]
        %v6482 = vld [vmem:[%s845 + $0x8] sm:$0xf]
        %v6483 = vld [vmem:[%s845 + $0x10] sm:$0xf]
        %v6484 = vld [vmem:[%s845 + $0x18] sm:$0xf]
        %v6485 = vld [vmem:[%s845 + $0x20] sm:$0xf]
        %v6486 = vld [vmem:[%s845 + $0x28] sm:$0xf]
        %v6487 = vld [vmem:[%s845 + $0x30] sm:$0xf]
        %v6488 = vld [vmem:[%s845 + $0x38] sm:$0xf]
        %s6489 = scalar_lea.vmem [#allocation14], 12
        %v6490 = vld [vmem:[%s6489] sm:$0xf]
        %v6499 = vunpack.c.l.b16 %v6481
        %v6500 = vunpack.c.l.b16 %v6482
        %v6501 = vunpack.c.l.b16 %v6483
        %v6502 = vunpack.c.l.b16 %v6484
        %v6503 = vunpack.c.l.b16 %v6485
        %v6504 = vunpack.c.l.b16 %v6486
        %v6505 = vunpack.c.l.b16 %v6487
        %v6506 = vunpack.c.l.b16 %v6488
        %v6507 = vpack.c.b16 %v6500, %v6499
        %v6508 = vpack.c.b16 %v6502, %v6501
        %v6509 = vpack.c.b16 %v6504, %v6503
        %v6510 = vpack.c.b16 %v6506, %v6505
        %v6512 = vsel %vm2775, %v6507, 0
        %v6515 = vsel %vm2775, %v6508, 0
        %v6518 = vsel %vm2775, %v6509, 0
        %v6521 = vsel %vm2775, %v6510, 0
        %v6524 = vsel %vm2788, %v6490, 0
        %6526 = vmatprep.subr.bf16.mxu0 0
        %6527 = vmatpush1.bf16.msra.mxu0 %v6524
        %6528 = vmatprep.subr.bf16.mxu0 0
        %6529 = vmatpush1.bf16.msra.mxu0 0
        %6530 = vmatprep.subr.bf16.mxu0 0
        %6531 = vmatpush1.bf16.msra.mxu0 0
        %6532 = vmatprep.subr.bf16.mxu0 0
        %6533 = vmatpush1.bf16.msra.mxu0 0
        %6534 = vmatprep.subr.bf16.mxu0 0
        %6535 = vmatpush1.bf16.msra.mxu0 0
        %6536 = vmatprep.subr.bf16.mxu0 0
        %6537 = vmatpush1.bf16.msra.mxu0 0
        %6538 = vmatprep.subr.bf16.mxu0 0
        %6539 = vmatpush1.bf16.msra.mxu0 0
        %6540 = vmatprep.subr.bf16.mxu0 0
        %6541 = vmatpush1.bf16.msra.mxu0 0
        %6542 = vmatprep.subr.bf16.mxu0 0
        %6543 = vmatpush1.bf16.msra.mxu0 0
        %6544 = vmatprep.subr.bf16.mxu0 0
        %6545 = vmatpush1.bf16.msra.mxu0 0
        %6546 = vmatprep.subr.bf16.mxu0 0
        %6547 = vmatpush1.bf16.msra.mxu0 0
        %6548 = vmatprep.subr.bf16.mxu0 0
        %6549 = vmatpush1.bf16.msra.mxu0 0
        %6550 = vmatprep.subr.bf16.mxu0 0
        %6551 = vmatpush1.bf16.msra.mxu0 0
        %6552 = vmatprep.subr.bf16.mxu0 0
        %6553 = vmatpush1.bf16.msra.mxu0 0
        %6554 = vmatprep.subr.bf16.mxu0 0
        %6555 = vmatpush1.bf16.msra.mxu0 0
        %6556 = vmatprep.subr.bf16.mxu0 0
        %6557 = vmatpush1.bf16.msra.mxu0 0
        %6558 = vmatprep.mubr.bf16.mxu0 0
        %6559 = vmatmul.mubr.bf16.gmra.mrb[0].mxu0 %v6512
        %v6560 = vpop.f32.mrb[0].mxu0
        %v6561 = vadd.f32 0.0, %v6560
        %v6562 = vpop.f32.mrb[0].mxu0
        %v6563 = vpop.f32.mrb[0].mxu0
        %v6564 = vadd.f32 0.0, %v6563
        %v6565 = vpop.f32.mrb[0].mxu0
        %6566 = vmatprep.mubr.bf16.mxu0 0
        %6567 = vmatmul.mubr.bf16.gmra.mrb[0].mxu0 %v6515
        %v6568 = vpop.f32.mrb[0].mxu0
        %v6569 = vadd.f32 0.0, %v6568
        %v6570 = vpop.f32.mrb[0].mxu0
        %v6571 = vpop.f32.mrb[0].mxu0
        %v6572 = vadd.f32 0.0, %v6571
        %v6573 = vpop.f32.mrb[0].mxu0
        %6574 = vmatprep.mubr.bf16.mxu0 0
        %6575 = vmatmul.mubr.bf16.gmra.mrb[0].mxu0 %v6518
        %v6576 = vpop.f32.mrb[0].mxu0
        %v6577 = vadd.f32 0.0, %v6576
        %v6578 = vpop.f32.mrb[0].mxu0
        %v6579 = vpop.f32.mrb[0].mxu0
        %v6580 = vadd.f32 0.0, %v6579
        %v6581 = vpop.f32.mrb[0].mxu0
        %6582 = vmatprep.mubr.bf16.mxu0 0
        %6583 = vmatmul.mubr.bf16.gmra.mrb[0].mxu0 %v6521
        %v6584 = vpop.f32.mrb[0].mxu0
        %v6585 = vadd.f32 0.0, %v6584
        %v6586 = vpop.f32.mrb[0].mxu0
        %v6587 = vpop.f32.mrb[0].mxu0
        %v6588 = vadd.f32 0.0, %v6587
        %v6589 = vpop.f32.mrb[0].mxu0
        %6590 = vdwg.mxu0
        %v6591 = vadd.f32 %v6473, %v6561
        %v6592 = vadd.f32 %v6474, %v6564
        %v6593 = vadd.f32 %v6475, %v6569
        %v6594 = vadd.f32 %v6476, %v6572
        %v6595 = vadd.f32 %v6477, %v6577
        %v6596 = vadd.f32 %v6478, %v6580
        %v6597 = vadd.f32 %v6479, %v6585
        %v6598 = vadd.f32 %v6480, %v6588
        %v6599 = vld [vmem:[%s845] sm:$0xf]
        %v6600 = vld [vmem:[%s845 + $0x4] sm:$0x1]
        %v6601 = vld [vmem:[%s845 + $0x8] sm:$0xf]
        %v6602 = vld [vmem:[%s845 + $0xc] sm:$0x1]
        %v6603 = vld [vmem:[%s845 + $0x10] sm:$0xf]
        %v6604 = vld [vmem:[%s845 + $0x14] sm:$0x1]
        %v6605 = vld [vmem:[%s845 + $0x18] sm:$0xf]
        %v6606 = vld [vmem:[%s845 + $0x1c] sm:$0x1]
        %v6607 = vld [vmem:[%s845 + $0x20] sm:$0xf]
        %v6608 = vld [vmem:[%s845 + $0x24] sm:$0x1]
        %v6609 = vld [vmem:[%s845 + $0x28] sm:$0xf]
        %v6610 = vld [vmem:[%s845 + $0x2c] sm:$0x1]
        %v6611 = vld [vmem:[%s845 + $0x30] sm:$0xf]
        %v6612 = vld [vmem:[%s845 + $0x34] sm:$0x1]
        %v6613 = vld [vmem:[%s845 + $0x38] sm:$0xf]
        %v6614 = vld [vmem:[%s845 + $0x3c] sm:$0x1]
        %v6616 = vshrl.u32 %v6599, 16
        %v6618 = vrot.slane %v6616, 4
        %v6619 = vshll.u32 %v6599, 16
        %v6621 = vrot.slane %v6619, 5
        %v6622 = vor.u32 %v6618, %v6621
        %v6623 = vrot.slane %v6622, 4
        %v6625 = vshll.u32 %v6600, 16
        %v6627 = vrot.slane %v6625, 5
        %v6628 = vsel %vm920, %v6623, %v6627
        %v6630 = vshrl.u32 %v6601, 16
        %v6632 = vrot.slane %v6630, 4
        %v6633 = vshll.u32 %v6601, 16
        %v6635 = vrot.slane %v6633, 5
        %v6636 = vor.u32 %v6632, %v6635
        %v6637 = vrot.slane %v6636, 4
        %v6639 = vshll.u32 %v6602, 16
        %v6641 = vrot.slane %v6639, 5
        %v6642 = vsel %vm920, %v6637, %v6641
        %v6644 = vshrl.u32 %v6603, 16
        %v6646 = vrot.slane %v6644, 4
        %v6647 = vshll.u32 %v6603, 16
        %v6649 = vrot.slane %v6647, 5
        %v6650 = vor.u32 %v6646, %v6649
        %v6651 = vrot.slane %v6650, 4
        %v6653 = vshll.u32 %v6604, 16
        %v6655 = vrot.slane %v6653, 5
        %v6656 = vsel %vm920, %v6651, %v6655
        %v6658 = vshrl.u32 %v6605, 16
        %v6660 = vrot.slane %v6658, 4
        %v6661 = vshll.u32 %v6605, 16
        %v6663 = vrot.slane %v6661, 5
        %v6664 = vor.u32 %v6660, %v6663
        %v6665 = vrot.slane %v6664, 4
        %v6667 = vshll.u32 %v6606, 16
        %v6669 = vrot.slane %v6667, 5
        %v6670 = vsel %vm920, %v6665, %v6669
        %v6672 = vshrl.u32 %v6607, 16
        %v6674 = vrot.slane %v6672, 4
        %v6675 = vshll.u32 %v6607, 16
        %v6677 = vrot.slane %v6675, 5
        %v6678 = vor.u32 %v6674, %v6677
        %v6679 = vrot.slane %v6678, 4
        %v6681 = vshll.u32 %v6608, 16
        %v6683 = vrot.slane %v6681, 5
        %v6684 = vsel %vm920, %v6679, %v6683
        %v6686 = vshrl.u32 %v6609, 16
        %v6688 = vrot.slane %v6686, 4
        %v6689 = vshll.u32 %v6609, 16
        %v6691 = vrot.slane %v6689, 5
        %v6692 = vor.u32 %v6688, %v6691
        %v6693 = vrot.slane %v6692, 4
        %v6695 = vshll.u32 %v6610, 16
        %v6697 = vrot.slane %v6695, 5
        %v6698 = vsel %vm920, %v6693, %v6697
        %v6700 = vshrl.u32 %v6611, 16
        %v6702 = vrot.slane %v6700, 4
        %v6703 = vshll.u32 %v6611, 16
        %v6705 = vrot.slane %v6703, 5
        %v6706 = vor.u32 %v6702, %v6705
        %v6707 = vrot.slane %v6706, 4
        %v6709 = vshll.u32 %v6612, 16
        %v6711 = vrot.slane %v6709, 5
        %v6712 = vsel %vm920, %v6707, %v6711
        %v6714 = vshrl.u32 %v6613, 16
        %v6716 = vrot.slane %v6714, 4
        %v6717 = vshll.u32 %v6613, 16
        %v6719 = vrot.slane %v6717, 5
        %v6720 = vor.u32 %v6716, %v6719
        %v6721 = vrot.slane %v6720, 4
        %v6723 = vshll.u32 %v6614, 16
        %v6725 = vrot.slane %v6723, 5
        %v6726 = vsel %vm920, %v6721, %v6725
        %s6727 = scalar_lea.vmem [#allocation14], 16
        %v6728 = vld [vmem:[%s6727] sm:$0xf]
        %v6729 = vunpack.c.l.b16 %v6628
        %v6730 = vunpack.c.l.b16 %v6642
        %v6731 = vunpack.c.l.b16 %v6656
        %v6732 = vunpack.c.l.b16 %v6670
        %v6733 = vunpack.c.l.b16 %v6684
        %v6734 = vunpack.c.l.b16 %v6698
        %v6735 = vunpack.c.l.b16 %v6712
        %v6736 = vunpack.c.l.b16 %v6726
        %v6737 = vpack.c.b16 %v6730, %v6729
        %v6738 = vpack.c.b16 %v6732, %v6731
        %v6739 = vpack.c.b16 %v6734, %v6733
        %v6740 = vpack.c.b16 %v6736, %v6735
        %v6742 = vsel %vm2775, %v6737, 0
        %v6745 = vsel %vm2775, %v6738, 0
        %v6748 = vsel %vm2775, %v6739, 0
        %v6751 = vsel %vm2775, %v6740, 0
        %v6754 = vsel %vm2788, %v6728, 0
        %6756 = vmatprep.subr.bf16.mxu0 0
        %6757 = vmatpush1.bf16.msra.mxu0 %v6754
        %6758 = vmatprep.subr.bf16.mxu0 0
        %6759 = vmatpush1.bf16.msra.mxu0 0
        %6760 = vmatprep.subr.bf16.mxu0 0
        %6761 = vmatpush1.bf16.msra.mxu0 0
        %6762 = vmatprep.subr.bf16.mxu0 0
        %6763 = vmatpush1.bf16.msra.mxu0 0
        %6764 = vmatprep.subr.bf16.mxu0 0
        %6765 = vmatpush1.bf16.msra.mxu0 0
        %6766 = vmatprep.subr.bf16.mxu0 0
        %6767 = vmatpush1.bf16.msra.mxu0 0
        %6768 = vmatprep.subr.bf16.mxu0 0
        %6769 = vmatpush1.bf16.msra.mxu0 0
        %6770 = vmatprep.subr.bf16.mxu0 0
        %6771 = vmatpush1.bf16.msra.mxu0 0
        %6772 = vmatprep.subr.bf16.mxu0 0
        %6773 = vmatpush1.bf16.msra.mxu0 0
        %6774 = vmatprep.subr.bf16.mxu0 0
        %6775 = vmatpush1.bf16.msra.mxu0 0
        %6776 = vmatprep.subr.bf16.mxu0 0
        %6777 = vmatpush1.bf16.msra.mxu0 0
        %6778 = vmatprep.subr.bf16.mxu0 0
        %6779 = vmatpush1.bf16.msra.mxu0 0
        %6780 = vmatprep.subr.bf16.mxu0 0
        %6781 = vmatpush1.bf16.msra.mxu0 0
        %6782 = vmatprep.subr.bf16.mxu0 0
        %6783 = vmatpush1.bf16.msra.mxu0 0
        %6784 = vmatprep.subr.bf16.mxu0 0
        %6785 = vmatpush1.bf16.msra.mxu0 0
        %6786 = vmatprep.subr.bf16.mxu0 0
        %6787 = vmatpush1.bf16.msra.mxu0 0
        %6788 = vmatprep.mubr.bf16.mxu0 0
        %6789 = vmatmul.mubr.bf16.gmra.mrb[0].mxu0 %v6742
        %v6790 = vpop.f32.mrb[0].mxu0
        %v6791 = vadd.f32 0.0, %v6790
        %v6792 = vpop.f32.mrb[0].mxu0
        %v6793 = vpop.f32.mrb[0].mxu0
        %v6794 = vadd.f32 0.0, %v6793
        %v6795 = vpop.f32.mrb[0].mxu0
        %6796 = vmatprep.mubr.bf16.mxu0 0
        %6797 = vmatmul.mubr.bf16.gmra.mrb[0].mxu0 %v6745
        %v6798 = vpop.f32.mrb[0].mxu0
        %v6799 = vadd.f32 0.0, %v6798
        %v6800 = vpop.f32.mrb[0].mxu0
        %v6801 = vpop.f32.mrb[0].mxu0
        %v6802 = vadd.f32 0.0, %v6801
        %v6803 = vpop.f32.mrb[0].mxu0
        %6804 = vmatprep.mubr.bf16.mxu0 0
        %6805 = vmatmul.mubr.bf16.gmra.mrb[0].mxu0 %v6748
        %v6806 = vpop.f32.mrb[0].mxu0
        %v6807 = vadd.f32 0.0, %v6806
        %v6808 = vpop.f32.mrb[0].mxu0
        %v6809 = vpop.f32.mrb[0].mxu0
        %v6810 = vadd.f32 0.0, %v6809
        %v6811 = vpop.f32.mrb[0].mxu0
        %6812 = vmatprep.mubr.bf16.mxu0 0
        %6813 = vmatmul.mubr.bf16.gmra.mrb[0].mxu0 %v6751
        %v6814 = vpop.f32.mrb[0].mxu0
        %v6815 = vadd.f32 0.0, %v6814
        %v6816 = vpop.f32.mrb[0].mxu0
        %v6817 = vpop.f32.mrb[0].mxu0
        %v6818 = vadd.f32 0.0, %v6817
        %v6819 = vpop.f32.mrb[0].mxu0
        %6820 = vdwg.mxu0
        %v6821 = vadd.f32 %v6591, %v6791
        %v6822 = vadd.f32 %v6592, %v6794
        %v6823 = vadd.f32 %v6593, %v6799
        %v6824 = vadd.f32 %v6594, %v6802
        %v6825 = vadd.f32 %v6595, %v6807
        %v6826 = vadd.f32 %v6596, %v6810
        %v6827 = vadd.f32 %v6597, %v6815
        %v6828 = vadd.f32 %v6598, %v6818
        %v6829 = vld [vmem:[%s845] sm:$0xe]
        %v6830 = vld [vmem:[%s845 + $0x8] sm:$0xe]
        %v6831 = vld [vmem:[%s845 + $0x10] sm:$0xe]
        %v6832 = vld [vmem:[%s845 + $0x18] sm:$0xe]
        %v6833 = vld [vmem:[%s845 + $0x20] sm:$0xe]
        %v6834 = vld [vmem:[%s845 + $0x28] sm:$0xe]
        %v6835 = vld [vmem:[%s845 + $0x30] sm:$0xe]
        %v6836 = vld [vmem:[%s845 + $0x38] sm:$0xe]
        %v6853 = vrot.slane %v6829, 5
        %v6854 = vrot.slane %v6853, 4
        %v6855 = vrot.slane %v6600, 5
        %v6856 = vsel %vm1260, %v6854, %v6855
        %v6857 = vrot.slane %v6830, 5
        %v6858 = vrot.slane %v6857, 4
        %v6859 = vrot.slane %v6602, 5
        %v6860 = vsel %vm1260, %v6858, %v6859
        %v6861 = vrot.slane %v6831, 5
        %v6862 = vrot.slane %v6861, 4
        %v6863 = vrot.slane %v6604, 5
        %v6864 = vsel %vm1260, %v6862, %v6863
        %v6865 = vrot.slane %v6832, 5
        %v6866 = vrot.slane %v6865, 4
        %v6867 = vrot.slane %v6606, 5
        %v6868 = vsel %vm1260, %v6866, %v6867
        %v6869 = vrot.slane %v6833, 5
        %v6870 = vrot.slane %v6869, 4
        %v6871 = vrot.slane %v6608, 5
        %v6872 = vsel %vm1260, %v6870, %v6871
        %v6873 = vrot.slane %v6834, 5
        %v6874 = vrot.slane %v6873, 4
        %v6875 = vrot.slane %v6610, 5
        %v6876 = vsel %vm1260, %v6874, %v6875
        %v6877 = vrot.slane %v6835, 5
        %v6878 = vrot.slane %v6877, 4
        %v6879 = vrot.slane %v6612, 5
        %v6880 = vsel %vm1260, %v6878, %v6879
        %v6881 = vrot.slane %v6836, 5
        %v6882 = vrot.slane %v6881, 4
        %v6883 = vrot.slane %v6614, 5
        %v6884 = vsel %vm1260, %v6882, %v6883
        %s6885 = scalar_lea.vmem [#allocation14], 20
        %v6886 = vld [vmem:[%s6885] sm:$0xf]
        %v6887 = vunpack.c.l.b16 %v6856
        %v6888 = vunpack.c.l.b16 %v6860
        %v6889 = vunpack.c.l.b16 %v6864
        %v6890 = vunpack.c.l.b16 %v6868
        %v6891 = vunpack.c.l.b16 %v6872
        %v6892 = vunpack.c.l.b16 %v6876
        %v6893 = vunpack.c.l.b16 %v6880
        %v6894 = vunpack.c.l.b16 %v6884
        %v6895 = vpack.c.b16 %v6888, %v6887
        %v6896 = vpack.c.b16 %v6890, %v6889
        %v6897 = vpack.c.b16 %v6892, %v6891
        %v6898 = vpack.c.b16 %v6894, %v6893
        %v6900 = vsel %vm2775, %v6895, 0
        %v6903 = vsel %vm2775, %v6896, 0
        %v6906 = vsel %vm2775, %v6897, 0
        %v6909 = vsel %vm2775, %v6898, 0
        %v6912 = vsel %vm2788, %v6886, 0
        %6914 = vmatprep.subr.bf16.mxu0 0
        %6915 = vmatpush1.bf16.msra.mxu0 %v6912
        %6916 = vmatprep.subr.bf16.mxu0 0
        %6917 = vmatpush1.bf16.msra.mxu0 0
        %6918 = vmatprep.subr.bf16.mxu0 0
        %6919 = vmatpush1.bf16.msra.mxu0 0
        %6920 = vmatprep.subr.bf16.mxu0 0
        %6921 = vmatpush1.bf16.msra.mxu0 0
        %6922 = vmatprep.subr.bf16.mxu0 0
        %6923 = vmatpush1.bf16.msra.mxu0 0
        %6924 = vmatprep.subr.bf16.mxu0 0
        %6925 = vmatpush1.bf16.msra.mxu0 0
        %6926 = vmatprep.subr.bf16.mxu0 0
        %6927 = vmatpush1.bf16.msra.mxu0 0
        %6928 = vmatprep.subr.bf16.mxu0 0
        %6929 = vmatpush1.bf16.msra.mxu0 0
        %6930 = vmatprep.subr.bf16.mxu0 0
        %6931 = vmatpush1.bf16.msra.mxu0 0
        %6932 = vmatprep.subr.bf16.mxu0 0
        %6933 = vmatpush1.bf16.msra.mxu0 0
        %6934 = vmatprep.subr.bf16.mxu0 0
        %6935 = vmatpush1.bf16.msra.mxu0 0
        %6936 = vmatprep.subr.bf16.mxu0 0
        %6937 = vmatpush1.bf16.msra.mxu0 0
        %6938 = vmatprep.subr.bf16.mxu0 0
        %6939 = vmatpush1.bf16.msra.mxu0 0
        %6940 = vmatprep.subr.bf16.mxu0 0
        %6941 = vmatpush1.bf16.msra.mxu0 0
        %6942 = vmatprep.subr.bf16.mxu0 0
        %6943 = vmatpush1.bf16.msra.mxu0 0
        %6944 = vmatprep.subr.bf16.mxu0 0
        %6945 = vmatpush1.bf16.msra.mxu0 0
        %6946 = vmatprep.mubr.bf16.mxu0 0
        %6947 = vmatmul.mubr.bf16.gmra.mrb[0].mxu0 %v6900
        %v6948 = vpop.f32.mrb[0].mxu0
        %v6949 = vadd.f32 0.0, %v6948
        %v6950 = vpop.f32.mrb[0].mxu0
        %v6951 = vpop.f32.mrb[0].mxu0
        %v6952 = vadd.f32 0.0, %v6951
        %v6953 = vpop.f32.mrb[0].mxu0
        %6954 = vmatprep.mubr.bf16.mxu0 0
        %6955 = vmatmul.mubr.bf16.gmra.mrb[0].mxu0 %v6903
        %v6956 = vpop.f32.mrb[0].mxu0
        %v6957 = vadd.f32 0.0, %v6956
        %v6958 = vpop.f32.mrb[0].mxu0
        %v6959 = vpop.f32.mrb[0].mxu0
        %v6960 = vadd.f32 0.0, %v6959
        %v6961 = vpop.f32.mrb[0].mxu0
        %6962 = vmatprep.mubr.bf16.mxu0 0
        %6963 = vmatmul.mubr.bf16.gmra.mrb[0].mxu0 %v6906
        %v6964 = vpop.f32.mrb[0].mxu0
        %v6965 = vadd.f32 0.0, %v6964
        %v6966 = vpop.f32.mrb[0].mxu0
        %v6967 = vpop.f32.mrb[0].mxu0
        %v6968 = vadd.f32 0.0, %v6967
        %v6969 = vpop.f32.mrb[0].mxu0
        %6970 = vmatprep.mubr.bf16.mxu0 0
        %6971 = vmatmul.mubr.bf16.gmra.mrb[0].mxu0 %v6909
        %v6972 = vpop.f32.mrb[0].mxu0
        %v6973 = vadd.f32 0.0, %v6972
        %v6974 = vpop.f32.mrb[0].mxu0
        %v6975 = vpop.f32.mrb[0].mxu0
        %v6976 = vadd.f32 0.0, %v6975
        %v6977 = vpop.f32.mrb[0].mxu0
        %6978 = vdwg.mxu0
        %v6979 = vadd.f32 %v6821, %v6949
        %v6980 = vadd.f32 %v6822, %v6952
        %v6981 = vadd.f32 %v6823, %v6957
        %v6982 = vadd.f32 %v6824, %v6960
        %v6983 = vadd.f32 %v6825, %v6965
        %v6984 = vadd.f32 %v6826, %v6968
        %v6985 = vadd.f32 %v6827, %v6973
        %v6986 = vadd.f32 %v6828, %v6976
        %v6987 = vld [vmem:[%s1917] sm:$0xf]
        %v6988 = vld [vmem:[%s1917 + $0x8] sm:$0xf]
        %v6989 = vld [vmem:[%s1917 + $0x10] sm:$0xf]
        %v6990 = vld [vmem:[%s1917 + $0x18] sm:$0xf]
        %v6991 = vld [vmem:[%s1917 + $0x20] sm:$0xf]
        %v6992 = vld [vmem:[%s1917 + $0x28] sm:$0xf]
        %v6993 = vld [vmem:[%s1917 + $0x30] sm:$0xf]
        %v6994 = vld [vmem:[%s1917 + $0x38] sm:$0xf]
        %s6995 = scalar_lea.vmem [#allocation14], 24
        %v6996 = vld [vmem:[%s6995] sm:$0xf]
        %v7005 = vunpack.c.l.b16 %v6987
        %v7006 = vunpack.c.l.b16 %v6988
        %v7007 = vunpack.c.l.b16 %v6989
        %v7008 = vunpack.c.l.b16 %v6990
        %v7009 = vunpack.c.l.b16 %v6991
        %v7010 = vunpack.c.l.b16 %v6992
        %v7011 = vunpack.c.l.b16 %v6993
        %v7012 = vunpack.c.l.b16 %v6994
        %v7013 = vpack.c.b16 %v7006, %v7005
        %v7014 = vpack.c.b16 %v7008, %v7007
        %v7015 = vpack.c.b16 %v7010, %v7009
        %v7016 = vpack.c.b16 %v7012, %v7011
        %v7018 = vsel %vm2775, %v7013, 0
        %v7021 = vsel %vm2775, %v7014, 0
        %v7024 = vsel %vm2775, %v7015, 0
        %v7027 = vsel %vm2775, %v7016, 0
        %v7030 = vsel %vm2788, %v6996, 0
        %7032 = vmatprep.subr.bf16.mxu0 0
        %7033 = vmatpush1.bf16.msra.mxu0 %v7030
        %7034 = vmatprep.subr.bf16.mxu0 0
        %7035 = vmatpush1.bf16.msra.mxu0 0
        %7036 = vmatprep.subr.bf16.mxu0 0
        %7037 = vmatpush1.bf16.msra.mxu0 0
        %7038 = vmatprep.subr.bf16.mxu0 0
        %7039 = vmatpush1.bf16.msra.mxu0 0
        %7040 = vmatprep.subr.bf16.mxu0 0
        %7041 = vmatpush1.bf16.msra.mxu0 0
        %7042 = vmatprep.subr.bf16.mxu0 0
        %7043 = vmatpush1.bf16.msra.mxu0 0
        %7044 = vmatprep.subr.bf16.mxu0 0
        %7045 = vmatpush1.bf16.msra.mxu0 0
        %7046 = vmatprep.subr.bf16.mxu0 0
        %7047 = vmatpush1.bf16.msra.mxu0 0
        %7048 = vmatprep.subr.bf16.mxu0 0
        %7049 = vmatpush1.bf16.msra.mxu0 0
        %7050 = vmatprep.subr.bf16.mxu0 0
        %7051 = vmatpush1.bf16.msra.mxu0 0
        %7052 = vmatprep.subr.bf16.mxu0 0
        %7053 = vmatpush1.bf16.msra.mxu0 0
        %7054 = vmatprep.subr.bf16.mxu0 0
        %7055 = vmatpush1.bf16.msra.mxu0 0
        %7056 = vmatprep.subr.bf16.mxu0 0
        %7057 = vmatpush1.bf16.msra.mxu0 0
        %7058 = vmatprep.subr.bf16.mxu0 0
        %7059 = vmatpush1.bf16.msra.mxu0 0
        %7060 = vmatprep.subr.bf16.mxu0 0
        %7061 = vmatpush1.bf16.msra.mxu0 0
        %7062 = vmatprep.subr.bf16.mxu0 0
        %7063 = vmatpush1.bf16.msra.mxu0 0
        %7064 = vmatprep.mubr.bf16.mxu0 0
        %7065 = vmatmul.mubr.bf16.gmra.mrb[0].mxu0 %v7018
        %v7066 = vpop.f32.mrb[0].mxu0
        %v7067 = vadd.f32 0.0, %v7066
        %v7068 = vpop.f32.mrb[0].mxu0
        %v7069 = vpop.f32.mrb[0].mxu0
        %v7070 = vadd.f32 0.0, %v7069
        %v7071 = vpop.f32.mrb[0].mxu0
        %7072 = vmatprep.mubr.bf16.mxu0 0
        %7073 = vmatmul.mubr.bf16.gmra.mrb[0].mxu0 %v7021
        %v7074 = vpop.f32.mrb[0].mxu0
        %v7075 = vadd.f32 0.0, %v7074
        %v7076 = vpop.f32.mrb[0].mxu0
        %v7077 = vpop.f32.mrb[0].mxu0
        %v7078 = vadd.f32 0.0, %v7077
        %v7079 = vpop.f32.mrb[0].mxu0
        %7080 = vmatprep.mubr.bf16.mxu0 0
        %7081 = vmatmul.mubr.bf16.gmra.mrb[0].mxu0 %v7024
        %v7082 = vpop.f32.mrb[0].mxu0
        %v7083 = vadd.f32 0.0, %v7082
        %v7084 = vpop.f32.mrb[0].mxu0
        %v7085 = vpop.f32.mrb[0].mxu0
        %v7086 = vadd.f32 0.0, %v7085
        %v7087 = vpop.f32.mrb[0].mxu0
        %7088 = vmatprep.mubr.bf16.mxu0 0
        %7089 = vmatmul.mubr.bf16.gmra.mrb[0].mxu0 %v7027
        %v7090 = vpop.f32.mrb[0].mxu0
        %v7091 = vadd.f32 0.0, %v7090
        %v7092 = vpop.f32.mrb[0].mxu0
        %v7093 = vpop.f32.mrb[0].mxu0
        %v7094 = vadd.f32 0.0, %v7093
        %v7095 = vpop.f32.mrb[0].mxu0
        %7096 = vdwg.mxu0
        %v7097 = vadd.f32 %v6979, %v7067
        %v7098 = vadd.f32 %v6980, %v7070
        %v7099 = vadd.f32 %v6981, %v7075
        %v7100 = vadd.f32 %v6982, %v7078
        %v7101 = vadd.f32 %v6983, %v7083
        %v7102 = vadd.f32 %v6984, %v7086
        %v7103 = vadd.f32 %v6985, %v7091
        %v7104 = vadd.f32 %v6986, %v7094
        %v7105 = vld [vmem:[%s1917] sm:$0xf]
        %v7106 = vld [vmem:[%s1917 + $0x4] sm:$0x1]
        %v7107 = vld [vmem:[%s1917 + $0x8] sm:$0xf]
        %v7108 = vld [vmem:[%s1917 + $0xc] sm:$0x1]
        %v7109 = vld [vmem:[%s1917 + $0x10] sm:$0xf]
        %v7110 = vld [vmem:[%s1917 + $0x14] sm:$0x1]
        %v7111 = vld [vmem:[%s1917 + $0x18] sm:$0xf]
        %v7112 = vld [vmem:[%s1917 + $0x1c] sm:$0x1]
        %v7113 = vld [vmem:[%s1917 + $0x20] sm:$0xf]
        %v7114 = vld [vmem:[%s1917 + $0x24] sm:$0x1]
        %v7115 = vld [vmem:[%s1917 + $0x28] sm:$0xf]
        %v7116 = vld [vmem:[%s1917 + $0x2c] sm:$0x1]
        %v7117 = vld [vmem:[%s1917 + $0x30] sm:$0xf]
        %v7118 = vld [vmem:[%s1917 + $0x34] sm:$0x1]
        %v7119 = vld [vmem:[%s1917 + $0x38] sm:$0xf]
        %v7120 = vld [vmem:[%s1917 + $0x3c] sm:$0x1]
        %v7122 = vshrl.u32 %v7105, 16
        %v7124 = vrot.slane %v7122, 4
        %v7125 = vshll.u32 %v7105, 16
        %v7127 = vrot.slane %v7125, 5
        %v7128 = vor.u32 %v7124, %v7127
        %v7129 = vrot.slane %v7128, 4
        %v7131 = vshll.u32 %v7106, 16
        %v7133 = vrot.slane %v7131, 5
        %v7134 = vsel %vm920, %v7129, %v7133
        %v7136 = vshrl.u32 %v7107, 16
        %v7138 = vrot.slane %v7136, 4
        %v7139 = vshll.u32 %v7107, 16
        %v7141 = vrot.slane %v7139, 5
        %v7142 = vor.u32 %v7138, %v7141
        %v7143 = vrot.slane %v7142, 4
        %v7145 = vshll.u32 %v7108, 16
        %v7147 = vrot.slane %v7145, 5
        %v7148 = vsel %vm920, %v7143, %v7147
        %v7150 = vshrl.u32 %v7109, 16
        %v7152 = vrot.slane %v7150, 4
        %v7153 = vshll.u32 %v7109, 16
        %v7155 = vrot.slane %v7153, 5
        %v7156 = vor.u32 %v7152, %v7155
        %v7157 = vrot.slane %v7156, 4
        %v7159 = vshll.u32 %v7110, 16
        %v7161 = vrot.slane %v7159, 5
        %v7162 = vsel %vm920, %v7157, %v7161
        %v7164 = vshrl.u32 %v7111, 16
        %v7166 = vrot.slane %v7164, 4
        %v7167 = vshll.u32 %v7111, 16
        %v7169 = vrot.slane %v7167, 5
        %v7170 = vor.u32 %v7166, %v7169
        %v7171 = vrot.slane %v7170, 4
        %v7173 = vshll.u32 %v7112, 16
        %v7175 = vrot.slane %v7173, 5
        %v7176 = vsel %vm920, %v7171, %v7175
        %v7178 = vshrl.u32 %v7113, 16
        %v7180 = vrot.slane %v7178, 4
        %v7181 = vshll.u32 %v7113, 16
        %v7183 = vrot.slane %v7181, 5
        %v7184 = vor.u32 %v7180, %v7183
        %v7185 = vrot.slane %v7184, 4
        %v7187 = vshll.u32 %v7114, 16
        %v7189 = vrot.slane %v7187, 5
        %v7190 = vsel %vm920, %v7185, %v7189
        %v7192 = vshrl.u32 %v7115, 16
        %v7194 = vrot.slane %v7192, 4
        %v7195 = vshll.u32 %v7115, 16
        %v7197 = vrot.slane %v7195, 5
        %v7198 = vor.u32 %v7194, %v7197
        %v7199 = vrot.slane %v7198, 4
        %v7201 = vshll.u32 %v7116, 16
        %v7203 = vrot.slane %v7201, 5
        %v7204 = vsel %vm920, %v7199, %v7203
        %v7206 = vshrl.u32 %v7117, 16
        %v7208 = vrot.slane %v7206, 4
        %v7209 = vshll.u32 %v7117, 16
        %v7211 = vrot.slane %v7209, 5
        %v7212 = vor.u32 %v7208, %v7211
        %v7213 = vrot.slane %v7212, 4
        %v7215 = vshll.u32 %v7118, 16
        %v7217 = vrot.slane %v7215, 5
        %v7218 = vsel %vm920, %v7213, %v7217
        %v7220 = vshrl.u32 %v7119, 16
        %v7222 = vrot.slane %v7220, 4
        %v7223 = vshll.u32 %v7119, 16
        %v7225 = vrot.slane %v7223, 5
        %v7226 = vor.u32 %v7222, %v7225
        %v7227 = vrot.slane %v7226, 4
        %v7229 = vshll.u32 %v7120, 16
        %v7231 = vrot.slane %v7229, 5
        %v7232 = vsel %vm920, %v7227, %v7231
        %s7233 = scalar_lea.vmem [#allocation14], 28
        %v7234 = vld [vmem:[%s7233] sm:$0xf]
        %v7235 = vunpack.c.l.b16 %v7134
        %v7236 = vunpack.c.l.b16 %v7148
        %v7237 = vunpack.c.l.b16 %v7162
        %v7238 = vunpack.c.l.b16 %v7176
        %v7239 = vunpack.c.l.b16 %v7190
        %v7240 = vunpack.c.l.b16 %v7204
        %v7241 = vunpack.c.l.b16 %v7218
        %v7242 = vunpack.c.l.b16 %v7232
        %v7243 = vpack.c.b16 %v7236, %v7235
        %v7244 = vpack.c.b16 %v7238, %v7237
        %v7245 = vpack.c.b16 %v7240, %v7239
        %v7246 = vpack.c.b16 %v7242, %v7241
        %v7248 = vsel %vm2775, %v7243, 0
        %v7251 = vsel %vm2775, %v7244, 0
        %v7254 = vsel %vm2775, %v7245, 0
        %v7257 = vsel %vm2775, %v7246, 0
        %v7260 = vsel %vm2788, %v7234, 0
        %7262 = vmatprep.subr.bf16.mxu0 0
        %7263 = vmatpush1.bf16.msra.mxu0 %v7260
        %7264 = vmatprep.subr.bf16.mxu0 0
        %7265 = vmatpush1.bf16.msra.mxu0 0
        %7266 = vmatprep.subr.bf16.mxu0 0
        %7267 = vmatpush1.bf16.msra.mxu0 0
        %7268 = vmatprep.subr.bf16.mxu0 0
        %7269 = vmatpush1.bf16.msra.mxu0 0
        %7270 = vmatprep.subr.bf16.mxu0 0
        %7271 = vmatpush1.bf16.msra.mxu0 0
        %7272 = vmatprep.subr.bf16.mxu0 0
        %7273 = vmatpush1.bf16.msra.mxu0 0
        %7274 = vmatprep.subr.bf16.mxu0 0
        %7275 = vmatpush1.bf16.msra.mxu0 0
        %7276 = vmatprep.subr.bf16.mxu0 0
        %7277 = vmatpush1.bf16.msra.mxu0 0
        %7278 = vmatprep.subr.bf16.mxu0 0
        %7279 = vmatpush1.bf16.msra.mxu0 0
        %7280 = vmatprep.subr.bf16.mxu0 0
        %7281 = vmatpush1.bf16.msra.mxu0 0
        %7282 = vmatprep.subr.bf16.mxu0 0
        %7283 = vmatpush1.bf16.msra.mxu0 0
        %7284 = vmatprep.subr.bf16.mxu0 0
        %7285 = vmatpush1.bf16.msra.mxu0 0
        %7286 = vmatprep.subr.bf16.mxu0 0
        %7287 = vmatpush1.bf16.msra.mxu0 0
        %7288 = vmatprep.subr.bf16.mxu0 0
        %7289 = vmatpush1.bf16.msra.mxu0 0
        %7290 = vmatprep.subr.bf16.mxu0 0
        %7291 = vmatpush1.bf16.msra.mxu0 0
        %7292 = vmatprep.subr.bf16.mxu0 0
        %7293 = vmatpush1.bf16.msra.mxu0 0
        %7294 = vmatprep.mubr.bf16.mxu0 0
        %7295 = vmatmul.mubr.bf16.gmra.mrb[0].mxu0 %v7248
        %v7296 = vpop.f32.mrb[0].mxu0
        %v7297 = vadd.f32 0.0, %v7296
        %v7298 = vpop.f32.mrb[0].mxu0
        %v7299 = vpop.f32.mrb[0].mxu0
        %v7300 = vadd.f32 0.0, %v7299
        %v7301 = vpop.f32.mrb[0].mxu0
        %7302 = vmatprep.mubr.bf16.mxu0 0
        %7303 = vmatmul.mubr.bf16.gmra.mrb[0].mxu0 %v7251
        %v7304 = vpop.f32.mrb[0].mxu0
        %v7305 = vadd.f32 0.0, %v7304
        %v7306 = vpop.f32.mrb[0].mxu0
        %v7307 = vpop.f32.mrb[0].mxu0
        %v7308 = vadd.f32 0.0, %v7307
        %v7309 = vpop.f32.mrb[0].mxu0
        %7310 = vmatprep.mubr.bf16.mxu0 0
        %7311 = vmatmul.mubr.bf16.gmra.mrb[0].mxu0 %v7254
        %v7312 = vpop.f32.mrb[0].mxu0
        %v7313 = vadd.f32 0.0, %v7312
        %v7314 = vpop.f32.mrb[0].mxu0
        %v7315 = vpop.f32.mrb[0].mxu0
        %v7316 = vadd.f32 0.0, %v7315
        %v7317 = vpop.f32.mrb[0].mxu0
        %7318 = vmatprep.mubr.bf16.mxu0 0
        %7319 = vmatmul.mubr.bf16.gmra.mrb[0].mxu0 %v7257
        %v7320 = vpop.f32.mrb[0].mxu0
        %v7321 = vadd.f32 0.0, %v7320
        %v7322 = vpop.f32.mrb[0].mxu0
        %v7323 = vpop.f32.mrb[0].mxu0
        %v7324 = vadd.f32 0.0, %v7323
        %v7325 = vpop.f32.mrb[0].mxu0
        %7326 = vdwg.mxu0
        %v7327 = vadd.f32 %v7097, %v7297
        %v7328 = vadd.f32 %v7098, %v7300
        %v7329 = vadd.f32 %v7099, %v7305
        %v7330 = vadd.f32 %v7100, %v7308
        %v7331 = vadd.f32 %v7101, %v7313
        %v7332 = vadd.f32 %v7102, %v7316
        %v7333 = vadd.f32 %v7103, %v7321
        %v7334 = vadd.f32 %v7104, %v7324
        %v7335 = vld [vmem:[%s1917] sm:$0xe]
        %v7336 = vld [vmem:[%s1917 + $0x8] sm:$0xe]
        %v7337 = vld [vmem:[%s1917 + $0x10] sm:$0xe]
        %v7338 = vld [vmem:[%s1917 + $0x18] sm:$0xe]
        %v7339 = vld [vmem:[%s1917 + $0x20] sm:$0xe]
        %v7340 = vld [vmem:[%s1917 + $0x28] sm:$0xe]
        %v7341 = vld [vmem:[%s1917 + $0x30] sm:$0xe]
        %v7342 = vld [vmem:[%s1917 + $0x38] sm:$0xe]
        %v7359 = vrot.slane %v7335, 5
        %v7360 = vrot.slane %v7359, 4
        %v7361 = vrot.slane %v7106, 5
        %v7362 = vsel %vm1260, %v7360, %v7361
        %v7363 = vrot.slane %v7336, 5
        %v7364 = vrot.slane %v7363, 4
        %v7365 = vrot.slane %v7108, 5
        %v7366 = vsel %vm1260, %v7364, %v7365
        %v7367 = vrot.slane %v7337, 5
        %v7368 = vrot.slane %v7367, 4
        %v7369 = vrot.slane %v7110, 5
        %v7370 = vsel %vm1260, %v7368, %v7369
        %v7371 = vrot.slane %v7338, 5
        %v7372 = vrot.slane %v7371, 4
        %v7373 = vrot.slane %v7112, 5
        %v7374 = vsel %vm1260, %v7372, %v7373
        %v7375 = vrot.slane %v7339, 5
        %v7376 = vrot.slane %v7375, 4
        %v7377 = vrot.slane %v7114, 5
        %v7378 = vsel %vm1260, %v7376, %v7377
        %v7379 = vrot.slane %v7340, 5
        %v7380 = vrot.slane %v7379, 4
        %v7381 = vrot.slane %v7116, 5
        %v7382 = vsel %vm1260, %v7380, %v7381
        %v7383 = vrot.slane %v7341, 5
        %v7384 = vrot.slane %v7383, 4
        %v7385 = vrot.slane %v7118, 5
        %v7386 = vsel %vm1260, %v7384, %v7385
        %v7387 = vrot.slane %v7342, 5
        %v7388 = vrot.slane %v7387, 4
        %v7389 = vrot.slane %v7120, 5
        %v7390 = vsel %vm1260, %v7388, %v7389
        %s7391 = scalar_lea.vmem [#allocation14], 32
        %v7392 = vld [vmem:[%s7391] sm:$0xf]
        %v7393 = vunpack.c.l.b16 %v7362
        %v7394 = vunpack.c.l.b16 %v7366
        %v7395 = vunpack.c.l.b16 %v7370
        %v7396 = vunpack.c.l.b16 %v7374
        %v7397 = vunpack.c.l.b16 %v7378
        %v7398 = vunpack.c.l.b16 %v7382
        %v7399 = vunpack.c.l.b16 %v7386
        %v7400 = vunpack.c.l.b16 %v7390
        %v7401 = vpack.c.b16 %v7394, %v7393
        %v7402 = vpack.c.b16 %v7396, %v7395
        %v7403 = vpack.c.b16 %v7398, %v7397
        %v7404 = vpack.c.b16 %v7400, %v7399
        %v7406 = vsel %vm2775, %v7401, 0
        %v7409 = vsel %vm2775, %v7402, 0
        %v7412 = vsel %vm2775, %v7403, 0
        %v7415 = vsel %vm2775, %v7404, 0
        %v7418 = vsel %vm2788, %v7392, 0
        %7420 = vmatprep.subr.bf16.mxu0 0
        %7421 = vmatpush1.bf16.msra.mxu0 %v7418
        %7422 = vmatprep.subr.bf16.mxu0 0
        %7423 = vmatpush1.bf16.msra.mxu0 0
        %7424 = vmatprep.subr.bf16.mxu0 0
        %7425 = vmatpush1.bf16.msra.mxu0 0
        %7426 = vmatprep.subr.bf16.mxu0 0
        %7427 = vmatpush1.bf16.msra.mxu0 0
        %7428 = vmatprep.subr.bf16.mxu0 0
        %7429 = vmatpush1.bf16.msra.mxu0 0
        %7430 = vmatprep.subr.bf16.mxu0 0
        %7431 = vmatpush1.bf16.msra.mxu0 0
        %7432 = vmatprep.subr.bf16.mxu0 0
        %7433 = vmatpush1.bf16.msra.mxu0 0
        %7434 = vmatprep.subr.bf16.mxu0 0
        %7435 = vmatpush1.bf16.msra.mxu0 0
        %7436 = vmatprep.subr.bf16.mxu0 0
        %7437 = vmatpush1.bf16.msra.mxu0 0
        %7438 = vmatprep.subr.bf16.mxu0 0
        %7439 = vmatpush1.bf16.msra.mxu0 0
        %7440 = vmatprep.subr.bf16.mxu0 0
        %7441 = vmatpush1.bf16.msra.mxu0 0
        %7442 = vmatprep.subr.bf16.mxu0 0
        %7443 = vmatpush1.bf16.msra.mxu0 0
        %7444 = vmatprep.subr.bf16.mxu0 0
        %7445 = vmatpush1.bf16.msra.mxu0 0
        %7446 = vmatprep.subr.bf16.mxu0 0
        %7447 = vmatpush1.bf16.msra.mxu0 0
        %7448 = vmatprep.subr.bf16.mxu0 0
        %7449 = vmatpush1.bf16.msra.mxu0 0
        %7450 = vmatprep.subr.bf16.mxu0 0
        %7451 = vmatpush1.bf16.msra.mxu0 0
        %7452 = vmatprep.mubr.bf16.mxu0 0
        %7453 = vmatmul.mubr.bf16.gmra.mrb[0].mxu0 %v7406
        %v7454 = vpop.f32.mrb[0].mxu0
        %v7455 = vadd.f32 0.0, %v7454
        %v7456 = vpop.f32.mrb[0].mxu0
        %v7457 = vpop.f32.mrb[0].mxu0
        %v7458 = vadd.f32 0.0, %v7457
        %v7459 = vpop.f32.mrb[0].mxu0
        %7460 = vmatprep.mubr.bf16.mxu0 0
        %7461 = vmatmul.mubr.bf16.gmra.mrb[0].mxu0 %v7409
        %v7462 = vpop.f32.mrb[0].mxu0
        %v7463 = vadd.f32 0.0, %v7462
        %v7464 = vpop.f32.mrb[0].mxu0
        %v7465 = vpop.f32.mrb[0].mxu0
        %v7466 = vadd.f32 0.0, %v7465
        %v7467 = vpop.f32.mrb[0].mxu0
        %7468 = vmatprep.mubr.bf16.mxu0 0
        %7469 = vmatmul.mubr.bf16.gmra.mrb[0].mxu0 %v7412
        %v7470 = vpop.f32.mrb[0].mxu0
        %v7471 = vadd.f32 0.0, %v7470
        %v7472 = vpop.f32.mrb[0].mxu0
        %v7473 = vpop.f32.mrb[0].mxu0
        %v7474 = vadd.f32 0.0, %v7473
        %v7475 = vpop.f32.mrb[0].mxu0
        %7476 = vmatprep.mubr.bf16.mxu0 0
        %7477 = vmatmul.mubr.bf16.gmra.mrb[0].mxu0 %v7415
        %v7478 = vpop.f32.mrb[0].mxu0
        %v7479 = vadd.f32 0.0, %v7478
        %v7480 = vpop.f32.mrb[0].mxu0
        %v7481 = vpop.f32.mrb[0].mxu0
        %v7482 = vadd.f32 0.0, %v7481
        %v7483 = vpop.f32.mrb[0].mxu0
        %7484 = vdwg.mxu0
        %v7485 = vadd.f32 %v7327, %v7455
        %v7486 = vadd.f32 %v7328, %v7458
        %v7487 = vadd.f32 %v7329, %v7463
        %v7488 = vadd.f32 %v7330, %v7466
        %v7489 = vadd.f32 %v7331, %v7471
        %v7490 = vadd.f32 %v7332, %v7474
        %v7491 = vadd.f32 %v7333, %v7479
        %v7492 = vadd.f32 %v7334, %v7482
        %v7493 = vld [vmem:[#allocation18] sm:$0x1]
        %v7495 = vlaneseq
        %v7496 = vshrl.u32 %v7495, 7
        %v7497 = vsub.s32 0, %v7496
        %v7498 = vrot.slane %v7493, %v7497
        %v7500 = vmul.f32 %v7485, %v7498
        %v7501 = vmul.f32 %v7486, %v7498
        %v7502 = vmul.f32 %v7487, %v7498
        %v7503 = vmul.f32 %v7488, %v7498
        %v7504 = vmul.f32 %v7489, %v7498
        %v7505 = vmul.f32 %v7490, %v7498
        %v7506 = vmul.f32 %v7491, %v7498
        %v7507 = vmul.f32 %v7492, %v7498
        %v7508 = vld [vmem:[#allocation20] sm:$0x1]
        %v7510 = vlaneseq
        %v7511 = vshrl.u32 %v7510, 7
        %v7512 = vsub.s32 0, %v7511
        %v7513 = vrot.slane %v7508, %v7512
        %v7515 = vadd.f32 %v7500, %v7513
        %v7516 = vadd.f32 %v7501, %v7513
        %v7517 = vadd.f32 %v7502, %v7513
        %v7518 = vadd.f32 %v7503, %v7513
        %v7519 = vadd.f32 %v7504, %v7513
        %v7520 = vadd.f32 %v7505, %v7513
        %v7521 = vadd.f32 %v7506, %v7513
        %v7522 = vadd.f32 %v7507, %v7513
        %v7523 = vmax.f32 %v7515, 0.0
        %v7524 = vmax.f32 %v7516, 0.0
        %v7525 = vmax.f32 %v7517, 0.0
        %v7526 = vmax.f32 %v7518, 0.0
        %v7527 = vmax.f32 %v7519, 0.0
        %v7528 = vmax.f32 %v7520, 0.0
        %v7529 = vmax.f32 %v7521, 0.0
        %v7530 = vmax.f32 %v7522, 0.0
        %7531 = vxpose.xlu0.b32.start [1/16] %v7523, 128
        %7532 = vxpose.xlu0.b32.cont [2/16] %v7524, 128
        %7533 = vxpose.xlu0.b32.cont [3/16] %v7525, 128
        %7534 = vxpose.xlu0.b32.cont [4/16] %v7526, 128
        %7535 = vxpose.xlu0.b32.cont [5/16] %v7527, 128
        %7536 = vxpose.xlu0.b32.cont [6/16] %v7528, 128
        %7537 = vxpose.xlu0.b32.cont [7/16] %v7529, 128
        %7538 = vxpose.xlu0.b32.cont [8/16] %v7530, 128
        %7539 = vxpose.xlu0.b32.cont [9/16] 0.0, 128
        %7540 = vxpose.xlu0.b32.cont [10/16] 0.0, 128
        %7541 = vxpose.xlu0.b32.cont [11/16] 0.0, 128
        %7542 = vxpose.xlu0.b32.cont [12/16] 0.0, 128
        %7543 = vxpose.xlu0.b32.cont [13/16] 0.0, 128
        %7544 = vxpose.xlu0.b32.cont [14/16] 0.0, 128
        %7545 = vxpose.xlu0.b32.cont [15/16] 0.0, 128
        %7546 = vxpose.xlu0.b32.end [16/16] 0.0, 128
        %v7547 = vpop.trf.xlu0
        %v7548 = vpop.trf.xlu0
        %v7549 = vpop.trf.xlu0
        %v7550 = vpop.trf.xlu0
        %v7551 = vpop.trf.xlu0
        %v7552 = vpop.trf.xlu0
        %v7553 = vpop.trf.xlu0
        %v7554 = vpop.trf.xlu0
        %v7555 = vpop.trf.xlu0
        %v7556 = vpop.trf.xlu0
        %v7557 = vpop.trf.xlu0
        %v7558 = vpop.trf.xlu0
        %v7559 = vpop.trf.xlu0
        %v7560 = vpop.trf.xlu0
        %v7561 = vpop.trf.xlu0
        %v7562 = vpop.trf.xlu0
        %vm7563 = vcmask 523264
        %7564 = vst.msk [vmem:[%s563] sm:$0xff] %vm7563, %v7547
        %s7565 = sand.u32 %s284, 1
        %s7566 = scalar_lea.sflag [#allocation5], %s7565
        %s7567 = sand.u32 %s284, 1
        %s7568 = smul.addr %s7567, 8
        %s7569 = scalar_lea.vmem [#allocation21], %s7568
        // Predicated region
        $region109: #{tpu_custom_call.1} parent=63 // pred_check
          %p7570 = pneg %p294
        $region110: #{tpu_custom_call.1} parent=63 // pred_check_branch
          %7572 = sbr.rel (%p7570) target = $region112
        $region111: #{tpu_custom_call.1} parent=63 // pred_region
          %s7574 = ssub.s32 128, 128
          %7575 = vsyncadd %s7566, %s7574
          %s7576 = smul.addr %s35, 128
          %s7577 = scalar_lea.hbm %s11, %s7576
          %s7579 = sshll.u32 %s7569, 4
          %s7580 = int_to_ptr.vmem [resolvable:$true] %s7579
          %7582 = dma.vmem_to_hbm [thread:$0]  %s7580, 128, %s7577, %s7566
        $region112: #{tpu_custom_call.1} parent=63 // pred_fallthru
          _
      $region64: #{tpu_custom_call.1} parent=5 // pred_fallthru
        _
      %p7583 = scmp.le.s32.totalorder 2, %s30
      // Predicated region
      $region113: #{tpu_custom_call.1} parent=5 // pred_check
        %p7584 = pneg %p7583
      $region114: #{tpu_custom_call.1} parent=5 // pred_check_branch
        %7586 = sbr.rel (%p7584) target = $region116
      $region115: #{tpu_custom_call.1} parent=5 // pred_region
        %s7587 = ssub.s32 %s30, 2
        // Predicated region
        $region117: #{tpu_custom_call.1} parent=115 // pred_check
          %p7588 = pneg %p300
        $region118: #{tpu_custom_call.1} parent=115 // pred_check_branch
          %7590 = sbr.rel (%p7588) target = $region120
        $region119: #{tpu_custom_call.1} parent=115 // pred_region
          %s7591 = sand.u32 %s285, 1
          %s7592 = scalar_lea.sflag [#allocation5], %s7591
          %s7593 = sand.u32 %s285, 1
          %s7594 = smul.addr %s7593, 8
          %s7595 = scalar_lea.vmem [#allocation21], %s7594
          %7596 = dma.done %s7592, 128
        $region120: #{tpu_custom_call.1} parent=115 // pred_fallthru
          _
      $region116: #{tpu_custom_call.1} parent=5 // pred_fallthru
        _
    $region6: #{tpu_custom_call.1} parent=1 // loop_footer
      %s34 = sadd.s32 1, %s30
    $region7: #{tpu_custom_call.1} parent=1 // loop_footer_branch
      %29 = sbr.rel target = $region3
    $region8: #{tpu_custom_call.1} parent=1 // loop_exit
      _
    %7597 = vsyncpa [#allocation4], 1
    %s7598 = scalar_lea.sflag [#allocation4], 1
    %7599 = vsyncpa %s7598, 1
    %7600 = vsyncpa [#allocation7], 1
    %s7601 = scalar_lea.sflag [#allocation7], 1
    %7602 = vsyncpa %s7601, 1
    %7603 = vsyncpa [#allocation10], 1
    %7604 = vsyncpa [#allocation13], 1
    %7605 = vsyncpa [#allocation16], 1
    %7606 = vsyncpa [#allocation19], 1
    %7607 = vsyncpa [#allocation5], 1
    %s7608 = scalar_lea.sflag [#allocation5], 1
    %7609 = vsyncpa %s7608, 1

</llo_original>
